<compile_context>
chip_gen: v5e
topology: v5e:2x2
jax: 0.10.0
libtpu: 0.0.40
codegen_flags: <defaults>
</compile_context>

<pallas_src>
import functools

import jax
import jax.numpy as jnp
from jax import lax
from jax.experimental import pallas as pl
from jax.experimental.pallas import tpu as pltpu

BN_EPS = 1e-5

# Row-tile limits for the [rows, 128] lane-dense kernels.
#   BN epilogue: bf16 in + bf16 out, ~3 live f32 temporaries -> 8192 rows is ~20 MiB
#   peak VMEM (double-buffered I/O + temps), safe on v5e/v6e/v7x default scoped VMEM.
#   Skin mask: ~10 live f32 temporaries per block -> cap at 2048 rows (~16 MiB peak).
_BN_MAX_ROW_TILE = 8192
_SKIN_MAX_ROW_TILE = 2048
_MIN_ROW_TILE = 512


def _round_up(x, m):
    return ((x + m - 1) // m) * m


def _pick_row_tile(rows, max_tile):
    """Row-tile for a [rows, 128] lane-dense activation (bf16-friendly multiples of 16).

    Big tensors: ~rows/8 clamped to [_MIN_ROW_TILE, max_tile] (>= 8 pipelined steps,
    megacore-splittable, per-step ~0.35us overhead kept small).  Small tensors: split
    into 2 blocks when legal (v7x has 2 TensorCores), else one full-array block.
    """
    if rows <= 16:
        return rows
    tile = min(max(_MIN_ROW_TILE, -(-rows // 8)), max_tile, rows)
    tile = _round_up(tile, 16)
    if tile >= rows:
        half = _round_up(-(-rows // 2), 16)
        return half if half < rows else rows
    return tile


def _to_lane_matrix(flat, total):
    """[total] -> ([rows,128], rows, pad) with a copy only when total % 128 != 0."""
    rows = pl.cdiv(total, 128)
    pad = rows * 128 - total
    if pad:
        flat = jnp.pad(flat, (0, pad))     # rare fallback; demo / typical shapes never hit this
    return flat.reshape(rows, 128), rows, pad


# -----------------------------------------------------------------------------
# Pallas kernels
# -----------------------------------------------------------------------------
def _bn_act_kernel(*refs, act, scaled):
    """Fused train-mode BatchNorm + activation (+ optional post-act scalar scale).

    y_ref : [TM, 128] bf16 conv output, channels tiled along the 128-lane axis
    a_ref : [1, 128]  f32  rsqrt(var+eps) per channel (lane-tiled)
    b_ref : [1, 128]  f32  -mean*rsqrt(var+eps) per channel (lane-tiled)
    s_ref : [1, 1]    f32  scalar multiplier in SMEM (only when scaled=True)
    o_ref : [TM, 128] bf16 output
    """
    if scaled:
        y_ref, a_ref, b_ref, s_ref, o_ref = refs
    else:
        y_ref, a_ref, b_ref, o_ref = refs
        s_ref = None

    z = y_ref[...].astype(jnp.float32) * a_ref[...] + b_ref[...]
    if act == "relu":
        z = jnp.maximum(z, 0.0)
    else:  # "elu", alpha = 1
        z = jnp.where(z > 0.0, z, jnp.exp(jnp.minimum(z, 0.0)) - 1.0)
    if scaled:
        z = z * s_ref[0, 0]                # scale applied AFTER the activation (module order)
    o_ref[...] = z.astype(o_ref.dtype)


def _skin_mask_kernel(x_ref, o_ref):
    """skin_mask_v2: per-pixel skin mask (lane-dense layout, division-free).

    x_ref : [3, TP, 128] bf16 R, G, B planes, pixel values in [0, 255]
    o_ref : [TP, 128]    bf16 mask in {0, 1}, same pixel order as the planes
    """
    r = x_ref[0].astype(jnp.float32)
    g = x_ref[1].astype(jnp.float32)
    b = x_ref[2].astype(jnp.float32)

    rgb_rule = ((r > 95.0) & (g > 40.0) & (b > 20.0)
                & (r > g) & (r > b) & (jnp.abs(r - g) > 15.0))

    # Under rgb_rule R is the strict channel max, so the OpenCV HSV window
    #   0 <= H <= 50 (H = deg/2) and 0.23*255 <= S <= 0.68*255 (S = 255*diff/max)
    # reduces, division-free, to:  g >= b  (hue in [0,60) deg, upper bound 100 deg is
    # automatic because g-b <= r-min(g,b)),  and  0.23*r <= diff <= 0.68*r.
    diff = r - jnp.minimum(g, b)
    mask1 = rgb_rule & (g >= b) & (diff >= 0.23 * r) & (diff <= 0.68 * r)

    # YCrCb (OpenCV BT.601 full-range, delta = 128).
    y = 0.299 * r + 0.587 * g + 0.114 * b
    cr = (r - y) * 0.713 + 128.0
    cb = (b - y) * 0.564 + 128.0
    mask2 = (
        rgb_rule
        & (cr > 135.0) & (cb > 85.0) & (y > 80.0)
        & (cr <= 1.5862 * cb + 20.0)
        & (cr >= 0.3448 * cb + 76.2069)
        & (cr >= -4.5652 * cb + 234.5652)
        & (cr <= -1.15 * cb + 301.75)
        & (cr <= -2.2857 * cb + 432.85)
    )
    o_ref[...] = (mask1 | mask2).astype(o_ref.dtype)


# -----------------------------------------------------------------------------
# Pallas wrappers (tiled, lane-dense, "parallel" grid)
# -----------------------------------------------------------------------------
def bn_act_scale(y, scale, *, act, out_dtype=jnp.bfloat16):
    """Train-mode BN (global batch stats, gamma=1/beta=0) + activation (+ scalar scale).

    y : [N,T,H,W,C] conv output (bf16), C must divide 128.  Returns same shape, `out_dtype`.
    """
    shape = y.shape
    C = shape[-1]
    assert 128 % C == 0, f"channel count {C} must divide 128"
    reps = 128 // C

    # Both reductions read the bf16 conv output once; XLA multi-output-fuses them.
    y32 = y.astype(jnp.float32)
    red = tuple(range(y.ndim - 1))
    mean = jnp.mean(y32, axis=red)
    meansq = jnp.mean(y32 * y32, axis=red)
    var = jnp.maximum(meansq - jnp.square(mean), 0.0)
    invstd = lax.rsqrt(var + BN_EPS)
    a = jnp.tile(invstd, reps).reshape(1, 128).astype(jnp.float32)       # lane = channel % C
    b = jnp.tile(-mean * invstd, reps).reshape(1, 128).astype(jnp.float32)

    total = y.size
    ymat, rows, pad = _to_lane_matrix(y.reshape(-1), total)
    tm = _pick_row_tile(rows, _BN_MAX_ROW_TILE)

    scaled = scale is not None
    in_specs = [
        pl.BlockSpec((tm, 128), lambda i: (i, 0)),
        pl.BlockSpec((1, 128), lambda i: (0, 0)),
        pl.BlockSpec((1, 128), lambda i: (0, 0)),
    ]
    args = [ymat, a, b]
    if scaled:
        in_specs.append(pl.BlockSpec(memory_space=pltpu.MemorySpace.SMEM))
        args.append(jnp.asarray(scale, jnp.float32).reshape(1, 1))

    out = pl.pallas_call(
        functools.partial(_bn_act_kernel, act=act, scaled=scaled),
        out_shape=jax.ShapeDtypeStruct((rows, 128), out_dtype),
        grid=(pl.cdiv(rows, tm),),
        in_specs=in_specs,
        out_specs=pl.BlockSpec((tm, 128), lambda i: (i, 0)),
        compiler_params=pltpu.CompilerParams(dimension_semantics=("parallel",)),
    )(*args)

    flat = out.reshape(-1)
    if pad:
        flat = flat[:total]
    return flat.reshape(shape)


def skin_mask(x):
    """x : [N,T,H,W,3] float32 RGB in [0,255] -> mask [N,T,H,W] bf16 in {0,1}."""
    N, T, H, W, C = x.shape
    P = N * T * H * W
    # bf16 cast before the plane transpose (0..255 exact in bf16) halves the copy + DMA.
    planes = jnp.transpose(x.astype(jnp.bfloat16), (4, 0, 1, 2, 3)).reshape(3, P)

    rows = pl.cdiv(P, 128)
    pad = rows * 128 - P
    if pad:
        planes = jnp.pad(planes, ((0, 0), (0, pad)))    # rare fallback
    planes = planes.reshape(3, rows, 128)
    tp = _pick_row_tile(rows, _SKIN_MAX_ROW_TILE)

    out = pl.pallas_call(
        _skin_mask_kernel,
        out_shape=jax.ShapeDtypeStruct((rows, 128), jnp.bfloat16),
        grid=(pl.cdiv(rows, tp),),
        in_specs=[pl.BlockSpec((3, tp, 128), lambda i: (0, i, 0))],
        out_specs=pl.BlockSpec((tp, 128), lambda i: (i, 0)),
        compiler_params=pltpu.CompilerParams(dimension_semantics=("parallel",)),
    )(planes)

    flat = out.reshape(-1)
    if pad:
        flat = flat[:P]
    return flat.reshape(N, T, H, W)                      # same pixel order as x; no back-transpose


# -----------------------------------------------------------------------------
# Conv / pool glue (XLA native conv — bf16 MXU path, f32 accumulation, bf16 output)
# -----------------------------------------------------------------------------
_DN = ("NDHWC", "DHWIO", "NDHWC")   # D == time axis


def conv3d(x, w_torch, padding):
    """x: [N,T,H,W,Cin]; w_torch: [Cout,Cin,Kt,Kh,Kw].  Bias omitted (cancelled by BN)."""
    w = jnp.transpose(w_torch, (2, 3, 4, 1, 0)).astype(jnp.bfloat16)
    y = lax.conv_general_dilated(
        x.astype(jnp.bfloat16), w,
        window_strides=(1, 1, 1),
        padding=[(padding[0],) * 2, (padding[1],) * 2, (padding[2],) * 2],
        dimension_numbers=_DN,
        preferred_element_type=jnp.float32)
    return y.astype(jnp.bfloat16)          # convert fuses into the conv; halves epilogue traffic


def conv_transpose_time(x, w_torch):
    """ConvTranspose3d(kernel=[4,1,1], stride=[2,1,1], pad=[1,0,0]) without BN/act.

    x: [N,T,H,W,Cin]; w_torch: [Cin,Cout,4,1,1]; output [N,2T,H,W,Cout] bf16.
    """
    w = jnp.transpose(w_torch[:, :, ::-1, :, :], (2, 3, 4, 0, 1)).astype(jnp.bfloat16)
    y = lax.conv_general_dilated(
        x.astype(jnp.bfloat16), w,
        window_strides=(1, 1, 1),
        padding=[(2, 2), (0, 0), (0, 0)],
        lhs_dilation=(2, 1, 1),
        dimension_numbers=_DN,
        preferred_element_type=jnp.float32)
    return y.astype(jnp.bfloat16)


def maxpool3d(x, k):
    N, T, H, W, C = x.shape
    kt, kh, kw = k
    x = x.reshape(N, T // kt, kt, H // kh, kh, W // kw, kw, C)
    return x.max(axis=(2, 4, 6))


def adaptive_avg_pool_t(x, out_t):
    """AdaptiveAvgPool3d((out_t, 1, 1)) on channels-last [N,T,H,W,C]."""
    x = x.mean(axis=(2, 3), keepdims=True)
    T = x.shape[1]
    chunks = []
    for i in range(out_t):
        s = (i * T) // out_t
        e = -((-(i + 1) * T) // out_t)
        chunks.append(x[:, s:e].mean(axis=1, keepdims=True))
    return jnp.concatenate(chunks, axis=1)


# -----------------------------------------------------------------------------
# Parameters (deterministic synthetic init; shapes follow the module's __init__).
# Conv biases b1..b9 / bu1 / bu2 are kept for parity with the module but unused:
# each of those convs is followed by BatchNorm, which cancels the bias exactly.
# -----------------------------------------------------------------------------
def init_params(key):
    def wgt(k, shape):
        return jax.random.normal(k, shape, jnp.float32) * 0.05

    def bia(k, shape):
        return jax.random.normal(k, shape, jnp.float32) * 0.01

    shapes = {
        "w1": (16, 3, 1, 5, 5), "b1": (16,),
        "w2": (32, 16, 3, 3, 3), "b2": (32,),
        "w3": (64, 32, 3, 3, 3), "b3": (64,),
        "w4": (64, 64, 3, 3, 3), "b4": (64,),
        "w5": (64, 64, 3, 3, 3), "b5": (64,),
        "w6": (64, 64, 3, 3, 3), "b6": (64,),
        "w7": (64, 64, 3, 3, 3), "b7": (64,),
        "w8": (64, 64, 3, 3, 3), "b8": (64,),
        "w9": (64, 64, 3, 3, 3), "b9": (64,),
        "wu1": (64, 64, 4, 1, 1), "bu1": (64,),   # ConvTranspose3d weight: [Cin,Cout,Kt,Kh,Kw]
        "wu2": (64, 64, 4, 1, 1), "bu2": (64,),
        "w10": (1, 64, 1, 1, 1), "b10": (1,),
    }
    params = {}
    keys = jax.random.split(key, len(shapes))
    for (name, shape), k in zip(shapes.items(), keys):
        params[name] = wgt(k, shape) if name.startswith("w") else bia(k, shape)
    return params


# -----------------------------------------------------------------------------
# Full forward
# -----------------------------------------------------------------------------
def physnet_forward(x, outputs, params, *, frames):
    """x: (B, T, C, H, W) float32, RGB pixel values in [0, 255]; outputs: 5 scalar multipliers."""
    B, T, C, H, W = x.shape
    x = jnp.transpose(x, (0, 1, 3, 4, 2)).astype(jnp.float32)      # NTHWC
    x_visual = jnp.transpose(x, (0, 4, 1, 2, 3))                    # NCTHW (matches torch x_visual)

    p = params
    mask = skin_mask(x)                                             # [N,T,H,W] bf16 {0,1}
    xm = x.astype(jnp.bfloat16) * mask[..., None]                   # fuses into conv1 input cast

    x = bn_act_scale(conv3d(xm, p["w1"], (0, 2, 2)), outputs[0], act="relu")
    x = maxpool3d(x, (1, 2, 2))
    x = bn_act_scale(conv3d(x, p["w2"], (1, 1, 1)), outputs[1], act="relu")
    x_v6464 = bn_act_scale(conv3d(x, p["w3"], (1, 1, 1)), outputs[2], act="relu")
    x = maxpool3d(x_v6464, (2, 2, 2))
    x = bn_act_scale(conv3d(x, p["w4"], (1, 1, 1)), outputs[3], act="relu")
    x_v3232 = bn_act_scale(conv3d(x, p["w5"], (1, 1, 1)), outputs[4], act="relu")
    x = maxpool3d(x_v3232, (2, 2, 2))
    x = bn_act_scale(conv3d(x, p["w6"], (1, 1, 1)), None, act="relu")
    x_v1616 = bn_act_scale(conv3d(x, p["w7"], (1, 1, 1)), None, act="relu")
    x = maxpool3d(x_v1616, (1, 2, 2))
    x = bn_act_scale(conv3d(x, p["w8"], (1, 1, 1)), None, act="relu")
    x = bn_act_scale(conv3d(x, p["w9"], (1, 1, 1)), None, act="relu")
    x = bn_act_scale(conv_transpose_time(x, p["wu1"]), None, act="elu")
    x = bn_act_scale(conv_transpose_time(x, p["wu2"]), None, act="elu")

    x = adaptive_avg_pool_t(x.astype(jnp.float32), frames)          # [N, frames, 1, 1, 64] f32

    # ConvBlock10: 1x1x1 conv, Cout=1 -> per-position 64->1 dot; kept off the MXU
    # (1/128 lane utilisation), plain XLA dot on the tiny pooled tensor.
    w10 = p["w10"].reshape(1, 64).T.astype(jnp.float32)              # [64, 1]
    head = jnp.dot(x.reshape(-1, 64), w10) + p["b10"].astype(jnp.float32)

    # NOTE: the reference does x.view(-1, length) and implicitly assumes frames == length;
    # reshape over the actual pooled time axis keeps it well-defined for frames != length.
    rPPG = head.reshape(-1, frames)

    return (
        rPPG,
        x_visual,
        jnp.transpose(x_v3232, (0, 4, 1, 2, 3)).astype(jnp.float32),
        jnp.transpose(x_v1616, (0, 4, 1, 2, 3)).astype(jnp.float32),
    )


# -----------------------------------------------------------------------------
# Demo
# -----------------------------------------------------------------------------
if __name__ == "__main__":
    B, T, C, H, W = 2, 8, 3, 16, 16      # small shapes; frames = T
    FRAMES = T

    key = jax.random.PRNGKey(0)
    k_x, k_p = jax.random.split(key)
    # pixel-range input so the skin mask is non-trivial
    x = jax.random.uniform(k_x, (B, T, C, H, W), jnp.float32) * 255.0
    outputs = jnp.array([1.0, 0.95, 1.05, 0.9, 1.1], jnp.float32)
    params = init_params(k_p)

    fwd = jax.jit(functools.partial(physnet_forward, frames=FRAMES))
    rPPG, x_visual, x_v3232, x_v1616 = fwd(x, outputs, params)
    jax.block_until_ready((rPPG, x_visual, x_v3232, x_v1616))

    assert rPPG.shape == (B, T)
    assert x_visual.shape == (B, C, T, H, W)
    assert x_v3232.shape == (B, 64, T // 2, H // 4, W // 4)
    assert x_v1616.shape == (B, 64, T // 4, H // 8, W // 8)
    assert bool(jnp.all(jnp.isfinite(rPPG)))

    print("KERNEL_OK")
</pallas_src>

<mosaic_0001>
module attributes {stable_mosaic.version = 11 : i64} {
  func.func @_skin_mask_kernel(%arg0: i32, %arg1: memref<3x16x128xbf16, #tpu.memory_space<vmem>>, %arg2: memref<16x128xbf16, #tpu.memory_space<vmem>>) attributes {dimension_semantics = [#tpu.dimension_semantics<parallel>], iteration_bounds = array<i64: 2>, scalar_prefetch = 0 : i64, scratch_operands = 0 : i64, tpu.core_type = #tpu.core_type<tc>, window_params = [{transform_indices = @transform_0, window_bounds = array<i64: 3, 16, 128>}, {transform_indices = @transform_1, window_bounds = array<i64: 16, 128>}]} {
    %c0 = arith.constant 0 : index
    %c0_0 = arith.constant 0 : index
    %c0_1 = arith.constant 0 : index
    %0 = vector.load %arg1[%c0, %c0_0, %c0_1] : memref<3x16x128xbf16, #tpu.memory_space<vmem>>, vector<1x16x128xbf16>
    %1 = vector.shape_cast %0 : vector<1x16x128xbf16> to vector<16x128xbf16>
    %2 = arith.extf %1 : vector<16x128xbf16> to vector<16x128xf32>
    %c1 = arith.constant 1 : index
    %c0_2 = arith.constant 0 : index
    %c0_3 = arith.constant 0 : index
    %3 = vector.load %arg1[%c1, %c0_2, %c0_3] : memref<3x16x128xbf16, #tpu.memory_space<vmem>>, vector<1x16x128xbf16>
    %4 = vector.shape_cast %3 : vector<1x16x128xbf16> to vector<16x128xbf16>
    %5 = arith.extf %4 : vector<16x128xbf16> to vector<16x128xf32>
    %c2 = arith.constant 2 : index
    %c0_4 = arith.constant 0 : index
    %c0_5 = arith.constant 0 : index
    %6 = vector.load %arg1[%c2, %c0_4, %c0_5] : memref<3x16x128xbf16, #tpu.memory_space<vmem>>, vector<1x16x128xbf16>
    %7 = vector.shape_cast %6 : vector<1x16x128xbf16> to vector<16x128xbf16>
    %8 = arith.extf %7 : vector<16x128xbf16> to vector<16x128xf32>
    %cst = arith.constant 9.500000e+01 : f32
    %9 = vector.broadcast %cst : f32 to vector<16x128xf32>
    %10 = arith.cmpf ogt, %2, %9 : vector<16x128xf32>
    %cst_6 = arith.constant 4.000000e+01 : f32
    %11 = vector.broadcast %cst_6 : f32 to vector<16x128xf32>
    %12 = arith.cmpf ogt, %5, %11 : vector<16x128xf32>
    %13 = arith.andi %10, %12 : vector<16x128xi1>
    %cst_7 = arith.constant 2.000000e+01 : f32
    %14 = vector.broadcast %cst_7 : f32 to vector<16x128xf32>
    %15 = arith.cmpf ogt, %8, %14 : vector<16x128xf32>
    %16 = arith.andi %13, %15 : vector<16x128xi1>
    %17 = arith.cmpf ogt, %2, %5 : vector<16x128xf32>
    %18 = arith.andi %16, %17 : vector<16x128xi1>
    %19 = arith.cmpf ogt, %2, %8 : vector<16x128xf32>
    %20 = arith.andi %18, %19 : vector<16x128xi1>
    %21 = arith.subf %2, %5 : vector<16x128xf32>
    %22 = math.absf %21 : vector<16x128xf32>
    %cst_8 = arith.constant 1.500000e+01 : f32
    %23 = vector.broadcast %cst_8 : f32 to vector<16x128xf32>
    %24 = arith.cmpf ogt, %22, %23 : vector<16x128xf32>
    %25 = arith.andi %20, %24 : vector<16x128xi1>
    %26 = arith.minimumf %5, %8 : vector<16x128xf32>
    %27 = arith.subf %2, %26 : vector<16x128xf32>
    %28 = arith.cmpf oge, %5, %8 : vector<16x128xf32>
    %29 = arith.andi %25, %28 : vector<16x128xi1>
    %cst_9 = arith.constant 2.300000e-01 : f32
    %30 = vector.broadcast %cst_9 : f32 to vector<16x128xf32>
    %31 = arith.mulf %30, %2 : vector<16x128xf32>
    %32 = arith.cmpf oge, %27, %31 : vector<16x128xf32>
    %33 = arith.andi %29, %32 : vector<16x128xi1>
    %cst_10 = arith.constant 6.800000e-01 : f32
    %34 = vector.broadcast %cst_10 : f32 to vector<16x128xf32>
    %35 = arith.mulf %34, %2 : vector<16x128xf32>
    %36 = arith.cmpf ole, %27, %35 : vector<16x128xf32>
    %37 = arith.andi %33, %36 : vector<16x128xi1>
    %cst_11 = arith.constant 2.990000e-01 : f32
    %38 = vector.broadcast %cst_11 : f32 to vector<16x128xf32>
    %39 = arith.mulf %38, %2 : vector<16x128xf32>
    %cst_12 = arith.constant 5.870000e-01 : f32
    %40 = vector.broadcast %cst_12 : f32 to vector<16x128xf32>
    %41 = arith.mulf %40, %5 : vector<16x128xf32>
    %42 = arith.addf %39, %41 : vector<16x128xf32>
    %cst_13 = arith.constant 1.140000e-01 : f32
    %43 = vector.broadcast %cst_13 : f32 to vector<16x128xf32>
    %44 = arith.mulf %43, %8 : vector<16x128xf32>
    %45 = arith.addf %42, %44 : vector<16x128xf32>
    %46 = arith.subf %2, %45 : vector<16x128xf32>
    %cst_14 = arith.constant 0.712999999 : f32
    %47 = vector.broadcast %cst_14 : f32 to vector<16x128xf32>
    %48 = arith.mulf %46, %47 : vector<16x128xf32>
    %cst_15 = arith.constant 1.280000e+02 : f32
    %49 = vector.broadcast %cst_15 : f32 to vector<16x128xf32>
    %50 = arith.addf %48, %49 : vector<16x128xf32>
    %51 = arith.subf %8, %45 : vector<16x128xf32>
    %cst_16 = arith.constant 5.640000e-01 : f32
    %52 = vector.broadcast %cst_16 : f32 to vector<16x128xf32>
    %53 = arith.mulf %51, %52 : vector<16x128xf32>
    %cst_17 = arith.constant 1.280000e+02 : f32
    %54 = vector.broadcast %cst_17 : f32 to vector<16x128xf32>
    %55 = arith.addf %53, %54 : vector<16x128xf32>
    %cst_18 = arith.constant 1.350000e+02 : f32
    %56 = vector.broadcast %cst_18 : f32 to vector<16x128xf32>
    %57 = arith.cmpf ogt, %50, %56 : vector<16x128xf32>
    %58 = arith.andi %25, %57 : vector<16x128xi1>
    %cst_19 = arith.constant 8.500000e+01 : f32
    %59 = vector.broadcast %cst_19 : f32 to vector<16x128xf32>
    %60 = arith.cmpf ogt, %55, %59 : vector<16x128xf32>
    %61 = arith.andi %58, %60 : vector<16x128xi1>
    %cst_20 = arith.constant 8.000000e+01 : f32
    %62 = vector.broadcast %cst_20 : f32 to vector<16x128xf32>
    %63 = arith.cmpf ogt, %45, %62 : vector<16x128xf32>
    %64 = arith.andi %61, %63 : vector<16x128xi1>
    %cst_21 = arith.constant 1.586200e+00 : f32
    %65 = vector.broadcast %cst_21 : f32 to vector<16x128xf32>
    %66 = arith.mulf %65, %55 : vector<16x128xf32>
    %cst_22 = arith.constant 2.000000e+01 : f32
    %67 = vector.broadcast %cst_22 : f32 to vector<16x128xf32>
    %68 = arith.addf %66, %67 : vector<16x128xf32>
    %69 = arith.cmpf ole, %50, %68 : vector<16x128xf32>
    %70 = arith.andi %64, %69 : vector<16x128xi1>
    %cst_23 = arith.constant 3.448000e-01 : f32
    %71 = vector.broadcast %cst_23 : f32 to vector<16x128xf32>
    %72 = arith.mulf %71, %55 : vector<16x128xf32>
    %cst_24 = arith.constant 7.620690e+01 : f32
    %73 = vector.broadcast %cst_24 : f32 to vector<16x128xf32>
    %74 = arith.addf %72, %73 : vector<16x128xf32>
    %75 = arith.cmpf oge, %50, %74 : vector<16x128xf32>
    %76 = arith.andi %70, %75 : vector<16x128xi1>
    %cst_25 = arith.constant -4.565200e+00 : f32
    %77 = vector.broadcast %cst_25 : f32 to vector<16x128xf32>
    %78 = arith.mulf %77, %55 : vector<16x128xf32>
    %cst_26 = arith.constant 234.565201 : f32
    %79 = vector.broadcast %cst_26 : f32 to vector<16x128xf32>
    %80 = arith.addf %78, %79 : vector<16x128xf32>
    %81 = arith.cmpf oge, %50, %80 : vector<16x128xf32>
    %82 = arith.andi %76, %81 : vector<16x128xi1>
    %cst_27 = arith.constant -1.150000e+00 : f32
    %83 = vector.broadcast %cst_27 : f32 to vector<16x128xf32>
    %84 = arith.mulf %83, %55 : vector<16x128xf32>
    %cst_28 = arith.constant 3.017500e+02 : f32
    %85 = vector.broadcast %cst_28 : f32 to vector<16x128xf32>
    %86 = arith.addf %84, %85 : vector<16x128xf32>
    %87 = arith.cmpf ole, %50, %86 : vector<16x128xf32>
    %88 = arith.andi %82, %87 : vector<16x128xi1>
    %cst_29 = arith.constant -2.285700e+00 : f32
    %89 = vector.broadcast %cst_29 : f32 to vector<16x128xf32>
    %90 = arith.mulf %89, %55 : vector<16x128xf32>
    %cst_30 = arith.constant 4.328500e+02 : f32
    %91 = vector.broadcast %cst_30 : f32 to vector<16x128xf32>
    %92 = arith.addf %90, %91 : vector<16x128xf32>
    %93 = arith.cmpf ole, %50, %92 : vector<16x128xf32>
    %94 = arith.andi %88, %93 : vector<16x128xi1>
    %95 = arith.ori %37, %94 : vector<16x128xi1>
    %96 = arith.extui %95 : vector<16x128xi1> to vector<16x128xi32>
    %97 = arith.sitofp %96 : vector<16x128xi32> to vector<16x128xf32>
    %98 = arith.truncf %97 : vector<16x128xf32> to vector<16x128xbf16>
    %c0_31 = arith.constant 0 : index
    %c0_32 = arith.constant 0 : index
    %99 = vector.load %arg2[%c0_31, %c0_32] : memref<16x128xbf16, #tpu.memory_space<vmem>>, vector<16x128xbf16>
    tpu.vector_store %arg2[%c0_31, %c0_32], %98 {strides = array<i32>} : memref<16x128xbf16, #tpu.memory_space<vmem>>, vector<16x128xbf16>,
    return
  }
  func.func @transform_0(%arg0: i32) -> (i32, i32, i32) {
    %c0_i32 = arith.constant 0 : i32
    %c0_i32_0 = arith.constant 0 : i32
    %c0_i32_1 = arith.constant 0 : i32
    return %c0_i32, %arg0, %c0_i32_0 : i32, i32, i32
  }
  func.func @transform_1(%arg0: i32) -> (i32, i32) {
    %c0_i32 = arith.constant 0 : i32
    %c0_i32_0 = arith.constant 0 : i32
    return %arg0, %c0_i32 : i32, i32
  }
}

module attributes {stable_mosaic.version = 11 : i64} {
  func.func @_bn_act_kernel(%arg0: i32, %arg1: memref<256x128xbf16, #tpu.memory_space<vmem>>, %arg2: memref<1x128xf32, #tpu.memory_space<vmem>>, %arg3: memref<1x128xf32, #tpu.memory_space<vmem>>, %arg4: memref<1x1xf32, #tpu.memory_space<smem>>, %arg5: memref<256x128xbf16, #tpu.memory_space<vmem>>) attributes {dimension_semantics = [#tpu.dimension_semantics<parallel>], iteration_bounds = array<i64: 2>, scalar_prefetch = 0 : i64, scratch_operands = 0 : i64, tpu.core_type = #tpu.core_type<tc>, window_params = [{transform_indices = @transform_0, window_bounds = array<i64: 256, 128>}, {pipeline_mode = #tpu.pipeline_mode<synchronous>, transform_indices = @transform_1, window_bounds = array<i64: 1, 128>}, {pipeline_mode = #tpu.pipeline_mode<synchronous>, transform_indices = @transform_2, window_bounds = array<i64: 1, 128>}, {transform_indices = @transform_3, window_bounds = array<i64: 1, 1>}, {transform_indices = @transform_4, window_bounds = array<i64: 256, 128>}]} {
    %c0 = arith.constant 0 : index
    %c0_0 = arith.constant 0 : index
    %0 = vector.load %arg1[%c0, %c0_0] : memref<256x128xbf16, #tpu.memory_space<vmem>>, vector<256x128xbf16>
    %1 = arith.extf %0 : vector<256x128xbf16> to vector<256x128xf32>
    %c0_1 = arith.constant 0 : index
    %c0_2 = arith.constant 0 : index
    %2 = vector.load %arg2[%c0_1, %c0_2] : memref<1x128xf32, #tpu.memory_space<vmem>>, vector<1x128xf32>
    %3 = vector.broadcast %2 : vector<1x128xf32> to vector<256x128xf32>
    %4 = arith.mulf %1, %3 : vector<256x128xf32>
    %c0_3 = arith.constant 0 : index
    %c0_4 = arith.constant 0 : index
    %5 = vector.load %arg3[%c0_3, %c0_4] : memref<1x128xf32, #tpu.memory_space<vmem>>, vector<1x128xf32>
    %6 = vector.broadcast %5 : vector<1x128xf32> to vector<256x128xf32>
    %7 = arith.addf %4, %6 : vector<256x128xf32>
    %cst = arith.constant 0.000000e+00 : f32
    %8 = vector.broadcast %cst : f32 to vector<256x128xf32>
    %9 = arith.maximumf %7, %8 : vector<256x128xf32>
    %c0_5 = arith.constant 0 : index
    %c0_6 = arith.constant 0 : index
    %10 = memref.load %arg4[%c0_5, %c0_6] : memref<1x1xf32, #tpu.memory_space<smem>>
    %11 = vector.broadcast %10 : f32 to vector<256x128xf32>
    %12 = arith.mulf %9, %11 : vector<256x128xf32>
    %13 = arith.truncf %12 : vector<256x128xf32> to vector<256x128xbf16>
    %c0_7 = arith.constant 0 : index
    %c0_8 = arith.constant 0 : index
    %14 = vector.load %arg5[%c0_7, %c0_8] : memref<256x128xbf16, #tpu.memory_space<vmem>>, vector<256x128xbf16>
    tpu.vector_store %arg5[%c0_7, %c0_8], %13 {strides = array<i32>} : memref<256x128xbf16, #tpu.memory_space<vmem>>, vector<256x128xbf16>,
    return
  }
  func.func @transform_0(%arg0: i32) -> (i32, i32) {
    %c0_i32 = arith.constant 0 : i32
    %c0_i32_0 = arith.constant 0 : i32
    return %arg0, %c0_i32 : i32, i32
  }
  func.func @transform_1(%arg0: i32) -> (i32, i32) {
    %c0_i32 = arith.constant 0 : i32
    %c0_i32_0 = arith.constant 0 : i32
    %c0_i32_1 = arith.constant 0 : i32
    return %c0_i32, %c0_i32_0 : i32, i32
  }
  func.func @transform_2(%arg0: i32) -> (i32, i32) {
    %c0_i32 = arith.constant 0 : i32
    %c0_i32_0 = arith.constant 0 : i32
    %c0_i32_1 = arith.constant 0 : i32
    return %c0_i32, %c0_i32_0 : i32, i32
  }
  func.func @transform_3(%arg0: i32) -> (i32, i32) {
    %c0_i32 = arith.constant 0 : i32
    %c0_i32_0 = arith.constant 0 : i32
    %c0_i32_1 = arith.constant 0 : i32
    return %c0_i32, %c0_i32_0 : i32, i32
  }
  func.func @transform_4(%arg0: i32) -> (i32, i32) {
    %c0_i32 = arith.constant 0 : i32
    %c0_i32_0 = arith.constant 0 : i32
    return %arg0, %c0_i32 : i32, i32
  }
}

module attributes {stable_mosaic.version = 11 : i64} {
  func.func @_bn_act_kernel(%arg0: i32, %arg1: memref<128x128xbf16, #tpu.memory_space<vmem>>, %arg2: memref<1x128xf32, #tpu.memory_space<vmem>>, %arg3: memref<1x128xf32, #tpu.memory_space<vmem>>, %arg4: memref<1x1xf32, #tpu.memory_space<smem>>, %arg5: memref<128x128xbf16, #tpu.memory_space<vmem>>) attributes {dimension_semantics = [#tpu.dimension_semantics<parallel>], iteration_bounds = array<i64: 2>, scalar_prefetch = 0 : i64, scratch_operands = 0 : i64, tpu.core_type = #tpu.core_type<tc>, window_params = [{transform_indices = @transform_0, window_bounds = array<i64: 128, 128>}, {pipeline_mode = #tpu.pipeline_mode<synchronous>, transform_indices = @transform_1, window_bounds = array<i64: 1, 128>}, {pipeline_mode = #tpu.pipeline_mode<synchronous>, transform_indices = @transform_2, window_bounds = array<i64: 1, 128>}, {transform_indices = @transform_3, window_bounds = array<i64: 1, 1>}, {transform_indices = @transform_4, window_bounds = array<i64: 128, 128>}]} {
    %c0 = arith.constant 0 : index
    %c0_0 = arith.constant 0 : index
    %0 = vector.load %arg1[%c0, %c0_0] : memref<128x128xbf16, #tpu.memory_space<vmem>>, vector<128x128xbf16>
    %1 = arith.extf %0 : vector<128x128xbf16> to vector<128x128xf32>
    %c0_1 = arith.constant 0 : index
    %c0_2 = arith.constant 0 : index
    %2 = vector.load %arg2[%c0_1, %c0_2] : memref<1x128xf32, #tpu.memory_space<vmem>>, vector<1x128xf32>
    %3 = vector.broadcast %2 : vector<1x128xf32> to vector<128x128xf32>
    %4 = arith.mulf %1, %3 : vector<128x128xf32>
    %c0_3 = arith.constant 0 : index
    %c0_4 = arith.constant 0 : index
    %5 = vector.load %arg3[%c0_3, %c0_4] : memref<1x128xf32, #tpu.memory_space<vmem>>, vector<1x128xf32>
    %6 = vector.broadcast %5 : vector<1x128xf32> to vector<128x128xf32>
    %7 = arith.addf %4, %6 : vector<128x128xf32>
    %cst = arith.constant 0.000000e+00 : f32
    %8 = vector.broadcast %cst : f32 to vector<128x128xf32>
    %9 = arith.maximumf %7, %8 : vector<128x128xf32>
    %c0_5 = arith.constant 0 : index
    %c0_6 = arith.constant 0 : index
    %10 = memref.load %arg4[%c0_5, %c0_6] : memref<1x1xf32, #tpu.memory_space<smem>>
    %11 = vector.broadcast %10 : f32 to vector<128x128xf32>
    %12 = arith.mulf %9, %11 : vector<128x128xf32>
    %13 = arith.truncf %12 : vector<128x128xf32> to vector<128x128xbf16>
    %c0_7 = arith.constant 0 : index
    %c0_8 = arith.constant 0 : index
    %14 = vector.load %arg5[%c0_7, %c0_8] : memref<128x128xbf16, #tpu.memory_space<vmem>>, vector<128x128xbf16>
    tpu.vector_store %arg5[%c0_7, %c0_8], %13 {strides = array<i32>} : memref<128x128xbf16, #tpu.memory_space<vmem>>, vector<128x128xbf16>,
    return
  }
  func.func @transform_0(%arg0: i32) -> (i32, i32) {
    %c0_i32 = arith.constant 0 : i32
    %c0_i32_0 = arith.constant 0 : i32
    return %arg0, %c0_i32 : i32, i32
  }
  func.func @transform_1(%arg0: i32) -> (i32, i32) {
    %c0_i32 = arith.constant 0 : i32
    %c0_i32_0 = arith.constant 0 : i32
    %c0_i32_1 = arith.constant 0 : i32
    return %c0_i32, %c0_i32_0 : i32, i32
  }
  func.func @transform_2(%arg0: i32) -> (i32, i32) {
    %c0_i32 = arith.constant 0 : i32
    %c0_i32_0 = arith.constant 0 : i32
    %c0_i32_1 = arith.constant 0 : i32
    return %c0_i32, %c0_i32_0 : i32, i32
  }
  func.func @transform_3(%arg0: i32) -> (i32, i32) {
    %c0_i32 = arith.constant 0 : i32
    %c0_i32_0 = arith.constant 0 : i32
    %c0_i32_1 = arith.constant 0 : i32
    return %c0_i32, %c0_i32_0 : i32, i32
  }
  func.func @transform_4(%arg0: i32) -> (i32, i32) {
    %c0_i32 = arith.constant 0 : i32
    %c0_i32_0 = arith.constant 0 : i32
    return %arg0, %c0_i32 : i32, i32
  }
}

module attributes {stable_mosaic.version = 11 : i64} {
  func.func @_bn_act_kernel(%arg0: i32, %arg1: memref<32x128xbf16, #tpu.memory_space<vmem>>, %arg2: memref<1x128xf32, #tpu.memory_space<vmem>>, %arg3: memref<1x128xf32, #tpu.memory_space<vmem>>, %arg4: memref<1x1xf32, #tpu.memory_space<smem>>, %arg5: memref<32x128xbf16, #tpu.memory_space<vmem>>) attributes {dimension_semantics = [#tpu.dimension_semantics<parallel>], iteration_bounds = array<i64: 2>, scalar_prefetch = 0 : i64, scratch_operands = 0 : i64, tpu.core_type = #tpu.core_type<tc>, window_params = [{transform_indices = @transform_0, window_bounds = array<i64: 32, 128>}, {pipeline_mode = #tpu.pipeline_mode<synchronous>, transform_indices = @transform_1, window_bounds = array<i64: 1, 128>}, {pipeline_mode = #tpu.pipeline_mode<synchronous>, transform_indices = @transform_2, window_bounds = array<i64: 1, 128>}, {transform_indices = @transform_3, window_bounds = array<i64: 1, 1>}, {transform_indices = @transform_4, window_bounds = array<i64: 32, 128>}]} {
    %c0 = arith.constant 0 : index
    %c0_0 = arith.constant 0 : index
    %0 = vector.load %arg1[%c0, %c0_0] : memref<32x128xbf16, #tpu.memory_space<vmem>>, vector<32x128xbf16>
    %1 = arith.extf %0 : vector<32x128xbf16> to vector<32x128xf32>
    %c0_1 = arith.constant 0 : index
    %c0_2 = arith.constant 0 : index
    %2 = vector.load %arg2[%c0_1, %c0_2] : memref<1x128xf32, #tpu.memory_space<vmem>>, vector<1x128xf32>
    %3 = vector.broadcast %2 : vector<1x128xf32> to vector<32x128xf32>
    %4 = arith.mulf %1, %3 : vector<32x128xf32>
    %c0_3 = arith.constant 0 : index
    %c0_4 = arith.constant 0 : index
    %5 = vector.load %arg3[%c0_3, %c0_4] : memref<1x128xf32, #tpu.memory_space<vmem>>, vector<1x128xf32>
    %6 = vector.broadcast %5 : vector<1x128xf32> to vector<32x128xf32>
    %7 = arith.addf %4, %6 : vector<32x128xf32>
    %cst = arith.constant 0.000000e+00 : f32
    %8 = vector.broadcast %cst : f32 to vector<32x128xf32>
    %9 = arith.maximumf %7, %8 : vector<32x128xf32>
    %c0_5 = arith.constant 0 : index
    %c0_6 = arith.constant 0 : index
    %10 = memref.load %arg4[%c0_5, %c0_6] : memref<1x1xf32, #tpu.memory_space<smem>>
    %11 = vector.broadcast %10 : f32 to vector<32x128xf32>
    %12 = arith.mulf %9, %11 : vector<32x128xf32>
    %13 = arith.truncf %12 : vector<32x128xf32> to vector<32x128xbf16>
    %c0_7 = arith.constant 0 : index
    %c0_8 = arith.constant 0 : index
    %14 = vector.load %arg5[%c0_7, %c0_8] : memref<32x128xbf16, #tpu.memory_space<vmem>>, vector<32x128xbf16>
    tpu.vector_store %arg5[%c0_7, %c0_8], %13 {strides = array<i32>} : memref<32x128xbf16, #tpu.memory_space<vmem>>, vector<32x128xbf16>,
    return
  }
  func.func @transform_0(%arg0: i32) -> (i32, i32) {
    %c0_i32 = arith.constant 0 : i32
    %c0_i32_0 = arith.constant 0 : i32
    return %arg0, %c0_i32 : i32, i32
  }
  func.func @transform_1(%arg0: i32) -> (i32, i32) {
    %c0_i32 = arith.constant 0 : i32
    %c0_i32_0 = arith.constant 0 : i32
    %c0_i32_1 = arith.constant 0 : i32
    return %c0_i32, %c0_i32_0 : i32, i32
  }
  func.func @transform_2(%arg0: i32) -> (i32, i32) {
    %c0_i32 = arith.constant 0 : i32
    %c0_i32_0 = arith.constant 0 : i32
    %c0_i32_1 = arith.constant 0 : i32
    return %c0_i32, %c0_i32_0 : i32, i32
  }
  func.func @transform_3(%arg0: i32) -> (i32, i32) {
    %c0_i32 = arith.constant 0 : i32
    %c0_i32_0 = arith.constant 0 : i32
    %c0_i32_1 = arith.constant 0 : i32
    return %c0_i32, %c0_i32_0 : i32, i32
  }
  func.func @transform_4(%arg0: i32) -> (i32, i32) {
    %c0_i32 = arith.constant 0 : i32
    %c0_i32_0 = arith.constant 0 : i32
    return %arg0, %c0_i32 : i32, i32
  }
}

module attributes {stable_mosaic.version = 11 : i64} {
  func.func @_bn_act_kernel(%arg0: i32, %arg1: memref<8x128xbf16, #tpu.memory_space<vmem>>, %arg2: memref<1x128xf32, #tpu.memory_space<vmem>>, %arg3: memref<1x128xf32, #tpu.memory_space<vmem>>, %arg4: memref<8x128xbf16, #tpu.memory_space<vmem>>) attributes {dimension_semantics = [#tpu.dimension_semantics<parallel>], iteration_bounds = array<i64: 1>, scalar_prefetch = 0 : i64, scratch_operands = 0 : i64, tpu.core_type = #tpu.core_type<tc>, window_params = [{transform_indices = @transform_0, window_bounds = array<i64: 8, 128>}, {pipeline_mode = #tpu.pipeline_mode<synchronous>, transform_indices = @transform_1, window_bounds = array<i64: 1, 128>}, {pipeline_mode = #tpu.pipeline_mode<synchronous>, transform_indices = @transform_2, window_bounds = array<i64: 1, 128>}, {transform_indices = @transform_3, window_bounds = array<i64: 8, 128>}]} {
    %c0 = arith.constant 0 : index
    %c0_0 = arith.constant 0 : index
    %0 = vector.load %arg1[%c0, %c0_0] : memref<8x128xbf16, #tpu.memory_space<vmem>>, vector<8x128xbf16>
    %1 = arith.extf %0 : vector<8x128xbf16> to vector<8x128xf32>
    %c0_1 = arith.constant 0 : index
    %c0_2 = arith.constant 0 : index
    %2 = vector.load %arg2[%c0_1, %c0_2] : memref<1x128xf32, #tpu.memory_space<vmem>>, vector<1x128xf32>
    %3 = vector.broadcast %2 : vector<1x128xf32> to vector<8x128xf32>
    %4 = arith.mulf %1, %3 : vector<8x128xf32>
    %c0_3 = arith.constant 0 : index
    %c0_4 = arith.constant 0 : index
    %5 = vector.load %arg3[%c0_3, %c0_4] : memref<1x128xf32, #tpu.memory_space<vmem>>, vector<1x128xf32>
    %6 = vector.broadcast %5 : vector<1x128xf32> to vector<8x128xf32>
    %7 = arith.addf %4, %6 : vector<8x128xf32>
    %cst = arith.constant 0.000000e+00 : f32
    %8 = vector.broadcast %cst : f32 to vector<8x128xf32>
    %9 = arith.maximumf %7, %8 : vector<8x128xf32>
    %10 = arith.truncf %9 : vector<8x128xf32> to vector<8x128xbf16>
    %c0_5 = arith.constant 0 : index
    %c0_6 = arith.constant 0 : index
    %11 = vector.load %arg4[%c0_5, %c0_6] : memref<8x128xbf16, #tpu.memory_space<vmem>>, vector<8x128xbf16>
    tpu.vector_store %arg4[%c0_5, %c0_6], %10 {strides = array<i32>} : memref<8x128xbf16, #tpu.memory_space<vmem>>, vector<8x128xbf16>,
    return
  }
  func.func @transform_0(%arg0: i32) -> (i32, i32) {
    %c0_i32 = arith.constant 0 : i32
    %c0_i32_0 = arith.constant 0 : i32
    return %arg0, %c0_i32 : i32, i32
  }
  func.func @transform_1(%arg0: i32) -> (i32, i32) {
    %c0_i32 = arith.constant 0 : i32
    %c0_i32_0 = arith.constant 0 : i32
    %c0_i32_1 = arith.constant 0 : i32
    return %c0_i32, %c0_i32_0 : i32, i32
  }
  func.func @transform_2(%arg0: i32) -> (i32, i32) {
    %c0_i32 = arith.constant 0 : i32
    %c0_i32_0 = arith.constant 0 : i32
    %c0_i32_1 = arith.constant 0 : i32
    return %c0_i32, %c0_i32_0 : i32, i32
  }
  func.func @transform_3(%arg0: i32) -> (i32, i32) {
    %c0_i32 = arith.constant 0 : i32
    %c0_i32_0 = arith.constant 0 : i32
    return %arg0, %c0_i32 : i32, i32
  }
}

module attributes {stable_mosaic.version = 11 : i64} {
  func.func @_bn_act_kernel(%arg0: i32, %arg1: memref<2x128xbf16, #tpu.memory_space<vmem>>, %arg2: memref<1x128xf32, #tpu.memory_space<vmem>>, %arg3: memref<1x128xf32, #tpu.memory_space<vmem>>, %arg4: memref<2x128xbf16, #tpu.memory_space<vmem>>) attributes {dimension_semantics = [#tpu.dimension_semantics<parallel>], iteration_bounds = array<i64: 1>, scalar_prefetch = 0 : i64, scratch_operands = 0 : i64, tpu.core_type = #tpu.core_type<tc>, window_params = [{transform_indices = @transform_0, window_bounds = array<i64: 2, 128>}, {pipeline_mode = #tpu.pipeline_mode<synchronous>, transform_indices = @transform_1, window_bounds = array<i64: 1, 128>}, {pipeline_mode = #tpu.pipeline_mode<synchronous>, transform_indices = @transform_2, window_bounds = array<i64: 1, 128>}, {transform_indices = @transform_3, window_bounds = array<i64: 2, 128>}]} {
    %c0 = arith.constant 0 : index
    %c0_0 = arith.constant 0 : index
    %0 = vector.load %arg1[%c0, %c0_0] : memref<2x128xbf16, #tpu.memory_space<vmem>>, vector<2x128xbf16>
    %1 = arith.extf %0 : vector<2x128xbf16> to vector<2x128xf32>
    %c0_1 = arith.constant 0 : index
    %c0_2 = arith.constant 0 : index
    %2 = vector.load %arg2[%c0_1, %c0_2] : memref<1x128xf32, #tpu.memory_space<vmem>>, vector<1x128xf32>
    %3 = vector.broadcast %2 : vector<1x128xf32> to vector<2x128xf32>
    %4 = arith.mulf %1, %3 : vector<2x128xf32>
    %c0_3 = arith.constant 0 : index
    %c0_4 = arith.constant 0 : index
    %5 = vector.load %arg3[%c0_3, %c0_4] : memref<1x128xf32, #tpu.memory_space<vmem>>, vector<1x128xf32>
    %6 = vector.broadcast %5 : vector<1x128xf32> to vector<2x128xf32>
    %7 = arith.addf %4, %6 : vector<2x128xf32>
    %cst = arith.constant 0.000000e+00 : f32
    %8 = vector.broadcast %cst : f32 to vector<2x128xf32>
    %9 = arith.maximumf %7, %8 : vector<2x128xf32>
    %10 = arith.truncf %9 : vector<2x128xf32> to vector<2x128xbf16>
    %c0_5 = arith.constant 0 : index
    %c0_6 = arith.constant 0 : index
    %11 = vector.load %arg4[%c0_5, %c0_6] : memref<2x128xbf16, #tpu.memory_space<vmem>>, vector<2x128xbf16>
    tpu.vector_store %arg4[%c0_5, %c0_6], %10 {strides = array<i32>} : memref<2x128xbf16, #tpu.memory_space<vmem>>, vector<2x128xbf16>,
    return
  }
  func.func @transform_0(%arg0: i32) -> (i32, i32) {
    %c0_i32 = arith.constant 0 : i32
    %c0_i32_0 = arith.constant 0 : i32
    return %arg0, %c0_i32 : i32, i32
  }
  func.func @transform_1(%arg0: i32) -> (i32, i32) {
    %c0_i32 = arith.constant 0 : i32
    %c0_i32_0 = arith.constant 0 : i32
    %c0_i32_1 = arith.constant 0 : i32
    return %c0_i32, %c0_i32_0 : i32, i32
  }
  func.func @transform_2(%arg0: i32) -> (i32, i32) {
    %c0_i32 = arith.constant 0 : i32
    %c0_i32_0 = arith.constant 0 : i32
    %c0_i32_1 = arith.constant 0 : i32
    return %c0_i32, %c0_i32_0 : i32, i32
  }
  func.func @transform_3(%arg0: i32) -> (i32, i32) {
    %c0_i32 = arith.constant 0 : i32
    %c0_i32_0 = arith.constant 0 : i32
    return %arg0, %c0_i32 : i32, i32
  }
}

module attributes {stable_mosaic.version = 11 : i64} {
  func.func @_bn_act_kernel(%arg0: i32, %arg1: memref<4x128xbf16, #tpu.memory_space<vmem>>, %arg2: memref<1x128xf32, #tpu.memory_space<vmem>>, %arg3: memref<1x128xf32, #tpu.memory_space<vmem>>, %arg4: memref<4x128xbf16, #tpu.memory_space<vmem>>) attributes {dimension_semantics = [#tpu.dimension_semantics<parallel>], iteration_bounds = array<i64: 1>, scalar_prefetch = 0 : i64, scratch_operands = 0 : i64, tpu.core_type = #tpu.core_type<tc>, window_params = [{transform_indices = @transform_0, window_bounds = array<i64: 4, 128>}, {pipeline_mode = #tpu.pipeline_mode<synchronous>, transform_indices = @transform_1, window_bounds = array<i64: 1, 128>}, {pipeline_mode = #tpu.pipeline_mode<synchronous>, transform_indices = @transform_2, window_bounds = array<i64: 1, 128>}, {transform_indices = @transform_3, window_bounds = array<i64: 4, 128>}]} {
    %c0 = arith.constant 0 : index
    %c0_0 = arith.constant 0 : index
    %0 = vector.load %arg1[%c0, %c0_0] : memref<4x128xbf16, #tpu.memory_space<vmem>>, vector<4x128xbf16>
    %1 = arith.extf %0 : vector<4x128xbf16> to vector<4x128xf32>
    %c0_1 = arith.constant 0 : index
    %c0_2 = arith.constant 0 : index
    %2 = vector.load %arg2[%c0_1, %c0_2] : memref<1x128xf32, #tpu.memory_space<vmem>>, vector<1x128xf32>
    %3 = vector.broadcast %2 : vector<1x128xf32> to vector<4x128xf32>
    %4 = arith.mulf %1, %3 : vector<4x128xf32>
    %c0_3 = arith.constant 0 : index
    %c0_4 = arith.constant 0 : index
    %5 = vector.load %arg3[%c0_3, %c0_4] : memref<1x128xf32, #tpu.memory_space<vmem>>, vector<1x128xf32>
    %6 = vector.broadcast %5 : vector<1x128xf32> to vector<4x128xf32>
    %7 = arith.addf %4, %6 : vector<4x128xf32>
    %cst = arith.constant 0.000000e+00 : f32
    %8 = vector.broadcast %cst : f32 to vector<4x128xf32>
    %9 = arith.cmpf ogt, %7, %8 : vector<4x128xf32>
    %cst_5 = arith.constant 0.000000e+00 : f32
    %10 = vector.broadcast %cst_5 : f32 to vector<4x128xf32>
    %11 = arith.minimumf %7, %10 : vector<4x128xf32>
    %12 = math.exp %11 : vector<4x128xf32>
    %cst_6 = arith.constant 1.000000e+00 : f32
    %13 = vector.broadcast %cst_6 : f32 to vector<4x128xf32>
    %14 = arith.subf %12, %13 : vector<4x128xf32>
    %15 = arith.select %9, %7, %14 : vector<4x128xi1>, vector<4x128xf32>
    %16 = arith.truncf %15 : vector<4x128xf32> to vector<4x128xbf16>
    %c0_7 = arith.constant 0 : index
    %c0_8 = arith.constant 0 : index
    %17 = vector.load %arg4[%c0_7, %c0_8] : memref<4x128xbf16, #tpu.memory_space<vmem>>, vector<4x128xbf16>
    tpu.vector_store %arg4[%c0_7, %c0_8], %16 {strides = array<i32>} : memref<4x128xbf16, #tpu.memory_space<vmem>>, vector<4x128xbf16>,
    return
  }
  func.func @transform_0(%arg0: i32) -> (i32, i32) {
    %c0_i32 = arith.constant 0 : i32
    %c0_i32_0 = arith.constant 0 : i32
    return %arg0, %c0_i32 : i32, i32
  }
  func.func @transform_1(%arg0: i32) -> (i32, i32) {
    %c0_i32 = arith.constant 0 : i32
    %c0_i32_0 = arith.constant 0 : i32
    %c0_i32_1 = arith.constant 0 : i32
    return %c0_i32, %c0_i32_0 : i32, i32
  }
  func.func @transform_2(%arg0: i32) -> (i32, i32) {
    %c0_i32 = arith.constant 0 : i32
    %c0_i32_0 = arith.constant 0 : i32
    %c0_i32_1 = arith.constant 0 : i32
    return %c0_i32, %c0_i32_0 : i32, i32
  }
  func.func @transform_3(%arg0: i32) -> (i32, i32) {
    %c0_i32 = arith.constant 0 : i32
    %c0_i32_0 = arith.constant 0 : i32
    return %arg0, %c0_i32 : i32, i32
  }
}

module attributes {stable_mosaic.version = 11 : i64} {
  func.func @_bn_act_kernel(%arg0: i32, %arg1: memref<8x128xbf16, #tpu.memory_space<vmem>>, %arg2: memref<1x128xf32, #tpu.memory_space<vmem>>, %arg3: memref<1x128xf32, #tpu.memory_space<vmem>>, %arg4: memref<8x128xbf16, #tpu.memory_space<vmem>>) attributes {dimension_semantics = [#tpu.dimension_semantics<parallel>], iteration_bounds = array<i64: 1>, scalar_prefetch = 0 : i64, scratch_operands = 0 : i64, tpu.core_type = #tpu.core_type<tc>, window_params = [{transform_indices = @transform_0, window_bounds = array<i64: 8, 128>}, {pipeline_mode = #tpu.pipeline_mode<synchronous>, transform_indices = @transform_1, window_bounds = array<i64: 1, 128>}, {pipeline_mode = #tpu.pipeline_mode<synchronous>, transform_indices = @transform_2, window_bounds = array<i64: 1, 128>}, {transform_indices = @transform_3, window_bounds = array<i64: 8, 128>}]} {
    %c0 = arith.constant 0 : index
    %c0_0 = arith.constant 0 : index
    %0 = vector.load %arg1[%c0, %c0_0] : memref<8x128xbf16, #tpu.memory_space<vmem>>, vector<8x128xbf16>
    %1 = arith.extf %0 : vector<8x128xbf16> to vector<8x128xf32>
    %c0_1 = arith.constant 0 : index
    %c0_2 = arith.constant 0 : index
    %2 = vector.load %arg2[%c0_1, %c0_2] : memref<1x128xf32, #tpu.memory_space<vmem>>, vector<1x128xf32>
    %3 = vector.broadcast %2 : vector<1x128xf32> to vector<8x128xf32>
    %4 = arith.mulf %1, %3 : vector<8x128xf32>
    %c0_3 = arith.constant 0 : index
    %c0_4 = arith.constant 0 : index
    %5 = vector.load %arg3[%c0_3, %c0_4] : memref<1x128xf32, #tpu.memory_space<vmem>>, vector<1x128xf32>
    %6 = vector.broadcast %5 : vector<1x128xf32> to vector<8x128xf32>
    %7 = arith.addf %4, %6 : vector<8x128xf32>
    %cst = arith.constant 0.000000e+00 : f32
    %8 = vector.broadcast %cst : f32 to vector<8x128xf32>
    %9 = arith.cmpf ogt, %7, %8 : vector<8x128xf32>
    %cst_5 = arith.constant 0.000000e+00 : f32
    %10 = vector.broadcast %cst_5 : f32 to vector<8x128xf32>
    %11 = arith.minimumf %7, %10 : vector<8x128xf32>
    %12 = math.exp %11 : vector<8x128xf32>
    %cst_6 = arith.constant 1.000000e+00 : f32
    %13 = vector.broadcast %cst_6 : f32 to vector<8x128xf32>
    %14 = arith.subf %12, %13 : vector<8x128xf32>
    %15 = arith.select %9, %7, %14 : vector<8x128xi1>, vector<8x128xf32>
    %16 = arith.truncf %15 : vector<8x128xf32> to vector<8x128xbf16>
    %c0_7 = arith.constant 0 : index
    %c0_8 = arith.constant 0 : index
    %17 = vector.load %arg4[%c0_7, %c0_8] : memref<8x128xbf16, #tpu.memory_space<vmem>>, vector<8x128xbf16>
    tpu.vector_store %arg4[%c0_7, %c0_8], %16 {strides = array<i32>} : memref<8x128xbf16, #tpu.memory_space<vmem>>, vector<8x128xbf16>,
    return
  }
  func.func @transform_0(%arg0: i32) -> (i32, i32) {
    %c0_i32 = arith.constant 0 : i32
    %c0_i32_0 = arith.constant 0 : i32
    return %arg0, %c0_i32 : i32, i32
  }
  func.func @transform_1(%arg0: i32) -> (i32, i32) {
    %c0_i32 = arith.constant 0 : i32
    %c0_i32_0 = arith.constant 0 : i32
    %c0_i32_1 = arith.constant 0 : i32
    return %c0_i32, %c0_i32_0 : i32, i32
  }
  func.func @transform_2(%arg0: i32) -> (i32, i32) {
    %c0_i32 = arith.constant 0 : i32
    %c0_i32_0 = arith.constant 0 : i32
    %c0_i32_1 = arith.constant 0 : i32
    return %c0_i32, %c0_i32_0 : i32, i32
  }
  func.func @transform_3(%arg0: i32) -> (i32, i32) {
    %c0_i32 = arith.constant 0 : i32
    %c0_i32_0 = arith.constant 0 : i32
    return %arg0, %c0_i32 : i32, i32
  }
}

</mosaic_0001>

<llo_original>
// kernel: mul.27
$region0: #{mul.27}
  %s0 = inlined_call_operand.vmem [shape: bf16[32,128], index: 0, kind: input, shape index: {}]
  %s1 = inlined_call_operand.vmem [shape: bf16[2,8,16,16], index: 1, kind: output, shape index: {}]
  $region1: #{mul.27} parent=0
    #allocation0 [shape = 'u8[131072]{0}', space=vmem, size = 0x20000, scoped, tag = 'scoped mem for output reshape']
    #allocation1 [shape = 'u8[16384]{0}', space=vmem, size = 0x4000, scoped, tag = 'scoped mem for input reshape']
    %s3 = ssub.s32 256, 1
    %s4 = scalar_lea.vmem %s0, 12
    %s5 = sshrl.u32 %s3, 1
    %s6 = sor.u32 %s3, %s5
    %s7 = sand.u32 %s6, 85
    %s8 = sshrl.u32 %s7, 1
    %s9 = sor.u32 %s7, %s8
    %s10 = sand.u32 51, %s9
    %s11 = sshrl.u32 %s10, 2
    %s12 = sor.u32 %s10, %s11
    %s13 = sand.u32 15, %s12
    %v14 = vld [vmem:[%s4] sm:%s13]
    %v15 = vunpack.c.l.bf16 %v14
    %v16 = vunpack.c.h.bf16 %v14
    %s17 = scalar_lea.vmem [#allocation1], 24
    %18 = vst [vmem:[%s17] sm:%s3] %v15
    %s19 = scalar_lea.vmem %s0, 8
    %s20 = sshrl.u32 %s3, 1
    %s21 = sor.u32 %s3, %s20
    %s22 = sand.u32 %s21, 85
    %s23 = sshrl.u32 %s22, 1
    %s24 = sor.u32 %s22, %s23
    %s25 = sand.u32 51, %s24
    %s26 = sshrl.u32 %s25, 2
    %s27 = sor.u32 %s25, %s26
    %s28 = sand.u32 15, %s27
    %v29 = vld [vmem:[%s19] sm:%s28]
    %v30 = vunpack.c.l.bf16 %v29
    %v31 = vunpack.c.h.bf16 %v29
    %s32 = scalar_lea.vmem [#allocation1], 16
    %33 = vst [vmem:[%s32] sm:%s3] %v30
    %s34 = scalar_lea.vmem %s0, 4
    %s35 = sshrl.u32 %s3, 1
    %s36 = sor.u32 %s3, %s35
    %s37 = sand.u32 %s36, 85
    %s38 = sshrl.u32 %s37, 1
    %s39 = sor.u32 %s37, %s38
    %s40 = sand.u32 51, %s39
    %s41 = sshrl.u32 %s40, 2
    %s42 = sor.u32 %s40, %s41
    %s43 = sand.u32 15, %s42
    %v44 = vld [vmem:[%s34] sm:%s43]
    %v45 = vunpack.c.l.bf16 %v44
    %v46 = vunpack.c.h.bf16 %v44
    %s47 = scalar_lea.vmem [#allocation1], 8
    %48 = vst [vmem:[%s47] sm:%s3] %v45
    %s49 = sshrl.u32 %s3, 1
    %s50 = sor.u32 %s3, %s49
    %s51 = sand.u32 %s50, 85
    %s52 = sshrl.u32 %s51, 1
    %s53 = sor.u32 %s51, %s52
    %s54 = sand.u32 51, %s53
    %s55 = sshrl.u32 %s54, 2
    %s56 = sor.u32 %s54, %s55
    %s57 = sand.u32 15, %s56
    %v58 = vld [vmem:[%s0] sm:%s57]
    %v59 = vunpack.c.l.bf16 %v58
    %v60 = vunpack.c.h.bf16 %v58
    %61 = vst [vmem:[#allocation1] sm:%s3] %v59
    %v62 = vld [vmem:[#allocation1] sm:$0xff]
    %vm63 = vcmask 130048
    %64 = vst.msk [vmem:[#allocation0] ss:$8 sm:$0xf] %vm63, %v62
    %65 = vst.msk [vmem:[#allocation0] ss:$8 sm:$0xf0] %vm63, %v62
    %s66 = scalar_lea.vmem [#allocation1], 8
    %v67 = vld [vmem:[%s66] sm:$0xff]
    %vm68 = vcmask 130048
    %s69 = scalar_lea.vmem [#allocation0], 64
    %70 = vst.msk [vmem:[%s69] ss:$8 sm:$0xf] %vm68, %v67
    %s71 = scalar_lea.vmem [#allocation0], 64
    %72 = vst.msk [vmem:[%s71] ss:$8 sm:$0xf0] %vm68, %v67
    %s73 = scalar_lea.vmem [#allocation1], 16
    %v74 = vld [vmem:[%s73] sm:$0xff]
    %vm75 = vcmask 130048
    %s76 = scalar_lea.vmem [#allocation0], 128
    %77 = vst.msk [vmem:[%s76] ss:$8 sm:$0xf] %vm75, %v74
    %s78 = scalar_lea.vmem [#allocation0], 128
    %79 = vst.msk [vmem:[%s78] ss:$8 sm:$0xf0] %vm75, %v74
    %s80 = scalar_lea.vmem [#allocation1], 24
    %v81 = vld [vmem:[%s80] sm:$0xff]
    %vm82 = vcmask 130048
    %s83 = scalar_lea.vmem [#allocation0], 192
    %84 = vst.msk [vmem:[%s83] ss:$8 sm:$0xf] %vm82, %v81
    %s85 = scalar_lea.vmem [#allocation0], 192
    %86 = vst.msk [vmem:[%s85] ss:$8 sm:$0xf0] %vm82, %v81
    %v87 = vld [vmem:[#allocation1] sm:$0xff]
    %88 = vrot.lane.b32.xlu0 %v87, 112
    %v89 = vpop.permute.xlu0 %88
    %vm90 = vcmask 130048
    %s91 = scalar_lea.vmem [#allocation0], 1
    %92 = vst.msk [vmem:[%s91] ss:$8 sm:$0xf] %vm90, %v89
    %s93 = scalar_lea.vmem [#allocation0], 1
    %94 = vst.msk [vmem:[%s93] ss:$8 sm:$0xf0] %vm90, %v89
    %s95 = scalar_lea.vmem [#allocation1], 8
    %v96 = vld [vmem:[%s95] sm:$0xff]
    %97 = vrot.lane.b32.xlu0 %v96, 112
    %v98 = vpop.permute.xlu0 %97
    %vm99 = vcmask 130048
    %s100 = scalar_lea.vmem [#allocation0], 65
    %101 = vst.msk [vmem:[%s100] ss:$8 sm:$0xf] %vm99, %v98
    %s102 = scalar_lea.vmem [#allocation0], 65
    %103 = vst.msk [vmem:[%s102] ss:$8 sm:$0xf0] %vm99, %v98
    %s104 = scalar_lea.vmem [#allocation1], 16
    %v105 = vld [vmem:[%s104] sm:$0xff]
    %106 = vrot.lane.b32.xlu0 %v105, 112
    %v107 = vpop.permute.xlu0 %106
    %vm108 = vcmask 130048
    %s109 = scalar_lea.vmem [#allocation0], 129
    %110 = vst.msk [vmem:[%s109] ss:$8 sm:$0xf] %vm108, %v107
    %s111 = scalar_lea.vmem [#allocation0], 129
    %112 = vst.msk [vmem:[%s111] ss:$8 sm:$0xf0] %vm108, %v107
    %s113 = scalar_lea.vmem [#allocation1], 24
    %v114 = vld [vmem:[%s113] sm:$0xff]
    %115 = vrot.lane.b32.xlu0 %v114, 112
    %v116 = vpop.permute.xlu0 %115
    %vm117 = vcmask 130048
    %s118 = scalar_lea.vmem [#allocation0], 193
    %119 = vst.msk [vmem:[%s118] ss:$8 sm:$0xf] %vm117, %v116
    %s120 = scalar_lea.vmem [#allocation0], 193
    %121 = vst.msk [vmem:[%s120] ss:$8 sm:$0xf0] %vm117, %v116
    %v122 = vld [vmem:[#allocation1] sm:$0xff]
    %123 = vrot.lane.b32.xlu0 %v122, 96
    %v124 = vpop.permute.xlu0 %123
    %vm125 = vcmask 130048
    %s126 = scalar_lea.vmem [#allocation0], 2
    %127 = vst.msk [vmem:[%s126] ss:$8 sm:$0xf] %vm125, %v124
    %s128 = scalar_lea.vmem [#allocation0], 2
    %129 = vst.msk [vmem:[%s128] ss:$8 sm:$0xf0] %vm125, %v124
    %s130 = scalar_lea.vmem [#allocation1], 8
    %v131 = vld [vmem:[%s130] sm:$0xff]
    %132 = vrot.lane.b32.xlu0 %v131, 96
    %v133 = vpop.permute.xlu0 %132
    %vm134 = vcmask 130048
    %s135 = scalar_lea.vmem [#allocation0], 66
    %136 = vst.msk [vmem:[%s135] ss:$8 sm:$0xf] %vm134, %v133
    %s137 = scalar_lea.vmem [#allocation0], 66
    %138 = vst.msk [vmem:[%s137] ss:$8 sm:$0xf0] %vm134, %v133
    %s139 = scalar_lea.vmem [#allocation1], 16
    %v140 = vld [vmem:[%s139] sm:$0xff]
    %141 = vrot.lane.b32.xlu0 %v140, 96
    %v142 = vpop.permute.xlu0 %141
    %vm143 = vcmask 130048
    %s144 = scalar_lea.vmem [#allocation0], 130
    %145 = vst.msk [vmem:[%s144] ss:$8 sm:$0xf] %vm143, %v142
    %s146 = scalar_lea.vmem [#allocation0], 130
    %147 = vst.msk [vmem:[%s146] ss:$8 sm:$0xf0] %vm143, %v142
    %s148 = scalar_lea.vmem [#allocation1], 24
    %v149 = vld [vmem:[%s148] sm:$0xff]
    %150 = vrot.lane.b32.xlu0 %v149, 96
    %v151 = vpop.permute.xlu0 %150
    %vm152 = vcmask 130048
    %s153 = scalar_lea.vmem [#allocation0], 194
    %154 = vst.msk [vmem:[%s153] ss:$8 sm:$0xf] %vm152, %v151
    %s155 = scalar_lea.vmem [#allocation0], 194
    %156 = vst.msk [vmem:[%s155] ss:$8 sm:$0xf0] %vm152, %v151
    %v157 = vld [vmem:[#allocation1] sm:$0xff]
    %158 = vrot.lane.b32.xlu0 %v157, 80
    %v159 = vpop.permute.xlu0 %158
    %vm160 = vcmask 130048
    %s161 = scalar_lea.vmem [#allocation0], 3
    %162 = vst.msk [vmem:[%s161] ss:$8 sm:$0xf] %vm160, %v159
    %s163 = scalar_lea.vmem [#allocation0], 3
    %164 = vst.msk [vmem:[%s163] ss:$8 sm:$0xf0] %vm160, %v159
    %s165 = scalar_lea.vmem [#allocation1], 8
    %v166 = vld [vmem:[%s165] sm:$0xff]
    %167 = vrot.lane.b32.xlu0 %v166, 80
    %v168 = vpop.permute.xlu0 %167
    %vm169 = vcmask 130048
    %s170 = scalar_lea.vmem [#allocation0], 67
    %171 = vst.msk [vmem:[%s170] ss:$8 sm:$0xf] %vm169, %v168
    %s172 = scalar_lea.vmem [#allocation0], 67
    %173 = vst.msk [vmem:[%s172] ss:$8 sm:$0xf0] %vm169, %v168
    %s174 = scalar_lea.vmem [#allocation1], 16
    %v175 = vld [vmem:[%s174] sm:$0xff]
    %176 = vrot.lane.b32.xlu0 %v175, 80
    %v177 = vpop.permute.xlu0 %176
    %vm178 = vcmask 130048
    %s179 = scalar_lea.vmem [#allocation0], 131
    %180 = vst.msk [vmem:[%s179] ss:$8 sm:$0xf] %vm178, %v177
    %s181 = scalar_lea.vmem [#allocation0], 131
    %182 = vst.msk [vmem:[%s181] ss:$8 sm:$0xf0] %vm178, %v177
    %s183 = scalar_lea.vmem [#allocation1], 24
    %v184 = vld [vmem:[%s183] sm:$0xff]
    %185 = vrot.lane.b32.xlu0 %v184, 80
    %v186 = vpop.permute.xlu0 %185
    %vm187 = vcmask 130048
    %s188 = scalar_lea.vmem [#allocation0], 195
    %189 = vst.msk [vmem:[%s188] ss:$8 sm:$0xf] %vm187, %v186
    %s190 = scalar_lea.vmem [#allocation0], 195
    %191 = vst.msk [vmem:[%s190] ss:$8 sm:$0xf0] %vm187, %v186
    %v192 = vld [vmem:[#allocation1] sm:$0xff]
    %193 = vrot.lane.b32.xlu0 %v192, 64
    %v194 = vpop.permute.xlu0 %193
    %vm195 = vcmask 130048
    %s196 = scalar_lea.vmem [#allocation0], 4
    %197 = vst.msk [vmem:[%s196] ss:$8 sm:$0xf] %vm195, %v194
    %s198 = scalar_lea.vmem [#allocation0], 4
    %199 = vst.msk [vmem:[%s198] ss:$8 sm:$0xf0] %vm195, %v194
    %s200 = scalar_lea.vmem [#allocation1], 8
    %v201 = vld [vmem:[%s200] sm:$0xff]
    %202 = vrot.lane.b32.xlu0 %v201, 64
    %v203 = vpop.permute.xlu0 %202
    %vm204 = vcmask 130048
    %s205 = scalar_lea.vmem [#allocation0], 68
    %206 = vst.msk [vmem:[%s205] ss:$8 sm:$0xf] %vm204, %v203
    %s207 = scalar_lea.vmem [#allocation0], 68
    %208 = vst.msk [vmem:[%s207] ss:$8 sm:$0xf0] %vm204, %v203
    %s209 = scalar_lea.vmem [#allocation1], 16
    %v210 = vld [vmem:[%s209] sm:$0xff]
    %211 = vrot.lane.b32.xlu0 %v210, 64
    %v212 = vpop.permute.xlu0 %211
    %vm213 = vcmask 130048
    %s214 = scalar_lea.vmem [#allocation0], 132
    %215 = vst.msk [vmem:[%s214] ss:$8 sm:$0xf] %vm213, %v212
    %s216 = scalar_lea.vmem [#allocation0], 132
    %217 = vst.msk [vmem:[%s216] ss:$8 sm:$0xf0] %vm213, %v212
    %s218 = scalar_lea.vmem [#allocation1], 24
    %v219 = vld [vmem:[%s218] sm:$0xff]
    %220 = vrot.lane.b32.xlu0 %v219, 64
    %v221 = vpop.permute.xlu0 %220
    %vm222 = vcmask 130048
    %s223 = scalar_lea.vmem [#allocation0], 196
    %224 = vst.msk [vmem:[%s223] ss:$8 sm:$0xf] %vm222, %v221
    %s225 = scalar_lea.vmem [#allocation0], 196
    %226 = vst.msk [vmem:[%s225] ss:$8 sm:$0xf0] %vm222, %v221
    %v227 = vld [vmem:[#allocation1] sm:$0xff]
    %228 = vrot.lane.b32.xlu0 %v227, 48
    %v229 = vpop.permute.xlu0 %228
    %vm230 = vcmask 130048
    %s231 = scalar_lea.vmem [#allocation0], 5
    %232 = vst.msk [vmem:[%s231] ss:$8 sm:$0xf] %vm230, %v229
    %s233 = scalar_lea.vmem [#allocation0], 5
    %234 = vst.msk [vmem:[%s233] ss:$8 sm:$0xf0] %vm230, %v229
    %s235 = scalar_lea.vmem [#allocation1], 8
    %v236 = vld [vmem:[%s235] sm:$0xff]
    %237 = vrot.lane.b32.xlu0 %v236, 48
    %v238 = vpop.permute.xlu0 %237
    %vm239 = vcmask 130048
    %s240 = scalar_lea.vmem [#allocation0], 69
    %241 = vst.msk [vmem:[%s240] ss:$8 sm:$0xf] %vm239, %v238
    %s242 = scalar_lea.vmem [#allocation0], 69
    %243 = vst.msk [vmem:[%s242] ss:$8 sm:$0xf0] %vm239, %v238
    %s244 = scalar_lea.vmem [#allocation1], 16
    %v245 = vld [vmem:[%s244] sm:$0xff]
    %246 = vrot.lane.b32.xlu0 %v245, 48
    %v247 = vpop.permute.xlu0 %246
    %vm248 = vcmask 130048
    %s249 = scalar_lea.vmem [#allocation0], 133
    %250 = vst.msk [vmem:[%s249] ss:$8 sm:$0xf] %vm248, %v247
    %s251 = scalar_lea.vmem [#allocation0], 133
    %252 = vst.msk [vmem:[%s251] ss:$8 sm:$0xf0] %vm248, %v247
    %s253 = scalar_lea.vmem [#allocation1], 24
    %v254 = vld [vmem:[%s253] sm:$0xff]
    %255 = vrot.lane.b32.xlu0 %v254, 48
    %v256 = vpop.permute.xlu0 %255
    %vm257 = vcmask 130048
    %s258 = scalar_lea.vmem [#allocation0], 197
    %259 = vst.msk [vmem:[%s258] ss:$8 sm:$0xf] %vm257, %v256
    %s260 = scalar_lea.vmem [#allocation0], 197
    %261 = vst.msk [vmem:[%s260] ss:$8 sm:$0xf0] %vm257, %v256
    %v262 = vld [vmem:[#allocation1] sm:$0xff]
    %263 = vrot.lane.b32.xlu0 %v262, 32
    %v264 = vpop.permute.xlu0 %263
    %vm265 = vcmask 130048
    %s266 = scalar_lea.vmem [#allocation0], 6
    %267 = vst.msk [vmem:[%s266] ss:$8 sm:$0xf] %vm265, %v264
    %s268 = scalar_lea.vmem [#allocation0], 6
    %269 = vst.msk [vmem:[%s268] ss:$8 sm:$0xf0] %vm265, %v264
    %s270 = scalar_lea.vmem [#allocation1], 8
    %v271 = vld [vmem:[%s270] sm:$0xff]
    %272 = vrot.lane.b32.xlu0 %v271, 32
    %v273 = vpop.permute.xlu0 %272
    %vm274 = vcmask 130048
    %s275 = scalar_lea.vmem [#allocation0], 70
    %276 = vst.msk [vmem:[%s275] ss:$8 sm:$0xf] %vm274, %v273
    %s277 = scalar_lea.vmem [#allocation0], 70
    %278 = vst.msk [vmem:[%s277] ss:$8 sm:$0xf0] %vm274, %v273
    %s279 = scalar_lea.vmem [#allocation1], 16
    %v280 = vld [vmem:[%s279] sm:$0xff]
    %281 = vrot.lane.b32.xlu0 %v280, 32
    %v282 = vpop.permute.xlu0 %281
    %vm283 = vcmask 130048
    %s284 = scalar_lea.vmem [#allocation0], 134
    %285 = vst.msk [vmem:[%s284] ss:$8 sm:$0xf] %vm283, %v282
    %s286 = scalar_lea.vmem [#allocation0], 134
    %287 = vst.msk [vmem:[%s286] ss:$8 sm:$0xf0] %vm283, %v282
    %s288 = scalar_lea.vmem [#allocation1], 24
    %v289 = vld [vmem:[%s288] sm:$0xff]
    %290 = vrot.lane.b32.xlu0 %v289, 32
    %v291 = vpop.permute.xlu0 %290
    %vm292 = vcmask 130048
    %s293 = scalar_lea.vmem [#allocation0], 198
    %294 = vst.msk [vmem:[%s293] ss:$8 sm:$0xf] %vm292, %v291
    %s295 = scalar_lea.vmem [#allocation0], 198
    %296 = vst.msk [vmem:[%s295] ss:$8 sm:$0xf0] %vm292, %v291
    %v297 = vld [vmem:[#allocation1] sm:$0xff]
    %298 = vrot.lane.b32.xlu0 %v297, 16
    %v299 = vpop.permute.xlu0 %298
    %vm300 = vcmask 130048
    %s301 = scalar_lea.vmem [#allocation0], 7
    %302 = vst.msk [vmem:[%s301] ss:$8 sm:$0xf] %vm300, %v299
    %s303 = scalar_lea.vmem [#allocation0], 7
    %304 = vst.msk [vmem:[%s303] ss:$8 sm:$0xf0] %vm300, %v299
    %s305 = scalar_lea.vmem [#allocation1], 8
    %v306 = vld [vmem:[%s305] sm:$0xff]
    %307 = vrot.lane.b32.xlu0 %v306, 16
    %v308 = vpop.permute.xlu0 %307
    %vm309 = vcmask 130048
    %s310 = scalar_lea.vmem [#allocation0], 71
    %311 = vst.msk [vmem:[%s310] ss:$8 sm:$0xf] %vm309, %v308
    %s312 = scalar_lea.vmem [#allocation0], 71
    %313 = vst.msk [vmem:[%s312] ss:$8 sm:$0xf0] %vm309, %v308
    %s314 = scalar_lea.vmem [#allocation1], 16
    %v315 = vld [vmem:[%s314] sm:$0xff]
    %316 = vrot.lane.b32.xlu0 %v315, 16
    %v317 = vpop.permute.xlu0 %316
    %vm318 = vcmask 130048
    %s319 = scalar_lea.vmem [#allocation0], 135
    %320 = vst.msk [vmem:[%s319] ss:$8 sm:$0xf] %vm318, %v317
    %s321 = scalar_lea.vmem [#allocation0], 135
    %322 = vst.msk [vmem:[%s321] ss:$8 sm:$0xf0] %vm318, %v317
    %s323 = scalar_lea.vmem [#allocation1], 24
    %v324 = vld [vmem:[%s323] sm:$0xff]
    %325 = vrot.lane.b32.xlu0 %v324, 16
    %v326 = vpop.permute.xlu0 %325
    %vm327 = vcmask 130048
    %s328 = scalar_lea.vmem [#allocation0], 199
    %329 = vst.msk [vmem:[%s328] ss:$8 sm:$0xf] %vm327, %v326
    %s330 = scalar_lea.vmem [#allocation0], 199
    %331 = vst.msk [vmem:[%s330] ss:$8 sm:$0xf0] %vm327, %v326
    %s333 = ssub.s32 256, 1
    %v334 = vld [vmem:[#allocation0] sm:%s333]
    %v335 = vpack.c.bf16 0.0, %v334
    %s337 = ssub.s32 16, 1
    %338 = vst [vmem:[%s1] sm:%s337] %v335
    %s339 = scalar_lea.vmem [#allocation0], 8
    %v340 = vld [vmem:[%s339] sm:%s333]
    %v341 = vpack.c.bf16 0.0, %v340
    %s343 = ssub.s32 16, 1
    %s344 = scalar_lea.vmem %s1, 4
    %345 = vst [vmem:[%s344] sm:%s343] %v341
    %s346 = scalar_lea.vmem [#allocation0], 16
    %v347 = vld [vmem:[%s346] sm:%s333]
    %v348 = vpack.c.bf16 0.0, %v347
    %s350 = ssub.s32 16, 1
    %s351 = scalar_lea.vmem %s1, 8
    %352 = vst [vmem:[%s351] sm:%s350] %v348
    %s353 = scalar_lea.vmem [#allocation0], 24
    %v354 = vld [vmem:[%s353] sm:%s333]
    %v355 = vpack.c.bf16 0.0, %v354
    %s357 = ssub.s32 16, 1
    %s358 = scalar_lea.vmem %s1, 12
    %359 = vst [vmem:[%s358] sm:%s357] %v355
    %s360 = scalar_lea.vmem [#allocation0], 32
    %v361 = vld [vmem:[%s360] sm:%s333]
    %v362 = vpack.c.bf16 0.0, %v361
    %s364 = ssub.s32 16, 1
    %s365 = scalar_lea.vmem %s1, 16
    %366 = vst [vmem:[%s365] sm:%s364] %v362
    %s367 = scalar_lea.vmem [#allocation0], 40
    %v368 = vld [vmem:[%s367] sm:%s333]
    %v369 = vpack.c.bf16 0.0, %v368
    %s371 = ssub.s32 16, 1
    %s372 = scalar_lea.vmem %s1, 20
    %373 = vst [vmem:[%s372] sm:%s371] %v369
    %s374 = scalar_lea.vmem [#allocation0], 48
    %v375 = vld [vmem:[%s374] sm:%s333]
    %v376 = vpack.c.bf16 0.0, %v375
    %s378 = ssub.s32 16, 1
    %s379 = scalar_lea.vmem %s1, 24
    %380 = vst [vmem:[%s379] sm:%s378] %v376
    %s381 = scalar_lea.vmem [#allocation0], 56
    %v382 = vld [vmem:[%s381] sm:%s333]
    %v383 = vpack.c.bf16 0.0, %v382
    %s385 = ssub.s32 16, 1
    %s386 = scalar_lea.vmem %s1, 28
    %387 = vst [vmem:[%s386] sm:%s385] %v383
    %s388 = scalar_lea.vmem [#allocation0], 64
    %v389 = vld [vmem:[%s388] sm:%s333]
    %v390 = vpack.c.bf16 0.0, %v389
    %s392 = ssub.s32 16, 1
    %s393 = scalar_lea.vmem %s1, 32
    %394 = vst [vmem:[%s393] sm:%s392] %v390
    %s395 = scalar_lea.vmem [#allocation0], 72
    %v396 = vld [vmem:[%s395] sm:%s333]
    %v397 = vpack.c.bf16 0.0, %v396
    %s399 = ssub.s32 16, 1
    %s400 = scalar_lea.vmem %s1, 36
    %401 = vst [vmem:[%s400] sm:%s399] %v397
    %s402 = scalar_lea.vmem [#allocation0], 80
    %v403 = vld [vmem:[%s402] sm:%s333]
    %v404 = vpack.c.bf16 0.0, %v403
    %s406 = ssub.s32 16, 1
    %s407 = scalar_lea.vmem %s1, 40
    %408 = vst [vmem:[%s407] sm:%s406] %v404
    %s409 = scalar_lea.vmem [#allocation0], 88
    %v410 = vld [vmem:[%s409] sm:%s333]
    %v411 = vpack.c.bf16 0.0, %v410
    %s413 = ssub.s32 16, 1
    %s414 = scalar_lea.vmem %s1, 44
    %415 = vst [vmem:[%s414] sm:%s413] %v411
    %s416 = scalar_lea.vmem [#allocation0], 96
    %v417 = vld [vmem:[%s416] sm:%s333]
    %v418 = vpack.c.bf16 0.0, %v417
    %s420 = ssub.s32 16, 1
    %s421 = scalar_lea.vmem %s1, 48
    %422 = vst [vmem:[%s421] sm:%s420] %v418
    %s423 = scalar_lea.vmem [#allocation0], 104
    %v424 = vld [vmem:[%s423] sm:%s333]
    %v425 = vpack.c.bf16 0.0, %v424
    %s427 = ssub.s32 16, 1
    %s428 = scalar_lea.vmem %s1, 52
    %429 = vst [vmem:[%s428] sm:%s427] %v425
    %s430 = scalar_lea.vmem [#allocation0], 112
    %v431 = vld [vmem:[%s430] sm:%s333]
    %v432 = vpack.c.bf16 0.0, %v431
    %s434 = ssub.s32 16, 1
    %s435 = scalar_lea.vmem %s1, 56
    %436 = vst [vmem:[%s435] sm:%s434] %v432
    %s437 = scalar_lea.vmem [#allocation0], 120
    %v438 = vld [vmem:[%s437] sm:%s333]
    %v439 = vpack.c.bf16 0.0, %v438
    %s441 = ssub.s32 16, 1
    %s442 = scalar_lea.vmem %s1, 60
    %443 = vst [vmem:[%s442] sm:%s441] %v439
    %s444 = scalar_lea.vmem [#allocation0], 128
    %v445 = vld [vmem:[%s444] sm:%s333]
    %v446 = vpack.c.bf16 0.0, %v445
    %s448 = ssub.s32 16, 1
    %s449 = scalar_lea.vmem %s1, 64
    %450 = vst [vmem:[%s449] sm:%s448] %v446
    %s451 = scalar_lea.vmem [#allocation0], 136
    %v452 = vld [vmem:[%s451] sm:%s333]
    %v453 = vpack.c.bf16 0.0, %v452
    %s455 = ssub.s32 16, 1
    %s456 = scalar_lea.vmem %s1, 68
    %457 = vst [vmem:[%s456] sm:%s455] %v453
    %s458 = scalar_lea.vmem [#allocation0], 144
    %v459 = vld [vmem:[%s458] sm:%s333]
    %v460 = vpack.c.bf16 0.0, %v459
    %s462 = ssub.s32 16, 1
    %s463 = scalar_lea.vmem %s1, 72
    %464 = vst [vmem:[%s463] sm:%s462] %v460
    %s465 = scalar_lea.vmem [#allocation0], 152
    %v466 = vld [vmem:[%s465] sm:%s333]
    %v467 = vpack.c.bf16 0.0, %v466
    %s469 = ssub.s32 16, 1
    %s470 = scalar_lea.vmem %s1, 76
    %471 = vst [vmem:[%s470] sm:%s469] %v467
    %s472 = scalar_lea.vmem [#allocation0], 160
    %v473 = vld [vmem:[%s472] sm:%s333]
    %v474 = vpack.c.bf16 0.0, %v473
    %s476 = ssub.s32 16, 1
    %s477 = scalar_lea.vmem %s1, 80
    %478 = vst [vmem:[%s477] sm:%s476] %v474
    %s479 = scalar_lea.vmem [#allocation0], 168
    %v480 = vld [vmem:[%s479] sm:%s333]
    %v481 = vpack.c.bf16 0.0, %v480
    %s483 = ssub.s32 16, 1
    %s484 = scalar_lea.vmem %s1, 84
    %485 = vst [vmem:[%s484] sm:%s483] %v481
    %s486 = scalar_lea.vmem [#allocation0], 176
    %v487 = vld [vmem:[%s486] sm:%s333]
    %v488 = vpack.c.bf16 0.0, %v487
    %s490 = ssub.s32 16, 1
    %s491 = scalar_lea.vmem %s1, 88
    %492 = vst [vmem:[%s491] sm:%s490] %v488
    %s493 = scalar_lea.vmem [#allocation0], 184
    %v494 = vld [vmem:[%s493] sm:%s333]
    %v495 = vpack.c.bf16 0.0, %v494
    %s497 = ssub.s32 16, 1
    %s498 = scalar_lea.vmem %s1, 92
    %499 = vst [vmem:[%s498] sm:%s497] %v495
    %s500 = scalar_lea.vmem [#allocation0], 192
    %v501 = vld [vmem:[%s500] sm:%s333]
    %v502 = vpack.c.bf16 0.0, %v501
    %s504 = ssub.s32 16, 1
    %s505 = scalar_lea.vmem %s1, 96
    %506 = vst [vmem:[%s505] sm:%s504] %v502
    %s507 = scalar_lea.vmem [#allocation0], 200
    %v508 = vld [vmem:[%s507] sm:%s333]
    %v509 = vpack.c.bf16 0.0, %v508
    %s511 = ssub.s32 16, 1
    %s512 = scalar_lea.vmem %s1, 100
    %513 = vst [vmem:[%s512] sm:%s511] %v509
    %s514 = scalar_lea.vmem [#allocation0], 208
    %v515 = vld [vmem:[%s514] sm:%s333]
    %v516 = vpack.c.bf16 0.0, %v515
    %s518 = ssub.s32 16, 1
    %s519 = scalar_lea.vmem %s1, 104
    %520 = vst [vmem:[%s519] sm:%s518] %v516
    %s521 = scalar_lea.vmem [#allocation0], 216
    %v522 = vld [vmem:[%s521] sm:%s333]
    %v523 = vpack.c.bf16 0.0, %v522
    %s525 = ssub.s32 16, 1
    %s526 = scalar_lea.vmem %s1, 108
    %527 = vst [vmem:[%s526] sm:%s525] %v523
    %s528 = scalar_lea.vmem [#allocation0], 224
    %v529 = vld [vmem:[%s528] sm:%s333]
    %v530 = vpack.c.bf16 0.0, %v529
    %s532 = ssub.s32 16, 1
    %s533 = scalar_lea.vmem %s1, 112
    %534 = vst [vmem:[%s533] sm:%s532] %v530
    %s535 = scalar_lea.vmem [#allocation0], 232
    %v536 = vld [vmem:[%s535] sm:%s333]
    %v537 = vpack.c.bf16 0.0, %v536
    %s539 = ssub.s32 16, 1
    %s540 = scalar_lea.vmem %s1, 116
    %541 = vst [vmem:[%s540] sm:%s539] %v537
    %s542 = scalar_lea.vmem [#allocation0], 240
    %v543 = vld [vmem:[%s542] sm:%s333]
    %v544 = vpack.c.bf16 0.0, %v543
    %s546 = ssub.s32 16, 1
    %s547 = scalar_lea.vmem %s1, 120
    %548 = vst [vmem:[%s547] sm:%s546] %v544
    %s549 = scalar_lea.vmem [#allocation0], 248
    %v550 = vld [vmem:[%s549] sm:%s333]
    %v551 = vpack.c.bf16 0.0, %v550
    %s553 = ssub.s32 16, 1
    %s554 = scalar_lea.vmem %s1, 124
    %555 = vst [vmem:[%s554] sm:%s553] %v551

// kernel: tile.113
$region0: #{tile.113}
  #allocation0 [shape = 's32[1]{0}', space=sflag, size = 0x4, scoped, tag = 'scoped memory for tile.113']
  %s0 = inlined_call_operand.vmem [shape: f32[16], index: 0, kind: input, shape index: {}]
  %s1 = inlined_call_operand.vmem [shape: f32[8,16], index: 1, kind: output, shape index: {}]
  // Predicated region
  $region2: #{tile.113} parent=0 // pred_check
    _
  $region3: #{tile.113} parent=0 // pred_check_branch
    %3 = sbr.rel (0) target = $region5
  $region4: #{tile.113} parent=0 // pred_region
    _
  $region5: #{tile.113} parent=0 // pred_fallthru
    _
  %v4 = vld [vmem:[%s0] ss:$0 sm:$0xff]
  %5 = vst [vmem:[%s1] sm:$0xff] %v4

// kernel: tile.114
$region0: #{tile.114}
  %s0 = inlined_call_operand.vmem [shape: f32[8,16], index: 0, kind: input, shape index: {}]
  %s1 = inlined_call_operand.vmem [shape: f32[1,128], index: 1, kind: output, shape index: {}]
  $region1: #{tile.114} parent=0
    #allocation0 [shape = 'u8[4096]{0}', space=vmem, size = 0x1000, scoped, tag = 'scoped mem for output reshape']
    %v2 = vld [vmem:[%s0] sm:$0x1]
    %vm3 = vcmask 130048
    %4 = vst.msk [vmem:[#allocation0] sm:$0x1] %vm3, %v2
    %s5 = scalar_lea.vmem %s0, 7
    %v6 = vld [vmem:[%s5] sm:$0x1]
    %7 = vrot.lane.b32.xlu0 %v6, 112
    %v8 = vpop.permute.xlu0 %7
    %vm9 = vcmask 1048448
    %10 = vst.msk [vmem:[#allocation0] sm:$0x1] %vm9, %v8
    %s11 = scalar_lea.vmem %s0, 6
    %v12 = vld [vmem:[%s11] sm:$0x1]
    %13 = vrot.lane.b32.xlu0 %v12, 96
    %v14 = vpop.permute.xlu0 %13
    %vm15 = vcmask 917248
    %16 = vst.msk [vmem:[#allocation0] sm:$0x1] %vm15, %v14
    %s17 = scalar_lea.vmem %s0, 5
    %v18 = vld [vmem:[%s17] sm:$0x1]
    %19 = vrot.lane.b32.xlu0 %v18, 80
    %v20 = vpop.permute.xlu0 %19
    %vm21 = vcmask 786048
    %22 = vst.msk [vmem:[#allocation0] sm:$0x1] %vm21, %v20
    %s23 = scalar_lea.vmem %s0, 4
    %v24 = vld [vmem:[%s23] sm:$0x1]
    %25 = vrot.lane.b32.xlu0 %v24, 64
    %v26 = vpop.permute.xlu0 %25
    %vm27 = vcmask 654848
    %28 = vst.msk [vmem:[#allocation0] sm:$0x1] %vm27, %v26
    %s29 = scalar_lea.vmem %s0, 3
    %v30 = vld [vmem:[%s29] sm:$0x1]
    %31 = vrot.lane.b32.xlu0 %v30, 48
    %v32 = vpop.permute.xlu0 %31
    %vm33 = vcmask 523648
    %34 = vst.msk [vmem:[#allocation0] sm:$0x1] %vm33, %v32
    %s35 = scalar_lea.vmem %s0, 2
    %v36 = vld [vmem:[%s35] sm:$0x1]
    %37 = vrot.lane.b32.xlu0 %v36, 32
    %v38 = vpop.permute.xlu0 %37
    %vm39 = vcmask 392448
    %40 = vst.msk [vmem:[#allocation0] sm:$0x1] %vm39, %v38
    %s41 = scalar_lea.vmem %s0, 1
    %v42 = vld [vmem:[%s41] sm:$0x1]
    %43 = vrot.lane.b32.xlu0 %v42, 16
    %v44 = vpop.permute.xlu0 %43
    %vm45 = vcmask 261248
    %46 = vst.msk [vmem:[#allocation0] sm:$0x1] %vm45, %v44
    %s48 = ssub.s32 2, 1
    %v49 = vld [vmem:[#allocation0] sm:%s48]
    %s51 = ssub.s32 2, 1
    %52 = vst [vmem:[%s1] sm:%s51] %v49

// kernel: physnet_forward.12
$region0: #{physnet_forward.12}
  #allocation0 [shape = 'u32[]', space=smem, size = 0x4, offset = 0x4, fixed_abs, tag = 'smem constant byte address 0x4 - core index']
  #allocation1 [shape = 'u32[72,128]{1,0:T(1,128)}', space=vmem, size = 0x9000, scoped, tag = 'internal scratch']
  %s0 = inlined_call_operand.vmem [shape: bf16[3,32,128], index: 0, kind: input, shape index: {}]
  %s1 = inlined_call_operand.vmem [shape: bf16[32,128], index: 1, kind: output, shape index: {}]
  %s2 = sld [smem:[#allocation0]]
  $region78: #{physnet_forward.12} parent=0
    _
  %s4 = ssub.s32 1, %s2
  %s5 = scalar_select 0, %s4, %s2
  $region1: #{physnet_forward.12} parent=0
    #allocation2 [shape = 'u8[24576]{0}', space=vmem, size = 0x6000, scoped, tag = 'input window, operand 0']
    loop: start=0, step=1, limit=4
    $region2: #{physnet_forward.12} parent=1 // loop_pre_header
      _
    $region3: #{physnet_forward.12} parent=1 // loop_header
      %s7 = sphi 0, %s11
      %p8 = scmp.ge.s32.totalorder %s7, 4
      %s17 = sphi 0, %s19
      %s20 = sphi 0, %s17
      %s21 = sphi 0, %s20
      %s37 = sphi 0, %s21
      %s43 = sphi 0, %s45
      %s46 = sphi 0, %s43
      %s47 = sphi 0, %s46
      %s63 = sphi 0, %s47
    $region4: #{physnet_forward.12} parent=1 // loop_header_branch
      %10 = sbr.rel (%p8) target = $region8
    $region5: #{physnet_forward.12} parent=1 // loop_body
      %s12 = ssub.s32 %s7, 1
      %s13 = ssub.s32 %s7, 2
      %s14 = sadd.s32 %s7, 1
      %s15 = ssub.s32 %s7, %s14
      %p16 = scmp.eq.s32.totalorder %s15, 0
      %s18 = sadd.s32 %s17, 1
      %s19 = scalar_select %p16, %s17, %s18
      %p22 = pneg %p16
      %p23 = scmp.eq.s32.totalorder %s7, 1
      %p24 = por %p22, %p23
      %p25 = scmp.ne.s32.totalorder %s17, %s20
      %p26 = scmp.eq.s32.totalorder %s7, 0
      %p27 = por %p25, %p26
      %p28 = scmp.ne.s32.totalorder %s17, %s20
      %p29 = scmp.eq.s32.totalorder %s12, 1
      %p30 = por %p28, %p29
      %p31 = scmp.ne.s32.totalorder %s20, %s21
      %p32 = scmp.eq.s32.totalorder %s12, 0
      %p33 = por %p31, %p32
      %p34 = scmp.ne.s32.totalorder %s20, %s21
      %p35 = scmp.eq.s32.totalorder %s13, 1
      %p36 = por %p34, %p35
      %p38 = scmp.ne.s32.totalorder %s21, %s37
      %p39 = scmp.eq.s32.totalorder %s13, 0
      %p40 = por %p38, %p39
      %s41 = ssub.s32 %s7, %s14
      %p42 = scmp.eq.s32.totalorder %s41, 0
      %s44 = sadd.s32 %s43, 1
      %s45 = scalar_select %p42, %s43, %s44
      %p48 = pneg %p42
      %p49 = scmp.eq.s32.totalorder %s7, 1
      %p50 = por %p48, %p49
      %p51 = scmp.ne.s32.totalorder %s43, %s46
      %p52 = scmp.eq.s32.totalorder %s7, 0
      %p53 = por %p51, %p52
      %p54 = scmp.ne.s32.totalorder %s43, %s46
      %p55 = scmp.eq.s32.totalorder %s12, 1
      %p56 = por %p54, %p55
      %p57 = scmp.ne.s32.totalorder %s46, %s47
      %p58 = scmp.eq.s32.totalorder %s12, 0
      %p59 = por %p57, %p58
      %p60 = scmp.ne.s32.totalorder %s46, %s47
      %p61 = scmp.eq.s32.totalorder %s13, 1
      %p62 = por %p60, %p61
      %p64 = scmp.ne.s32.totalorder %s47, %s63
      %p65 = scmp.eq.s32.totalorder %s13, 0
      %p66 = por %p64, %p65
      %p67 = scmp.le.s32.totalorder 1, %s7
      %p68 = scmp.lt.s32.totalorder %s7, 3
      %p69 = pnand %p67, %p68
      %p70 = pneg %p69
      // Predicated region
      $region9: #{physnet_forward.12} parent=5 // pred_check
        _
      $region10: #{physnet_forward.12} parent=5 // pred_check_branch
        %72 = sbr.rel (%p69) target = $region12
      $region11: #{physnet_forward.12} parent=5 // pred_region
        %s73 = ssub.s32 %s7, 1
      $region12: #{physnet_forward.12} parent=5 // pred_fallthru
        _
      %p74 = scmp.lt.s32.totalorder %s7, 2
      // Predicated region
      $region13: #{physnet_forward.12} parent=5 // pred_check
        %p75 = pneg %p74
      $region14: #{physnet_forward.12} parent=5 // pred_check_branch
        %77 = sbr.rel (%p75) target = $region16
      $region15: #{physnet_forward.12} parent=5 // pred_region
        // Predicated region
        $region17: #{physnet_forward.12} parent=15 // pred_check
          %p78 = pneg %p27
        $region18: #{physnet_forward.12} parent=15 // pred_check_branch
          %80 = sbr.rel (%p78) target = $region20
        $region19: #{physnet_forward.12} parent=15 // pred_region
          %s81 = sand.u32 %s17, 1
          %s82 = sand.u32 %s17, 1
          %s83 = smul.addr %s82, 24
          %s84 = scalar_lea.vmem [#allocation2], %s83
          %s85 = smul.u32 2, %s7
          %s86 = smul.addr %s85, 4
          %s87 = scalar_lea.vmem %s0, %s86
          // Predicated region
          $region21: #{physnet_forward.12} parent=19 // pred_check
            _
          $region22: #{physnet_forward.12} parent=19 // pred_check_branch
            %89 = sbr.rel (0) target = $region24
          $region23: #{physnet_forward.12} parent=19 // pred_region
            // Predicated region
            $region25: #{physnet_forward.12} parent=23 // pred_check
              _
            $region26: #{physnet_forward.12} parent=23 // pred_check_branch
              %91 = sbr.rel target = $region28
            $region27: #{physnet_forward.12} parent=23 // pred_region
              // Predicated region
              $region40: #{physnet_forward.12} parent=27 // pred_check
                _
              $region41: #{physnet_forward.12} parent=27 // pred_check_branch
                %117 = sbr.rel (0) target = $region43
              $region42: #{physnet_forward.12} parent=27 // pred_region
                loop: start=0, step=1, limit=1
                $region44: #{physnet_forward.12} parent=42 // loop_pre_header
                  _
                $region45: #{physnet_forward.12} parent=42 // loop_header
                  %s119 = sphi 0, %s123
                  %p120 = scmp.ge.s32.totalorder %s119, 1
                  %s124 = sphi %s87, %s87
                  %s125 = sphi %s84, %s84
                $region46: #{physnet_forward.12} parent=42 // loop_header_branch
                  %122 = sbr.rel (%p120) target = $region50
                $region47: #{physnet_forward.12} parent=42 // loop_body
                  _
                $region48: #{physnet_forward.12} parent=42 // loop_footer
                  %s123 = sadd.s32 1, %s119
                $region49: #{physnet_forward.12} parent=42 // loop_footer_branch
                  %118 = sbr.rel target = $region45
                $region50: #{physnet_forward.12} parent=42 // loop_exit
                  _
                %s127 = ssub.s32 16, 1
                loop: start=0, step=1, limit=1
                $region51: #{physnet_forward.12} parent=42 // loop_pre_header
                  _
                $region52: #{physnet_forward.12} parent=42 // loop_header
                  %s129 = sphi 0, %s133
                  %p130 = scmp.ge.s32.totalorder %s129, 1
                  %s134 = sphi %s87, %s87
                  %s135 = sphi %s84, %s84
                $region53: #{physnet_forward.12} parent=42 // loop_header_branch
                  %132 = sbr.rel (%p130) target = $region57
                $region54: #{physnet_forward.12} parent=42 // loop_body
                  %v136 = vld [vmem:[%s134] sm:%s127]
                  %137 = vst [vmem:[%s135] sm:%s127] %v136
                  %v138 = vld [vmem:[%s134 + $0x4] sm:%s127]
                  %139 = vst [vmem:[%s135 + $0x4] sm:%s127] %v138
                  %v140 = vld [vmem:[%s134 + $0x10] sm:%s127]
                  %141 = vst [vmem:[%s135 + $0x8] sm:%s127] %v140
                  %v142 = vld [vmem:[%s134 + $0x14] sm:%s127]
                  %143 = vst [vmem:[%s135 + $0xc] sm:%s127] %v142
                  %v144 = vld [vmem:[%s134 + $0x20] sm:%s127]
                  %145 = vst [vmem:[%s135 + $0x10] sm:%s127] %v144
                  %v146 = vld [vmem:[%s134 + $0x24] sm:%s127]
                  %147 = vst [vmem:[%s135 + $0x14] sm:%s127] %v146
                $region55: #{physnet_forward.12} parent=42 // loop_footer
                  %s133 = sadd.s32 1, %s129
                $region56: #{physnet_forward.12} parent=42 // loop_footer_branch
                  %128 = sbr.rel target = $region52
                $region57: #{physnet_forward.12} parent=42 // loop_exit
                  _
              $region43: #{physnet_forward.12} parent=27 // pred_fallthru
                _
            $region28: #{physnet_forward.12} parent=23 // pred_fallthru
              _
            // Predicated region
            $region29: #{physnet_forward.12} parent=23 // pred_check
              _
            $region30: #{physnet_forward.12} parent=23 // pred_check_branch
              %93 = sbr.rel (0) target = $region32
            $region31: #{physnet_forward.12} parent=23 // pred_region
              %s95 = ssub.s32 16, 1
              loop: start=0, step=1, limit=1
              $region33: #{physnet_forward.12} parent=31 // loop_pre_header
                _
              $region34: #{physnet_forward.12} parent=31 // loop_header
                %s97 = sphi 0, %s101
                %p98 = scmp.ge.s32.totalorder %s97, 1
                %s102 = sphi %s87, %s87
                %s103 = sphi %s84, %s84
              $region35: #{physnet_forward.12} parent=31 // loop_header_branch
                %100 = sbr.rel (%p98) target = $region39
              $region36: #{physnet_forward.12} parent=31 // loop_body
                %v104 = vld [vmem:[%s102] sm:%s95]
                %105 = vst [vmem:[%s103] sm:%s95] %v104
                %v106 = vld [vmem:[%s102 + $0x4] sm:%s95]
                %107 = vst [vmem:[%s103 + $0x4] sm:%s95] %v106
                %v108 = vld [vmem:[%s102 + $0x10] sm:%s95]
                %109 = vst [vmem:[%s103 + $0x8] sm:%s95] %v108
                %v110 = vld [vmem:[%s102 + $0x14] sm:%s95]
                %111 = vst [vmem:[%s103 + $0xc] sm:%s95] %v110
                %v112 = vld [vmem:[%s102 + $0x20] sm:%s95]
                %113 = vst [vmem:[%s103 + $0x10] sm:%s95] %v112
                %v114 = vld [vmem:[%s102 + $0x24] sm:%s95]
                %115 = vst [vmem:[%s103 + $0x14] sm:%s95] %v114
              $region37: #{physnet_forward.12} parent=31 // loop_footer
                %s101 = sadd.s32 1, %s97
              $region38: #{physnet_forward.12} parent=31 // loop_footer_branch
                %96 = sbr.rel target = $region34
              $region39: #{physnet_forward.12} parent=31 // loop_exit
                _
            $region32: #{physnet_forward.12} parent=23 // pred_fallthru
              _
          $region24: #{physnet_forward.12} parent=19 // pred_fallthru
            _
          %148 = vnop
        $region20: #{physnet_forward.12} parent=15 // pred_fallthru
          _
      $region16: #{physnet_forward.12} parent=5 // pred_fallthru
        _
      %p149 = scmp.le.s32.totalorder 1, %s7
      %p150 = scmp.lt.s32.totalorder %s7, 3
      %p151 = pnand %p149, %p150
      %p152 = pneg %p151
      // Predicated region
      $region58: #{physnet_forward.12} parent=5 // pred_check
        _
      $region59: #{physnet_forward.12} parent=5 // pred_check_branch
        %154 = sbr.rel (%p151) target = $region61
      $region60: #{physnet_forward.12} parent=5 // pred_region
        %s155 = ssub.s32 %s7, 1
        %s156 = sand.u32 %s20, 1
        %s157 = sand.u32 %s20, 1
        %s158 = smul.addr %s157, 24
        %s159 = scalar_lea.vmem [#allocation2], %s158
        // Predicated region
        $region62: #{physnet_forward.12} parent=60 // pred_check
          %p160 = pneg %p33
        $region63: #{physnet_forward.12} parent=60 // pred_check_branch
          %162 = sbr.rel (%p160) target = $region65
        $region64: #{physnet_forward.12} parent=60 // pred_region
          _
        $region65: #{physnet_forward.12} parent=60 // pred_fallthru
          _
        %s163 = sand.u32 %s20, 1
        %s164 = sand.u32 %s20, 1
        %s165 = smul.addr %s164, 24
        %s166 = scalar_lea.vmem [#allocation2], %s165
        %p167 = pneg %p33
        %p168 = pneg %p30
        %p169 = pneg %p59
        %p170 = pneg %p56
        %s171 = smul.u32 2, %s12
        %p172 = scmp.lt.s32.totalorder %s171, 3
        %s173 = scalar_select %p172, %s171, 3
        %s174 = smul.addr %s173, 4
        %s175 = scalar_lea.vmem %s1, %s174
        %s176 = smul.u32 2, %s12
        %s177 = smul.u32 2, %s12
        %p178 = scmp.lt.s32.totalorder %s177, 3
        %s179 = scalar_select %p178, %s177, 3
        %s180 = smul.addr %s179, 4
        %s181 = scalar_lea.vmem %s1, %s180
        %s182 = smul.u32 2, %s12
        %v183 = vld [vmem:[%s159] sm:$0xf]
        %v184 = vld [vmem:[%s159 + $0x4] sm:$0xf]
        %v185 = vunpack.c.l.bf16 %v183
        %v186 = vunpack.c.l.bf16 %v184
        %s187 = scalar_lea.vmem %s159, 8 [#allocation2]
        %v188 = vld [vmem:[%s187] sm:$0xf]
        %v189 = vld [vmem:[%s187 + $0x4] sm:$0xf]
        %v190 = vunpack.c.l.bf16 %v188
        %v191 = vunpack.c.l.bf16 %v189
        %s192 = scalar_lea.vmem %s159, 16 [#allocation2]
        %v193 = vld [vmem:[%s192] sm:$0xf]
        %v194 = vld [vmem:[%s192 + $0x4] sm:$0xf]
        %v195 = vunpack.c.l.bf16 %v193
        %v196 = vunpack.c.l.bf16 %v194
        %vm197 = vcmp.gt.f32.partialorder %v185, 95.0
        %vm198 = vcmp.gt.f32.partialorder %v186, 95.0
        %vm199 = vcmp.gt.f32.partialorder %v190, 40.0
        %vm200 = vcmp.gt.f32.partialorder %v191, 40.0
        %vm201 = vmand %vm197, %vm199
        %vm202 = vmand %vm198, %vm200
        %vm203 = vcmp.gt.f32.partialorder %v195, 20.0
        %vm204 = vcmp.gt.f32.partialorder %v196, 20.0
        %vm205 = vmand %vm201, %vm203
        %vm206 = vmand %vm202, %vm204
        %vm207 = vcmp.gt.f32.partialorder %v185, %v190
        %vm208 = vcmp.gt.f32.partialorder %v186, %v191
        %vm209 = vmand %vm205, %vm207
        %vm210 = vmand %vm206, %vm208
        %vm211 = vcmp.gt.f32.partialorder %v185, %v195
        %vm212 = vcmp.gt.f32.partialorder %v186, %v196
        %vm213 = vmand %vm209, %vm211
        %vm214 = vmand %vm210, %vm212
        %v215 = vsub.f32 %v185, %v190
        %v216 = vsub.f32 %v186, %v191
        %v217 = vand.u32 2147483647, %v215
        %v218 = vand.u32 2147483647, %v216
        %vm219 = vcmp.gt.f32.partialorder %v217, 15.0
        %vm220 = vcmp.gt.f32.partialorder %v218, 15.0
        %vm221 = vmand %vm213, %vm219
        %vm222 = vmand %vm214, %vm220
        %v223 = vmin.f32 %v190, %v195
        %v224 = vmin.f32 %v191, %v196
        %v225 = vsub.f32 %v185, %v223
        %v226 = vsub.f32 %v186, %v224
        %vm227 = vcmp.ge.f32.partialorder %v190, %v195
        %vm228 = vcmp.ge.f32.partialorder %v191, %v196
        %vm229 = vmand %vm221, %vm227
        %vm230 = vmand %vm222, %vm228
        %v231 = vmul.f32 %v185, 0.23
        %v232 = vmul.f32 %v186, 0.23
        %vm233 = vcmp.ge.f32.partialorder %v225, %v231
        %vm234 = vcmp.ge.f32.partialorder %v226, %v232
        %vm235 = vmand %vm229, %vm233
        %vm236 = vmand %vm230, %vm234
        %v237 = vmul.f32 %v185, 0.68
        %v238 = vmul.f32 %v186, 0.68
        %vm239 = vcmp.le.f32.partialorder %v225, %v237
        %vm240 = vcmp.le.f32.partialorder %v226, %v238
        %vm241 = vmand %vm235, %vm239
        %vm242 = vmand %vm236, %vm240
        %v243 = vmul.f32 %v185, 0.299
        %v244 = vmul.f32 %v186, 0.299
        %v245 = vmul.f32 %v190, 0.587
        %v246 = vmul.f32 %v191, 0.587
        %v247 = vadd.f32 %v243, %v245
        %v248 = vadd.f32 %v244, %v246
        %v249 = vmul.f32 %v195, 0.114
        %v250 = vmul.f32 %v196, 0.114
        %v251 = vadd.f32 %v247, %v249
        %v252 = vadd.f32 %v248, %v250
        %v253 = vsub.f32 %v185, %v251
        %v254 = vsub.f32 %v186, %v252
        %v255 = vmul.f32 %v253, 0.713
        %v256 = vmul.f32 %v254, 0.713
        %v257 = vadd.f32 %v255, 128.0
        %v258 = vadd.f32 %v256, 128.0
        %v259 = vsub.f32 %v195, %v251
        %v260 = vsub.f32 %v196, %v252
        %v261 = vmul.f32 %v259, 0.564
        %v262 = vmul.f32 %v260, 0.564
        %v263 = vadd.f32 %v261, 128.0
        %v264 = vadd.f32 %v262, 128.0
        %vm265 = vcmp.gt.f32.partialorder %v257, 135.0
        %vm266 = vcmp.gt.f32.partialorder %v258, 135.0
        %vm267 = vmand %vm221, %vm265
        %vm268 = vmand %vm222, %vm266
        %vm269 = vcmp.gt.f32.partialorder %v263, 85.0
        %vm270 = vcmp.gt.f32.partialorder %v264, 85.0
        %vm271 = vmand %vm267, %vm269
        %vm272 = vmand %vm268, %vm270
        %vm273 = vcmp.gt.f32.partialorder %v251, 80.0
        %vm274 = vcmp.gt.f32.partialorder %v252, 80.0
        %vm275 = vmand %vm271, %vm273
        %vm276 = vmand %vm272, %vm274
        %v277 = vmul.f32 %v263, 1.5862
        %v278 = vmul.f32 %v264, 1.5862
        %v279 = vadd.f32 %v277, 20.0
        %v280 = vadd.f32 %v278, 20.0
        %vm281 = vcmp.le.f32.partialorder %v257, %v279
        %vm282 = vcmp.le.f32.partialorder %v258, %v280
        %vm283 = vmand %vm275, %vm281
        %vm284 = vmand %vm276, %vm282
        %v285 = vmul.f32 %v263, 0.3448
        %v286 = vmul.f32 %v264, 0.3448
        %v287 = vadd.f32 %v285, 76.2069
        %v288 = vadd.f32 %v286, 76.2069
        %vm289 = vcmp.ge.f32.partialorder %v257, %v287
        %vm290 = vcmp.ge.f32.partialorder %v258, %v288
        %vm291 = vmand %vm283, %vm289
        %vm292 = vmand %vm284, %vm290
        %v293 = vmul.f32 %v263, -4.5652
        %v294 = vmul.f32 %v264, -4.5652
        %v295 = vadd.f32 %v293, 234.5652
        %v296 = vadd.f32 %v294, 234.5652
        %vm297 = vcmp.ge.f32.partialorder %v257, %v295
        %vm298 = vcmp.ge.f32.partialorder %v258, %v296
        %vm299 = vmand %vm291, %vm297
        %vm300 = vmand %vm292, %vm298
        %v301 = vmul.f32 %v263, -1.15
        %v302 = vmul.f32 %v264, -1.15
        %v303 = vadd.f32 %v301, 301.75
        %v304 = vadd.f32 %v302, 301.75
        %vm305 = vcmp.le.f32.partialorder %v257, %v303
        %vm306 = vcmp.le.f32.partialorder %v258, %v304
        %vm307 = vmand %vm299, %vm305
        %vm308 = vmand %vm300, %vm306
        %v309 = vmul.f32 %v263, -2.2857
        %v310 = vmul.f32 %v264, -2.2857
        %v311 = vadd.f32 %v309, 432.85
        %v312 = vadd.f32 %v310, 432.85
        %vm313 = vcmp.le.f32.partialorder %v257, %v311
        %vm314 = vcmp.le.f32.partialorder %v258, %v312
        %vm315 = vmand %vm307, %vm313
        %vm316 = vmand %vm308, %vm314
        %vm317 = vmor %vm241, %vm315
        %vm318 = vmor %vm242, %vm316
        %v319 = vsel %vm317, 1, 0
        %v320 = vsel %vm318, 1, 0
        %v321 = vcvt.s32.f32 %v319
        %v322 = vcvt.s32.f32 %v320
        %v323 = vpack.c.bf16 %v321, %v321
        %v324 = vpack.c.bf16 %v322, %v322
        %325 = vst [vmem:[%s181] sm:$0xf] %v323
        %326 = vst [vmem:[%s181 + $0x4] sm:$0xf] %v324
        %s327 = smul.u32 2, %s12
        %p328 = scmp.lt.s32.totalorder %s327, 3
        %s329 = scalar_select %p328, %s327, 3
        %s330 = smul.addr %s329, 4
        %s331 = scalar_lea.vmem %s1, %s330
        // Predicated region
        $region66: #{physnet_forward.12} parent=60 // pred_check
          %p332 = pneg %p56
        $region67: #{physnet_forward.12} parent=60 // pred_check_branch
          %334 = sbr.rel (%p332) target = $region69
        $region68: #{physnet_forward.12} parent=60 // pred_region
          %s335 = smul.u32 2, %s12
        $region69: #{physnet_forward.12} parent=60 // pred_fallthru
          _
      $region61: #{physnet_forward.12} parent=5 // pred_fallthru
        _
      %p336 = scmp.le.s32.totalorder 2, %s7
      // Predicated region
      $region70: #{physnet_forward.12} parent=5 // pred_check
        %p337 = pneg %p336
      $region71: #{physnet_forward.12} parent=5 // pred_check_branch
        %339 = sbr.rel (%p337) target = $region73
      $region72: #{physnet_forward.12} parent=5 // pred_region
        %s340 = ssub.s32 %s7, 2
        // Predicated region
        $region74: #{physnet_forward.12} parent=72 // pred_check
          %p341 = pneg %p62
        $region75: #{physnet_forward.12} parent=72 // pred_check_branch
          %343 = sbr.rel (%p341) target = $region77
        $region76: #{physnet_forward.12} parent=72 // pred_region
          %s344 = smul.u32 2, %s13
          %p345 = scmp.lt.s32.totalorder %s344, 3
          %s346 = scalar_select %p345, %s344, 3
          %s347 = smul.addr %s346, 4
          %s348 = scalar_lea.vmem %s1, %s347
        $region77: #{physnet_forward.12} parent=72 // pred_fallthru
          _
      $region73: #{physnet_forward.12} parent=5 // pred_fallthru
        _
    $region6: #{physnet_forward.12} parent=1 // loop_footer
      %s11 = sadd.s32 1, %s7
    $region7: #{physnet_forward.12} parent=1 // loop_footer_branch
      %6 = sbr.rel target = $region3
    $region8: #{physnet_forward.12} parent=1 // loop_exit
      _

// kernel: physnet_forward.13
$region0: #{physnet_forward.13}
  #allocation0 [shape = 'u32[]', space=smem, size = 0x4, offset = 0x4, fixed_abs, tag = 'smem constant byte address 0x4 - core index']
  #allocation1 [shape = 'u32[72,128]{1,0:T(1,128)}', space=vmem, size = 0x9000, scoped, tag = 'internal scratch']
  #allocation2 [shape = 'f32[1,1]{1,0:T(1,128)S(6)}', space=smem, size = 0x200, scoped, tag = 'scoped memory for physnet_forward.13']
  %s0 = inlined_call_operand.vmem [shape: bf16[512,128], index: 0, kind: input, shape index: {}]
  %s1 = inlined_call_operand.vmem [shape: f32[1,128], index: 1, kind: input, shape index: {}]
  %s2 = inlined_call_operand.vmem [shape: f32[1,128], index: 2, kind: input, shape index: {}]
  %s3 = inlined_call_operand.<no memory space> [shape: f32[1,1], index: 3, kind: input, shape index: {}]
  %s4 = inlined_call_operand.vmem [shape: bf16[512,128], index: 4, kind: output, shape index: {}]
  %s5 = sld [smem:[#allocation0]]
  $region49: #{physnet_forward.13} parent=0
    _
  %s7 = ssub.s32 1, %s5
  %s8 = scalar_select 0, %s7, %s5
  %9 = sst [smem:[#allocation2]] %s3
  loop: start=0, step=1, limit=4
  $region2: #{physnet_forward.13} parent=0 // loop_pre_header
    _
  $region3: #{physnet_forward.13} parent=0 // loop_header
    %s11 = sphi 0, %s15
    %p12 = scmp.ge.s32.totalorder %s11, 4
    %s21 = sphi 0, %s23
    %s24 = sphi 0, %s21
    %s25 = sphi 0, %s24
    %s41 = sphi 0, %s25
    %s45 = sphi 0, %s45
    %s47 = sphi 0, %s45
    %s48 = sphi 0, %s47
    %s62 = sphi 0, %s48
    %s66 = sphi 0, %s66
    %s68 = sphi 0, %s66
    %s69 = sphi 0, %s68
    %s83 = sphi 0, %s69
    %s87 = sphi 0, %s87
    %s89 = sphi 0, %s87
    %s90 = sphi 0, %s89
    %s104 = sphi 0, %s90
    %s110 = sphi 0, %s112
    %s113 = sphi 0, %s110
    %s114 = sphi 0, %s113
    %s130 = sphi 0, %s114
  $region4: #{physnet_forward.13} parent=0 // loop_header_branch
    %14 = sbr.rel (%p12) target = $region8
  $region5: #{physnet_forward.13} parent=0 // loop_body
    %s16 = ssub.s32 %s11, 1
    %s17 = ssub.s32 %s11, 2
    %s18 = sadd.s32 %s11, 1
    %s19 = ssub.s32 %s11, %s18
    %p20 = scmp.eq.s32.totalorder %s19, 0
    %s22 = sadd.s32 %s21, 1
    %s23 = scalar_select %p20, %s21, %s22
    %p26 = pneg %p20
    %p27 = scmp.eq.s32.totalorder %s11, 1
    %p28 = por %p26, %p27
    %p29 = scmp.ne.s32.totalorder %s21, %s24
    %p30 = scmp.eq.s32.totalorder %s11, 0
    %p31 = por %p29, %p30
    %p32 = scmp.ne.s32.totalorder %s21, %s24
    %p33 = scmp.eq.s32.totalorder %s16, 1
    %p34 = por %p32, %p33
    %p35 = scmp.ne.s32.totalorder %s24, %s25
    %p36 = scmp.eq.s32.totalorder %s16, 0
    %p37 = por %p35, %p36
    %p38 = scmp.ne.s32.totalorder %s24, %s25
    %p39 = scmp.eq.s32.totalorder %s17, 1
    %p40 = por %p38, %p39
    %p42 = scmp.ne.s32.totalorder %s25, %s41
    %p43 = scmp.eq.s32.totalorder %s17, 0
    %p44 = por %p42, %p43
    %s46 = sadd.s32 %s45, 1
    %p49 = scmp.eq.s32.totalorder %s11, 1
    %p50 = scmp.ne.s32.totalorder %s45, %s47
    %p51 = scmp.eq.s32.totalorder %s11, 0
    %p52 = por %p50, %p51
    %p53 = scmp.ne.s32.totalorder %s45, %s47
    %p54 = scmp.eq.s32.totalorder %s16, 1
    %p55 = por %p53, %p54
    %p56 = scmp.ne.s32.totalorder %s47, %s48
    %p57 = scmp.eq.s32.totalorder %s16, 0
    %p58 = por %p56, %p57
    %p59 = scmp.ne.s32.totalorder %s47, %s48
    %p60 = scmp.eq.s32.totalorder %s17, 1
    %p61 = por %p59, %p60
    %p63 = scmp.ne.s32.totalorder %s48, %s62
    %p64 = scmp.eq.s32.totalorder %s17, 0
    %p65 = por %p63, %p64
    %s67 = sadd.s32 %s66, 1
    %p70 = scmp.eq.s32.totalorder %s11, 1
    %p71 = scmp.ne.s32.totalorder %s66, %s68
    %p72 = scmp.eq.s32.totalorder %s11, 0
    %p73 = por %p71, %p72
    %p74 = scmp.ne.s32.totalorder %s66, %s68
    %p75 = scmp.eq.s32.totalorder %s16, 1
    %p76 = por %p74, %p75
    %p77 = scmp.ne.s32.totalorder %s68, %s69
    %p78 = scmp.eq.s32.totalorder %s16, 0
    %p79 = por %p77, %p78
    %p80 = scmp.ne.s32.totalorder %s68, %s69
    %p81 = scmp.eq.s32.totalorder %s17, 1
    %p82 = por %p80, %p81
    %p84 = scmp.ne.s32.totalorder %s69, %s83
    %p85 = scmp.eq.s32.totalorder %s17, 0
    %p86 = por %p84, %p85
    %s88 = sadd.s32 %s87, 1
    %p91 = scmp.eq.s32.totalorder %s11, 1
    %p92 = scmp.ne.s32.totalorder %s87, %s89
    %p93 = scmp.eq.s32.totalorder %s11, 0
    %p94 = por %p92, %p93
    %p95 = scmp.ne.s32.totalorder %s87, %s89
    %p96 = scmp.eq.s32.totalorder %s16, 1
    %p97 = por %p95, %p96
    %p98 = scmp.ne.s32.totalorder %s89, %s90
    %p99 = scmp.eq.s32.totalorder %s16, 0
    %p100 = por %p98, %p99
    %p101 = scmp.ne.s32.totalorder %s89, %s90
    %p102 = scmp.eq.s32.totalorder %s17, 1
    %p103 = por %p101, %p102
    %p105 = scmp.ne.s32.totalorder %s90, %s104
    %p106 = scmp.eq.s32.totalorder %s17, 0
    %p107 = por %p105, %p106
    %s108 = ssub.s32 %s11, %s18
    %p109 = scmp.eq.s32.totalorder %s108, 0
    %s111 = sadd.s32 %s110, 1
    %s112 = scalar_select %p109, %s110, %s111
    %p115 = pneg %p109
    %p116 = scmp.eq.s32.totalorder %s11, 1
    %p117 = por %p115, %p116
    %p118 = scmp.ne.s32.totalorder %s110, %s113
    %p119 = scmp.eq.s32.totalorder %s11, 0
    %p120 = por %p118, %p119
    %p121 = scmp.ne.s32.totalorder %s110, %s113
    %p122 = scmp.eq.s32.totalorder %s16, 1
    %p123 = por %p121, %p122
    %p124 = scmp.ne.s32.totalorder %s113, %s114
    %p125 = scmp.eq.s32.totalorder %s16, 0
    %p126 = por %p124, %p125
    %p127 = scmp.ne.s32.totalorder %s113, %s114
    %p128 = scmp.eq.s32.totalorder %s17, 1
    %p129 = por %p127, %p128
    %p131 = scmp.ne.s32.totalorder %s114, %s130
    %p132 = scmp.eq.s32.totalorder %s17, 0
    %p133 = por %p131, %p132
    %p134 = scmp.le.s32.totalorder 1, %s11
    %p135 = scmp.lt.s32.totalorder %s11, 3
    %p136 = pnand %p134, %p135
    %p137 = pneg %p136
    // Predicated region
    $region9: #{physnet_forward.13} parent=5 // pred_check
      _
    $region10: #{physnet_forward.13} parent=5 // pred_check_branch
      %139 = sbr.rel (%p136) target = $region12
    $region11: #{physnet_forward.13} parent=5 // pred_region
      %s140 = ssub.s32 %s11, 1
      // Predicated region
      $region13: #{physnet_forward.13} parent=11 // pred_check
        %p141 = pneg %p58
      $region14: #{physnet_forward.13} parent=11 // pred_check_branch
        %143 = sbr.rel (%p141) target = $region16
      $region15: #{physnet_forward.13} parent=11 // pred_region
        _
      $region16: #{physnet_forward.13} parent=11 // pred_fallthru
        _
      // Predicated region
      $region17: #{physnet_forward.13} parent=11 // pred_check
        %p144 = pneg %p79
      $region18: #{physnet_forward.13} parent=11 // pred_check_branch
        %146 = sbr.rel (%p144) target = $region20
      $region19: #{physnet_forward.13} parent=11 // pred_region
        _
      $region20: #{physnet_forward.13} parent=11 // pred_fallthru
        _
      // Predicated region
      $region21: #{physnet_forward.13} parent=11 // pred_check
        %p147 = pneg %p100
      $region22: #{physnet_forward.13} parent=11 // pred_check_branch
        %149 = sbr.rel (%p147) target = $region24
      $region23: #{physnet_forward.13} parent=11 // pred_region
        _
      $region24: #{physnet_forward.13} parent=11 // pred_fallthru
        _
    $region12: #{physnet_forward.13} parent=5 // pred_fallthru
      _
    %p150 = scmp.lt.s32.totalorder %s11, 2
    // Predicated region
    $region25: #{physnet_forward.13} parent=5 // pred_check
      %p151 = pneg %p150
    $region26: #{physnet_forward.13} parent=5 // pred_check_branch
      %153 = sbr.rel (%p151) target = $region28
    $region27: #{physnet_forward.13} parent=5 // pred_region
      // Predicated region
      $region29: #{physnet_forward.13} parent=27 // pred_check
        %p154 = pneg %p31
      $region30: #{physnet_forward.13} parent=27 // pred_check_branch
        %156 = sbr.rel (%p154) target = $region32
      $region31: #{physnet_forward.13} parent=27 // pred_region
        %s157 = smul.u32 32, %s11
        %p158 = scmp.lt.s32.totalorder %s157, 63
        %s159 = scalar_select %p158, %s157, 63
        %s160 = smul.addr %s159, 4
        %s161 = scalar_lea.vmem %s0, %s160
        %s162 = smul.u32 32, %s11
      $region32: #{physnet_forward.13} parent=27 // pred_fallthru
        _
    $region28: #{physnet_forward.13} parent=5 // pred_fallthru
      _
    %p163 = scmp.le.s32.totalorder 1, %s11
    %p164 = scmp.lt.s32.totalorder %s11, 3
    %p165 = pnand %p163, %p164
    %p166 = pneg %p165
    // Predicated region
    $region33: #{physnet_forward.13} parent=5 // pred_check
      _
    $region34: #{physnet_forward.13} parent=5 // pred_check_branch
      %168 = sbr.rel (%p165) target = $region36
    $region35: #{physnet_forward.13} parent=5 // pred_region
      %s169 = ssub.s32 %s11, 1
      %s170 = smul.u32 32, %s16
      %p171 = scmp.lt.s32.totalorder %s170, 63
      %s172 = scalar_select %p171, %s170, 63
      %s173 = smul.addr %s172, 4
      %s174 = scalar_lea.vmem %s0, %s173
      %p175 = pneg %p37
      %p176 = pneg %p34
      %p177 = pneg %p58
      %p178 = pneg %p55
      %p179 = pneg %p79
      %p180 = pneg %p76
      %p181 = pneg %p100
      %p182 = pneg %p97
      %p183 = pneg %p126
      %p184 = pneg %p123
      %s185 = smul.u32 32, %s16
      %p186 = scmp.lt.s32.totalorder %s185, 63
      %s187 = scalar_select %p186, %s185, 63
      %s188 = smul.addr %s187, 4
      %s189 = scalar_lea.vmem %s4, %s188
      %s190 = smul.u32 32, %s16
      %p191 = scmp.lt.s32.totalorder %s190, 63
      %s192 = scalar_select %p191, %s190, 63
      %s193 = smul.addr %s192, 4
      %s194 = scalar_lea.vmem %s0, %s193
      %s195 = smul.u32 32, %s16
      %s196 = smul.u32 32, %s16
      %p197 = scmp.lt.s32.totalorder %s196, 63
      %s198 = scalar_select %p197, %s196, 63
      %s199 = smul.addr %s198, 4
      %s200 = scalar_lea.vmem %s4, %s199
      %s201 = smul.u32 32, %s16
      %v202 = vld [vmem:[%s194] sm:$0xf]
      %v203 = vld [vmem:[%s194 + $0x4] sm:$0xf]
      %v204 = vld [vmem:[%s194 + $0x8] sm:$0xf]
      %v205 = vld [vmem:[%s194 + $0xc] sm:$0xf]
      %v206 = vld [vmem:[%s194 + $0x10] sm:$0xf]
      %v207 = vld [vmem:[%s194 + $0x14] sm:$0xf]
      %v208 = vld [vmem:[%s194 + $0x18] sm:$0xf]
      %v209 = vld [vmem:[%s194 + $0x1c] sm:$0xf]
      %v210 = vld [vmem:[%s194 + $0x20] sm:$0xf]
      %v211 = vld [vmem:[%s194 + $0x24] sm:$0xf]
      %v212 = vld [vmem:[%s194 + $0x28] sm:$0xf]
      %v213 = vld [vmem:[%s194 + $0x2c] sm:$0xf]
      %v214 = vld [vmem:[%s194 + $0x30] sm:$0xf]
      %v215 = vld [vmem:[%s194 + $0x34] sm:$0xf]
      %v216 = vld [vmem:[%s194 + $0x38] sm:$0xf]
      %v217 = vld [vmem:[%s194 + $0x3c] sm:$0xf]
      %v218 = vld [vmem:[%s194 + $0x40] sm:$0xf]
      %v219 = vld [vmem:[%s194 + $0x44] sm:$0xf]
      %v220 = vld [vmem:[%s194 + $0x48] sm:$0xf]
      %v221 = vld [vmem:[%s194 + $0x4c] sm:$0xf]
      %v222 = vld [vmem:[%s194 + $0x50] sm:$0xf]
      %v223 = vld [vmem:[%s194 + $0x54] sm:$0xf]
      %v224 = vld [vmem:[%s194 + $0x58] sm:$0xf]
      %v225 = vld [vmem:[%s194 + $0x5c] sm:$0xf]
      %v226 = vld [vmem:[%s194 + $0x60] sm:$0xf]
      %v227 = vld [vmem:[%s194 + $0x64] sm:$0xf]
      %v228 = vld [vmem:[%s194 + $0x68] sm:$0xf]
      %v229 = vld [vmem:[%s194 + $0x6c] sm:$0xf]
      %v230 = vld [vmem:[%s194 + $0x70] sm:$0xf]
      %v231 = vld [vmem:[%s194 + $0x74] sm:$0xf]
      %v232 = vld [vmem:[%s194 + $0x78] sm:$0xf]
      %v233 = vld [vmem:[%s194 + $0x7c] sm:$0xf]
      %v234 = vunpack.c.l.bf16 %v202
      %v235 = vunpack.c.l.bf16 %v203
      %v236 = vunpack.c.l.bf16 %v204
      %v237 = vunpack.c.l.bf16 %v205
      %v238 = vunpack.c.l.bf16 %v206
      %v239 = vunpack.c.l.bf16 %v207
      %v240 = vunpack.c.l.bf16 %v208
      %v241 = vunpack.c.l.bf16 %v209
      %v242 = vunpack.c.l.bf16 %v210
      %v243 = vunpack.c.l.bf16 %v211
      %v244 = vunpack.c.l.bf16 %v212
      %v245 = vunpack.c.l.bf16 %v213
      %v246 = vunpack.c.l.bf16 %v214
      %v247 = vunpack.c.l.bf16 %v215
      %v248 = vunpack.c.l.bf16 %v216
      %v249 = vunpack.c.l.bf16 %v217
      %v250 = vunpack.c.l.bf16 %v218
      %v251 = vunpack.c.l.bf16 %v219
      %v252 = vunpack.c.l.bf16 %v220
      %v253 = vunpack.c.l.bf16 %v221
      %v254 = vunpack.c.l.bf16 %v222
      %v255 = vunpack.c.l.bf16 %v223
      %v256 = vunpack.c.l.bf16 %v224
      %v257 = vunpack.c.l.bf16 %v225
      %v258 = vunpack.c.l.bf16 %v226
      %v259 = vunpack.c.l.bf16 %v227
      %v260 = vunpack.c.l.bf16 %v228
      %v261 = vunpack.c.l.bf16 %v229
      %v262 = vunpack.c.l.bf16 %v230
      %v263 = vunpack.c.l.bf16 %v231
      %v264 = vunpack.c.l.bf16 %v232
      %v265 = vunpack.c.l.bf16 %v233
      %v266 = vld [vmem:[%s1] sm:$0x1]
      %v268 = vperm.slane %v266, 0
      %v270 = vmul.f32 %v234, %v268
      %v271 = vmul.f32 %v235, %v268
      %v272 = vmul.f32 %v236, %v268
      %v273 = vmul.f32 %v237, %v268
      %v274 = vmul.f32 %v238, %v268
      %v275 = vmul.f32 %v239, %v268
      %v276 = vmul.f32 %v240, %v268
      %v277 = vmul.f32 %v241, %v268
      %v278 = vmul.f32 %v242, %v268
      %v279 = vmul.f32 %v243, %v268
      %v280 = vmul.f32 %v244, %v268
      %v281 = vmul.f32 %v245, %v268
      %v282 = vmul.f32 %v246, %v268
      %v283 = vmul.f32 %v247, %v268
      %v284 = vmul.f32 %v248, %v268
      %v285 = vmul.f32 %v249, %v268
      %v286 = vmul.f32 %v250, %v268
      %v287 = vmul.f32 %v251, %v268
      %v288 = vmul.f32 %v252, %v268
      %v289 = vmul.f32 %v253, %v268
      %v290 = vmul.f32 %v254, %v268
      %v291 = vmul.f32 %v255, %v268
      %v292 = vmul.f32 %v256, %v268
      %v293 = vmul.f32 %v257, %v268
      %v294 = vmul.f32 %v258, %v268
      %v295 = vmul.f32 %v259, %v268
      %v296 = vmul.f32 %v260, %v268
      %v297 = vmul.f32 %v261, %v268
      %v298 = vmul.f32 %v262, %v268
      %v299 = vmul.f32 %v263, %v268
      %v300 = vmul.f32 %v264, %v268
      %v301 = vmul.f32 %v265, %v268
      %v302 = vld [vmem:[%s2] sm:$0x1]
      %v304 = vperm.slane %v302, 0
      %v306 = vadd.f32 %v270, %v304
      %v307 = vadd.f32 %v271, %v304
      %v308 = vadd.f32 %v272, %v304
      %v309 = vadd.f32 %v273, %v304
      %v310 = vadd.f32 %v274, %v304
      %v311 = vadd.f32 %v275, %v304
      %v312 = vadd.f32 %v276, %v304
      %v313 = vadd.f32 %v277, %v304
      %v314 = vadd.f32 %v278, %v304
      %v315 = vadd.f32 %v279, %v304
      %v316 = vadd.f32 %v280, %v304
      %v317 = vadd.f32 %v281, %v304
      %v318 = vadd.f32 %v282, %v304
      %v319 = vadd.f32 %v283, %v304
      %v320 = vadd.f32 %v284, %v304
      %v321 = vadd.f32 %v285, %v304
      %v322 = vadd.f32 %v286, %v304
      %v323 = vadd.f32 %v287, %v304
      %v324 = vadd.f32 %v288, %v304
      %v325 = vadd.f32 %v289, %v304
      %v326 = vadd.f32 %v290, %v304
      %v327 = vadd.f32 %v291, %v304
      %v328 = vadd.f32 %v292, %v304
      %v329 = vadd.f32 %v293, %v304
      %v330 = vadd.f32 %v294, %v304
      %v331 = vadd.f32 %v295, %v304
      %v332 = vadd.f32 %v296, %v304
      %v333 = vadd.f32 %v297, %v304
      %v334 = vadd.f32 %v298, %v304
      %v335 = vadd.f32 %v299, %v304
      %v336 = vadd.f32 %v300, %v304
      %v337 = vadd.f32 %v301, %v304
      %v338 = vmax.f32 %v306, 0.0
      %v339 = vmax.f32 %v307, 0.0
      %v340 = vmax.f32 %v308, 0.0
      %v341 = vmax.f32 %v309, 0.0
      %v342 = vmax.f32 %v310, 0.0
      %v343 = vmax.f32 %v311, 0.0
      %v344 = vmax.f32 %v312, 0.0
      %v345 = vmax.f32 %v313, 0.0
      %v346 = vmax.f32 %v314, 0.0
      %v347 = vmax.f32 %v315, 0.0
      %v348 = vmax.f32 %v316, 0.0
      %v349 = vmax.f32 %v317, 0.0
      %v350 = vmax.f32 %v318, 0.0
      %v351 = vmax.f32 %v319, 0.0
      %v352 = vmax.f32 %v320, 0.0
      %v353 = vmax.f32 %v321, 0.0
      %v354 = vmax.f32 %v322, 0.0
      %v355 = vmax.f32 %v323, 0.0
      %v356 = vmax.f32 %v324, 0.0
      %v357 = vmax.f32 %v325, 0.0
      %v358 = vmax.f32 %v326, 0.0
      %v359 = vmax.f32 %v327, 0.0
      %v360 = vmax.f32 %v328, 0.0
      %v361 = vmax.f32 %v329, 0.0
      %v362 = vmax.f32 %v330, 0.0
      %v363 = vmax.f32 %v331, 0.0
      %v364 = vmax.f32 %v332, 0.0
      %v365 = vmax.f32 %v333, 0.0
      %v366 = vmax.f32 %v334, 0.0
      %v367 = vmax.f32 %v335, 0.0
      %v368 = vmax.f32 %v336, 0.0
      %v369 = vmax.f32 %v337, 0.0
      %s370 = sld [smem:[#allocation2]]
      %v371 = vstv %s370
      %v372 = vmul.f32 %v338, %v371
      %v373 = vmul.f32 %v339, %v371
      %v374 = vmul.f32 %v340, %v371
      %v375 = vmul.f32 %v341, %v371
      %v376 = vmul.f32 %v342, %v371
      %v377 = vmul.f32 %v343, %v371
      %v378 = vmul.f32 %v344, %v371
      %v379 = vmul.f32 %v345, %v371
      %v380 = vmul.f32 %v346, %v371
      %v381 = vmul.f32 %v347, %v371
      %v382 = vmul.f32 %v348, %v371
      %v383 = vmul.f32 %v349, %v371
      %v384 = vmul.f32 %v350, %v371
      %v385 = vmul.f32 %v351, %v371
      %v386 = vmul.f32 %v352, %v371
      %v387 = vmul.f32 %v353, %v371
      %v388 = vmul.f32 %v354, %v371
      %v389 = vmul.f32 %v355, %v371
      %v390 = vmul.f32 %v356, %v371
      %v391 = vmul.f32 %v357, %v371
      %v392 = vmul.f32 %v358, %v371
      %v393 = vmul.f32 %v359, %v371
      %v394 = vmul.f32 %v360, %v371
      %v395 = vmul.f32 %v361, %v371
      %v396 = vmul.f32 %v362, %v371
      %v397 = vmul.f32 %v363, %v371
      %v398 = vmul.f32 %v364, %v371
      %v399 = vmul.f32 %v365, %v371
      %v400 = vmul.f32 %v366, %v371
      %v401 = vmul.f32 %v367, %v371
      %v402 = vmul.f32 %v368, %v371
      %v403 = vmul.f32 %v369, %v371
      %v404 = vpack.c.bf16 %v372, %v372
      %v405 = vpack.c.bf16 %v373, %v373
      %v406 = vpack.c.bf16 %v374, %v374
      %v407 = vpack.c.bf16 %v375, %v375
      %v408 = vpack.c.bf16 %v376, %v376
      %v409 = vpack.c.bf16 %v377, %v377
      %v410 = vpack.c.bf16 %v378, %v378
      %v411 = vpack.c.bf16 %v379, %v379
      %v412 = vpack.c.bf16 %v380, %v380
      %v413 = vpack.c.bf16 %v381, %v381
      %v414 = vpack.c.bf16 %v382, %v382
      %v415 = vpack.c.bf16 %v383, %v383
      %v416 = vpack.c.bf16 %v384, %v384
      %v417 = vpack.c.bf16 %v385, %v385
      %v418 = vpack.c.bf16 %v386, %v386
      %v419 = vpack.c.bf16 %v387, %v387
      %v420 = vpack.c.bf16 %v388, %v388
      %v421 = vpack.c.bf16 %v389, %v389
      %v422 = vpack.c.bf16 %v390, %v390
      %v423 = vpack.c.bf16 %v391, %v391
      %v424 = vpack.c.bf16 %v392, %v392
      %v425 = vpack.c.bf16 %v393, %v393
      %v426 = vpack.c.bf16 %v394, %v394
      %v427 = vpack.c.bf16 %v395, %v395
      %v428 = vpack.c.bf16 %v396, %v396
      %v429 = vpack.c.bf16 %v397, %v397
      %v430 = vpack.c.bf16 %v398, %v398
      %v431 = vpack.c.bf16 %v399, %v399
      %v432 = vpack.c.bf16 %v400, %v400
      %v433 = vpack.c.bf16 %v401, %v401
      %v434 = vpack.c.bf16 %v402, %v402
      %v435 = vpack.c.bf16 %v403, %v403
      %436 = vst [vmem:[%s200] sm:$0xf] %v404
      %437 = vst [vmem:[%s200 + $0x4] sm:$0xf] %v405
      %438 = vst [vmem:[%s200 + $0x8] sm:$0xf] %v406
      %439 = vst [vmem:[%s200 + $0xc] sm:$0xf] %v407
      %440 = vst [vmem:[%s200 + $0x10] sm:$0xf] %v408
      %441 = vst [vmem:[%s200 + $0x14] sm:$0xf] %v409
      %442 = vst [vmem:[%s200 + $0x18] sm:$0xf] %v410
      %443 = vst [vmem:[%s200 + $0x1c] sm:$0xf] %v411
      %444 = vst [vmem:[%s200 + $0x20] sm:$0xf] %v412
      %445 = vst [vmem:[%s200 + $0x24] sm:$0xf] %v413
      %446 = vst [vmem:[%s200 + $0x28] sm:$0xf] %v414
      %447 = vst [vmem:[%s200 + $0x2c] sm:$0xf] %v415
      %448 = vst [vmem:[%s200 + $0x30] sm:$0xf] %v416
      %449 = vst [vmem:[%s200 + $0x34] sm:$0xf] %v417
      %450 = vst [vmem:[%s200 + $0x38] sm:$0xf] %v418
      %451 = vst [vmem:[%s200 + $0x3c] sm:$0xf] %v419
      %452 = vst [vmem:[%s200 + $0x40] sm:$0xf] %v420
      %453 = vst [vmem:[%s200 + $0x44] sm:$0xf] %v421
      %454 = vst [vmem:[%s200 + $0x48] sm:$0xf] %v422
      %455 = vst [vmem:[%s200 + $0x4c] sm:$0xf] %v423
      %456 = vst [vmem:[%s200 + $0x50] sm:$0xf] %v424
      %457 = vst [vmem:[%s200 + $0x54] sm:$0xf] %v425
      %458 = vst [vmem:[%s200 + $0x58] sm:$0xf] %v426
      %459 = vst [vmem:[%s200 + $0x5c] sm:$0xf] %v427
      %460 = vst [vmem:[%s200 + $0x60] sm:$0xf] %v428
      %461 = vst [vmem:[%s200 + $0x64] sm:$0xf] %v429
      %462 = vst [vmem:[%s200 + $0x68] sm:$0xf] %v430
      %463 = vst [vmem:[%s200 + $0x6c] sm:$0xf] %v431
      %464 = vst [vmem:[%s200 + $0x70] sm:$0xf] %v432
      %465 = vst [vmem:[%s200 + $0x74] sm:$0xf] %v433
      %466 = vst [vmem:[%s200 + $0x78] sm:$0xf] %v434
      %467 = vst [vmem:[%s200 + $0x7c] sm:$0xf] %v435
      %s468 = smul.u32 32, %s16
      %p469 = scmp.lt.s32.totalorder %s468, 63
      %s470 = scalar_select %p469, %s468, 63
      %s471 = smul.addr %s470, 4
      %s472 = scalar_lea.vmem %s4, %s471
      // Predicated region
      $region37: #{physnet_forward.13} parent=35 // pred_check
        %p473 = pneg %p123
      $region38: #{physnet_forward.13} parent=35 // pred_check_branch
        %475 = sbr.rel (%p473) target = $region40
      $region39: #{physnet_forward.13} parent=35 // pred_region
        %s476 = smul.u32 32, %s16
      $region40: #{physnet_forward.13} parent=35 // pred_fallthru
        _
    $region36: #{physnet_forward.13} parent=5 // pred_fallthru
      _
    %p477 = scmp.le.s32.totalorder 2, %s11
    // Predicated region
    $region41: #{physnet_forward.13} parent=5 // pred_check
      %p478 = pneg %p477
    $region42: #{physnet_forward.13} parent=5 // pred_check_branch
      %480 = sbr.rel (%p478) target = $region44
    $region43: #{physnet_forward.13} parent=5 // pred_region
      %s481 = ssub.s32 %s11, 2
      // Predicated region
      $region45: #{physnet_forward.13} parent=43 // pred_check
        %p482 = pneg %p129
      $region46: #{physnet_forward.13} parent=43 // pred_check_branch
        %484 = sbr.rel (%p482) target = $region48
      $region47: #{physnet_forward.13} parent=43 // pred_region
        %s485 = smul.u32 32, %s17
        %p486 = scmp.lt.s32.totalorder %s485, 63
        %s487 = scalar_select %p486, %s485, 63
        %s488 = smul.addr %s487, 4
        %s489 = scalar_lea.vmem %s4, %s488
      $region48: #{physnet_forward.13} parent=43 // pred_fallthru
        _
    $region44: #{physnet_forward.13} parent=5 // pred_fallthru
      _
  $region6: #{physnet_forward.13} parent=0 // loop_footer
    %s15 = sadd.s32 1, %s11
  $region7: #{physnet_forward.13} parent=0 // loop_footer_branch
    %10 = sbr.rel target = $region3
  $region8: #{physnet_forward.13} parent=0 // loop_exit
    _

// kernel: tile.123
$region0: #{tile.123}
  #allocation0 [shape = 's32[1]{0}', space=sflag, size = 0x4, scoped, tag = 'scoped memory for tile.123']
  %s0 = inlined_call_operand.vmem [shape: f32[32], index: 0, kind: input, shape index: {}]
  %s1 = inlined_call_operand.vmem [shape: f32[4,32], index: 1, kind: output, shape index: {}]
  // Predicated region
  $region2: #{tile.123} parent=0 // pred_check
    _
  $region3: #{tile.123} parent=0 // pred_check_branch
    %3 = sbr.rel (0) target = $region5
  $region4: #{tile.123} parent=0 // pred_region
    _
  $region5: #{tile.123} parent=0 // pred_fallthru
    _
  %v4 = vld [vmem:[%s0] ss:$0 sm:$0xff]
  %5 = vst [vmem:[%s1] sm:$0xf] %v4

// kernel: tile.124
$region0: #{tile.124}
  %s0 = inlined_call_operand.vmem [shape: f32[4,32], index: 0, kind: input, shape index: {}]
  %s1 = inlined_call_operand.vmem [shape: f32[1,128], index: 1, kind: output, shape index: {}]
  $region1: #{tile.124} parent=0
    #allocation0 [shape = 'u8[4096]{0}', space=vmem, size = 0x1000, scoped, tag = 'scoped mem for output reshape']
    #allocation1 [shape = 'u8[4096]{0}', space=vmem, size = 0x1000, scoped, tag = 'scoped mem for input reshape']
    %s3 = ssub.s32 16, 1
    %v4 = vld [vmem:[%s0] sm:%s3]
    %5 = vst [vmem:[#allocation1] sm:%s3] %v4
    %v6 = vld [vmem:[#allocation1] sm:$0x1]
    %vm7 = vcmask 261120
    %8 = vst.msk [vmem:[#allocation0] sm:$0x1] %vm7, %v6
    %s9 = scalar_lea.vmem [#allocation1], 3
    %v10 = vld [vmem:[%s9] sm:$0x1]
    %11 = vrot.lane.b32.xlu0 %v10, 96
    %v12 = vpop.permute.xlu0 %11
    %vm13 = vcmask 1048320
    %14 = vst.msk [vmem:[#allocation0] sm:$0x1] %vm13, %v12
    %s15 = scalar_lea.vmem [#allocation1], 2
    %v16 = vld [vmem:[%s15] sm:$0x1]
    %17 = vrot.lane.b32.xlu0 %v16, 64
    %v18 = vpop.permute.xlu0 %17
    %vm19 = vcmask 785920
    %20 = vst.msk [vmem:[#allocation0] sm:$0x1] %vm19, %v18
    %s21 = scalar_lea.vmem [#allocation1], 1
    %v22 = vld [vmem:[%s21] sm:$0x1]
    %23 = vrot.lane.b32.xlu0 %v22, 32
    %v24 = vpop.permute.xlu0 %23
    %vm25 = vcmask 523520
    %26 = vst.msk [vmem:[#allocation0] sm:$0x1] %vm25, %v24
    %s28 = ssub.s32 2, 1
    %v29 = vld [vmem:[#allocation0] sm:%s28]
    %s31 = ssub.s32 2, 1
    %32 = vst [vmem:[%s1] sm:%s31] %v29

// kernel: physnet_forward.14
$region0: #{physnet_forward.14}
  #allocation0 [shape = 'u32[]', space=smem, size = 0x4, offset = 0x4, fixed_abs, tag = 'smem constant byte address 0x4 - core index']
  #allocation1 [shape = 'u32[72,128]{1,0:T(1,128)}', space=vmem, size = 0x9000, scoped, tag = 'internal scratch']
  #allocation2 [shape = 'f32[1,1]{1,0:T(1,128)S(6)}', space=smem, size = 0x200, scoped, tag = 'scoped memory for physnet_forward.14']
  %s0 = inlined_call_operand.vmem [shape: bf16[256,128], index: 0, kind: input, shape index: {}]
  %s1 = inlined_call_operand.vmem [shape: f32[1,128], index: 1, kind: input, shape index: {}]
  %s2 = inlined_call_operand.vmem [shape: f32[1,128], index: 2, kind: input, shape index: {}]
  %s3 = inlined_call_operand.<no memory space> [shape: f32[1,1], index: 3, kind: input, shape index: {}]
  %s4 = inlined_call_operand.vmem [shape: bf16[256,128], index: 4, kind: output, shape index: {}]
  %s5 = sld [smem:[#allocation0]]
  $region49: #{physnet_forward.14} parent=0
    _
  %s7 = ssub.s32 1, %s5
  %s8 = scalar_select 0, %s7, %s5
  %9 = sst [smem:[#allocation2]] %s3
  loop: start=0, step=1, limit=4
  $region2: #{physnet_forward.14} parent=0 // loop_pre_header
    _
  $region3: #{physnet_forward.14} parent=0 // loop_header
    %s11 = sphi 0, %s15
    %p12 = scmp.ge.s32.totalorder %s11, 4
    %s21 = sphi 0, %s23
    %s24 = sphi 0, %s21
    %s25 = sphi 0, %s24
    %s41 = sphi 0, %s25
    %s45 = sphi 0, %s45
    %s47 = sphi 0, %s45
    %s48 = sphi 0, %s47
    %s62 = sphi 0, %s48
    %s66 = sphi 0, %s66
    %s68 = sphi 0, %s66
    %s69 = sphi 0, %s68
    %s83 = sphi 0, %s69
    %s87 = sphi 0, %s87
    %s89 = sphi 0, %s87
    %s90 = sphi 0, %s89
    %s104 = sphi 0, %s90
    %s110 = sphi 0, %s112
    %s113 = sphi 0, %s110
    %s114 = sphi 0, %s113
    %s130 = sphi 0, %s114
  $region4: #{physnet_forward.14} parent=0 // loop_header_branch
    %14 = sbr.rel (%p12) target = $region8
  $region5: #{physnet_forward.14} parent=0 // loop_body
    %s16 = ssub.s32 %s11, 1
    %s17 = ssub.s32 %s11, 2
    %s18 = sadd.s32 %s11, 1
    %s19 = ssub.s32 %s11, %s18
    %p20 = scmp.eq.s32.totalorder %s19, 0
    %s22 = sadd.s32 %s21, 1
    %s23 = scalar_select %p20, %s21, %s22
    %p26 = pneg %p20
    %p27 = scmp.eq.s32.totalorder %s11, 1
    %p28 = por %p26, %p27
    %p29 = scmp.ne.s32.totalorder %s21, %s24
    %p30 = scmp.eq.s32.totalorder %s11, 0
    %p31 = por %p29, %p30
    %p32 = scmp.ne.s32.totalorder %s21, %s24
    %p33 = scmp.eq.s32.totalorder %s16, 1
    %p34 = por %p32, %p33
    %p35 = scmp.ne.s32.totalorder %s24, %s25
    %p36 = scmp.eq.s32.totalorder %s16, 0
    %p37 = por %p35, %p36
    %p38 = scmp.ne.s32.totalorder %s24, %s25
    %p39 = scmp.eq.s32.totalorder %s17, 1
    %p40 = por %p38, %p39
    %p42 = scmp.ne.s32.totalorder %s25, %s41
    %p43 = scmp.eq.s32.totalorder %s17, 0
    %p44 = por %p42, %p43
    %s46 = sadd.s32 %s45, 1
    %p49 = scmp.eq.s32.totalorder %s11, 1
    %p50 = scmp.ne.s32.totalorder %s45, %s47
    %p51 = scmp.eq.s32.totalorder %s11, 0
    %p52 = por %p50, %p51
    %p53 = scmp.ne.s32.totalorder %s45, %s47
    %p54 = scmp.eq.s32.totalorder %s16, 1
    %p55 = por %p53, %p54
    %p56 = scmp.ne.s32.totalorder %s47, %s48
    %p57 = scmp.eq.s32.totalorder %s16, 0
    %p58 = por %p56, %p57
    %p59 = scmp.ne.s32.totalorder %s47, %s48
    %p60 = scmp.eq.s32.totalorder %s17, 1
    %p61 = por %p59, %p60
    %p63 = scmp.ne.s32.totalorder %s48, %s62
    %p64 = scmp.eq.s32.totalorder %s17, 0
    %p65 = por %p63, %p64
    %s67 = sadd.s32 %s66, 1
    %p70 = scmp.eq.s32.totalorder %s11, 1
    %p71 = scmp.ne.s32.totalorder %s66, %s68
    %p72 = scmp.eq.s32.totalorder %s11, 0
    %p73 = por %p71, %p72
    %p74 = scmp.ne.s32.totalorder %s66, %s68
    %p75 = scmp.eq.s32.totalorder %s16, 1
    %p76 = por %p74, %p75
    %p77 = scmp.ne.s32.totalorder %s68, %s69
    %p78 = scmp.eq.s32.totalorder %s16, 0
    %p79 = por %p77, %p78
    %p80 = scmp.ne.s32.totalorder %s68, %s69
    %p81 = scmp.eq.s32.totalorder %s17, 1
    %p82 = por %p80, %p81
    %p84 = scmp.ne.s32.totalorder %s69, %s83
    %p85 = scmp.eq.s32.totalorder %s17, 0
    %p86 = por %p84, %p85
    %s88 = sadd.s32 %s87, 1
    %p91 = scmp.eq.s32.totalorder %s11, 1
    %p92 = scmp.ne.s32.totalorder %s87, %s89
    %p93 = scmp.eq.s32.totalorder %s11, 0
    %p94 = por %p92, %p93
    %p95 = scmp.ne.s32.totalorder %s87, %s89
    %p96 = scmp.eq.s32.totalorder %s16, 1
    %p97 = por %p95, %p96
    %p98 = scmp.ne.s32.totalorder %s89, %s90
    %p99 = scmp.eq.s32.totalorder %s16, 0
    %p100 = por %p98, %p99
    %p101 = scmp.ne.s32.totalorder %s89, %s90
    %p102 = scmp.eq.s32.totalorder %s17, 1
    %p103 = por %p101, %p102
    %p105 = scmp.ne.s32.totalorder %s90, %s104
    %p106 = scmp.eq.s32.totalorder %s17, 0
    %p107 = por %p105, %p106
    %s108 = ssub.s32 %s11, %s18
    %p109 = scmp.eq.s32.totalorder %s108, 0
    %s111 = sadd.s32 %s110, 1
    %s112 = scalar_select %p109, %s110, %s111
    %p115 = pneg %p109
    %p116 = scmp.eq.s32.totalorder %s11, 1
    %p117 = por %p115, %p116
    %p118 = scmp.ne.s32.totalorder %s110, %s113
    %p119 = scmp.eq.s32.totalorder %s11, 0
    %p120 = por %p118, %p119
    %p121 = scmp.ne.s32.totalorder %s110, %s113
    %p122 = scmp.eq.s32.totalorder %s16, 1
    %p123 = por %p121, %p122
    %p124 = scmp.ne.s32.totalorder %s113, %s114
    %p125 = scmp.eq.s32.totalorder %s16, 0
    %p126 = por %p124, %p125
    %p127 = scmp.ne.s32.totalorder %s113, %s114
    %p128 = scmp.eq.s32.totalorder %s17, 1
    %p129 = por %p127, %p128
    %p131 = scmp.ne.s32.totalorder %s114, %s130
    %p132 = scmp.eq.s32.totalorder %s17, 0
    %p133 = por %p131, %p132
    %p134 = scmp.le.s32.totalorder 1, %s11
    %p135 = scmp.lt.s32.totalorder %s11, 3
    %p136 = pnand %p134, %p135
    %p137 = pneg %p136
    // Predicated region
    $region9: #{physnet_forward.14} parent=5 // pred_check
      _
    $region10: #{physnet_forward.14} parent=5 // pred_check_branch
      %139 = sbr.rel (%p136) target = $region12
    $region11: #{physnet_forward.14} parent=5 // pred_region
      %s140 = ssub.s32 %s11, 1
      // Predicated region
      $region13: #{physnet_forward.14} parent=11 // pred_check
        %p141 = pneg %p58
      $region14: #{physnet_forward.14} parent=11 // pred_check_branch
        %143 = sbr.rel (%p141) target = $region16
      $region15: #{physnet_forward.14} parent=11 // pred_region
        _
      $region16: #{physnet_forward.14} parent=11 // pred_fallthru
        _
      // Predicated region
      $region17: #{physnet_forward.14} parent=11 // pred_check
        %p144 = pneg %p79
      $region18: #{physnet_forward.14} parent=11 // pred_check_branch
        %146 = sbr.rel (%p144) target = $region20
      $region19: #{physnet_forward.14} parent=11 // pred_region
        _
      $region20: #{physnet_forward.14} parent=11 // pred_fallthru
        _
      // Predicated region
      $region21: #{physnet_forward.14} parent=11 // pred_check
        %p147 = pneg %p100
      $region22: #{physnet_forward.14} parent=11 // pred_check_branch
        %149 = sbr.rel (%p147) target = $region24
      $region23: #{physnet_forward.14} parent=11 // pred_region
        _
      $region24: #{physnet_forward.14} parent=11 // pred_fallthru
        _
    $region12: #{physnet_forward.14} parent=5 // pred_fallthru
      _
    %p150 = scmp.lt.s32.totalorder %s11, 2
    // Predicated region
    $region25: #{physnet_forward.14} parent=5 // pred_check
      %p151 = pneg %p150
    $region26: #{physnet_forward.14} parent=5 // pred_check_branch
      %153 = sbr.rel (%p151) target = $region28
    $region27: #{physnet_forward.14} parent=5 // pred_region
      // Predicated region
      $region29: #{physnet_forward.14} parent=27 // pred_check
        %p154 = pneg %p31
      $region30: #{physnet_forward.14} parent=27 // pred_check_branch
        %156 = sbr.rel (%p154) target = $region32
      $region31: #{physnet_forward.14} parent=27 // pred_region
        %s157 = smul.u32 16, %s11
        %p158 = scmp.lt.s32.totalorder %s157, 31
        %s159 = scalar_select %p158, %s157, 31
        %s160 = smul.addr %s159, 4
        %s161 = scalar_lea.vmem %s0, %s160
        %s162 = smul.u32 16, %s11
      $region32: #{physnet_forward.14} parent=27 // pred_fallthru
        _
    $region28: #{physnet_forward.14} parent=5 // pred_fallthru
      _
    %p163 = scmp.le.s32.totalorder 1, %s11
    %p164 = scmp.lt.s32.totalorder %s11, 3
    %p165 = pnand %p163, %p164
    %p166 = pneg %p165
    // Predicated region
    $region33: #{physnet_forward.14} parent=5 // pred_check
      _
    $region34: #{physnet_forward.14} parent=5 // pred_check_branch
      %168 = sbr.rel (%p165) target = $region36
    $region35: #{physnet_forward.14} parent=5 // pred_region
      %s169 = ssub.s32 %s11, 1
      %s170 = smul.u32 16, %s16
      %p171 = scmp.lt.s32.totalorder %s170, 31
      %s172 = scalar_select %p171, %s170, 31
      %s173 = smul.addr %s172, 4
      %s174 = scalar_lea.vmem %s0, %s173
      %p175 = pneg %p37
      %p176 = pneg %p34
      %p177 = pneg %p58
      %p178 = pneg %p55
      %p179 = pneg %p79
      %p180 = pneg %p76
      %p181 = pneg %p100
      %p182 = pneg %p97
      %p183 = pneg %p126
      %p184 = pneg %p123
      %s185 = smul.u32 16, %s16
      %p186 = scmp.lt.s32.totalorder %s185, 31
      %s187 = scalar_select %p186, %s185, 31
      %s188 = smul.addr %s187, 4
      %s189 = scalar_lea.vmem %s4, %s188
      %s190 = smul.u32 16, %s16
      %p191 = scmp.lt.s32.totalorder %s190, 31
      %s192 = scalar_select %p191, %s190, 31
      %s193 = smul.addr %s192, 4
      %s194 = scalar_lea.vmem %s0, %s193
      %s195 = smul.u32 16, %s16
      %s196 = smul.u32 16, %s16
      %p197 = scmp.lt.s32.totalorder %s196, 31
      %s198 = scalar_select %p197, %s196, 31
      %s199 = smul.addr %s198, 4
      %s200 = scalar_lea.vmem %s4, %s199
      %s201 = smul.u32 16, %s16
      %v202 = vld [vmem:[%s194] sm:$0xf]
      %v203 = vld [vmem:[%s194 + $0x4] sm:$0xf]
      %v204 = vld [vmem:[%s194 + $0x8] sm:$0xf]
      %v205 = vld [vmem:[%s194 + $0xc] sm:$0xf]
      %v206 = vld [vmem:[%s194 + $0x10] sm:$0xf]
      %v207 = vld [vmem:[%s194 + $0x14] sm:$0xf]
      %v208 = vld [vmem:[%s194 + $0x18] sm:$0xf]
      %v209 = vld [vmem:[%s194 + $0x1c] sm:$0xf]
      %v210 = vld [vmem:[%s194 + $0x20] sm:$0xf]
      %v211 = vld [vmem:[%s194 + $0x24] sm:$0xf]
      %v212 = vld [vmem:[%s194 + $0x28] sm:$0xf]
      %v213 = vld [vmem:[%s194 + $0x2c] sm:$0xf]
      %v214 = vld [vmem:[%s194 + $0x30] sm:$0xf]
      %v215 = vld [vmem:[%s194 + $0x34] sm:$0xf]
      %v216 = vld [vmem:[%s194 + $0x38] sm:$0xf]
      %v217 = vld [vmem:[%s194 + $0x3c] sm:$0xf]
      %v218 = vunpack.c.l.bf16 %v202
      %v219 = vunpack.c.l.bf16 %v203
      %v220 = vunpack.c.l.bf16 %v204
      %v221 = vunpack.c.l.bf16 %v205
      %v222 = vunpack.c.l.bf16 %v206
      %v223 = vunpack.c.l.bf16 %v207
      %v224 = vunpack.c.l.bf16 %v208
      %v225 = vunpack.c.l.bf16 %v209
      %v226 = vunpack.c.l.bf16 %v210
      %v227 = vunpack.c.l.bf16 %v211
      %v228 = vunpack.c.l.bf16 %v212
      %v229 = vunpack.c.l.bf16 %v213
      %v230 = vunpack.c.l.bf16 %v214
      %v231 = vunpack.c.l.bf16 %v215
      %v232 = vunpack.c.l.bf16 %v216
      %v233 = vunpack.c.l.bf16 %v217
      %v234 = vld [vmem:[%s1] sm:$0x1]
      %v236 = vperm.slane %v234, 0
      %v238 = vmul.f32 %v218, %v236
      %v239 = vmul.f32 %v219, %v236
      %v240 = vmul.f32 %v220, %v236
      %v241 = vmul.f32 %v221, %v236
      %v242 = vmul.f32 %v222, %v236
      %v243 = vmul.f32 %v223, %v236
      %v244 = vmul.f32 %v224, %v236
      %v245 = vmul.f32 %v225, %v236
      %v246 = vmul.f32 %v226, %v236
      %v247 = vmul.f32 %v227, %v236
      %v248 = vmul.f32 %v228, %v236
      %v249 = vmul.f32 %v229, %v236
      %v250 = vmul.f32 %v230, %v236
      %v251 = vmul.f32 %v231, %v236
      %v252 = vmul.f32 %v232, %v236
      %v253 = vmul.f32 %v233, %v236
      %v254 = vld [vmem:[%s2] sm:$0x1]
      %v256 = vperm.slane %v254, 0
      %v258 = vadd.f32 %v238, %v256
      %v259 = vadd.f32 %v239, %v256
      %v260 = vadd.f32 %v240, %v256
      %v261 = vadd.f32 %v241, %v256
      %v262 = vadd.f32 %v242, %v256
      %v263 = vadd.f32 %v243, %v256
      %v264 = vadd.f32 %v244, %v256
      %v265 = vadd.f32 %v245, %v256
      %v266 = vadd.f32 %v246, %v256
      %v267 = vadd.f32 %v247, %v256
      %v268 = vadd.f32 %v248, %v256
      %v269 = vadd.f32 %v249, %v256
      %v270 = vadd.f32 %v250, %v256
      %v271 = vadd.f32 %v251, %v256
      %v272 = vadd.f32 %v252, %v256
      %v273 = vadd.f32 %v253, %v256
      %v274 = vmax.f32 %v258, 0.0
      %v275 = vmax.f32 %v259, 0.0
      %v276 = vmax.f32 %v260, 0.0
      %v277 = vmax.f32 %v261, 0.0
      %v278 = vmax.f32 %v262, 0.0
      %v279 = vmax.f32 %v263, 0.0
      %v280 = vmax.f32 %v264, 0.0
      %v281 = vmax.f32 %v265, 0.0
      %v282 = vmax.f32 %v266, 0.0
      %v283 = vmax.f32 %v267, 0.0
      %v284 = vmax.f32 %v268, 0.0
      %v285 = vmax.f32 %v269, 0.0
      %v286 = vmax.f32 %v270, 0.0
      %v287 = vmax.f32 %v271, 0.0
      %v288 = vmax.f32 %v272, 0.0
      %v289 = vmax.f32 %v273, 0.0
      %s290 = sld [smem:[#allocation2]]
      %v291 = vstv %s290
      %v292 = vmul.f32 %v274, %v291
      %v293 = vmul.f32 %v275, %v291
      %v294 = vmul.f32 %v276, %v291
      %v295 = vmul.f32 %v277, %v291
      %v296 = vmul.f32 %v278, %v291
      %v297 = vmul.f32 %v279, %v291
      %v298 = vmul.f32 %v280, %v291
      %v299 = vmul.f32 %v281, %v291
      %v300 = vmul.f32 %v282, %v291
      %v301 = vmul.f32 %v283, %v291
      %v302 = vmul.f32 %v284, %v291
      %v303 = vmul.f32 %v285, %v291
      %v304 = vmul.f32 %v286, %v291
      %v305 = vmul.f32 %v287, %v291
      %v306 = vmul.f32 %v288, %v291
      %v307 = vmul.f32 %v289, %v291
      %v308 = vpack.c.bf16 %v292, %v292
      %v309 = vpack.c.bf16 %v293, %v293
      %v310 = vpack.c.bf16 %v294, %v294
      %v311 = vpack.c.bf16 %v295, %v295
      %v312 = vpack.c.bf16 %v296, %v296
      %v313 = vpack.c.bf16 %v297, %v297
      %v314 = vpack.c.bf16 %v298, %v298
      %v315 = vpack.c.bf16 %v299, %v299
      %v316 = vpack.c.bf16 %v300, %v300
      %v317 = vpack.c.bf16 %v301, %v301
      %v318 = vpack.c.bf16 %v302, %v302
      %v319 = vpack.c.bf16 %v303, %v303
      %v320 = vpack.c.bf16 %v304, %v304
      %v321 = vpack.c.bf16 %v305, %v305
      %v322 = vpack.c.bf16 %v306, %v306
      %v323 = vpack.c.bf16 %v307, %v307
      %324 = vst [vmem:[%s200] sm:$0xf] %v308
      %325 = vst [vmem:[%s200 + $0x4] sm:$0xf] %v309
      %326 = vst [vmem:[%s200 + $0x8] sm:$0xf] %v310
      %327 = vst [vmem:[%s200 + $0xc] sm:$0xf] %v311
      %328 = vst [vmem:[%s200 + $0x10] sm:$0xf] %v312
      %329 = vst [vmem:[%s200 + $0x14] sm:$0xf] %v313
      %330 = vst [vmem:[%s200 + $0x18] sm:$0xf] %v314
      %331 = vst [vmem:[%s200 + $0x1c] sm:$0xf] %v315
      %332 = vst [vmem:[%s200 + $0x20] sm:$0xf] %v316
      %333 = vst [vmem:[%s200 + $0x24] sm:$0xf] %v317
      %334 = vst [vmem:[%s200 + $0x28] sm:$0xf] %v318
      %335 = vst [vmem:[%s200 + $0x2c] sm:$0xf] %v319
      %336 = vst [vmem:[%s200 + $0x30] sm:$0xf] %v320
      %337 = vst [vmem:[%s200 + $0x34] sm:$0xf] %v321
      %338 = vst [vmem:[%s200 + $0x38] sm:$0xf] %v322
      %339 = vst [vmem:[%s200 + $0x3c] sm:$0xf] %v323
      %s340 = smul.u32 16, %s16
      %p341 = scmp.lt.s32.totalorder %s340, 31
      %s342 = scalar_select %p341, %s340, 31
      %s343 = smul.addr %s342, 4
      %s344 = scalar_lea.vmem %s4, %s343
      // Predicated region
      $region37: #{physnet_forward.14} parent=35 // pred_check
        %p345 = pneg %p123
      $region38: #{physnet_forward.14} parent=35 // pred_check_branch
        %347 = sbr.rel (%p345) target = $region40
      $region39: #{physnet_forward.14} parent=35 // pred_region
        %s348 = smul.u32 16, %s16
      $region40: #{physnet_forward.14} parent=35 // pred_fallthru
        _
    $region36: #{physnet_forward.14} parent=5 // pred_fallthru
      _
    %p349 = scmp.le.s32.totalorder 2, %s11
    // Predicated region
    $region41: #{physnet_forward.14} parent=5 // pred_check
      %p350 = pneg %p349
    $region42: #{physnet_forward.14} parent=5 // pred_check_branch
      %352 = sbr.rel (%p350) target = $region44
    $region43: #{physnet_forward.14} parent=5 // pred_region
      %s353 = ssub.s32 %s11, 2
      // Predicated region
      $region45: #{physnet_forward.14} parent=43 // pred_check
        %p354 = pneg %p129
      $region46: #{physnet_forward.14} parent=43 // pred_check_branch
        %356 = sbr.rel (%p354) target = $region48
      $region47: #{physnet_forward.14} parent=43 // pred_region
        %s357 = smul.u32 16, %s17
        %p358 = scmp.lt.s32.totalorder %s357, 31
        %s359 = scalar_select %p358, %s357, 31
        %s360 = smul.addr %s359, 4
        %s361 = scalar_lea.vmem %s4, %s360
      $region48: #{physnet_forward.14} parent=43 // pred_fallthru
        _
    $region44: #{physnet_forward.14} parent=5 // pred_fallthru
      _
  $region6: #{physnet_forward.14} parent=0 // loop_footer
    %s15 = sadd.s32 1, %s11
  $region7: #{physnet_forward.14} parent=0 // loop_footer_branch
    %10 = sbr.rel target = $region3
  $region8: #{physnet_forward.14} parent=0 // loop_exit
    _

// kernel: tile.133
$region0: #{tile.133}
  #allocation0 [shape = 's32[1]{0}', space=sflag, size = 0x4, scoped, tag = 'scoped memory for tile.133']
  %s0 = inlined_call_operand.vmem [shape: f32[64], index: 0, kind: input, shape index: {}]
  %s1 = inlined_call_operand.vmem [shape: f32[2,64], index: 1, kind: output, shape index: {}]
  // Predicated region
  $region2: #{tile.133} parent=0 // pred_check
    _
  $region3: #{tile.133} parent=0 // pred_check_branch
    %3 = sbr.rel (0) target = $region5
  $region4: #{tile.133} parent=0 // pred_region
    _
  $region5: #{tile.133} parent=0 // pred_fallthru
    _
  %v4 = vld [vmem:[%s0] ss:$0 sm:$0xff]
  %5 = vst [vmem:[%s1] sm:$0x3] %v4

// kernel: tile.134
$region0: #{tile.134}
  %s0 = inlined_call_operand.vmem [shape: f32[2,64], index: 0, kind: input, shape index: {}]
  %s1 = inlined_call_operand.vmem [shape: f32[1,128], index: 1, kind: output, shape index: {}]
  $region1: #{tile.134} parent=0
    #allocation0 [shape = 'u8[4096]{0}', space=vmem, size = 0x1000, scoped, tag = 'scoped mem for output reshape']
    #allocation1 [shape = 'u8[4096]{0}', space=vmem, size = 0x1000, scoped, tag = 'scoped mem for input reshape']
    %s3 = ssub.s32 4, 1
    %v4 = vld [vmem:[%s0] sm:%s3]
    %5 = vst [vmem:[#allocation1] sm:%s3] %v4
    %v6 = vld [vmem:[#allocation1] sm:$0x1]
    %vm7 = vcmask 523264
    %8 = vst.msk [vmem:[#allocation0] sm:$0x1] %vm7, %v6
    %s9 = scalar_lea.vmem [#allocation1], 1
    %v10 = vld [vmem:[%s9] sm:$0x1]
    %11 = vrot.lane.b32.xlu0 %v10, 64
    %v12 = vpop.permute.xlu0 %11
    %vm13 = vcmask 1048064
    %14 = vst.msk [vmem:[#allocation0] sm:$0x1] %vm13, %v12
    %s16 = ssub.s32 2, 1
    %v17 = vld [vmem:[#allocation0] sm:%s16]
    %s19 = ssub.s32 2, 1
    %20 = vst [vmem:[%s1] sm:%s19] %v17

// kernel: physnet_forward.16
$region0: #{physnet_forward.16}
  #allocation0 [shape = 'u32[]', space=smem, size = 0x4, offset = 0x4, fixed_abs, tag = 'smem constant byte address 0x4 - core index']
  #allocation1 [shape = 'u32[72,128]{1,0:T(1,128)}', space=vmem, size = 0x9000, scoped, tag = 'internal scratch']
  #allocation2 [shape = 'f32[1,1]{1,0:T(1,128)S(6)}', space=smem, size = 0x200, scoped, tag = 'scoped memory for physnet_forward.16']
  %s0 = inlined_call_operand.vmem [shape: bf16[64,128], index: 0, kind: input, shape index: {}]
  %s1 = inlined_call_operand.vmem [shape: f32[1,128], index: 1, kind: input, shape index: {}]
  %s2 = inlined_call_operand.vmem [shape: f32[1,128], index: 2, kind: input, shape index: {}]
  %s3 = inlined_call_operand.<no memory space> [shape: f32[1,1], index: 3, kind: input, shape index: {}]
  %s4 = inlined_call_operand.vmem [shape: bf16[64,128], index: 4, kind: output, shape index: {}]
  %s5 = sld [smem:[#allocation0]]
  $region49: #{physnet_forward.16} parent=0
    _
  %s7 = ssub.s32 1, %s5
  %s8 = scalar_select 0, %s7, %s5
  %9 = sst [smem:[#allocation2]] %s3
  loop: start=0, step=1, limit=4
  $region2: #{physnet_forward.16} parent=0 // loop_pre_header
    _
  $region3: #{physnet_forward.16} parent=0 // loop_header
    %s11 = sphi 0, %s15
    %p12 = scmp.ge.s32.totalorder %s11, 4
    %s21 = sphi 0, %s23
    %s24 = sphi 0, %s21
    %s25 = sphi 0, %s24
    %s41 = sphi 0, %s25
    %s45 = sphi 0, %s45
    %s47 = sphi 0, %s45
    %s48 = sphi 0, %s47
    %s62 = sphi 0, %s48
    %s66 = sphi 0, %s66
    %s68 = sphi 0, %s66
    %s69 = sphi 0, %s68
    %s83 = sphi 0, %s69
    %s87 = sphi 0, %s87
    %s89 = sphi 0, %s87
    %s90 = sphi 0, %s89
    %s104 = sphi 0, %s90
    %s110 = sphi 0, %s112
    %s113 = sphi 0, %s110
    %s114 = sphi 0, %s113
    %s130 = sphi 0, %s114
  $region4: #{physnet_forward.16} parent=0 // loop_header_branch
    %14 = sbr.rel (%p12) target = $region8
  $region5: #{physnet_forward.16} parent=0 // loop_body
    %s16 = ssub.s32 %s11, 1
    %s17 = ssub.s32 %s11, 2
    %s18 = sadd.s32 %s11, 1
    %s19 = ssub.s32 %s11, %s18
    %p20 = scmp.eq.s32.totalorder %s19, 0
    %s22 = sadd.s32 %s21, 1
    %s23 = scalar_select %p20, %s21, %s22
    %p26 = pneg %p20
    %p27 = scmp.eq.s32.totalorder %s11, 1
    %p28 = por %p26, %p27
    %p29 = scmp.ne.s32.totalorder %s21, %s24
    %p30 = scmp.eq.s32.totalorder %s11, 0
    %p31 = por %p29, %p30
    %p32 = scmp.ne.s32.totalorder %s21, %s24
    %p33 = scmp.eq.s32.totalorder %s16, 1
    %p34 = por %p32, %p33
    %p35 = scmp.ne.s32.totalorder %s24, %s25
    %p36 = scmp.eq.s32.totalorder %s16, 0
    %p37 = por %p35, %p36
    %p38 = scmp.ne.s32.totalorder %s24, %s25
    %p39 = scmp.eq.s32.totalorder %s17, 1
    %p40 = por %p38, %p39
    %p42 = scmp.ne.s32.totalorder %s25, %s41
    %p43 = scmp.eq.s32.totalorder %s17, 0
    %p44 = por %p42, %p43
    %s46 = sadd.s32 %s45, 1
    %p49 = scmp.eq.s32.totalorder %s11, 1
    %p50 = scmp.ne.s32.totalorder %s45, %s47
    %p51 = scmp.eq.s32.totalorder %s11, 0
    %p52 = por %p50, %p51
    %p53 = scmp.ne.s32.totalorder %s45, %s47
    %p54 = scmp.eq.s32.totalorder %s16, 1
    %p55 = por %p53, %p54
    %p56 = scmp.ne.s32.totalorder %s47, %s48
    %p57 = scmp.eq.s32.totalorder %s16, 0
    %p58 = por %p56, %p57
    %p59 = scmp.ne.s32.totalorder %s47, %s48
    %p60 = scmp.eq.s32.totalorder %s17, 1
    %p61 = por %p59, %p60
    %p63 = scmp.ne.s32.totalorder %s48, %s62
    %p64 = scmp.eq.s32.totalorder %s17, 0
    %p65 = por %p63, %p64
    %s67 = sadd.s32 %s66, 1
    %p70 = scmp.eq.s32.totalorder %s11, 1
    %p71 = scmp.ne.s32.totalorder %s66, %s68
    %p72 = scmp.eq.s32.totalorder %s11, 0
    %p73 = por %p71, %p72
    %p74 = scmp.ne.s32.totalorder %s66, %s68
    %p75 = scmp.eq.s32.totalorder %s16, 1
    %p76 = por %p74, %p75
    %p77 = scmp.ne.s32.totalorder %s68, %s69
    %p78 = scmp.eq.s32.totalorder %s16, 0
    %p79 = por %p77, %p78
    %p80 = scmp.ne.s32.totalorder %s68, %s69
    %p81 = scmp.eq.s32.totalorder %s17, 1
    %p82 = por %p80, %p81
    %p84 = scmp.ne.s32.totalorder %s69, %s83
    %p85 = scmp.eq.s32.totalorder %s17, 0
    %p86 = por %p84, %p85
    %s88 = sadd.s32 %s87, 1
    %p91 = scmp.eq.s32.totalorder %s11, 1
    %p92 = scmp.ne.s32.totalorder %s87, %s89
    %p93 = scmp.eq.s32.totalorder %s11, 0
    %p94 = por %p92, %p93
    %p95 = scmp.ne.s32.totalorder %s87, %s89
    %p96 = scmp.eq.s32.totalorder %s16, 1
    %p97 = por %p95, %p96
    %p98 = scmp.ne.s32.totalorder %s89, %s90
    %p99 = scmp.eq.s32.totalorder %s16, 0
    %p100 = por %p98, %p99
    %p101 = scmp.ne.s32.totalorder %s89, %s90
    %p102 = scmp.eq.s32.totalorder %s17, 1
    %p103 = por %p101, %p102
    %p105 = scmp.ne.s32.totalorder %s90, %s104
    %p106 = scmp.eq.s32.totalorder %s17, 0
    %p107 = por %p105, %p106
    %s108 = ssub.s32 %s11, %s18
    %p109 = scmp.eq.s32.totalorder %s108, 0
    %s111 = sadd.s32 %s110, 1
    %s112 = scalar_select %p109, %s110, %s111
    %p115 = pneg %p109
    %p116 = scmp.eq.s32.totalorder %s11, 1
    %p117 = por %p115, %p116
    %p118 = scmp.ne.s32.totalorder %s110, %s113
    %p119 = scmp.eq.s32.totalorder %s11, 0
    %p120 = por %p118, %p119
    %p121 = scmp.ne.s32.totalorder %s110, %s113
    %p122 = scmp.eq.s32.totalorder %s16, 1
    %p123 = por %p121, %p122
    %p124 = scmp.ne.s32.totalorder %s113, %s114
    %p125 = scmp.eq.s32.totalorder %s16, 0
    %p126 = por %p124, %p125
    %p127 = scmp.ne.s32.totalorder %s113, %s114
    %p128 = scmp.eq.s32.totalorder %s17, 1
    %p129 = por %p127, %p128
    %p131 = scmp.ne.s32.totalorder %s114, %s130
    %p132 = scmp.eq.s32.totalorder %s17, 0
    %p133 = por %p131, %p132
    %p134 = scmp.le.s32.totalorder 1, %s11
    %p135 = scmp.lt.s32.totalorder %s11, 3
    %p136 = pnand %p134, %p135
    %p137 = pneg %p136
    // Predicated region
    $region9: #{physnet_forward.16} parent=5 // pred_check
      _
    $region10: #{physnet_forward.16} parent=5 // pred_check_branch
      %139 = sbr.rel (%p136) target = $region12
    $region11: #{physnet_forward.16} parent=5 // pred_region
      %s140 = ssub.s32 %s11, 1
      // Predicated region
      $region13: #{physnet_forward.16} parent=11 // pred_check
        %p141 = pneg %p58
      $region14: #{physnet_forward.16} parent=11 // pred_check_branch
        %143 = sbr.rel (%p141) target = $region16
      $region15: #{physnet_forward.16} parent=11 // pred_region
        _
      $region16: #{physnet_forward.16} parent=11 // pred_fallthru
        _
      // Predicated region
      $region17: #{physnet_forward.16} parent=11 // pred_check
        %p144 = pneg %p79
      $region18: #{physnet_forward.16} parent=11 // pred_check_branch
        %146 = sbr.rel (%p144) target = $region20
      $region19: #{physnet_forward.16} parent=11 // pred_region
        _
      $region20: #{physnet_forward.16} parent=11 // pred_fallthru
        _
      // Predicated region
      $region21: #{physnet_forward.16} parent=11 // pred_check
        %p147 = pneg %p100
      $region22: #{physnet_forward.16} parent=11 // pred_check_branch
        %149 = sbr.rel (%p147) target = $region24
      $region23: #{physnet_forward.16} parent=11 // pred_region
        _
      $region24: #{physnet_forward.16} parent=11 // pred_fallthru
        _
    $region12: #{physnet_forward.16} parent=5 // pred_fallthru
      _
    %p150 = scmp.lt.s32.totalorder %s11, 2
    // Predicated region
    $region25: #{physnet_forward.16} parent=5 // pred_check
      %p151 = pneg %p150
    $region26: #{physnet_forward.16} parent=5 // pred_check_branch
      %153 = sbr.rel (%p151) target = $region28
    $region27: #{physnet_forward.16} parent=5 // pred_region
      // Predicated region
      $region29: #{physnet_forward.16} parent=27 // pred_check
        %p154 = pneg %p31
      $region30: #{physnet_forward.16} parent=27 // pred_check_branch
        %156 = sbr.rel (%p154) target = $region32
      $region31: #{physnet_forward.16} parent=27 // pred_region
        %s157 = smul.u32 4, %s11
        %p158 = scmp.lt.s32.totalorder %s157, 7
        %s159 = scalar_select %p158, %s157, 7
        %s160 = smul.addr %s159, 4
        %s161 = scalar_lea.vmem %s0, %s160
        %s162 = smul.u32 4, %s11
      $region32: #{physnet_forward.16} parent=27 // pred_fallthru
        _
    $region28: #{physnet_forward.16} parent=5 // pred_fallthru
      _
    %p163 = scmp.le.s32.totalorder 1, %s11
    %p164 = scmp.lt.s32.totalorder %s11, 3
    %p165 = pnand %p163, %p164
    %p166 = pneg %p165
    // Predicated region
    $region33: #{physnet_forward.16} parent=5 // pred_check
      _
    $region34: #{physnet_forward.16} parent=5 // pred_check_branch
      %168 = sbr.rel (%p165) target = $region36
    $region35: #{physnet_forward.16} parent=5 // pred_region
      %s169 = ssub.s32 %s11, 1
      %s170 = smul.u32 4, %s16
      %p171 = scmp.lt.s32.totalorder %s170, 7
      %s172 = scalar_select %p171, %s170, 7
      %s173 = smul.addr %s172, 4
      %s174 = scalar_lea.vmem %s0, %s173
      %p175 = pneg %p37
      %p176 = pneg %p34
      %p177 = pneg %p58
      %p178 = pneg %p55
      %p179 = pneg %p79
      %p180 = pneg %p76
      %p181 = pneg %p100
      %p182 = pneg %p97
      %p183 = pneg %p126
      %p184 = pneg %p123
      %s185 = smul.u32 4, %s16
      %p186 = scmp.lt.s32.totalorder %s185, 7
      %s187 = scalar_select %p186, %s185, 7
      %s188 = smul.addr %s187, 4
      %s189 = scalar_lea.vmem %s4, %s188
      %s190 = smul.u32 4, %s16
      %p191 = scmp.lt.s32.totalorder %s190, 7
      %s192 = scalar_select %p191, %s190, 7
      %s193 = smul.addr %s192, 4
      %s194 = scalar_lea.vmem %s0, %s193
      %s195 = smul.u32 4, %s16
      %s196 = smul.u32 4, %s16
      %p197 = scmp.lt.s32.totalorder %s196, 7
      %s198 = scalar_select %p197, %s196, 7
      %s199 = smul.addr %s198, 4
      %s200 = scalar_lea.vmem %s4, %s199
      %s201 = smul.u32 4, %s16
      %v202 = vld [vmem:[%s194] sm:$0xf]
      %v203 = vld [vmem:[%s194 + $0x4] sm:$0xf]
      %v204 = vld [vmem:[%s194 + $0x8] sm:$0xf]
      %v205 = vld [vmem:[%s194 + $0xc] sm:$0xf]
      %v206 = vunpack.c.l.bf16 %v202
      %v207 = vunpack.c.l.bf16 %v203
      %v208 = vunpack.c.l.bf16 %v204
      %v209 = vunpack.c.l.bf16 %v205
      %v210 = vld [vmem:[%s1] sm:$0x1]
      %v212 = vperm.slane %v210, 0
      %v214 = vmul.f32 %v206, %v212
      %v215 = vmul.f32 %v207, %v212
      %v216 = vmul.f32 %v208, %v212
      %v217 = vmul.f32 %v209, %v212
      %v218 = vld [vmem:[%s2] sm:$0x1]
      %v220 = vperm.slane %v218, 0
      %v222 = vadd.f32 %v214, %v220
      %v223 = vadd.f32 %v215, %v220
      %v224 = vadd.f32 %v216, %v220
      %v225 = vadd.f32 %v217, %v220
      %v226 = vmax.f32 %v222, 0.0
      %v227 = vmax.f32 %v223, 0.0
      %v228 = vmax.f32 %v224, 0.0
      %v229 = vmax.f32 %v225, 0.0
      %s230 = sld [smem:[#allocation2]]
      %v231 = vstv %s230
      %v232 = vmul.f32 %v226, %v231
      %v233 = vmul.f32 %v227, %v231
      %v234 = vmul.f32 %v228, %v231
      %v235 = vmul.f32 %v229, %v231
      %v236 = vpack.c.bf16 %v232, %v232
      %v237 = vpack.c.bf16 %v233, %v233
      %v238 = vpack.c.bf16 %v234, %v234
      %v239 = vpack.c.bf16 %v235, %v235
      %240 = vst [vmem:[%s200] sm:$0xf] %v236
      %241 = vst [vmem:[%s200 + $0x4] sm:$0xf] %v237
      %242 = vst [vmem:[%s200 + $0x8] sm:$0xf] %v238
      %243 = vst [vmem:[%s200 + $0xc] sm:$0xf] %v239
      %s244 = smul.u32 4, %s16
      %p245 = scmp.lt.s32.totalorder %s244, 7
      %s246 = scalar_select %p245, %s244, 7
      %s247 = smul.addr %s246, 4
      %s248 = scalar_lea.vmem %s4, %s247
      // Predicated region
      $region37: #{physnet_forward.16} parent=35 // pred_check
        %p249 = pneg %p123
      $region38: #{physnet_forward.16} parent=35 // pred_check_branch
        %251 = sbr.rel (%p249) target = $region40
      $region39: #{physnet_forward.16} parent=35 // pred_region
        %s252 = smul.u32 4, %s16
      $region40: #{physnet_forward.16} parent=35 // pred_fallthru
        _
    $region36: #{physnet_forward.16} parent=5 // pred_fallthru
      _
    %p253 = scmp.le.s32.totalorder 2, %s11
    // Predicated region
    $region41: #{physnet_forward.16} parent=5 // pred_check
      %p254 = pneg %p253
    $region42: #{physnet_forward.16} parent=5 // pred_check_branch
      %256 = sbr.rel (%p254) target = $region44
    $region43: #{physnet_forward.16} parent=5 // pred_region
      %s257 = ssub.s32 %s11, 2
      // Predicated region
      $region45: #{physnet_forward.16} parent=43 // pred_check
        %p258 = pneg %p129
      $region46: #{physnet_forward.16} parent=43 // pred_check_branch
        %260 = sbr.rel (%p258) target = $region48
      $region47: #{physnet_forward.16} parent=43 // pred_region
        %s261 = smul.u32 4, %s17
        %p262 = scmp.lt.s32.totalorder %s261, 7
        %s263 = scalar_select %p262, %s261, 7
        %s264 = smul.addr %s263, 4
        %s265 = scalar_lea.vmem %s4, %s264
      $region48: #{physnet_forward.16} parent=43 // pred_fallthru
        _
    $region44: #{physnet_forward.16} parent=5 // pred_fallthru
      _
  $region6: #{physnet_forward.16} parent=0 // loop_footer
    %s15 = sadd.s32 1, %s11
  $region7: #{physnet_forward.16} parent=0 // loop_footer_branch
    %10 = sbr.rel target = $region3
  $region8: #{physnet_forward.16} parent=0 // loop_exit
    _

// kernel: reverse
$region0: #{reverse}
  #allocation0 [shape = 's32[1]{0}', space=sflag, size = 0x4, scoped, tag = 'scoped memory for reverse']
  %s0 = inlined_call_operand.vmem [shape: bf16[64,64,3,3,3], index: 0, kind: input, shape index: {}]
  %s1 = inlined_call_operand.vmem [shape: bf16[64,64,3,3,3], index: 1, kind: output, shape index: {}]
  %s2 = scalar_lea.vmem %s0, 832
  %v3 = vld [vmem:[%s2] sm:$0xf]
  %v4 = vunpack.c.l.bf16 %v3
  %v5 = vunpack.c.h.bf16 %v3
  %v6 = vpack.c.bf16 0.0, %v4
  %7 = vst [vmem:[%s1] sm:$0xf] %v6
  %s8 = scalar_lea.vmem %s0, 544
  %v9 = vld [vmem:[%s8] sm:$0xf]
  %v10 = vunpack.c.l.bf16 %v9
  %v11 = vunpack.c.h.bf16 %v9
  %s12 = scalar_lea.vmem %s1, 288
  %v13 = vpack.c.bf16 0.0, %v10
  %14 = vst [vmem:[%s12] sm:$0xf] %v13
  %s15 = scalar_lea.vmem %s0, 256
  %v16 = vld [vmem:[%s15] sm:$0xf]
  %v17 = vunpack.c.l.bf16 %v16
  %v18 = vunpack.c.h.bf16 %v16
  %s19 = scalar_lea.vmem %s1, 576
  %v20 = vpack.c.bf16 0.0, %v17
  %21 = vst [vmem:[%s19] sm:$0xf] %v20
  %s22 = scalar_lea.vmem %s0, 736
  %v23 = vld [vmem:[%s22] sm:$0xf]
  %v24 = vunpack.c.l.bf16 %v23
  %v25 = vunpack.c.h.bf16 %v23
  %s26 = scalar_lea.vmem %s1, 96
  %v27 = vpack.c.bf16 0.0, %v24
  %28 = vst [vmem:[%s26] sm:$0xf] %v27
  %s29 = scalar_lea.vmem %s0, 448
  %v30 = vld [vmem:[%s29] sm:$0xf]
  %v31 = vunpack.c.l.bf16 %v30
  %v32 = vunpack.c.h.bf16 %v30
  %s33 = scalar_lea.vmem %s1, 384
  %v34 = vpack.c.bf16 0.0, %v31
  %35 = vst [vmem:[%s33] sm:$0xf] %v34
  %s36 = scalar_lea.vmem %s0, 160
  %v37 = vld [vmem:[%s36] sm:$0xf]
  %v38 = vunpack.c.l.bf16 %v37
  %v39 = vunpack.c.h.bf16 %v37
  %s40 = scalar_lea.vmem %s1, 672
  %v41 = vpack.c.bf16 0.0, %v38
  %42 = vst [vmem:[%s40] sm:$0xf] %v41
  %s43 = scalar_lea.vmem %s0, 640
  %v44 = vld [vmem:[%s43] sm:$0xf]
  %v45 = vunpack.c.l.bf16 %v44
  %v46 = vunpack.c.h.bf16 %v44
  %s47 = scalar_lea.vmem %s1, 192
  %v48 = vpack.c.bf16 0.0, %v45
  %49 = vst [vmem:[%s47] sm:$0xf] %v48
  %s50 = scalar_lea.vmem %s0, 352
  %v51 = vld [vmem:[%s50] sm:$0xf]
  %v52 = vunpack.c.l.bf16 %v51
  %v53 = vunpack.c.h.bf16 %v51
  %s54 = scalar_lea.vmem %s1, 480
  %v55 = vpack.c.bf16 0.0, %v52
  %56 = vst [vmem:[%s54] sm:$0xf] %v55
  %s57 = scalar_lea.vmem %s0, 64
  %v58 = vld [vmem:[%s57] sm:$0xf]
  %v59 = vunpack.c.l.bf16 %v58
  %v60 = vunpack.c.h.bf16 %v58
  %s61 = scalar_lea.vmem %s1, 768
  %v62 = vpack.c.bf16 0.0, %v59
  %63 = vst [vmem:[%s61] sm:$0xf] %v62
  %s64 = scalar_lea.vmem %s0, 800
  %v65 = vld [vmem:[%s64] sm:$0xf]
  %v66 = vunpack.c.l.bf16 %v65
  %v67 = vunpack.c.h.bf16 %v65
  %s68 = scalar_lea.vmem %s1, 32
  %v69 = vpack.c.bf16 0.0, %v66
  %70 = vst [vmem:[%s68] sm:$0xf] %v69
  %s71 = scalar_lea.vmem %s0, 512
  %v72 = vld [vmem:[%s71] sm:$0xf]
  %v73 = vunpack.c.l.bf16 %v72
  %v74 = vunpack.c.h.bf16 %v72
  %s75 = scalar_lea.vmem %s1, 320
  %v76 = vpack.c.bf16 0.0, %v73
  %77 = vst [vmem:[%s75] sm:$0xf] %v76
  %s78 = scalar_lea.vmem %s0, 224
  %v79 = vld [vmem:[%s78] sm:$0xf]
  %v80 = vunpack.c.l.bf16 %v79
  %v81 = vunpack.c.h.bf16 %v79
  %s82 = scalar_lea.vmem %s1, 608
  %v83 = vpack.c.bf16 0.0, %v80
  %84 = vst [vmem:[%s82] sm:$0xf] %v83
  %s85 = scalar_lea.vmem %s0, 704
  %v86 = vld [vmem:[%s85] sm:$0xf]
  %v87 = vunpack.c.l.bf16 %v86
  %v88 = vunpack.c.h.bf16 %v86
  %s89 = scalar_lea.vmem %s1, 128
  %v90 = vpack.c.bf16 0.0, %v87
  %91 = vst [vmem:[%s89] sm:$0xf] %v90
  %s92 = scalar_lea.vmem %s0, 416
  %v93 = vld [vmem:[%s92] sm:$0xf]
  %v94 = vunpack.c.l.bf16 %v93
  %v95 = vunpack.c.h.bf16 %v93
  %s96 = scalar_lea.vmem %s1, 416
  %v97 = vpack.c.bf16 0.0, %v94
  %98 = vst [vmem:[%s96] sm:$0xf] %v97
  %s99 = scalar_lea.vmem %s0, 128
  %v100 = vld [vmem:[%s99] sm:$0xf]
  %v101 = vunpack.c.l.bf16 %v100
  %v102 = vunpack.c.h.bf16 %v100
  %s103 = scalar_lea.vmem %s1, 704
  %v104 = vpack.c.bf16 0.0, %v101
  %105 = vst [vmem:[%s103] sm:$0xf] %v104
  %s106 = scalar_lea.vmem %s0, 608
  %v107 = vld [vmem:[%s106] sm:$0xf]
  %v108 = vunpack.c.l.bf16 %v107
  %v109 = vunpack.c.h.bf16 %v107
  %s110 = scalar_lea.vmem %s1, 224
  %v111 = vpack.c.bf16 0.0, %v108
  %112 = vst [vmem:[%s110] sm:$0xf] %v111
  %s113 = scalar_lea.vmem %s0, 320
  %v114 = vld [vmem:[%s113] sm:$0xf]
  %v115 = vunpack.c.l.bf16 %v114
  %v116 = vunpack.c.h.bf16 %v114
  %s117 = scalar_lea.vmem %s1, 512
  %v118 = vpack.c.bf16 0.0, %v115
  %119 = vst [vmem:[%s117] sm:$0xf] %v118
  %s120 = scalar_lea.vmem %s0, 32
  %v121 = vld [vmem:[%s120] sm:$0xf]
  %v122 = vunpack.c.l.bf16 %v121
  %v123 = vunpack.c.h.bf16 %v121
  %s124 = scalar_lea.vmem %s1, 800
  %v125 = vpack.c.bf16 0.0, %v122
  %126 = vst [vmem:[%s124] sm:$0xf] %v125
  %s127 = scalar_lea.vmem %s0, 768
  %v128 = vld [vmem:[%s127] sm:$0xf]
  %v129 = vunpack.c.l.bf16 %v128
  %v130 = vunpack.c.h.bf16 %v128
  %s131 = scalar_lea.vmem %s1, 64
  %v132 = vpack.c.bf16 0.0, %v129
  %133 = vst [vmem:[%s131] sm:$0xf] %v132
  %s134 = scalar_lea.vmem %s0, 480
  %v135 = vld [vmem:[%s134] sm:$0xf]
  %v136 = vunpack.c.l.bf16 %v135
  %v137 = vunpack.c.h.bf16 %v135
  %s138 = scalar_lea.vmem %s1, 352
  %v139 = vpack.c.bf16 0.0, %v136
  %140 = vst [vmem:[%s138] sm:$0xf] %v139
  %s141 = scalar_lea.vmem %s0, 192
  %v142 = vld [vmem:[%s141] sm:$0xf]
  %v143 = vunpack.c.l.bf16 %v142
  %v144 = vunpack.c.h.bf16 %v142
  %s145 = scalar_lea.vmem %s1, 640
  %v146 = vpack.c.bf16 0.0, %v143
  %147 = vst [vmem:[%s145] sm:$0xf] %v146
  %s148 = scalar_lea.vmem %s0, 672
  %v149 = vld [vmem:[%s148] sm:$0xf]
  %v150 = vunpack.c.l.bf16 %v149
  %v151 = vunpack.c.h.bf16 %v149
  %s152 = scalar_lea.vmem %s1, 160
  %v153 = vpack.c.bf16 0.0, %v150
  %154 = vst [vmem:[%s152] sm:$0xf] %v153
  %s155 = scalar_lea.vmem %s0, 384
  %v156 = vld [vmem:[%s155] sm:$0xf]
  %v157 = vunpack.c.l.bf16 %v156
  %v158 = vunpack.c.h.bf16 %v156
  %s159 = scalar_lea.vmem %s1, 448
  %v160 = vpack.c.bf16 0.0, %v157
  %161 = vst [vmem:[%s159] sm:$0xf] %v160
  %s162 = scalar_lea.vmem %s0, 96
  %v163 = vld [vmem:[%s162] sm:$0xf]
  %v164 = vunpack.c.l.bf16 %v163
  %v165 = vunpack.c.h.bf16 %v163
  %s166 = scalar_lea.vmem %s1, 736
  %v167 = vpack.c.bf16 0.0, %v164
  %168 = vst [vmem:[%s166] sm:$0xf] %v167
  %s169 = scalar_lea.vmem %s0, 576
  %v170 = vld [vmem:[%s169] sm:$0xf]
  %v171 = vunpack.c.l.bf16 %v170
  %v172 = vunpack.c.h.bf16 %v170
  %s173 = scalar_lea.vmem %s1, 256
  %v174 = vpack.c.bf16 0.0, %v171
  %175 = vst [vmem:[%s173] sm:$0xf] %v174
  %s176 = scalar_lea.vmem %s0, 288
  %v177 = vld [vmem:[%s176] sm:$0xf]
  %v178 = vunpack.c.l.bf16 %v177
  %v179 = vunpack.c.h.bf16 %v177
  %s180 = scalar_lea.vmem %s1, 544
  %v181 = vpack.c.bf16 0.0, %v178
  %182 = vst [vmem:[%s180] sm:$0xf] %v181
  %v183 = vld [vmem:[%s0] sm:$0xf]
  %v184 = vunpack.c.l.bf16 %v183
  %v185 = vunpack.c.h.bf16 %v183
  %s186 = scalar_lea.vmem %s1, 832
  %v187 = vpack.c.bf16 0.0, %v184
  %188 = vst [vmem:[%s186] sm:$0xf] %v187
  %s189 = scalar_lea.vmem %s0, 836
  %v190 = vld [vmem:[%s189] sm:$0xf]
  %v191 = vunpack.c.l.bf16 %v190
  %v192 = vunpack.c.h.bf16 %v190
  %s193 = scalar_lea.vmem %s1, 4
  %v194 = vpack.c.bf16 0.0, %v191
  %195 = vst [vmem:[%s193] sm:$0xf] %v194
  %s196 = scalar_lea.vmem %s0, 548
  %v197 = vld [vmem:[%s196] sm:$0xf]
  %v198 = vunpack.c.l.bf16 %v197
  %v199 = vunpack.c.h.bf16 %v197
  %s200 = scalar_lea.vmem %s1, 292
  %v201 = vpack.c.bf16 0.0, %v198
  %202 = vst [vmem:[%s200] sm:$0xf] %v201
  %s203 = scalar_lea.vmem %s0, 260
  %v204 = vld [vmem:[%s203] sm:$0xf]
  %v205 = vunpack.c.l.bf16 %v204
  %v206 = vunpack.c.h.bf16 %v204
  %s207 = scalar_lea.vmem %s1, 580
  %v208 = vpack.c.bf16 0.0, %v205
  %209 = vst [vmem:[%s207] sm:$0xf] %v208
  %s210 = scalar_lea.vmem %s0, 740
  %v211 = vld [vmem:[%s210] sm:$0xf]
  %v212 = vunpack.c.l.bf16 %v211
  %v213 = vunpack.c.h.bf16 %v211
  %s214 = scalar_lea.vmem %s1, 100
  %v215 = vpack.c.bf16 0.0, %v212
  %216 = vst [vmem:[%s214] sm:$0xf] %v215
  %s217 = scalar_lea.vmem %s0, 452
  %v218 = vld [vmem:[%s217] sm:$0xf]
  %v219 = vunpack.c.l.bf16 %v218
  %v220 = vunpack.c.h.bf16 %v218
  %s221 = scalar_lea.vmem %s1, 388
  %v222 = vpack.c.bf16 0.0, %v219
  %223 = vst [vmem:[%s221] sm:$0xf] %v222
  %s224 = scalar_lea.vmem %s0, 164
  %v225 = vld [vmem:[%s224] sm:$0xf]
  %v226 = vunpack.c.l.bf16 %v225
  %v227 = vunpack.c.h.bf16 %v225
  %s228 = scalar_lea.vmem %s1, 676
  %v229 = vpack.c.bf16 0.0, %v226
  %230 = vst [vmem:[%s228] sm:$0xf] %v229
  %s231 = scalar_lea.vmem %s0, 644
  %v232 = vld [vmem:[%s231] sm:$0xf]
  %v233 = vunpack.c.l.bf16 %v232
  %v234 = vunpack.c.h.bf16 %v232
  %s235 = scalar_lea.vmem %s1, 196
  %v236 = vpack.c.bf16 0.0, %v233
  %237 = vst [vmem:[%s235] sm:$0xf] %v236
  %s238 = scalar_lea.vmem %s0, 356
  %v239 = vld [vmem:[%s238] sm:$0xf]
  %v240 = vunpack.c.l.bf16 %v239
  %v241 = vunpack.c.h.bf16 %v239
  %s242 = scalar_lea.vmem %s1, 484
  %v243 = vpack.c.bf16 0.0, %v240
  %244 = vst [vmem:[%s242] sm:$0xf] %v243
  %s245 = scalar_lea.vmem %s0, 68
  %v246 = vld [vmem:[%s245] sm:$0xf]
  %v247 = vunpack.c.l.bf16 %v246
  %v248 = vunpack.c.h.bf16 %v246
  %s249 = scalar_lea.vmem %s1, 772
  %v250 = vpack.c.bf16 0.0, %v247
  %251 = vst [vmem:[%s249] sm:$0xf] %v250
  %s252 = scalar_lea.vmem %s0, 804
  %v253 = vld [vmem:[%s252] sm:$0xf]
  %v254 = vunpack.c.l.bf16 %v253
  %v255 = vunpack.c.h.bf16 %v253
  %s256 = scalar_lea.vmem %s1, 36
  %v257 = vpack.c.bf16 0.0, %v254
  %258 = vst [vmem:[%s256] sm:$0xf] %v257
  %s259 = scalar_lea.vmem %s0, 516
  %v260 = vld [vmem:[%s259] sm:$0xf]
  %v261 = vunpack.c.l.bf16 %v260
  %v262 = vunpack.c.h.bf16 %v260
  %s263 = scalar_lea.vmem %s1, 324
  %v264 = vpack.c.bf16 0.0, %v261
  %265 = vst [vmem:[%s263] sm:$0xf] %v264
  %s266 = scalar_lea.vmem %s0, 228
  %v267 = vld [vmem:[%s266] sm:$0xf]
  %v268 = vunpack.c.l.bf16 %v267
  %v269 = vunpack.c.h.bf16 %v267
  %s270 = scalar_lea.vmem %s1, 612
  %v271 = vpack.c.bf16 0.0, %v268
  %272 = vst [vmem:[%s270] sm:$0xf] %v271
  %s273 = scalar_lea.vmem %s0, 708
  %v274 = vld [vmem:[%s273] sm:$0xf]
  %v275 = vunpack.c.l.bf16 %v274
  %v276 = vunpack.c.h.bf16 %v274
  %s277 = scalar_lea.vmem %s1, 132
  %v278 = vpack.c.bf16 0.0, %v275
  %279 = vst [vmem:[%s277] sm:$0xf] %v278
  %s280 = scalar_lea.vmem %s0, 420
  %v281 = vld [vmem:[%s280] sm:$0xf]
  %v282 = vunpack.c.l.bf16 %v281
  %v283 = vunpack.c.h.bf16 %v281
  %s284 = scalar_lea.vmem %s1, 420
  %v285 = vpack.c.bf16 0.0, %v282
  %286 = vst [vmem:[%s284] sm:$0xf] %v285
  %s287 = scalar_lea.vmem %s0, 132
  %v288 = vld [vmem:[%s287] sm:$0xf]
  %v289 = vunpack.c.l.bf16 %v288
  %v290 = vunpack.c.h.bf16 %v288
  %s291 = scalar_lea.vmem %s1, 708
  %v292 = vpack.c.bf16 0.0, %v289
  %293 = vst [vmem:[%s291] sm:$0xf] %v292
  %s294 = scalar_lea.vmem %s0, 612
  %v295 = vld [vmem:[%s294] sm:$0xf]
  %v296 = vunpack.c.l.bf16 %v295
  %v297 = vunpack.c.h.bf16 %v295
  %s298 = scalar_lea.vmem %s1, 228
  %v299 = vpack.c.bf16 0.0, %v296
  %300 = vst [vmem:[%s298] sm:$0xf] %v299
  %s301 = scalar_lea.vmem %s0, 324
  %v302 = vld [vmem:[%s301] sm:$0xf]
  %v303 = vunpack.c.l.bf16 %v302
  %v304 = vunpack.c.h.bf16 %v302
  %s305 = scalar_lea.vmem %s1, 516
  %v306 = vpack.c.bf16 0.0, %v303
  %307 = vst [vmem:[%s305] sm:$0xf] %v306
  %s308 = scalar_lea.vmem %s0, 36
  %v309 = vld [vmem:[%s308] sm:$0xf]
  %v310 = vunpack.c.l.bf16 %v309
  %v311 = vunpack.c.h.bf16 %v309
  %s312 = scalar_lea.vmem %s1, 804
  %v313 = vpack.c.bf16 0.0, %v310
  %314 = vst [vmem:[%s312] sm:$0xf] %v313
  %s315 = scalar_lea.vmem %s0, 772
  %v316 = vld [vmem:[%s315] sm:$0xf]
  %v317 = vunpack.c.l.bf16 %v316
  %v318 = vunpack.c.h.bf16 %v316
  %s319 = scalar_lea.vmem %s1, 68
  %v320 = vpack.c.bf16 0.0, %v317
  %321 = vst [vmem:[%s319] sm:$0xf] %v320
  %s322 = scalar_lea.vmem %s0, 484
  %v323 = vld [vmem:[%s322] sm:$0xf]
  %v324 = vunpack.c.l.bf16 %v323
  %v325 = vunpack.c.h.bf16 %v323
  %s326 = scalar_lea.vmem %s1, 356
  %v327 = vpack.c.bf16 0.0, %v324
  %328 = vst [vmem:[%s326] sm:$0xf] %v327
  %s329 = scalar_lea.vmem %s0, 196
  %v330 = vld [vmem:[%s329] sm:$0xf]
  %v331 = vunpack.c.l.bf16 %v330
  %v332 = vunpack.c.h.bf16 %v330
  %s333 = scalar_lea.vmem %s1, 644
  %v334 = vpack.c.bf16 0.0, %v331
  %335 = vst [vmem:[%s333] sm:$0xf] %v334
  %s336 = scalar_lea.vmem %s0, 676
  %v337 = vld [vmem:[%s336] sm:$0xf]
  %v338 = vunpack.c.l.bf16 %v337
  %v339 = vunpack.c.h.bf16 %v337
  %s340 = scalar_lea.vmem %s1, 164
  %v341 = vpack.c.bf16 0.0, %v338
  %342 = vst [vmem:[%s340] sm:$0xf] %v341
  %s343 = scalar_lea.vmem %s0, 388
  %v344 = vld [vmem:[%s343] sm:$0xf]
  %v345 = vunpack.c.l.bf16 %v344
  %v346 = vunpack.c.h.bf16 %v344
  %s347 = scalar_lea.vmem %s1, 452
  %v348 = vpack.c.bf16 0.0, %v345
  %349 = vst [vmem:[%s347] sm:$0xf] %v348
  %s350 = scalar_lea.vmem %s0, 100
  %v351 = vld [vmem:[%s350] sm:$0xf]
  %v352 = vunpack.c.l.bf16 %v351
  %v353 = vunpack.c.h.bf16 %v351
  %s354 = scalar_lea.vmem %s1, 740
  %v355 = vpack.c.bf16 0.0, %v352
  %356 = vst [vmem:[%s354] sm:$0xf] %v355
  %s357 = scalar_lea.vmem %s0, 580
  %v358 = vld [vmem:[%s357] sm:$0xf]
  %v359 = vunpack.c.l.bf16 %v358
  %v360 = vunpack.c.h.bf16 %v358
  %s361 = scalar_lea.vmem %s1, 260
  %v362 = vpack.c.bf16 0.0, %v359
  %363 = vst [vmem:[%s361] sm:$0xf] %v362
  %s364 = scalar_lea.vmem %s0, 292
  %v365 = vld [vmem:[%s364] sm:$0xf]
  %v366 = vunpack.c.l.bf16 %v365
  %v367 = vunpack.c.h.bf16 %v365
  %s368 = scalar_lea.vmem %s1, 548
  %v369 = vpack.c.bf16 0.0, %v366
  %370 = vst [vmem:[%s368] sm:$0xf] %v369
  %s371 = scalar_lea.vmem %s0, 4
  %v372 = vld [vmem:[%s371] sm:$0xf]
  %v373 = vunpack.c.l.bf16 %v372
  %v374 = vunpack.c.h.bf16 %v372
  %s375 = scalar_lea.vmem %s1, 836
  %v376 = vpack.c.bf16 0.0, %v373
  %377 = vst [vmem:[%s375] sm:$0xf] %v376
  %s378 = scalar_lea.vmem %s0, 840
  %v379 = vld [vmem:[%s378] sm:$0xf]
  %v380 = vunpack.c.l.bf16 %v379
  %v381 = vunpack.c.h.bf16 %v379
  %s382 = scalar_lea.vmem %s1, 8
  %v383 = vpack.c.bf16 0.0, %v380
  %384 = vst [vmem:[%s382] sm:$0xf] %v383
  %s385 = scalar_lea.vmem %s0, 552
  %v386 = vld [vmem:[%s385] sm:$0xf]
  %v387 = vunpack.c.l.bf16 %v386
  %v388 = vunpack.c.h.bf16 %v386
  %s389 = scalar_lea.vmem %s1, 296
  %v390 = vpack.c.bf16 0.0, %v387
  %391 = vst [vmem:[%s389] sm:$0xf] %v390
  %s392 = scalar_lea.vmem %s0, 264
  %v393 = vld [vmem:[%s392] sm:$0xf]
  %v394 = vunpack.c.l.bf16 %v393
  %v395 = vunpack.c.h.bf16 %v393
  %s396 = scalar_lea.vmem %s1, 584
  %v397 = vpack.c.bf16 0.0, %v394
  %398 = vst [vmem:[%s396] sm:$0xf] %v397
  %s399 = scalar_lea.vmem %s0, 744
  %v400 = vld [vmem:[%s399] sm:$0xf]
  %v401 = vunpack.c.l.bf16 %v400
  %v402 = vunpack.c.h.bf16 %v400
  %s403 = scalar_lea.vmem %s1, 104
  %v404 = vpack.c.bf16 0.0, %v401
  %405 = vst [vmem:[%s403] sm:$0xf] %v404
  %s406 = scalar_lea.vmem %s0, 456
  %v407 = vld [vmem:[%s406] sm:$0xf]
  %v408 = vunpack.c.l.bf16 %v407
  %v409 = vunpack.c.h.bf16 %v407
  %s410 = scalar_lea.vmem %s1, 392
  %v411 = vpack.c.bf16 0.0, %v408
  %412 = vst [vmem:[%s410] sm:$0xf] %v411
  %s413 = scalar_lea.vmem %s0, 168
  %v414 = vld [vmem:[%s413] sm:$0xf]
  %v415 = vunpack.c.l.bf16 %v414
  %v416 = vunpack.c.h.bf16 %v414
  %s417 = scalar_lea.vmem %s1, 680
  %v418 = vpack.c.bf16 0.0, %v415
  %419 = vst [vmem:[%s417] sm:$0xf] %v418
  %s420 = scalar_lea.vmem %s0, 648
  %v421 = vld [vmem:[%s420] sm:$0xf]
  %v422 = vunpack.c.l.bf16 %v421
  %v423 = vunpack.c.h.bf16 %v421
  %s424 = scalar_lea.vmem %s1, 200
  %v425 = vpack.c.bf16 0.0, %v422
  %426 = vst [vmem:[%s424] sm:$0xf] %v425
  %s427 = scalar_lea.vmem %s0, 360
  %v428 = vld [vmem:[%s427] sm:$0xf]
  %v429 = vunpack.c.l.bf16 %v428
  %v430 = vunpack.c.h.bf16 %v428
  %s431 = scalar_lea.vmem %s1, 488
  %v432 = vpack.c.bf16 0.0, %v429
  %433 = vst [vmem:[%s431] sm:$0xf] %v432
  %s434 = scalar_lea.vmem %s0, 72
  %v435 = vld [vmem:[%s434] sm:$0xf]
  %v436 = vunpack.c.l.bf16 %v435
  %v437 = vunpack.c.h.bf16 %v435
  %s438 = scalar_lea.vmem %s1, 776
  %v439 = vpack.c.bf16 0.0, %v436
  %440 = vst [vmem:[%s438] sm:$0xf] %v439
  %s441 = scalar_lea.vmem %s0, 808
  %v442 = vld [vmem:[%s441] sm:$0xf]
  %v443 = vunpack.c.l.bf16 %v442
  %v444 = vunpack.c.h.bf16 %v442
  %s445 = scalar_lea.vmem %s1, 40
  %v446 = vpack.c.bf16 0.0, %v443
  %447 = vst [vmem:[%s445] sm:$0xf] %v446
  %s448 = scalar_lea.vmem %s0, 520
  %v449 = vld [vmem:[%s448] sm:$0xf]
  %v450 = vunpack.c.l.bf16 %v449
  %v451 = vunpack.c.h.bf16 %v449
  %s452 = scalar_lea.vmem %s1, 328
  %v453 = vpack.c.bf16 0.0, %v450
  %454 = vst [vmem:[%s452] sm:$0xf] %v453
  %s455 = scalar_lea.vmem %s0, 232
  %v456 = vld [vmem:[%s455] sm:$0xf]
  %v457 = vunpack.c.l.bf16 %v456
  %v458 = vunpack.c.h.bf16 %v456
  %s459 = scalar_lea.vmem %s1, 616
  %v460 = vpack.c.bf16 0.0, %v457
  %461 = vst [vmem:[%s459] sm:$0xf] %v460
  %s462 = scalar_lea.vmem %s0, 712
  %v463 = vld [vmem:[%s462] sm:$0xf]
  %v464 = vunpack.c.l.bf16 %v463
  %v465 = vunpack.c.h.bf16 %v463
  %s466 = scalar_lea.vmem %s1, 136
  %v467 = vpack.c.bf16 0.0, %v464
  %468 = vst [vmem:[%s466] sm:$0xf] %v467
  %s469 = scalar_lea.vmem %s0, 424
  %v470 = vld [vmem:[%s469] sm:$0xf]
  %v471 = vunpack.c.l.bf16 %v470
  %v472 = vunpack.c.h.bf16 %v470
  %s473 = scalar_lea.vmem %s1, 424
  %v474 = vpack.c.bf16 0.0, %v471
  %475 = vst [vmem:[%s473] sm:$0xf] %v474
  %s476 = scalar_lea.vmem %s0, 136
  %v477 = vld [vmem:[%s476] sm:$0xf]
  %v478 = vunpack.c.l.bf16 %v477
  %v479 = vunpack.c.h.bf16 %v477
  %s480 = scalar_lea.vmem %s1, 712
  %v481 = vpack.c.bf16 0.0, %v478
  %482 = vst [vmem:[%s480] sm:$0xf] %v481
  %s483 = scalar_lea.vmem %s0, 616
  %v484 = vld [vmem:[%s483] sm:$0xf]
  %v485 = vunpack.c.l.bf16 %v484
  %v486 = vunpack.c.h.bf16 %v484
  %s487 = scalar_lea.vmem %s1, 232
  %v488 = vpack.c.bf16 0.0, %v485
  %489 = vst [vmem:[%s487] sm:$0xf] %v488
  %s490 = scalar_lea.vmem %s0, 328
  %v491 = vld [vmem:[%s490] sm:$0xf]
  %v492 = vunpack.c.l.bf16 %v491
  %v493 = vunpack.c.h.bf16 %v491
  %s494 = scalar_lea.vmem %s1, 520
  %v495 = vpack.c.bf16 0.0, %v492
  %496 = vst [vmem:[%s494] sm:$0xf] %v495
  %s497 = scalar_lea.vmem %s0, 40
  %v498 = vld [vmem:[%s497] sm:$0xf]
  %v499 = vunpack.c.l.bf16 %v498
  %v500 = vunpack.c.h.bf16 %v498
  %s501 = scalar_lea.vmem %s1, 808
  %v502 = vpack.c.bf16 0.0, %v499
  %503 = vst [vmem:[%s501] sm:$0xf] %v502
  %s504 = scalar_lea.vmem %s0, 776
  %v505 = vld [vmem:[%s504] sm:$0xf]
  %v506 = vunpack.c.l.bf16 %v505
  %v507 = vunpack.c.h.bf16 %v505
  %s508 = scalar_lea.vmem %s1, 72
  %v509 = vpack.c.bf16 0.0, %v506
  %510 = vst [vmem:[%s508] sm:$0xf] %v509
  %s511 = scalar_lea.vmem %s0, 488
  %v512 = vld [vmem:[%s511] sm:$0xf]
  %v513 = vunpack.c.l.bf16 %v512
  %v514 = vunpack.c.h.bf16 %v512
  %s515 = scalar_lea.vmem %s1, 360
  %v516 = vpack.c.bf16 0.0, %v513
  %517 = vst [vmem:[%s515] sm:$0xf] %v516
  %s518 = scalar_lea.vmem %s0, 200
  %v519 = vld [vmem:[%s518] sm:$0xf]
  %v520 = vunpack.c.l.bf16 %v519
  %v521 = vunpack.c.h.bf16 %v519
  %s522 = scalar_lea.vmem %s1, 648
  %v523 = vpack.c.bf16 0.0, %v520
  %524 = vst [vmem:[%s522] sm:$0xf] %v523
  %s525 = scalar_lea.vmem %s0, 680
  %v526 = vld [vmem:[%s525] sm:$0xf]
  %v527 = vunpack.c.l.bf16 %v526
  %v528 = vunpack.c.h.bf16 %v526
  %s529 = scalar_lea.vmem %s1, 168
  %v530 = vpack.c.bf16 0.0, %v527
  %531 = vst [vmem:[%s529] sm:$0xf] %v530
  %s532 = scalar_lea.vmem %s0, 392
  %v533 = vld [vmem:[%s532] sm:$0xf]
  %v534 = vunpack.c.l.bf16 %v533
  %v535 = vunpack.c.h.bf16 %v533
  %s536 = scalar_lea.vmem %s1, 456
  %v537 = vpack.c.bf16 0.0, %v534
  %538 = vst [vmem:[%s536] sm:$0xf] %v537
  %s539 = scalar_lea.vmem %s0, 104
  %v540 = vld [vmem:[%s539] sm:$0xf]
  %v541 = vunpack.c.l.bf16 %v540
  %v542 = vunpack.c.h.bf16 %v540
  %s543 = scalar_lea.vmem %s1, 744
  %v544 = vpack.c.bf16 0.0, %v541
  %545 = vst [vmem:[%s543] sm:$0xf] %v544
  %s546 = scalar_lea.vmem %s0, 584
  %v547 = vld [vmem:[%s546] sm:$0xf]
  %v548 = vunpack.c.l.bf16 %v547
  %v549 = vunpack.c.h.bf16 %v547
  %s550 = scalar_lea.vmem %s1, 264
  %v551 = vpack.c.bf16 0.0, %v548
  %552 = vst [vmem:[%s550] sm:$0xf] %v551
  %s553 = scalar_lea.vmem %s0, 296
  %v554 = vld [vmem:[%s553] sm:$0xf]
  %v555 = vunpack.c.l.bf16 %v554
  %v556 = vunpack.c.h.bf16 %v554
  %s557 = scalar_lea.vmem %s1, 552
  %v558 = vpack.c.bf16 0.0, %v555
  %559 = vst [vmem:[%s557] sm:$0xf] %v558
  %s560 = scalar_lea.vmem %s0, 8
  %v561 = vld [vmem:[%s560] sm:$0xf]
  %v562 = vunpack.c.l.bf16 %v561
  %v563 = vunpack.c.h.bf16 %v561
  %s564 = scalar_lea.vmem %s1, 840
  %v565 = vpack.c.bf16 0.0, %v562
  %566 = vst [vmem:[%s564] sm:$0xf] %v565
  %s567 = scalar_lea.vmem %s0, 844
  %v568 = vld [vmem:[%s567] sm:$0xf]
  %v569 = vunpack.c.l.bf16 %v568
  %v570 = vunpack.c.h.bf16 %v568
  %s571 = scalar_lea.vmem %s1, 12
  %v572 = vpack.c.bf16 0.0, %v569
  %573 = vst [vmem:[%s571] sm:$0xf] %v572
  %s574 = scalar_lea.vmem %s0, 556
  %v575 = vld [vmem:[%s574] sm:$0xf]
  %v576 = vunpack.c.l.bf16 %v575
  %v577 = vunpack.c.h.bf16 %v575
  %s578 = scalar_lea.vmem %s1, 300
  %v579 = vpack.c.bf16 0.0, %v576
  %580 = vst [vmem:[%s578] sm:$0xf] %v579
  %s581 = scalar_lea.vmem %s0, 268
  %v582 = vld [vmem:[%s581] sm:$0xf]
  %v583 = vunpack.c.l.bf16 %v582
  %v584 = vunpack.c.h.bf16 %v582
  %s585 = scalar_lea.vmem %s1, 588
  %v586 = vpack.c.bf16 0.0, %v583
  %587 = vst [vmem:[%s585] sm:$0xf] %v586
  %s588 = scalar_lea.vmem %s0, 748
  %v589 = vld [vmem:[%s588] sm:$0xf]
  %v590 = vunpack.c.l.bf16 %v589
  %v591 = vunpack.c.h.bf16 %v589
  %s592 = scalar_lea.vmem %s1, 108
  %v593 = vpack.c.bf16 0.0, %v590
  %594 = vst [vmem:[%s592] sm:$0xf] %v593
  %s595 = scalar_lea.vmem %s0, 460
  %v596 = vld [vmem:[%s595] sm:$0xf]
  %v597 = vunpack.c.l.bf16 %v596
  %v598 = vunpack.c.h.bf16 %v596
  %s599 = scalar_lea.vmem %s1, 396
  %v600 = vpack.c.bf16 0.0, %v597
  %601 = vst [vmem:[%s599] sm:$0xf] %v600
  %s602 = scalar_lea.vmem %s0, 172
  %v603 = vld [vmem:[%s602] sm:$0xf]
  %v604 = vunpack.c.l.bf16 %v603
  %v605 = vunpack.c.h.bf16 %v603
  %s606 = scalar_lea.vmem %s1, 684
  %v607 = vpack.c.bf16 0.0, %v604
  %608 = vst [vmem:[%s606] sm:$0xf] %v607
  %s609 = scalar_lea.vmem %s0, 652
  %v610 = vld [vmem:[%s609] sm:$0xf]
  %v611 = vunpack.c.l.bf16 %v610
  %v612 = vunpack.c.h.bf16 %v610
  %s613 = scalar_lea.vmem %s1, 204
  %v614 = vpack.c.bf16 0.0, %v611
  %615 = vst [vmem:[%s613] sm:$0xf] %v614
  %s616 = scalar_lea.vmem %s0, 364
  %v617 = vld [vmem:[%s616] sm:$0xf]
  %v618 = vunpack.c.l.bf16 %v617
  %v619 = vunpack.c.h.bf16 %v617
  %s620 = scalar_lea.vmem %s1, 492
  %v621 = vpack.c.bf16 0.0, %v618
  %622 = vst [vmem:[%s620] sm:$0xf] %v621
  %s623 = scalar_lea.vmem %s0, 76
  %v624 = vld [vmem:[%s623] sm:$0xf]
  %v625 = vunpack.c.l.bf16 %v624
  %v626 = vunpack.c.h.bf16 %v624
  %s627 = scalar_lea.vmem %s1, 780
  %v628 = vpack.c.bf16 0.0, %v625
  %629 = vst [vmem:[%s627] sm:$0xf] %v628
  %s630 = scalar_lea.vmem %s0, 812
  %v631 = vld [vmem:[%s630] sm:$0xf]
  %v632 = vunpack.c.l.bf16 %v631
  %v633 = vunpack.c.h.bf16 %v631
  %s634 = scalar_lea.vmem %s1, 44
  %v635 = vpack.c.bf16 0.0, %v632
  %636 = vst [vmem:[%s634] sm:$0xf] %v635
  %s637 = scalar_lea.vmem %s0, 524
  %v638 = vld [vmem:[%s637] sm:$0xf]
  %v639 = vunpack.c.l.bf16 %v638
  %v640 = vunpack.c.h.bf16 %v638
  %s641 = scalar_lea.vmem %s1, 332
  %v642 = vpack.c.bf16 0.0, %v639
  %643 = vst [vmem:[%s641] sm:$0xf] %v642
  %s644 = scalar_lea.vmem %s0, 236
  %v645 = vld [vmem:[%s644] sm:$0xf]
  %v646 = vunpack.c.l.bf16 %v645
  %v647 = vunpack.c.h.bf16 %v645
  %s648 = scalar_lea.vmem %s1, 620
  %v649 = vpack.c.bf16 0.0, %v646
  %650 = vst [vmem:[%s648] sm:$0xf] %v649
  %s651 = scalar_lea.vmem %s0, 716
  %v652 = vld [vmem:[%s651] sm:$0xf]
  %v653 = vunpack.c.l.bf16 %v652
  %v654 = vunpack.c.h.bf16 %v652
  %s655 = scalar_lea.vmem %s1, 140
  %v656 = vpack.c.bf16 0.0, %v653
  %657 = vst [vmem:[%s655] sm:$0xf] %v656
  %s658 = scalar_lea.vmem %s0, 428
  %v659 = vld [vmem:[%s658] sm:$0xf]
  %v660 = vunpack.c.l.bf16 %v659
  %v661 = vunpack.c.h.bf16 %v659
  %s662 = scalar_lea.vmem %s1, 428
  %v663 = vpack.c.bf16 0.0, %v660
  %664 = vst [vmem:[%s662] sm:$0xf] %v663
  %s665 = scalar_lea.vmem %s0, 140
  %v666 = vld [vmem:[%s665] sm:$0xf]
  %v667 = vunpack.c.l.bf16 %v666
  %v668 = vunpack.c.h.bf16 %v666
  %s669 = scalar_lea.vmem %s1, 716
  %v670 = vpack.c.bf16 0.0, %v667
  %671 = vst [vmem:[%s669] sm:$0xf] %v670
  %s672 = scalar_lea.vmem %s0, 620
  %v673 = vld [vmem:[%s672] sm:$0xf]
  %v674 = vunpack.c.l.bf16 %v673
  %v675 = vunpack.c.h.bf16 %v673
  %s676 = scalar_lea.vmem %s1, 236
  %v677 = vpack.c.bf16 0.0, %v674
  %678 = vst [vmem:[%s676] sm:$0xf] %v677
  %s679 = scalar_lea.vmem %s0, 332
  %v680 = vld [vmem:[%s679] sm:$0xf]
  %v681 = vunpack.c.l.bf16 %v680
  %v682 = vunpack.c.h.bf16 %v680
  %s683 = scalar_lea.vmem %s1, 524
  %v684 = vpack.c.bf16 0.0, %v681
  %685 = vst [vmem:[%s683] sm:$0xf] %v684
  %s686 = scalar_lea.vmem %s0, 44
  %v687 = vld [vmem:[%s686] sm:$0xf]
  %v688 = vunpack.c.l.bf16 %v687
  %v689 = vunpack.c.h.bf16 %v687
  %s690 = scalar_lea.vmem %s1, 812
  %v691 = vpack.c.bf16 0.0, %v688
  %692 = vst [vmem:[%s690] sm:$0xf] %v691
  %s693 = scalar_lea.vmem %s0, 780
  %v694 = vld [vmem:[%s693] sm:$0xf]
  %v695 = vunpack.c.l.bf16 %v694
  %v696 = vunpack.c.h.bf16 %v694
  %s697 = scalar_lea.vmem %s1, 76
  %v698 = vpack.c.bf16 0.0, %v695
  %699 = vst [vmem:[%s697] sm:$0xf] %v698
  %s700 = scalar_lea.vmem %s0, 492
  %v701 = vld [vmem:[%s700] sm:$0xf]
  %v702 = vunpack.c.l.bf16 %v701
  %v703 = vunpack.c.h.bf16 %v701
  %s704 = scalar_lea.vmem %s1, 364
  %v705 = vpack.c.bf16 0.0, %v702
  %706 = vst [vmem:[%s704] sm:$0xf] %v705
  %s707 = scalar_lea.vmem %s0, 204
  %v708 = vld [vmem:[%s707] sm:$0xf]
  %v709 = vunpack.c.l.bf16 %v708
  %v710 = vunpack.c.h.bf16 %v708
  %s711 = scalar_lea.vmem %s1, 652
  %v712 = vpack.c.bf16 0.0, %v709
  %713 = vst [vmem:[%s711] sm:$0xf] %v712
  %s714 = scalar_lea.vmem %s0, 684
  %v715 = vld [vmem:[%s714] sm:$0xf]
  %v716 = vunpack.c.l.bf16 %v715
  %v717 = vunpack.c.h.bf16 %v715
  %s718 = scalar_lea.vmem %s1, 172
  %v719 = vpack.c.bf16 0.0, %v716
  %720 = vst [vmem:[%s718] sm:$0xf] %v719
  %s721 = scalar_lea.vmem %s0, 396
  %v722 = vld [vmem:[%s721] sm:$0xf]
  %v723 = vunpack.c.l.bf16 %v722
  %v724 = vunpack.c.h.bf16 %v722
  %s725 = scalar_lea.vmem %s1, 460
  %v726 = vpack.c.bf16 0.0, %v723
  %727 = vst [vmem:[%s725] sm:$0xf] %v726
  %s728 = scalar_lea.vmem %s0, 108
  %v729 = vld [vmem:[%s728] sm:$0xf]
  %v730 = vunpack.c.l.bf16 %v729
  %v731 = vunpack.c.h.bf16 %v729
  %s732 = scalar_lea.vmem %s1, 748
  %v733 = vpack.c.bf16 0.0, %v730
  %734 = vst [vmem:[%s732] sm:$0xf] %v733
  %s735 = scalar_lea.vmem %s0, 588
  %v736 = vld [vmem:[%s735] sm:$0xf]
  %v737 = vunpack.c.l.bf16 %v736
  %v738 = vunpack.c.h.bf16 %v736
  %s739 = scalar_lea.vmem %s1, 268
  %v740 = vpack.c.bf16 0.0, %v737
  %741 = vst [vmem:[%s739] sm:$0xf] %v740
  %s742 = scalar_lea.vmem %s0, 300
  %v743 = vld [vmem:[%s742] sm:$0xf]
  %v744 = vunpack.c.l.bf16 %v743
  %v745 = vunpack.c.h.bf16 %v743
  %s746 = scalar_lea.vmem %s1, 556
  %v747 = vpack.c.bf16 0.0, %v744
  %748 = vst [vmem:[%s746] sm:$0xf] %v747
  %s749 = scalar_lea.vmem %s0, 12
  %v750 = vld [vmem:[%s749] sm:$0xf]
  %v751 = vunpack.c.l.bf16 %v750
  %v752 = vunpack.c.h.bf16 %v750
  %s753 = scalar_lea.vmem %s1, 844
  %v754 = vpack.c.bf16 0.0, %v751
  %755 = vst [vmem:[%s753] sm:$0xf] %v754
  %s756 = scalar_lea.vmem %s0, 848
  %v757 = vld [vmem:[%s756] sm:$0xf]
  %v758 = vunpack.c.l.bf16 %v757
  %v759 = vunpack.c.h.bf16 %v757
  %s760 = scalar_lea.vmem %s1, 16
  %v761 = vpack.c.bf16 0.0, %v758
  %762 = vst [vmem:[%s760] sm:$0xf] %v761
  %s763 = scalar_lea.vmem %s0, 560
  %v764 = vld [vmem:[%s763] sm:$0xf]
  %v765 = vunpack.c.l.bf16 %v764
  %v766 = vunpack.c.h.bf16 %v764
  %s767 = scalar_lea.vmem %s1, 304
  %v768 = vpack.c.bf16 0.0, %v765
  %769 = vst [vmem:[%s767] sm:$0xf] %v768
  %s770 = scalar_lea.vmem %s0, 272
  %v771 = vld [vmem:[%s770] sm:$0xf]
  %v772 = vunpack.c.l.bf16 %v771
  %v773 = vunpack.c.h.bf16 %v771
  %s774 = scalar_lea.vmem %s1, 592
  %v775 = vpack.c.bf16 0.0, %v772
  %776 = vst [vmem:[%s774] sm:$0xf] %v775
  %s777 = scalar_lea.vmem %s0, 752
  %v778 = vld [vmem:[%s777] sm:$0xf]
  %v779 = vunpack.c.l.bf16 %v778
  %v780 = vunpack.c.h.bf16 %v778
  %s781 = scalar_lea.vmem %s1, 112
  %v782 = vpack.c.bf16 0.0, %v779
  %783 = vst [vmem:[%s781] sm:$0xf] %v782
  %s784 = scalar_lea.vmem %s0, 464
  %v785 = vld [vmem:[%s784] sm:$0xf]
  %v786 = vunpack.c.l.bf16 %v785
  %v787 = vunpack.c.h.bf16 %v785
  %s788 = scalar_lea.vmem %s1, 400
  %v789 = vpack.c.bf16 0.0, %v786
  %790 = vst [vmem:[%s788] sm:$0xf] %v789
  %s791 = scalar_lea.vmem %s0, 176
  %v792 = vld [vmem:[%s791] sm:$0xf]
  %v793 = vunpack.c.l.bf16 %v792
  %v794 = vunpack.c.h.bf16 %v792
  %s795 = scalar_lea.vmem %s1, 688
  %v796 = vpack.c.bf16 0.0, %v793
  %797 = vst [vmem:[%s795] sm:$0xf] %v796
  %s798 = scalar_lea.vmem %s0, 656
  %v799 = vld [vmem:[%s798] sm:$0xf]
  %v800 = vunpack.c.l.bf16 %v799
  %v801 = vunpack.c.h.bf16 %v799
  %s802 = scalar_lea.vmem %s1, 208
  %v803 = vpack.c.bf16 0.0, %v800
  %804 = vst [vmem:[%s802] sm:$0xf] %v803
  %s805 = scalar_lea.vmem %s0, 368
  %v806 = vld [vmem:[%s805] sm:$0xf]
  %v807 = vunpack.c.l.bf16 %v806
  %v808 = vunpack.c.h.bf16 %v806
  %s809 = scalar_lea.vmem %s1, 496
  %v810 = vpack.c.bf16 0.0, %v807
  %811 = vst [vmem:[%s809] sm:$0xf] %v810
  %s812 = scalar_lea.vmem %s0, 80
  %v813 = vld [vmem:[%s812] sm:$0xf]
  %v814 = vunpack.c.l.bf16 %v813
  %v815 = vunpack.c.h.bf16 %v813
  %s816 = scalar_lea.vmem %s1, 784
  %v817 = vpack.c.bf16 0.0, %v814
  %818 = vst [vmem:[%s816] sm:$0xf] %v817
  %s819 = scalar_lea.vmem %s0, 816
  %v820 = vld [vmem:[%s819] sm:$0xf]
  %v821 = vunpack.c.l.bf16 %v820
  %v822 = vunpack.c.h.bf16 %v820
  %s823 = scalar_lea.vmem %s1, 48
  %v824 = vpack.c.bf16 0.0, %v821
  %825 = vst [vmem:[%s823] sm:$0xf] %v824
  %s826 = scalar_lea.vmem %s0, 528
  %v827 = vld [vmem:[%s826] sm:$0xf]
  %v828 = vunpack.c.l.bf16 %v827
  %v829 = vunpack.c.h.bf16 %v827
  %s830 = scalar_lea.vmem %s1, 336
  %v831 = vpack.c.bf16 0.0, %v828
  %832 = vst [vmem:[%s830] sm:$0xf] %v831
  %s833 = scalar_lea.vmem %s0, 240
  %v834 = vld [vmem:[%s833] sm:$0xf]
  %v835 = vunpack.c.l.bf16 %v834
  %v836 = vunpack.c.h.bf16 %v834
  %s837 = scalar_lea.vmem %s1, 624
  %v838 = vpack.c.bf16 0.0, %v835
  %839 = vst [vmem:[%s837] sm:$0xf] %v838
  %s840 = scalar_lea.vmem %s0, 720
  %v841 = vld [vmem:[%s840] sm:$0xf]
  %v842 = vunpack.c.l.bf16 %v841
  %v843 = vunpack.c.h.bf16 %v841
  %s844 = scalar_lea.vmem %s1, 144
  %v845 = vpack.c.bf16 0.0, %v842
  %846 = vst [vmem:[%s844] sm:$0xf] %v845
  %s847 = scalar_lea.vmem %s0, 432
  %v848 = vld [vmem:[%s847] sm:$0xf]
  %v849 = vunpack.c.l.bf16 %v848
  %v850 = vunpack.c.h.bf16 %v848
  %s851 = scalar_lea.vmem %s1, 432
  %v852 = vpack.c.bf16 0.0, %v849
  %853 = vst [vmem:[%s851] sm:$0xf] %v852
  %s854 = scalar_lea.vmem %s0, 144
  %v855 = vld [vmem:[%s854] sm:$0xf]
  %v856 = vunpack.c.l.bf16 %v855
  %v857 = vunpack.c.h.bf16 %v855
  %s858 = scalar_lea.vmem %s1, 720
  %v859 = vpack.c.bf16 0.0, %v856
  %860 = vst [vmem:[%s858] sm:$0xf] %v859
  %s861 = scalar_lea.vmem %s0, 624
  %v862 = vld [vmem:[%s861] sm:$0xf]
  %v863 = vunpack.c.l.bf16 %v862
  %v864 = vunpack.c.h.bf16 %v862
  %s865 = scalar_lea.vmem %s1, 240
  %v866 = vpack.c.bf16 0.0, %v863
  %867 = vst [vmem:[%s865] sm:$0xf] %v866
  %s868 = scalar_lea.vmem %s0, 336
  %v869 = vld [vmem:[%s868] sm:$0xf]
  %v870 = vunpack.c.l.bf16 %v869
  %v871 = vunpack.c.h.bf16 %v869
  %s872 = scalar_lea.vmem %s1, 528
  %v873 = vpack.c.bf16 0.0, %v870
  %874 = vst [vmem:[%s872] sm:$0xf] %v873
  %s875 = scalar_lea.vmem %s0, 48
  %v876 = vld [vmem:[%s875] sm:$0xf]
  %v877 = vunpack.c.l.bf16 %v876
  %v878 = vunpack.c.h.bf16 %v876
  %s879 = scalar_lea.vmem %s1, 816
  %v880 = vpack.c.bf16 0.0, %v877
  %881 = vst [vmem:[%s879] sm:$0xf] %v880
  %s882 = scalar_lea.vmem %s0, 784
  %v883 = vld [vmem:[%s882] sm:$0xf]
  %v884 = vunpack.c.l.bf16 %v883
  %v885 = vunpack.c.h.bf16 %v883
  %s886 = scalar_lea.vmem %s1, 80
  %v887 = vpack.c.bf16 0.0, %v884
  %888 = vst [vmem:[%s886] sm:$0xf] %v887
  %s889 = scalar_lea.vmem %s0, 496
  %v890 = vld [vmem:[%s889] sm:$0xf]
  %v891 = vunpack.c.l.bf16 %v890
  %v892 = vunpack.c.h.bf16 %v890
  %s893 = scalar_lea.vmem %s1, 368
  %v894 = vpack.c.bf16 0.0, %v891
  %895 = vst [vmem:[%s893] sm:$0xf] %v894
  %s896 = scalar_lea.vmem %s0, 208
  %v897 = vld [vmem:[%s896] sm:$0xf]
  %v898 = vunpack.c.l.bf16 %v897
  %v899 = vunpack.c.h.bf16 %v897
  %s900 = scalar_lea.vmem %s1, 656
  %v901 = vpack.c.bf16 0.0, %v898
  %902 = vst [vmem:[%s900] sm:$0xf] %v901
  %s903 = scalar_lea.vmem %s0, 688
  %v904 = vld [vmem:[%s903] sm:$0xf]
  %v905 = vunpack.c.l.bf16 %v904
  %v906 = vunpack.c.h.bf16 %v904
  %s907 = scalar_lea.vmem %s1, 176
  %v908 = vpack.c.bf16 0.0, %v905
  %909 = vst [vmem:[%s907] sm:$0xf] %v908
  %s910 = scalar_lea.vmem %s0, 400
  %v911 = vld [vmem:[%s910] sm:$0xf]
  %v912 = vunpack.c.l.bf16 %v911
  %v913 = vunpack.c.h.bf16 %v911
  %s914 = scalar_lea.vmem %s1, 464
  %v915 = vpack.c.bf16 0.0, %v912
  %916 = vst [vmem:[%s914] sm:$0xf] %v915
  %s917 = scalar_lea.vmem %s0, 112
  %v918 = vld [vmem:[%s917] sm:$0xf]
  %v919 = vunpack.c.l.bf16 %v918
  %v920 = vunpack.c.h.bf16 %v918
  %s921 = scalar_lea.vmem %s1, 752
  %v922 = vpack.c.bf16 0.0, %v919
  %923 = vst [vmem:[%s921] sm:$0xf] %v922
  %s924 = scalar_lea.vmem %s0, 592
  %v925 = vld [vmem:[%s924] sm:$0xf]
  %v926 = vunpack.c.l.bf16 %v925
  %v927 = vunpack.c.h.bf16 %v925
  %s928 = scalar_lea.vmem %s1, 272
  %v929 = vpack.c.bf16 0.0, %v926
  %930 = vst [vmem:[%s928] sm:$0xf] %v929
  %s931 = scalar_lea.vmem %s0, 304
  %v932 = vld [vmem:[%s931] sm:$0xf]
  %v933 = vunpack.c.l.bf16 %v932
  %v934 = vunpack.c.h.bf16 %v932
  %s935 = scalar_lea.vmem %s1, 560
  %v936 = vpack.c.bf16 0.0, %v933
  %937 = vst [vmem:[%s935] sm:$0xf] %v936
  %s938 = scalar_lea.vmem %s0, 16
  %v939 = vld [vmem:[%s938] sm:$0xf]
  %v940 = vunpack.c.l.bf16 %v939
  %v941 = vunpack.c.h.bf16 %v939
  %s942 = scalar_lea.vmem %s1, 848
  %v943 = vpack.c.bf16 0.0, %v940
  %944 = vst [vmem:[%s942] sm:$0xf] %v943
  %s945 = scalar_lea.vmem %s0, 852
  %v946 = vld [vmem:[%s945] sm:$0xf]
  %v947 = vunpack.c.l.bf16 %v946
  %v948 = vunpack.c.h.bf16 %v946
  %s949 = scalar_lea.vmem %s1, 20
  %v950 = vpack.c.bf16 0.0, %v947
  %951 = vst [vmem:[%s949] sm:$0xf] %v950
  %s952 = scalar_lea.vmem %s0, 564
  %v953 = vld [vmem:[%s952] sm:$0xf]
  %v954 = vunpack.c.l.bf16 %v953
  %v955 = vunpack.c.h.bf16 %v953
  %s956 = scalar_lea.vmem %s1, 308
  %v957 = vpack.c.bf16 0.0, %v954
  %958 = vst [vmem:[%s956] sm:$0xf] %v957
  %s959 = scalar_lea.vmem %s0, 276
  %v960 = vld [vmem:[%s959] sm:$0xf]
  %v961 = vunpack.c.l.bf16 %v960
  %v962 = vunpack.c.h.bf16 %v960
  %s963 = scalar_lea.vmem %s1, 596
  %v964 = vpack.c.bf16 0.0, %v961
  %965 = vst [vmem:[%s963] sm:$0xf] %v964
  %s966 = scalar_lea.vmem %s0, 756
  %v967 = vld [vmem:[%s966] sm:$0xf]
  %v968 = vunpack.c.l.bf16 %v967
  %v969 = vunpack.c.h.bf16 %v967
  %s970 = scalar_lea.vmem %s1, 116
  %v971 = vpack.c.bf16 0.0, %v968
  %972 = vst [vmem:[%s970] sm:$0xf] %v971
  %s973 = scalar_lea.vmem %s0, 468
  %v974 = vld [vmem:[%s973] sm:$0xf]
  %v975 = vunpack.c.l.bf16 %v974
  %v976 = vunpack.c.h.bf16 %v974
  %s977 = scalar_lea.vmem %s1, 404
  %v978 = vpack.c.bf16 0.0, %v975
  %979 = vst [vmem:[%s977] sm:$0xf] %v978
  %s980 = scalar_lea.vmem %s0, 180
  %v981 = vld [vmem:[%s980] sm:$0xf]
  %v982 = vunpack.c.l.bf16 %v981
  %v983 = vunpack.c.h.bf16 %v981
  %s984 = scalar_lea.vmem %s1, 692
  %v985 = vpack.c.bf16 0.0, %v982
  %986 = vst [vmem:[%s984] sm:$0xf] %v985
  %s987 = scalar_lea.vmem %s0, 660
  %v988 = vld [vmem:[%s987] sm:$0xf]
  %v989 = vunpack.c.l.bf16 %v988
  %v990 = vunpack.c.h.bf16 %v988
  %s991 = scalar_lea.vmem %s1, 212
  %v992 = vpack.c.bf16 0.0, %v989
  %993 = vst [vmem:[%s991] sm:$0xf] %v992
  %s994 = scalar_lea.vmem %s0, 372
  %v995 = vld [vmem:[%s994] sm:$0xf]
  %v996 = vunpack.c.l.bf16 %v995
  %v997 = vunpack.c.h.bf16 %v995
  %s998 = scalar_lea.vmem %s1, 500
  %v999 = vpack.c.bf16 0.0, %v996
  %1000 = vst [vmem:[%s998] sm:$0xf] %v999
  %s1001 = scalar_lea.vmem %s0, 84
  %v1002 = vld [vmem:[%s1001] sm:$0xf]
  %v1003 = vunpack.c.l.bf16 %v1002
  %v1004 = vunpack.c.h.bf16 %v1002
  %s1005 = scalar_lea.vmem %s1, 788
  %v1006 = vpack.c.bf16 0.0, %v1003
  %1007 = vst [vmem:[%s1005] sm:$0xf] %v1006
  %s1008 = scalar_lea.vmem %s0, 820
  %v1009 = vld [vmem:[%s1008] sm:$0xf]
  %v1010 = vunpack.c.l.bf16 %v1009
  %v1011 = vunpack.c.h.bf16 %v1009
  %s1012 = scalar_lea.vmem %s1, 52
  %v1013 = vpack.c.bf16 0.0, %v1010
  %1014 = vst [vmem:[%s1012] sm:$0xf] %v1013
  %s1015 = scalar_lea.vmem %s0, 532
  %v1016 = vld [vmem:[%s1015] sm:$0xf]
  %v1017 = vunpack.c.l.bf16 %v1016
  %v1018 = vunpack.c.h.bf16 %v1016
  %s1019 = scalar_lea.vmem %s1, 340
  %v1020 = vpack.c.bf16 0.0, %v1017
  %1021 = vst [vmem:[%s1019] sm:$0xf] %v1020
  %s1022 = scalar_lea.vmem %s0, 244
  %v1023 = vld [vmem:[%s1022] sm:$0xf]
  %v1024 = vunpack.c.l.bf16 %v1023
  %v1025 = vunpack.c.h.bf16 %v1023
  %s1026 = scalar_lea.vmem %s1, 628
  %v1027 = vpack.c.bf16 0.0, %v1024
  %1028 = vst [vmem:[%s1026] sm:$0xf] %v1027
  %s1029 = scalar_lea.vmem %s0, 724
  %v1030 = vld [vmem:[%s1029] sm:$0xf]
  %v1031 = vunpack.c.l.bf16 %v1030
  %v1032 = vunpack.c.h.bf16 %v1030
  %s1033 = scalar_lea.vmem %s1, 148
  %v1034 = vpack.c.bf16 0.0, %v1031
  %1035 = vst [vmem:[%s1033] sm:$0xf] %v1034
  %s1036 = scalar_lea.vmem %s0, 436
  %v1037 = vld [vmem:[%s1036] sm:$0xf]
  %v1038 = vunpack.c.l.bf16 %v1037
  %v1039 = vunpack.c.h.bf16 %v1037
  %s1040 = scalar_lea.vmem %s1, 436
  %v1041 = vpack.c.bf16 0.0, %v1038
  %1042 = vst [vmem:[%s1040] sm:$0xf] %v1041
  %s1043 = scalar_lea.vmem %s0, 148
  %v1044 = vld [vmem:[%s1043] sm:$0xf]
  %v1045 = vunpack.c.l.bf16 %v1044
  %v1046 = vunpack.c.h.bf16 %v1044
  %s1047 = scalar_lea.vmem %s1, 724
  %v1048 = vpack.c.bf16 0.0, %v1045
  %1049 = vst [vmem:[%s1047] sm:$0xf] %v1048
  %s1050 = scalar_lea.vmem %s0, 628
  %v1051 = vld [vmem:[%s1050] sm:$0xf]
  %v1052 = vunpack.c.l.bf16 %v1051
  %v1053 = vunpack.c.h.bf16 %v1051
  %s1054 = scalar_lea.vmem %s1, 244
  %v1055 = vpack.c.bf16 0.0, %v1052
  %1056 = vst [vmem:[%s1054] sm:$0xf] %v1055
  %s1057 = scalar_lea.vmem %s0, 340
  %v1058 = vld [vmem:[%s1057] sm:$0xf]
  %v1059 = vunpack.c.l.bf16 %v1058
  %v1060 = vunpack.c.h.bf16 %v1058
  %s1061 = scalar_lea.vmem %s1, 532
  %v1062 = vpack.c.bf16 0.0, %v1059
  %1063 = vst [vmem:[%s1061] sm:$0xf] %v1062
  %s1064 = scalar_lea.vmem %s0, 52
  %v1065 = vld [vmem:[%s1064] sm:$0xf]
  %v1066 = vunpack.c.l.bf16 %v1065
  %v1067 = vunpack.c.h.bf16 %v1065
  %s1068 = scalar_lea.vmem %s1, 820
  %v1069 = vpack.c.bf16 0.0, %v1066
  %1070 = vst [vmem:[%s1068] sm:$0xf] %v1069
  %s1071 = scalar_lea.vmem %s0, 788
  %v1072 = vld [vmem:[%s1071] sm:$0xf]
  %v1073 = vunpack.c.l.bf16 %v1072
  %v1074 = vunpack.c.h.bf16 %v1072
  %s1075 = scalar_lea.vmem %s1, 84
  %v1076 = vpack.c.bf16 0.0, %v1073
  %1077 = vst [vmem:[%s1075] sm:$0xf] %v1076
  %s1078 = scalar_lea.vmem %s0, 500
  %v1079 = vld [vmem:[%s1078] sm:$0xf]
  %v1080 = vunpack.c.l.bf16 %v1079
  %v1081 = vunpack.c.h.bf16 %v1079
  %s1082 = scalar_lea.vmem %s1, 372
  %v1083 = vpack.c.bf16 0.0, %v1080
  %1084 = vst [vmem:[%s1082] sm:$0xf] %v1083
  %s1085 = scalar_lea.vmem %s0, 212
  %v1086 = vld [vmem:[%s1085] sm:$0xf]
  %v1087 = vunpack.c.l.bf16 %v1086
  %v1088 = vunpack.c.h.bf16 %v1086
  %s1089 = scalar_lea.vmem %s1, 660
  %v1090 = vpack.c.bf16 0.0, %v1087
  %1091 = vst [vmem:[%s1089] sm:$0xf] %v1090
  %s1092 = scalar_lea.vmem %s0, 692
  %v1093 = vld [vmem:[%s1092] sm:$0xf]
  %v1094 = vunpack.c.l.bf16 %v1093
  %v1095 = vunpack.c.h.bf16 %v1093
  %s1096 = scalar_lea.vmem %s1, 180
  %v1097 = vpack.c.bf16 0.0, %v1094
  %1098 = vst [vmem:[%s1096] sm:$0xf] %v1097
  %s1099 = scalar_lea.vmem %s0, 404
  %v1100 = vld [vmem:[%s1099] sm:$0xf]
  %v1101 = vunpack.c.l.bf16 %v1100
  %v1102 = vunpack.c.h.bf16 %v1100
  %s1103 = scalar_lea.vmem %s1, 468
  %v1104 = vpack.c.bf16 0.0, %v1101
  %1105 = vst [vmem:[%s1103] sm:$0xf] %v1104
  %s1106 = scalar_lea.vmem %s0, 116
  %v1107 = vld [vmem:[%s1106] sm:$0xf]
  %v1108 = vunpack.c.l.bf16 %v1107
  %v1109 = vunpack.c.h.bf16 %v1107
  %s1110 = scalar_lea.vmem %s1, 756
  %v1111 = vpack.c.bf16 0.0, %v1108
  %1112 = vst [vmem:[%s1110] sm:$0xf] %v1111
  %s1113 = scalar_lea.vmem %s0, 596
  %v1114 = vld [vmem:[%s1113] sm:$0xf]
  %v1115 = vunpack.c.l.bf16 %v1114
  %v1116 = vunpack.c.h.bf16 %v1114
  %s1117 = scalar_lea.vmem %s1, 276
  %v1118 = vpack.c.bf16 0.0, %v1115
  %1119 = vst [vmem:[%s1117] sm:$0xf] %v1118
  %s1120 = scalar_lea.vmem %s0, 308
  %v1121 = vld [vmem:[%s1120] sm:$0xf]
  %v1122 = vunpack.c.l.bf16 %v1121
  %v1123 = vunpack.c.h.bf16 %v1121
  %s1124 = scalar_lea.vmem %s1, 564
  %v1125 = vpack.c.bf16 0.0, %v1122
  %1126 = vst [vmem:[%s1124] sm:$0xf] %v1125
  %s1127 = scalar_lea.vmem %s0, 20
  %v1128 = vld [vmem:[%s1127] sm:$0xf]
  %v1129 = vunpack.c.l.bf16 %v1128
  %v1130 = vunpack.c.h.bf16 %v1128
  %s1131 = scalar_lea.vmem %s1, 852
  %v1132 = vpack.c.bf16 0.0, %v1129
  %1133 = vst [vmem:[%s1131] sm:$0xf] %v1132
  %s1134 = scalar_lea.vmem %s0, 856
  %v1135 = vld [vmem:[%s1134] sm:$0xf]
  %v1136 = vunpack.c.l.bf16 %v1135
  %v1137 = vunpack.c.h.bf16 %v1135
  %s1138 = scalar_lea.vmem %s1, 24
  %v1139 = vpack.c.bf16 0.0, %v1136
  %1140 = vst [vmem:[%s1138] sm:$0xf] %v1139
  %s1141 = scalar_lea.vmem %s0, 568
  %v1142 = vld [vmem:[%s1141] sm:$0xf]
  %v1143 = vunpack.c.l.bf16 %v1142
  %v1144 = vunpack.c.h.bf16 %v1142
  %s1145 = scalar_lea.vmem %s1, 312
  %v1146 = vpack.c.bf16 0.0, %v1143
  %1147 = vst [vmem:[%s1145] sm:$0xf] %v1146
  %s1148 = scalar_lea.vmem %s0, 280
  %v1149 = vld [vmem:[%s1148] sm:$0xf]
  %v1150 = vunpack.c.l.bf16 %v1149
  %v1151 = vunpack.c.h.bf16 %v1149
  %s1152 = scalar_lea.vmem %s1, 600
  %v1153 = vpack.c.bf16 0.0, %v1150
  %1154 = vst [vmem:[%s1152] sm:$0xf] %v1153
  %s1155 = scalar_lea.vmem %s0, 760
  %v1156 = vld [vmem:[%s1155] sm:$0xf]
  %v1157 = vunpack.c.l.bf16 %v1156
  %v1158 = vunpack.c.h.bf16 %v1156
  %s1159 = scalar_lea.vmem %s1, 120
  %v1160 = vpack.c.bf16 0.0, %v1157
  %1161 = vst [vmem:[%s1159] sm:$0xf] %v1160
  %s1162 = scalar_lea.vmem %s0, 472
  %v1163 = vld [vmem:[%s1162] sm:$0xf]
  %v1164 = vunpack.c.l.bf16 %v1163
  %v1165 = vunpack.c.h.bf16 %v1163
  %s1166 = scalar_lea.vmem %s1, 408
  %v1167 = vpack.c.bf16 0.0, %v1164
  %1168 = vst [vmem:[%s1166] sm:$0xf] %v1167
  %s1169 = scalar_lea.vmem %s0, 184
  %v1170 = vld [vmem:[%s1169] sm:$0xf]
  %v1171 = vunpack.c.l.bf16 %v1170
  %v1172 = vunpack.c.h.bf16 %v1170
  %s1173 = scalar_lea.vmem %s1, 696
  %v1174 = vpack.c.bf16 0.0, %v1171
  %1175 = vst [vmem:[%s1173] sm:$0xf] %v1174
  %s1176 = scalar_lea.vmem %s0, 664
  %v1177 = vld [vmem:[%s1176] sm:$0xf]
  %v1178 = vunpack.c.l.bf16 %v1177
  %v1179 = vunpack.c.h.bf16 %v1177
  %s1180 = scalar_lea.vmem %s1, 216
  %v1181 = vpack.c.bf16 0.0, %v1178
  %1182 = vst [vmem:[%s1180] sm:$0xf] %v1181
  %s1183 = scalar_lea.vmem %s0, 376
  %v1184 = vld [vmem:[%s1183] sm:$0xf]
  %v1185 = vunpack.c.l.bf16 %v1184
  %v1186 = vunpack.c.h.bf16 %v1184
  %s1187 = scalar_lea.vmem %s1, 504
  %v1188 = vpack.c.bf16 0.0, %v1185
  %1189 = vst [vmem:[%s1187] sm:$0xf] %v1188
  %s1190 = scalar_lea.vmem %s0, 88
  %v1191 = vld [vmem:[%s1190] sm:$0xf]
  %v1192 = vunpack.c.l.bf16 %v1191
  %v1193 = vunpack.c.h.bf16 %v1191
  %s1194 = scalar_lea.vmem %s1, 792
  %v1195 = vpack.c.bf16 0.0, %v1192
  %1196 = vst [vmem:[%s1194] sm:$0xf] %v1195
  %s1197 = scalar_lea.vmem %s0, 824
  %v1198 = vld [vmem:[%s1197] sm:$0xf]
  %v1199 = vunpack.c.l.bf16 %v1198
  %v1200 = vunpack.c.h.bf16 %v1198
  %s1201 = scalar_lea.vmem %s1, 56
  %v1202 = vpack.c.bf16 0.0, %v1199
  %1203 = vst [vmem:[%s1201] sm:$0xf] %v1202
  %s1204 = scalar_lea.vmem %s0, 536
  %v1205 = vld [vmem:[%s1204] sm:$0xf]
  %v1206 = vunpack.c.l.bf16 %v1205
  %v1207 = vunpack.c.h.bf16 %v1205
  %s1208 = scalar_lea.vmem %s1, 344
  %v1209 = vpack.c.bf16 0.0, %v1206
  %1210 = vst [vmem:[%s1208] sm:$0xf] %v1209
  %s1211 = scalar_lea.vmem %s0, 248
  %v1212 = vld [vmem:[%s1211] sm:$0xf]
  %v1213 = vunpack.c.l.bf16 %v1212
  %v1214 = vunpack.c.h.bf16 %v1212
  %s1215 = scalar_lea.vmem %s1, 632
  %v1216 = vpack.c.bf16 0.0, %v1213
  %1217 = vst [vmem:[%s1215] sm:$0xf] %v1216
  %s1218 = scalar_lea.vmem %s0, 728
  %v1219 = vld [vmem:[%s1218] sm:$0xf]
  %v1220 = vunpack.c.l.bf16 %v1219
  %v1221 = vunpack.c.h.bf16 %v1219
  %s1222 = scalar_lea.vmem %s1, 152
  %v1223 = vpack.c.bf16 0.0, %v1220
  %1224 = vst [vmem:[%s1222] sm:$0xf] %v1223
  %s1225 = scalar_lea.vmem %s0, 440
  %v1226 = vld [vmem:[%s1225] sm:$0xf]
  %v1227 = vunpack.c.l.bf16 %v1226
  %v1228 = vunpack.c.h.bf16 %v1226
  %s1229 = scalar_lea.vmem %s1, 440
  %v1230 = vpack.c.bf16 0.0, %v1227
  %1231 = vst [vmem:[%s1229] sm:$0xf] %v1230
  %s1232 = scalar_lea.vmem %s0, 152
  %v1233 = vld [vmem:[%s1232] sm:$0xf]
  %v1234 = vunpack.c.l.bf16 %v1233
  %v1235 = vunpack.c.h.bf16 %v1233
  %s1236 = scalar_lea.vmem %s1, 728
  %v1237 = vpack.c.bf16 0.0, %v1234
  %1238 = vst [vmem:[%s1236] sm:$0xf] %v1237
  %s1239 = scalar_lea.vmem %s0, 632
  %v1240 = vld [vmem:[%s1239] sm:$0xf]
  %v1241 = vunpack.c.l.bf16 %v1240
  %v1242 = vunpack.c.h.bf16 %v1240
  %s1243 = scalar_lea.vmem %s1, 248
  %v1244 = vpack.c.bf16 0.0, %v1241
  %1245 = vst [vmem:[%s1243] sm:$0xf] %v1244
  %s1246 = scalar_lea.vmem %s0, 344
  %v1247 = vld [vmem:[%s1246] sm:$0xf]
  %v1248 = vunpack.c.l.bf16 %v1247
  %v1249 = vunpack.c.h.bf16 %v1247
  %s1250 = scalar_lea.vmem %s1, 536
  %v1251 = vpack.c.bf16 0.0, %v1248
  %1252 = vst [vmem:[%s1250] sm:$0xf] %v1251
  %s1253 = scalar_lea.vmem %s0, 56
  %v1254 = vld [vmem:[%s1253] sm:$0xf]
  %v1255 = vunpack.c.l.bf16 %v1254
  %v1256 = vunpack.c.h.bf16 %v1254
  %s1257 = scalar_lea.vmem %s1, 824
  %v1258 = vpack.c.bf16 0.0, %v1255
  %1259 = vst [vmem:[%s1257] sm:$0xf] %v1258
  %s1260 = scalar_lea.vmem %s0, 792
  %v1261 = vld [vmem:[%s1260] sm:$0xf]
  %v1262 = vunpack.c.l.bf16 %v1261
  %v1263 = vunpack.c.h.bf16 %v1261
  %s1264 = scalar_lea.vmem %s1, 88
  %v1265 = vpack.c.bf16 0.0, %v1262
  %1266 = vst [vmem:[%s1264] sm:$0xf] %v1265
  %s1267 = scalar_lea.vmem %s0, 504
  %v1268 = vld [vmem:[%s1267] sm:$0xf]
  %v1269 = vunpack.c.l.bf16 %v1268
  %v1270 = vunpack.c.h.bf16 %v1268
  %s1271 = scalar_lea.vmem %s1, 376
  %v1272 = vpack.c.bf16 0.0, %v1269
  %1273 = vst [vmem:[%s1271] sm:$0xf] %v1272
  %s1274 = scalar_lea.vmem %s0, 216
  %v1275 = vld [vmem:[%s1274] sm:$0xf]
  %v1276 = vunpack.c.l.bf16 %v1275
  %v1277 = vunpack.c.h.bf16 %v1275
  %s1278 = scalar_lea.vmem %s1, 664
  %v1279 = vpack.c.bf16 0.0, %v1276
  %1280 = vst [vmem:[%s1278] sm:$0xf] %v1279
  %s1281 = scalar_lea.vmem %s0, 696
  %v1282 = vld [vmem:[%s1281] sm:$0xf]
  %v1283 = vunpack.c.l.bf16 %v1282
  %v1284 = vunpack.c.h.bf16 %v1282
  %s1285 = scalar_lea.vmem %s1, 184
  %v1286 = vpack.c.bf16 0.0, %v1283
  %1287 = vst [vmem:[%s1285] sm:$0xf] %v1286
  %s1288 = scalar_lea.vmem %s0, 408
  %v1289 = vld [vmem:[%s1288] sm:$0xf]
  %v1290 = vunpack.c.l.bf16 %v1289
  %v1291 = vunpack.c.h.bf16 %v1289
  %s1292 = scalar_lea.vmem %s1, 472
  %v1293 = vpack.c.bf16 0.0, %v1290
  %1294 = vst [vmem:[%s1292] sm:$0xf] %v1293
  %s1295 = scalar_lea.vmem %s0, 120
  %v1296 = vld [vmem:[%s1295] sm:$0xf]
  %v1297 = vunpack.c.l.bf16 %v1296
  %v1298 = vunpack.c.h.bf16 %v1296
  %s1299 = scalar_lea.vmem %s1, 760
  %v1300 = vpack.c.bf16 0.0, %v1297
  %1301 = vst [vmem:[%s1299] sm:$0xf] %v1300
  %s1302 = scalar_lea.vmem %s0, 600
  %v1303 = vld [vmem:[%s1302] sm:$0xf]
  %v1304 = vunpack.c.l.bf16 %v1303
  %v1305 = vunpack.c.h.bf16 %v1303
  %s1306 = scalar_lea.vmem %s1, 280
  %v1307 = vpack.c.bf16 0.0, %v1304
  %1308 = vst [vmem:[%s1306] sm:$0xf] %v1307
  %s1309 = scalar_lea.vmem %s0, 312
  %v1310 = vld [vmem:[%s1309] sm:$0xf]
  %v1311 = vunpack.c.l.bf16 %v1310
  %v1312 = vunpack.c.h.bf16 %v1310
  %s1313 = scalar_lea.vmem %s1, 568
  %v1314 = vpack.c.bf16 0.0, %v1311
  %1315 = vst [vmem:[%s1313] sm:$0xf] %v1314
  %s1316 = scalar_lea.vmem %s0, 24
  %v1317 = vld [vmem:[%s1316] sm:$0xf]
  %v1318 = vunpack.c.l.bf16 %v1317
  %v1319 = vunpack.c.h.bf16 %v1317
  %s1320 = scalar_lea.vmem %s1, 856
  %v1321 = vpack.c.bf16 0.0, %v1318
  %1322 = vst [vmem:[%s1320] sm:$0xf] %v1321
  %s1323 = scalar_lea.vmem %s0, 860
  %v1324 = vld [vmem:[%s1323] sm:$0xf]
  %v1325 = vunpack.c.l.bf16 %v1324
  %v1326 = vunpack.c.h.bf16 %v1324
  %s1327 = scalar_lea.vmem %s1, 28
  %v1328 = vpack.c.bf16 0.0, %v1325
  %1329 = vst [vmem:[%s1327] sm:$0xf] %v1328
  %s1330 = scalar_lea.vmem %s0, 572
  %v1331 = vld [vmem:[%s1330] sm:$0xf]
  %v1332 = vunpack.c.l.bf16 %v1331
  %v1333 = vunpack.c.h.bf16 %v1331
  %s1334 = scalar_lea.vmem %s1, 316
  %v1335 = vpack.c.bf16 0.0, %v1332
  %1336 = vst [vmem:[%s1334] sm:$0xf] %v1335
  %s1337 = scalar_lea.vmem %s0, 284
  %v1338 = vld [vmem:[%s1337] sm:$0xf]
  %v1339 = vunpack.c.l.bf16 %v1338
  %v1340 = vunpack.c.h.bf16 %v1338
  %s1341 = scalar_lea.vmem %s1, 604
  %v1342 = vpack.c.bf16 0.0, %v1339
  %1343 = vst [vmem:[%s1341] sm:$0xf] %v1342
  %s1344 = scalar_lea.vmem %s0, 764
  %v1345 = vld [vmem:[%s1344] sm:$0xf]
  %v1346 = vunpack.c.l.bf16 %v1345
  %v1347 = vunpack.c.h.bf16 %v1345
  %s1348 = scalar_lea.vmem %s1, 124
  %v1349 = vpack.c.bf16 0.0, %v1346
  %1350 = vst [vmem:[%s1348] sm:$0xf] %v1349
  %s1351 = scalar_lea.vmem %s0, 476
  %v1352 = vld [vmem:[%s1351] sm:$0xf]
  %v1353 = vunpack.c.l.bf16 %v1352
  %v1354 = vunpack.c.h.bf16 %v1352
  %s1355 = scalar_lea.vmem %s1, 412
  %v1356 = vpack.c.bf16 0.0, %v1353
  %1357 = vst [vmem:[%s1355] sm:$0xf] %v1356
  %s1358 = scalar_lea.vmem %s0, 188
  %v1359 = vld [vmem:[%s1358] sm:$0xf]
  %v1360 = vunpack.c.l.bf16 %v1359
  %v1361 = vunpack.c.h.bf16 %v1359
  %s1362 = scalar_lea.vmem %s1, 700
  %v1363 = vpack.c.bf16 0.0, %v1360
  %1364 = vst [vmem:[%s1362] sm:$0xf] %v1363
  %s1365 = scalar_lea.vmem %s0, 668
  %v1366 = vld [vmem:[%s1365] sm:$0xf]
  %v1367 = vunpack.c.l.bf16 %v1366
  %v1368 = vunpack.c.h.bf16 %v1366
  %s1369 = scalar_lea.vmem %s1, 220
  %v1370 = vpack.c.bf16 0.0, %v1367
  %1371 = vst [vmem:[%s1369] sm:$0xf] %v1370
  %s1372 = scalar_lea.vmem %s0, 380
  %v1373 = vld [vmem:[%s1372] sm:$0xf]
  %v1374 = vunpack.c.l.bf16 %v1373
  %v1375 = vunpack.c.h.bf16 %v1373
  %s1376 = scalar_lea.vmem %s1, 508
  %v1377 = vpack.c.bf16 0.0, %v1374
  %1378 = vst [vmem:[%s1376] sm:$0xf] %v1377
  %s1379 = scalar_lea.vmem %s0, 92
  %v1380 = vld [vmem:[%s1379] sm:$0xf]
  %v1381 = vunpack.c.l.bf16 %v1380
  %v1382 = vunpack.c.h.bf16 %v1380
  %s1383 = scalar_lea.vmem %s1, 796
  %v1384 = vpack.c.bf16 0.0, %v1381
  %1385 = vst [vmem:[%s1383] sm:$0xf] %v1384
  %s1386 = scalar_lea.vmem %s0, 828
  %v1387 = vld [vmem:[%s1386] sm:$0xf]
  %v1388 = vunpack.c.l.bf16 %v1387
  %v1389 = vunpack.c.h.bf16 %v1387
  %s1390 = scalar_lea.vmem %s1, 60
  %v1391 = vpack.c.bf16 0.0, %v1388
  %1392 = vst [vmem:[%s1390] sm:$0xf] %v1391
  %s1393 = scalar_lea.vmem %s0, 540
  %v1394 = vld [vmem:[%s1393] sm:$0xf]
  %v1395 = vunpack.c.l.bf16 %v1394
  %v1396 = vunpack.c.h.bf16 %v1394
  %s1397 = scalar_lea.vmem %s1, 348
  %v1398 = vpack.c.bf16 0.0, %v1395
  %1399 = vst [vmem:[%s1397] sm:$0xf] %v1398
  %s1400 = scalar_lea.vmem %s0, 252
  %v1401 = vld [vmem:[%s1400] sm:$0xf]
  %v1402 = vunpack.c.l.bf16 %v1401
  %v1403 = vunpack.c.h.bf16 %v1401
  %s1404 = scalar_lea.vmem %s1, 636
  %v1405 = vpack.c.bf16 0.0, %v1402
  %1406 = vst [vmem:[%s1404] sm:$0xf] %v1405
  %s1407 = scalar_lea.vmem %s0, 732
  %v1408 = vld [vmem:[%s1407] sm:$0xf]
  %v1409 = vunpack.c.l.bf16 %v1408
  %v1410 = vunpack.c.h.bf16 %v1408
  %s1411 = scalar_lea.vmem %s1, 156
  %v1412 = vpack.c.bf16 0.0, %v1409
  %1413 = vst [vmem:[%s1411] sm:$0xf] %v1412
  %s1414 = scalar_lea.vmem %s0, 444
  %v1415 = vld [vmem:[%s1414] sm:$0xf]
  %v1416 = vunpack.c.l.bf16 %v1415
  %v1417 = vunpack.c.h.bf16 %v1415
  %s1418 = scalar_lea.vmem %s1, 444
  %v1419 = vpack.c.bf16 0.0, %v1416
  %1420 = vst [vmem:[%s1418] sm:$0xf] %v1419
  %s1421 = scalar_lea.vmem %s0, 156
  %v1422 = vld [vmem:[%s1421] sm:$0xf]
  %v1423 = vunpack.c.l.bf16 %v1422
  %v1424 = vunpack.c.h.bf16 %v1422
  %s1425 = scalar_lea.vmem %s1, 732
  %v1426 = vpack.c.bf16 0.0, %v1423
  %1427 = vst [vmem:[%s1425] sm:$0xf] %v1426
  %s1428 = scalar_lea.vmem %s0, 636
  %v1429 = vld [vmem:[%s1428] sm:$0xf]
  %v1430 = vunpack.c.l.bf16 %v1429
  %v1431 = vunpack.c.h.bf16 %v1429
  %s1432 = scalar_lea.vmem %s1, 252
  %v1433 = vpack.c.bf16 0.0, %v1430
  %1434 = vst [vmem:[%s1432] sm:$0xf] %v1433
  %s1435 = scalar_lea.vmem %s0, 348
  %v1436 = vld [vmem:[%s1435] sm:$0xf]
  %v1437 = vunpack.c.l.bf16 %v1436
  %v1438 = vunpack.c.h.bf16 %v1436
  %s1439 = scalar_lea.vmem %s1, 540
  %v1440 = vpack.c.bf16 0.0, %v1437
  %1441 = vst [vmem:[%s1439] sm:$0xf] %v1440
  %s1442 = scalar_lea.vmem %s0, 60
  %v1443 = vld [vmem:[%s1442] sm:$0xf]
  %v1444 = vunpack.c.l.bf16 %v1443
  %v1445 = vunpack.c.h.bf16 %v1443
  %s1446 = scalar_lea.vmem %s1, 828
  %v1447 = vpack.c.bf16 0.0, %v1444
  %1448 = vst [vmem:[%s1446] sm:$0xf] %v1447
  %s1449 = scalar_lea.vmem %s0, 796
  %v1450 = vld [vmem:[%s1449] sm:$0xf]
  %v1451 = vunpack.c.l.bf16 %v1450
  %v1452 = vunpack.c.h.bf16 %v1450
  %s1453 = scalar_lea.vmem %s1, 92
  %v1454 = vpack.c.bf16 0.0, %v1451
  %1455 = vst [vmem:[%s1453] sm:$0xf] %v1454
  %s1456 = scalar_lea.vmem %s0, 508
  %v1457 = vld [vmem:[%s1456] sm:$0xf]
  %v1458 = vunpack.c.l.bf16 %v1457
  %v1459 = vunpack.c.h.bf16 %v1457
  %s1460 = scalar_lea.vmem %s1, 380
  %v1461 = vpack.c.bf16 0.0, %v1458
  %1462 = vst [vmem:[%s1460] sm:$0xf] %v1461
  %s1463 = scalar_lea.vmem %s0, 220
  %v1464 = vld [vmem:[%s1463] sm:$0xf]
  %v1465 = vunpack.c.l.bf16 %v1464
  %v1466 = vunpack.c.h.bf16 %v1464
  %s1467 = scalar_lea.vmem %s1, 668
  %v1468 = vpack.c.bf16 0.0, %v1465
  %1469 = vst [vmem:[%s1467] sm:$0xf] %v1468
  %s1470 = scalar_lea.vmem %s0, 700
  %v1471 = vld [vmem:[%s1470] sm:$0xf]
  %v1472 = vunpack.c.l.bf16 %v1471
  %v1473 = vunpack.c.h.bf16 %v1471
  %s1474 = scalar_lea.vmem %s1, 188
  %v1475 = vpack.c.bf16 0.0, %v1472
  %1476 = vst [vmem:[%s1474] sm:$0xf] %v1475
  %s1477 = scalar_lea.vmem %s0, 412
  %v1478 = vld [vmem:[%s1477] sm:$0xf]
  %v1479 = vunpack.c.l.bf16 %v1478
  %v1480 = vunpack.c.h.bf16 %v1478
  %s1481 = scalar_lea.vmem %s1, 476
  %v1482 = vpack.c.bf16 0.0, %v1479
  %1483 = vst [vmem:[%s1481] sm:$0xf] %v1482
  %s1484 = scalar_lea.vmem %s0, 124
  %v1485 = vld [vmem:[%s1484] sm:$0xf]
  %v1486 = vunpack.c.l.bf16 %v1485
  %v1487 = vunpack.c.h.bf16 %v1485
  %s1488 = scalar_lea.vmem %s1, 764
  %v1489 = vpack.c.bf16 0.0, %v1486
  %1490 = vst [vmem:[%s1488] sm:$0xf] %v1489
  %s1491 = scalar_lea.vmem %s0, 604
  %v1492 = vld [vmem:[%s1491] sm:$0xf]
  %v1493 = vunpack.c.l.bf16 %v1492
  %v1494 = vunpack.c.h.bf16 %v1492
  %s1495 = scalar_lea.vmem %s1, 284
  %v1496 = vpack.c.bf16 0.0, %v1493
  %1497 = vst [vmem:[%s1495] sm:$0xf] %v1496
  %s1498 = scalar_lea.vmem %s0, 316
  %v1499 = vld [vmem:[%s1498] sm:$0xf]
  %v1500 = vunpack.c.l.bf16 %v1499
  %v1501 = vunpack.c.h.bf16 %v1499
  %s1502 = scalar_lea.vmem %s1, 572
  %v1503 = vpack.c.bf16 0.0, %v1500
  %1504 = vst [vmem:[%s1502] sm:$0xf] %v1503
  %s1505 = scalar_lea.vmem %s0, 28
  %v1506 = vld [vmem:[%s1505] sm:$0xf]
  %v1507 = vunpack.c.l.bf16 %v1506
  %v1508 = vunpack.c.h.bf16 %v1506
  %s1509 = scalar_lea.vmem %s1, 860
  %v1510 = vpack.c.bf16 0.0, %v1507
  %1511 = vst [vmem:[%s1509] sm:$0xf] %v1510

// kernel: physnet_forward.18
$region0: #{physnet_forward.18}
  #allocation0 [shape = 'u32[]', space=smem, size = 0x4, offset = 0x4, fixed_abs, tag = 'smem constant byte address 0x4 - core index']
  #allocation1 [shape = 'u32[72,128]{1,0:T(1,128)}', space=vmem, size = 0x9000, scoped, tag = 'internal scratch']
  %s0 = inlined_call_operand.vmem [shape: bf16[8,128], index: 0, kind: input, shape index: {}]
  %s1 = inlined_call_operand.vmem [shape: f32[1,128], index: 1, kind: input, shape index: {}]
  %s2 = inlined_call_operand.vmem [shape: f32[1,128], index: 2, kind: input, shape index: {}]
  %s3 = inlined_call_operand.vmem [shape: bf16[8,128], index: 3, kind: output, shape index: {}]
  %s4 = sld [smem:[#allocation0]]
  $region22: #{physnet_forward.18} parent=0
    _
  %s6 = ssub.s32 1, %s4
  %s7 = scalar_select 0, %s6, %s4
  // Predicated region
  $region2: #{physnet_forward.18} parent=0 // pred_check
    _
  $region3: #{physnet_forward.18} parent=0 // pred_check_branch
    %9 = sbr.rel (0) target = $region5
  $region4: #{physnet_forward.18} parent=0 // pred_region
    _
  $region5: #{physnet_forward.18} parent=0 // pred_fallthru
    _
  // Predicated region
  $region6: #{physnet_forward.18} parent=0 // pred_check
    _
  $region7: #{physnet_forward.18} parent=0 // pred_check_branch
    %11 = sbr.rel (0) target = $region9
  $region8: #{physnet_forward.18} parent=0 // pred_region
    _
  $region9: #{physnet_forward.18} parent=0 // pred_fallthru
    _
  // Predicated region
  $region10: #{physnet_forward.18} parent=0 // pred_check
    _
  $region11: #{physnet_forward.18} parent=0 // pred_check_branch
    %13 = sbr.rel (0) target = $region13
  $region12: #{physnet_forward.18} parent=0 // pred_region
    _
  $region13: #{physnet_forward.18} parent=0 // pred_fallthru
    _
  %v14 = vld [vmem:[%s0] sm:$0xf]
  %v15 = vunpack.c.l.bf16 %v14
  %v16 = vld [vmem:[%s1] sm:$0x1]
  %v18 = vperm.slane %v16, 0
  %v20 = vmul.f32 %v15, %v18
  %v21 = vld [vmem:[%s2] sm:$0x1]
  %v23 = vperm.slane %v21, 0
  %v25 = vadd.f32 %v20, %v23
  %v26 = vmax.f32 %v25, 0.0
  %v27 = vpack.c.bf16 %v26, %v26
  %28 = vst [vmem:[%s3] sm:$0xf] %v27
  // Predicated region
  $region14: #{physnet_forward.18} parent=0 // pred_check
    _
  $region15: #{physnet_forward.18} parent=0 // pred_check_branch
    %30 = sbr.rel (0) target = $region17
  $region16: #{physnet_forward.18} parent=0 // pred_region
    _
  $region17: #{physnet_forward.18} parent=0 // pred_fallthru
    _
  // Predicated region
  $region18: #{physnet_forward.18} parent=0 // pred_check
    _
  $region19: #{physnet_forward.18} parent=0 // pred_check_branch
    %32 = sbr.rel (0) target = $region21
  $region20: #{physnet_forward.18} parent=0 // pred_region
    _
  $region21: #{physnet_forward.18} parent=0 // pred_fallthru
    _

// kernel: physnet_forward.20
$region0: #{physnet_forward.20}
  #allocation0 [shape = 'u32[]', space=smem, size = 0x4, offset = 0x4, fixed_abs, tag = 'smem constant byte address 0x4 - core index']
  #allocation1 [shape = 'u32[72,128]{1,0:T(1,128)}', space=vmem, size = 0x9000, scoped, tag = 'internal scratch']
  %s0 = inlined_call_operand.vmem [shape: bf16[2,128], index: 0, kind: input, shape index: {}]
  %s1 = inlined_call_operand.vmem [shape: f32[1,128], index: 1, kind: input, shape index: {}]
  %s2 = inlined_call_operand.vmem [shape: f32[1,128], index: 2, kind: input, shape index: {}]
  %s3 = inlined_call_operand.vmem [shape: bf16[2,128], index: 3, kind: output, shape index: {}]
  %s4 = sld [smem:[#allocation0]]
  $region22: #{physnet_forward.20} parent=0
    _
  %s6 = ssub.s32 1, %s4
  %s7 = scalar_select 0, %s6, %s4
  // Predicated region
  $region2: #{physnet_forward.20} parent=0 // pred_check
    _
  $region3: #{physnet_forward.20} parent=0 // pred_check_branch
    %9 = sbr.rel (0) target = $region5
  $region4: #{physnet_forward.20} parent=0 // pred_region
    _
  $region5: #{physnet_forward.20} parent=0 // pred_fallthru
    _
  // Predicated region
  $region6: #{physnet_forward.20} parent=0 // pred_check
    _
  $region7: #{physnet_forward.20} parent=0 // pred_check_branch
    %11 = sbr.rel (0) target = $region9
  $region8: #{physnet_forward.20} parent=0 // pred_region
    _
  $region9: #{physnet_forward.20} parent=0 // pred_fallthru
    _
  // Predicated region
  $region10: #{physnet_forward.20} parent=0 // pred_check
    _
  $region11: #{physnet_forward.20} parent=0 // pred_check_branch
    %13 = sbr.rel (0) target = $region13
  $region12: #{physnet_forward.20} parent=0 // pred_region
    _
  $region13: #{physnet_forward.20} parent=0 // pred_fallthru
    _
  %v14 = vld [vmem:[%s0] sm:$0x1]
  %v15 = vunpack.c.l.bf16 %v14
  %v16 = vld [vmem:[%s1] sm:$0x1]
  %v18 = vperm.slane %v16, 0
  %v20 = vmul.f32 %v15, %v18
  %v21 = vld [vmem:[%s2] sm:$0x1]
  %v23 = vperm.slane %v21, 0
  %v25 = vadd.f32 %v20, %v23
  %v26 = vmax.f32 %v25, 0.0
  %v27 = vpack.c.bf16 %v26, %v26
  %28 = vst [vmem:[%s3] sm:$0x1] %v27
  // Predicated region
  $region14: #{physnet_forward.20} parent=0 // pred_check
    _
  $region15: #{physnet_forward.20} parent=0 // pred_check_branch
    %30 = sbr.rel (0) target = $region17
  $region16: #{physnet_forward.20} parent=0 // pred_region
    _
  $region17: #{physnet_forward.20} parent=0 // pred_fallthru
    _
  // Predicated region
  $region18: #{physnet_forward.20} parent=0 // pred_check
    _
  $region19: #{physnet_forward.20} parent=0 // pred_check_branch
    %32 = sbr.rel (0) target = $region21
  $region20: #{physnet_forward.20} parent=0 // pred_region
    _
  $region21: #{physnet_forward.20} parent=0 // pred_fallthru
    _

// kernel: reverse.4
$region0: #{reverse.4}
  #allocation0 [shape = 's32[1]{0}', space=sflag, size = 0x4, scoped, tag = 'scoped memory for reverse.4']
  %s0 = inlined_call_operand.vmem [shape: bf16[64,64,4,1,1], index: 0, kind: input, shape index: {}]
  %s1 = inlined_call_operand.vmem [shape: bf16[64,64,4,1,1], index: 1, kind: output, shape index: {}]
  %s2 = scalar_lea.vmem %s0, 3
  %v3 = vld [vmem:[%s2] ss:$0 sm:$0x3]
  %v4 = vunpack.i.l.bf16 %v3
  %v6 = vunpack.i.h.bf16 %v3
  %v8 = vpack.c.bf16 0.0, %v4
  %9 = vst [vmem:[%s1] sm:$0x1] %v8
  %s10 = scalar_lea.vmem %s0, 7
  %v11 = vld [vmem:[%s10] ss:$0 sm:$0x3]
  %v12 = vunpack.i.l.bf16 %v11
  %v14 = vunpack.i.h.bf16 %v11
  %s16 = scalar_lea.vmem %s1, 4
  %v17 = vpack.c.bf16 0.0, %v12
  %18 = vst [vmem:[%s16] sm:$0x1] %v17
  %s19 = scalar_lea.vmem %s0, 11
  %v20 = vld [vmem:[%s19] ss:$0 sm:$0x3]
  %v21 = vunpack.i.l.bf16 %v20
  %v23 = vunpack.i.h.bf16 %v20
  %s25 = scalar_lea.vmem %s1, 8
  %v26 = vpack.c.bf16 0.0, %v21
  %27 = vst [vmem:[%s25] sm:$0x1] %v26
  %s28 = scalar_lea.vmem %s0, 15
  %v29 = vld [vmem:[%s28] ss:$0 sm:$0x3]
  %v30 = vunpack.i.l.bf16 %v29
  %v32 = vunpack.i.h.bf16 %v29
  %s34 = scalar_lea.vmem %s1, 12
  %v35 = vpack.c.bf16 0.0, %v30
  %36 = vst [vmem:[%s34] sm:$0x1] %v35
  %s37 = scalar_lea.vmem %s0, 19
  %v38 = vld [vmem:[%s37] ss:$0 sm:$0x3]
  %v39 = vunpack.i.l.bf16 %v38
  %v41 = vunpack.i.h.bf16 %v38
  %s43 = scalar_lea.vmem %s1, 16
  %v44 = vpack.c.bf16 0.0, %v39
  %45 = vst [vmem:[%s43] sm:$0x1] %v44
  %s46 = scalar_lea.vmem %s0, 23
  %v47 = vld [vmem:[%s46] ss:$0 sm:$0x3]
  %v48 = vunpack.i.l.bf16 %v47
  %v50 = vunpack.i.h.bf16 %v47
  %s52 = scalar_lea.vmem %s1, 20
  %v53 = vpack.c.bf16 0.0, %v48
  %54 = vst [vmem:[%s52] sm:$0x1] %v53
  %s55 = scalar_lea.vmem %s0, 27
  %v56 = vld [vmem:[%s55] ss:$0 sm:$0x3]
  %v57 = vunpack.i.l.bf16 %v56
  %v59 = vunpack.i.h.bf16 %v56
  %s61 = scalar_lea.vmem %s1, 24
  %v62 = vpack.c.bf16 0.0, %v57
  %63 = vst [vmem:[%s61] sm:$0x1] %v62
  %s64 = scalar_lea.vmem %s0, 31
  %v65 = vld [vmem:[%s64] ss:$0 sm:$0x3]
  %v66 = vunpack.i.l.bf16 %v65
  %v68 = vunpack.i.h.bf16 %v65
  %s70 = scalar_lea.vmem %s1, 28
  %v71 = vpack.c.bf16 0.0, %v66
  %72 = vst [vmem:[%s70] sm:$0x1] %v71
  %s73 = scalar_lea.vmem %s0, 35
  %v74 = vld [vmem:[%s73] ss:$0 sm:$0x3]
  %v75 = vunpack.i.l.bf16 %v74
  %v77 = vunpack.i.h.bf16 %v74
  %s79 = scalar_lea.vmem %s1, 32
  %v80 = vpack.c.bf16 0.0, %v75
  %81 = vst [vmem:[%s79] sm:$0x1] %v80
  %s82 = scalar_lea.vmem %s0, 39
  %v83 = vld [vmem:[%s82] ss:$0 sm:$0x3]
  %v84 = vunpack.i.l.bf16 %v83
  %v86 = vunpack.i.h.bf16 %v83
  %s88 = scalar_lea.vmem %s1, 36
  %v89 = vpack.c.bf16 0.0, %v84
  %90 = vst [vmem:[%s88] sm:$0x1] %v89
  %s91 = scalar_lea.vmem %s0, 43
  %v92 = vld [vmem:[%s91] ss:$0 sm:$0x3]
  %v93 = vunpack.i.l.bf16 %v92
  %v95 = vunpack.i.h.bf16 %v92
  %s97 = scalar_lea.vmem %s1, 40
  %v98 = vpack.c.bf16 0.0, %v93
  %99 = vst [vmem:[%s97] sm:$0x1] %v98
  %s100 = scalar_lea.vmem %s0, 47
  %v101 = vld [vmem:[%s100] ss:$0 sm:$0x3]
  %v102 = vunpack.i.l.bf16 %v101
  %v104 = vunpack.i.h.bf16 %v101
  %s106 = scalar_lea.vmem %s1, 44
  %v107 = vpack.c.bf16 0.0, %v102
  %108 = vst [vmem:[%s106] sm:$0x1] %v107
  %s109 = scalar_lea.vmem %s0, 51
  %v110 = vld [vmem:[%s109] ss:$0 sm:$0x3]
  %v111 = vunpack.i.l.bf16 %v110
  %v113 = vunpack.i.h.bf16 %v110
  %s115 = scalar_lea.vmem %s1, 48
  %v116 = vpack.c.bf16 0.0, %v111
  %117 = vst [vmem:[%s115] sm:$0x1] %v116
  %s118 = scalar_lea.vmem %s0, 55
  %v119 = vld [vmem:[%s118] ss:$0 sm:$0x3]
  %v120 = vunpack.i.l.bf16 %v119
  %v122 = vunpack.i.h.bf16 %v119
  %s124 = scalar_lea.vmem %s1, 52
  %v125 = vpack.c.bf16 0.0, %v120
  %126 = vst [vmem:[%s124] sm:$0x1] %v125
  %s127 = scalar_lea.vmem %s0, 59
  %v128 = vld [vmem:[%s127] ss:$0 sm:$0x3]
  %v129 = vunpack.i.l.bf16 %v128
  %v131 = vunpack.i.h.bf16 %v128
  %s133 = scalar_lea.vmem %s1, 56
  %v134 = vpack.c.bf16 0.0, %v129
  %135 = vst [vmem:[%s133] sm:$0x1] %v134
  %s136 = scalar_lea.vmem %s0, 63
  %v137 = vld [vmem:[%s136] ss:$0 sm:$0x3]
  %v138 = vunpack.i.l.bf16 %v137
  %v140 = vunpack.i.h.bf16 %v137
  %s142 = scalar_lea.vmem %s1, 60
  %v143 = vpack.c.bf16 0.0, %v138
  %144 = vst [vmem:[%s142] sm:$0x1] %v143
  %s145 = scalar_lea.vmem %s0, 67
  %v146 = vld [vmem:[%s145] ss:$0 sm:$0x3]
  %v147 = vunpack.i.l.bf16 %v146
  %v149 = vunpack.i.h.bf16 %v146
  %s151 = scalar_lea.vmem %s1, 64
  %v152 = vpack.c.bf16 0.0, %v147
  %153 = vst [vmem:[%s151] sm:$0x1] %v152
  %s154 = scalar_lea.vmem %s0, 71
  %v155 = vld [vmem:[%s154] ss:$0 sm:$0x3]
  %v156 = vunpack.i.l.bf16 %v155
  %v158 = vunpack.i.h.bf16 %v155
  %s160 = scalar_lea.vmem %s1, 68
  %v161 = vpack.c.bf16 0.0, %v156
  %162 = vst [vmem:[%s160] sm:$0x1] %v161
  %s163 = scalar_lea.vmem %s0, 75
  %v164 = vld [vmem:[%s163] ss:$0 sm:$0x3]
  %v165 = vunpack.i.l.bf16 %v164
  %v167 = vunpack.i.h.bf16 %v164
  %s169 = scalar_lea.vmem %s1, 72
  %v170 = vpack.c.bf16 0.0, %v165
  %171 = vst [vmem:[%s169] sm:$0x1] %v170
  %s172 = scalar_lea.vmem %s0, 79
  %v173 = vld [vmem:[%s172] ss:$0 sm:$0x3]
  %v174 = vunpack.i.l.bf16 %v173
  %v176 = vunpack.i.h.bf16 %v173
  %s178 = scalar_lea.vmem %s1, 76
  %v179 = vpack.c.bf16 0.0, %v174
  %180 = vst [vmem:[%s178] sm:$0x1] %v179
  %s181 = scalar_lea.vmem %s0, 83
  %v182 = vld [vmem:[%s181] ss:$0 sm:$0x3]
  %v183 = vunpack.i.l.bf16 %v182
  %v185 = vunpack.i.h.bf16 %v182
  %s187 = scalar_lea.vmem %s1, 80
  %v188 = vpack.c.bf16 0.0, %v183
  %189 = vst [vmem:[%s187] sm:$0x1] %v188
  %s190 = scalar_lea.vmem %s0, 87
  %v191 = vld [vmem:[%s190] ss:$0 sm:$0x3]
  %v192 = vunpack.i.l.bf16 %v191
  %v194 = vunpack.i.h.bf16 %v191
  %s196 = scalar_lea.vmem %s1, 84
  %v197 = vpack.c.bf16 0.0, %v192
  %198 = vst [vmem:[%s196] sm:$0x1] %v197
  %s199 = scalar_lea.vmem %s0, 91
  %v200 = vld [vmem:[%s199] ss:$0 sm:$0x3]
  %v201 = vunpack.i.l.bf16 %v200
  %v203 = vunpack.i.h.bf16 %v200
  %s205 = scalar_lea.vmem %s1, 88
  %v206 = vpack.c.bf16 0.0, %v201
  %207 = vst [vmem:[%s205] sm:$0x1] %v206
  %s208 = scalar_lea.vmem %s0, 95
  %v209 = vld [vmem:[%s208] ss:$0 sm:$0x3]
  %v210 = vunpack.i.l.bf16 %v209
  %v212 = vunpack.i.h.bf16 %v209
  %s214 = scalar_lea.vmem %s1, 92
  %v215 = vpack.c.bf16 0.0, %v210
  %216 = vst [vmem:[%s214] sm:$0x1] %v215
  %s217 = scalar_lea.vmem %s0, 99
  %v218 = vld [vmem:[%s217] ss:$0 sm:$0x3]
  %v219 = vunpack.i.l.bf16 %v218
  %v221 = vunpack.i.h.bf16 %v218
  %s223 = scalar_lea.vmem %s1, 96
  %v224 = vpack.c.bf16 0.0, %v219
  %225 = vst [vmem:[%s223] sm:$0x1] %v224
  %s226 = scalar_lea.vmem %s0, 103
  %v227 = vld [vmem:[%s226] ss:$0 sm:$0x3]
  %v228 = vunpack.i.l.bf16 %v227
  %v230 = vunpack.i.h.bf16 %v227
  %s232 = scalar_lea.vmem %s1, 100
  %v233 = vpack.c.bf16 0.0, %v228
  %234 = vst [vmem:[%s232] sm:$0x1] %v233
  %s235 = scalar_lea.vmem %s0, 107
  %v236 = vld [vmem:[%s235] ss:$0 sm:$0x3]
  %v237 = vunpack.i.l.bf16 %v236
  %v239 = vunpack.i.h.bf16 %v236
  %s241 = scalar_lea.vmem %s1, 104
  %v242 = vpack.c.bf16 0.0, %v237
  %243 = vst [vmem:[%s241] sm:$0x1] %v242
  %s244 = scalar_lea.vmem %s0, 111
  %v245 = vld [vmem:[%s244] ss:$0 sm:$0x3]
  %v246 = vunpack.i.l.bf16 %v245
  %v248 = vunpack.i.h.bf16 %v245
  %s250 = scalar_lea.vmem %s1, 108
  %v251 = vpack.c.bf16 0.0, %v246
  %252 = vst [vmem:[%s250] sm:$0x1] %v251
  %s253 = scalar_lea.vmem %s0, 115
  %v254 = vld [vmem:[%s253] ss:$0 sm:$0x3]
  %v255 = vunpack.i.l.bf16 %v254
  %v257 = vunpack.i.h.bf16 %v254
  %s259 = scalar_lea.vmem %s1, 112
  %v260 = vpack.c.bf16 0.0, %v255
  %261 = vst [vmem:[%s259] sm:$0x1] %v260
  %s262 = scalar_lea.vmem %s0, 119
  %v263 = vld [vmem:[%s262] ss:$0 sm:$0x3]
  %v264 = vunpack.i.l.bf16 %v263
  %v266 = vunpack.i.h.bf16 %v263
  %s268 = scalar_lea.vmem %s1, 116
  %v269 = vpack.c.bf16 0.0, %v264
  %270 = vst [vmem:[%s268] sm:$0x1] %v269
  %s271 = scalar_lea.vmem %s0, 123
  %v272 = vld [vmem:[%s271] ss:$0 sm:$0x3]
  %v273 = vunpack.i.l.bf16 %v272
  %v275 = vunpack.i.h.bf16 %v272
  %s277 = scalar_lea.vmem %s1, 120
  %v278 = vpack.c.bf16 0.0, %v273
  %279 = vst [vmem:[%s277] sm:$0x1] %v278
  %s280 = scalar_lea.vmem %s0, 127
  %v281 = vld [vmem:[%s280] ss:$0 sm:$0x3]
  %v282 = vunpack.i.l.bf16 %v281
  %v284 = vunpack.i.h.bf16 %v281
  %s286 = scalar_lea.vmem %s1, 124
  %v287 = vpack.c.bf16 0.0, %v282
  %288 = vst [vmem:[%s286] sm:$0x1] %v287
  %s289 = scalar_lea.vmem %s0, 131
  %v290 = vld [vmem:[%s289] ss:$0 sm:$0x3]
  %v291 = vunpack.i.l.bf16 %v290
  %v293 = vunpack.i.h.bf16 %v290
  %s295 = scalar_lea.vmem %s1, 128
  %v296 = vpack.c.bf16 0.0, %v291
  %297 = vst [vmem:[%s295] sm:$0x1] %v296
  %s298 = scalar_lea.vmem %s0, 135
  %v299 = vld [vmem:[%s298] ss:$0 sm:$0x3]
  %v300 = vunpack.i.l.bf16 %v299
  %v302 = vunpack.i.h.bf16 %v299
  %s304 = scalar_lea.vmem %s1, 132
  %v305 = vpack.c.bf16 0.0, %v300
  %306 = vst [vmem:[%s304] sm:$0x1] %v305
  %s307 = scalar_lea.vmem %s0, 139
  %v308 = vld [vmem:[%s307] ss:$0 sm:$0x3]
  %v309 = vunpack.i.l.bf16 %v308
  %v311 = vunpack.i.h.bf16 %v308
  %s313 = scalar_lea.vmem %s1, 136
  %v314 = vpack.c.bf16 0.0, %v309
  %315 = vst [vmem:[%s313] sm:$0x1] %v314
  %s316 = scalar_lea.vmem %s0, 143
  %v317 = vld [vmem:[%s316] ss:$0 sm:$0x3]
  %v318 = vunpack.i.l.bf16 %v317
  %v320 = vunpack.i.h.bf16 %v317
  %s322 = scalar_lea.vmem %s1, 140
  %v323 = vpack.c.bf16 0.0, %v318
  %324 = vst [vmem:[%s322] sm:$0x1] %v323
  %s325 = scalar_lea.vmem %s0, 147
  %v326 = vld [vmem:[%s325] ss:$0 sm:$0x3]
  %v327 = vunpack.i.l.bf16 %v326
  %v329 = vunpack.i.h.bf16 %v326
  %s331 = scalar_lea.vmem %s1, 144
  %v332 = vpack.c.bf16 0.0, %v327
  %333 = vst [vmem:[%s331] sm:$0x1] %v332
  %s334 = scalar_lea.vmem %s0, 151
  %v335 = vld [vmem:[%s334] ss:$0 sm:$0x3]
  %v336 = vunpack.i.l.bf16 %v335
  %v338 = vunpack.i.h.bf16 %v335
  %s340 = scalar_lea.vmem %s1, 148
  %v341 = vpack.c.bf16 0.0, %v336
  %342 = vst [vmem:[%s340] sm:$0x1] %v341
  %s343 = scalar_lea.vmem %s0, 155
  %v344 = vld [vmem:[%s343] ss:$0 sm:$0x3]
  %v345 = vunpack.i.l.bf16 %v344
  %v347 = vunpack.i.h.bf16 %v344
  %s349 = scalar_lea.vmem %s1, 152
  %v350 = vpack.c.bf16 0.0, %v345
  %351 = vst [vmem:[%s349] sm:$0x1] %v350
  %s352 = scalar_lea.vmem %s0, 159
  %v353 = vld [vmem:[%s352] ss:$0 sm:$0x3]
  %v354 = vunpack.i.l.bf16 %v353
  %v356 = vunpack.i.h.bf16 %v353
  %s358 = scalar_lea.vmem %s1, 156
  %v359 = vpack.c.bf16 0.0, %v354
  %360 = vst [vmem:[%s358] sm:$0x1] %v359
  %s361 = scalar_lea.vmem %s0, 163
  %v362 = vld [vmem:[%s361] ss:$0 sm:$0x3]
  %v363 = vunpack.i.l.bf16 %v362
  %v365 = vunpack.i.h.bf16 %v362
  %s367 = scalar_lea.vmem %s1, 160
  %v368 = vpack.c.bf16 0.0, %v363
  %369 = vst [vmem:[%s367] sm:$0x1] %v368
  %s370 = scalar_lea.vmem %s0, 167
  %v371 = vld [vmem:[%s370] ss:$0 sm:$0x3]
  %v372 = vunpack.i.l.bf16 %v371
  %v374 = vunpack.i.h.bf16 %v371
  %s376 = scalar_lea.vmem %s1, 164
  %v377 = vpack.c.bf16 0.0, %v372
  %378 = vst [vmem:[%s376] sm:$0x1] %v377
  %s379 = scalar_lea.vmem %s0, 171
  %v380 = vld [vmem:[%s379] ss:$0 sm:$0x3]
  %v381 = vunpack.i.l.bf16 %v380
  %v383 = vunpack.i.h.bf16 %v380
  %s385 = scalar_lea.vmem %s1, 168
  %v386 = vpack.c.bf16 0.0, %v381
  %387 = vst [vmem:[%s385] sm:$0x1] %v386
  %s388 = scalar_lea.vmem %s0, 175
  %v389 = vld [vmem:[%s388] ss:$0 sm:$0x3]
  %v390 = vunpack.i.l.bf16 %v389
  %v392 = vunpack.i.h.bf16 %v389
  %s394 = scalar_lea.vmem %s1, 172
  %v395 = vpack.c.bf16 0.0, %v390
  %396 = vst [vmem:[%s394] sm:$0x1] %v395
  %s397 = scalar_lea.vmem %s0, 179
  %v398 = vld [vmem:[%s397] ss:$0 sm:$0x3]
  %v399 = vunpack.i.l.bf16 %v398
  %v401 = vunpack.i.h.bf16 %v398
  %s403 = scalar_lea.vmem %s1, 176
  %v404 = vpack.c.bf16 0.0, %v399
  %405 = vst [vmem:[%s403] sm:$0x1] %v404
  %s406 = scalar_lea.vmem %s0, 183
  %v407 = vld [vmem:[%s406] ss:$0 sm:$0x3]
  %v408 = vunpack.i.l.bf16 %v407
  %v410 = vunpack.i.h.bf16 %v407
  %s412 = scalar_lea.vmem %s1, 180
  %v413 = vpack.c.bf16 0.0, %v408
  %414 = vst [vmem:[%s412] sm:$0x1] %v413
  %s415 = scalar_lea.vmem %s0, 187
  %v416 = vld [vmem:[%s415] ss:$0 sm:$0x3]
  %v417 = vunpack.i.l.bf16 %v416
  %v419 = vunpack.i.h.bf16 %v416
  %s421 = scalar_lea.vmem %s1, 184
  %v422 = vpack.c.bf16 0.0, %v417
  %423 = vst [vmem:[%s421] sm:$0x1] %v422
  %s424 = scalar_lea.vmem %s0, 191
  %v425 = vld [vmem:[%s424] ss:$0 sm:$0x3]
  %v426 = vunpack.i.l.bf16 %v425
  %v428 = vunpack.i.h.bf16 %v425
  %s430 = scalar_lea.vmem %s1, 188
  %v431 = vpack.c.bf16 0.0, %v426
  %432 = vst [vmem:[%s430] sm:$0x1] %v431
  %s433 = scalar_lea.vmem %s0, 195
  %v434 = vld [vmem:[%s433] ss:$0 sm:$0x3]
  %v435 = vunpack.i.l.bf16 %v434
  %v437 = vunpack.i.h.bf16 %v434
  %s439 = scalar_lea.vmem %s1, 192
  %v440 = vpack.c.bf16 0.0, %v435
  %441 = vst [vmem:[%s439] sm:$0x1] %v440
  %s442 = scalar_lea.vmem %s0, 199
  %v443 = vld [vmem:[%s442] ss:$0 sm:$0x3]
  %v444 = vunpack.i.l.bf16 %v443
  %v446 = vunpack.i.h.bf16 %v443
  %s448 = scalar_lea.vmem %s1, 196
  %v449 = vpack.c.bf16 0.0, %v444
  %450 = vst [vmem:[%s448] sm:$0x1] %v449
  %s451 = scalar_lea.vmem %s0, 203
  %v452 = vld [vmem:[%s451] ss:$0 sm:$0x3]
  %v453 = vunpack.i.l.bf16 %v452
  %v455 = vunpack.i.h.bf16 %v452
  %s457 = scalar_lea.vmem %s1, 200
  %v458 = vpack.c.bf16 0.0, %v453
  %459 = vst [vmem:[%s457] sm:$0x1] %v458
  %s460 = scalar_lea.vmem %s0, 207
  %v461 = vld [vmem:[%s460] ss:$0 sm:$0x3]
  %v462 = vunpack.i.l.bf16 %v461
  %v464 = vunpack.i.h.bf16 %v461
  %s466 = scalar_lea.vmem %s1, 204
  %v467 = vpack.c.bf16 0.0, %v462
  %468 = vst [vmem:[%s466] sm:$0x1] %v467
  %s469 = scalar_lea.vmem %s0, 211
  %v470 = vld [vmem:[%s469] ss:$0 sm:$0x3]
  %v471 = vunpack.i.l.bf16 %v470
  %v473 = vunpack.i.h.bf16 %v470
  %s475 = scalar_lea.vmem %s1, 208
  %v476 = vpack.c.bf16 0.0, %v471
  %477 = vst [vmem:[%s475] sm:$0x1] %v476
  %s478 = scalar_lea.vmem %s0, 215
  %v479 = vld [vmem:[%s478] ss:$0 sm:$0x3]
  %v480 = vunpack.i.l.bf16 %v479
  %v482 = vunpack.i.h.bf16 %v479
  %s484 = scalar_lea.vmem %s1, 212
  %v485 = vpack.c.bf16 0.0, %v480
  %486 = vst [vmem:[%s484] sm:$0x1] %v485
  %s487 = scalar_lea.vmem %s0, 219
  %v488 = vld [vmem:[%s487] ss:$0 sm:$0x3]
  %v489 = vunpack.i.l.bf16 %v488
  %v491 = vunpack.i.h.bf16 %v488
  %s493 = scalar_lea.vmem %s1, 216
  %v494 = vpack.c.bf16 0.0, %v489
  %495 = vst [vmem:[%s493] sm:$0x1] %v494
  %s496 = scalar_lea.vmem %s0, 223
  %v497 = vld [vmem:[%s496] ss:$0 sm:$0x3]
  %v498 = vunpack.i.l.bf16 %v497
  %v500 = vunpack.i.h.bf16 %v497
  %s502 = scalar_lea.vmem %s1, 220
  %v503 = vpack.c.bf16 0.0, %v498
  %504 = vst [vmem:[%s502] sm:$0x1] %v503
  %s505 = scalar_lea.vmem %s0, 227
  %v506 = vld [vmem:[%s505] ss:$0 sm:$0x3]
  %v507 = vunpack.i.l.bf16 %v506
  %v509 = vunpack.i.h.bf16 %v506
  %s511 = scalar_lea.vmem %s1, 224
  %v512 = vpack.c.bf16 0.0, %v507
  %513 = vst [vmem:[%s511] sm:$0x1] %v512
  %s514 = scalar_lea.vmem %s0, 231
  %v515 = vld [vmem:[%s514] ss:$0 sm:$0x3]
  %v516 = vunpack.i.l.bf16 %v515
  %v518 = vunpack.i.h.bf16 %v515
  %s520 = scalar_lea.vmem %s1, 228
  %v521 = vpack.c.bf16 0.0, %v516
  %522 = vst [vmem:[%s520] sm:$0x1] %v521
  %s523 = scalar_lea.vmem %s0, 235
  %v524 = vld [vmem:[%s523] ss:$0 sm:$0x3]
  %v525 = vunpack.i.l.bf16 %v524
  %v527 = vunpack.i.h.bf16 %v524
  %s529 = scalar_lea.vmem %s1, 232
  %v530 = vpack.c.bf16 0.0, %v525
  %531 = vst [vmem:[%s529] sm:$0x1] %v530
  %s532 = scalar_lea.vmem %s0, 239
  %v533 = vld [vmem:[%s532] ss:$0 sm:$0x3]
  %v534 = vunpack.i.l.bf16 %v533
  %v536 = vunpack.i.h.bf16 %v533
  %s538 = scalar_lea.vmem %s1, 236
  %v539 = vpack.c.bf16 0.0, %v534
  %540 = vst [vmem:[%s538] sm:$0x1] %v539
  %s541 = scalar_lea.vmem %s0, 243
  %v542 = vld [vmem:[%s541] ss:$0 sm:$0x3]
  %v543 = vunpack.i.l.bf16 %v542
  %v545 = vunpack.i.h.bf16 %v542
  %s547 = scalar_lea.vmem %s1, 240
  %v548 = vpack.c.bf16 0.0, %v543
  %549 = vst [vmem:[%s547] sm:$0x1] %v548
  %s550 = scalar_lea.vmem %s0, 247
  %v551 = vld [vmem:[%s550] ss:$0 sm:$0x3]
  %v552 = vunpack.i.l.bf16 %v551
  %v554 = vunpack.i.h.bf16 %v551
  %s556 = scalar_lea.vmem %s1, 244
  %v557 = vpack.c.bf16 0.0, %v552
  %558 = vst [vmem:[%s556] sm:$0x1] %v557
  %s559 = scalar_lea.vmem %s0, 251
  %v560 = vld [vmem:[%s559] ss:$0 sm:$0x3]
  %v561 = vunpack.i.l.bf16 %v560
  %v563 = vunpack.i.h.bf16 %v560
  %s565 = scalar_lea.vmem %s1, 248
  %v566 = vpack.c.bf16 0.0, %v561
  %567 = vst [vmem:[%s565] sm:$0x1] %v566
  %s568 = scalar_lea.vmem %s0, 255
  %v569 = vld [vmem:[%s568] ss:$0 sm:$0x3]
  %v570 = vunpack.i.l.bf16 %v569
  %v572 = vunpack.i.h.bf16 %v569
  %s574 = scalar_lea.vmem %s1, 252
  %v575 = vpack.c.bf16 0.0, %v570
  %576 = vst [vmem:[%s574] sm:$0x1] %v575
  %s577 = scalar_lea.vmem %s0, 2
  %v578 = vld [vmem:[%s577] ss:$0 sm:$0x3]
  %v579 = vunpack.i.l.bf16 %v578
  %v581 = vunpack.i.h.bf16 %v578
  %s583 = scalar_lea.vmem %s1, 1
  %v584 = vpack.c.bf16 0.0, %v579
  %585 = vst [vmem:[%s583] sm:$0x1] %v584
  %s586 = scalar_lea.vmem %s0, 6
  %v587 = vld [vmem:[%s586] ss:$0 sm:$0x3]
  %v588 = vunpack.i.l.bf16 %v587
  %v590 = vunpack.i.h.bf16 %v587
  %s592 = scalar_lea.vmem %s1, 5
  %v593 = vpack.c.bf16 0.0, %v588
  %594 = vst [vmem:[%s592] sm:$0x1] %v593
  %s595 = scalar_lea.vmem %s0, 10
  %v596 = vld [vmem:[%s595] ss:$0 sm:$0x3]
  %v597 = vunpack.i.l.bf16 %v596
  %v599 = vunpack.i.h.bf16 %v596
  %s601 = scalar_lea.vmem %s1, 9
  %v602 = vpack.c.bf16 0.0, %v597
  %603 = vst [vmem:[%s601] sm:$0x1] %v602
  %s604 = scalar_lea.vmem %s0, 14
  %v605 = vld [vmem:[%s604] ss:$0 sm:$0x3]
  %v606 = vunpack.i.l.bf16 %v605
  %v608 = vunpack.i.h.bf16 %v605
  %s610 = scalar_lea.vmem %s1, 13
  %v611 = vpack.c.bf16 0.0, %v606
  %612 = vst [vmem:[%s610] sm:$0x1] %v611
  %s613 = scalar_lea.vmem %s0, 18
  %v614 = vld [vmem:[%s613] ss:$0 sm:$0x3]
  %v615 = vunpack.i.l.bf16 %v614
  %v617 = vunpack.i.h.bf16 %v614
  %s619 = scalar_lea.vmem %s1, 17
  %v620 = vpack.c.bf16 0.0, %v615
  %621 = vst [vmem:[%s619] sm:$0x1] %v620
  %s622 = scalar_lea.vmem %s0, 22
  %v623 = vld [vmem:[%s622] ss:$0 sm:$0x3]
  %v624 = vunpack.i.l.bf16 %v623
  %v626 = vunpack.i.h.bf16 %v623
  %s628 = scalar_lea.vmem %s1, 21
  %v629 = vpack.c.bf16 0.0, %v624
  %630 = vst [vmem:[%s628] sm:$0x1] %v629
  %s631 = scalar_lea.vmem %s0, 26
  %v632 = vld [vmem:[%s631] ss:$0 sm:$0x3]
  %v633 = vunpack.i.l.bf16 %v632
  %v635 = vunpack.i.h.bf16 %v632
  %s637 = scalar_lea.vmem %s1, 25
  %v638 = vpack.c.bf16 0.0, %v633
  %639 = vst [vmem:[%s637] sm:$0x1] %v638
  %s640 = scalar_lea.vmem %s0, 30
  %v641 = vld [vmem:[%s640] ss:$0 sm:$0x3]
  %v642 = vunpack.i.l.bf16 %v641
  %v644 = vunpack.i.h.bf16 %v641
  %s646 = scalar_lea.vmem %s1, 29
  %v647 = vpack.c.bf16 0.0, %v642
  %648 = vst [vmem:[%s646] sm:$0x1] %v647
  %s649 = scalar_lea.vmem %s0, 34
  %v650 = vld [vmem:[%s649] ss:$0 sm:$0x3]
  %v651 = vunpack.i.l.bf16 %v650
  %v653 = vunpack.i.h.bf16 %v650
  %s655 = scalar_lea.vmem %s1, 33
  %v656 = vpack.c.bf16 0.0, %v651
  %657 = vst [vmem:[%s655] sm:$0x1] %v656
  %s658 = scalar_lea.vmem %s0, 38
  %v659 = vld [vmem:[%s658] ss:$0 sm:$0x3]
  %v660 = vunpack.i.l.bf16 %v659
  %v662 = vunpack.i.h.bf16 %v659
  %s664 = scalar_lea.vmem %s1, 37
  %v665 = vpack.c.bf16 0.0, %v660
  %666 = vst [vmem:[%s664] sm:$0x1] %v665
  %s667 = scalar_lea.vmem %s0, 42
  %v668 = vld [vmem:[%s667] ss:$0 sm:$0x3]
  %v669 = vunpack.i.l.bf16 %v668
  %v671 = vunpack.i.h.bf16 %v668
  %s673 = scalar_lea.vmem %s1, 41
  %v674 = vpack.c.bf16 0.0, %v669
  %675 = vst [vmem:[%s673] sm:$0x1] %v674
  %s676 = scalar_lea.vmem %s0, 46
  %v677 = vld [vmem:[%s676] ss:$0 sm:$0x3]
  %v678 = vunpack.i.l.bf16 %v677
  %v680 = vunpack.i.h.bf16 %v677
  %s682 = scalar_lea.vmem %s1, 45
  %v683 = vpack.c.bf16 0.0, %v678
  %684 = vst [vmem:[%s682] sm:$0x1] %v683
  %s685 = scalar_lea.vmem %s0, 50
  %v686 = vld [vmem:[%s685] ss:$0 sm:$0x3]
  %v687 = vunpack.i.l.bf16 %v686
  %v689 = vunpack.i.h.bf16 %v686
  %s691 = scalar_lea.vmem %s1, 49
  %v692 = vpack.c.bf16 0.0, %v687
  %693 = vst [vmem:[%s691] sm:$0x1] %v692
  %s694 = scalar_lea.vmem %s0, 54
  %v695 = vld [vmem:[%s694] ss:$0 sm:$0x3]
  %v696 = vunpack.i.l.bf16 %v695
  %v698 = vunpack.i.h.bf16 %v695
  %s700 = scalar_lea.vmem %s1, 53
  %v701 = vpack.c.bf16 0.0, %v696
  %702 = vst [vmem:[%s700] sm:$0x1] %v701
  %s703 = scalar_lea.vmem %s0, 58
  %v704 = vld [vmem:[%s703] ss:$0 sm:$0x3]
  %v705 = vunpack.i.l.bf16 %v704
  %v707 = vunpack.i.h.bf16 %v704
  %s709 = scalar_lea.vmem %s1, 57
  %v710 = vpack.c.bf16 0.0, %v705
  %711 = vst [vmem:[%s709] sm:$0x1] %v710
  %s712 = scalar_lea.vmem %s0, 62
  %v713 = vld [vmem:[%s712] ss:$0 sm:$0x3]
  %v714 = vunpack.i.l.bf16 %v713
  %v716 = vunpack.i.h.bf16 %v713
  %s718 = scalar_lea.vmem %s1, 61
  %v719 = vpack.c.bf16 0.0, %v714
  %720 = vst [vmem:[%s718] sm:$0x1] %v719
  %s721 = scalar_lea.vmem %s0, 66
  %v722 = vld [vmem:[%s721] ss:$0 sm:$0x3]
  %v723 = vunpack.i.l.bf16 %v722
  %v725 = vunpack.i.h.bf16 %v722
  %s727 = scalar_lea.vmem %s1, 65
  %v728 = vpack.c.bf16 0.0, %v723
  %729 = vst [vmem:[%s727] sm:$0x1] %v728
  %s730 = scalar_lea.vmem %s0, 70
  %v731 = vld [vmem:[%s730] ss:$0 sm:$0x3]
  %v732 = vunpack.i.l.bf16 %v731
  %v734 = vunpack.i.h.bf16 %v731
  %s736 = scalar_lea.vmem %s1, 69
  %v737 = vpack.c.bf16 0.0, %v732
  %738 = vst [vmem:[%s736] sm:$0x1] %v737
  %s739 = scalar_lea.vmem %s0, 74
  %v740 = vld [vmem:[%s739] ss:$0 sm:$0x3]
  %v741 = vunpack.i.l.bf16 %v740
  %v743 = vunpack.i.h.bf16 %v740
  %s745 = scalar_lea.vmem %s1, 73
  %v746 = vpack.c.bf16 0.0, %v741
  %747 = vst [vmem:[%s745] sm:$0x1] %v746
  %s748 = scalar_lea.vmem %s0, 78
  %v749 = vld [vmem:[%s748] ss:$0 sm:$0x3]
  %v750 = vunpack.i.l.bf16 %v749
  %v752 = vunpack.i.h.bf16 %v749
  %s754 = scalar_lea.vmem %s1, 77
  %v755 = vpack.c.bf16 0.0, %v750
  %756 = vst [vmem:[%s754] sm:$0x1] %v755
  %s757 = scalar_lea.vmem %s0, 82
  %v758 = vld [vmem:[%s757] ss:$0 sm:$0x3]
  %v759 = vunpack.i.l.bf16 %v758
  %v761 = vunpack.i.h.bf16 %v758
  %s763 = scalar_lea.vmem %s1, 81
  %v764 = vpack.c.bf16 0.0, %v759
  %765 = vst [vmem:[%s763] sm:$0x1] %v764
  %s766 = scalar_lea.vmem %s0, 86
  %v767 = vld [vmem:[%s766] ss:$0 sm:$0x3]
  %v768 = vunpack.i.l.bf16 %v767
  %v770 = vunpack.i.h.bf16 %v767
  %s772 = scalar_lea.vmem %s1, 85
  %v773 = vpack.c.bf16 0.0, %v768
  %774 = vst [vmem:[%s772] sm:$0x1] %v773
  %s775 = scalar_lea.vmem %s0, 90
  %v776 = vld [vmem:[%s775] ss:$0 sm:$0x3]
  %v777 = vunpack.i.l.bf16 %v776
  %v779 = vunpack.i.h.bf16 %v776
  %s781 = scalar_lea.vmem %s1, 89
  %v782 = vpack.c.bf16 0.0, %v777
  %783 = vst [vmem:[%s781] sm:$0x1] %v782
  %s784 = scalar_lea.vmem %s0, 94
  %v785 = vld [vmem:[%s784] ss:$0 sm:$0x3]
  %v786 = vunpack.i.l.bf16 %v785
  %v788 = vunpack.i.h.bf16 %v785
  %s790 = scalar_lea.vmem %s1, 93
  %v791 = vpack.c.bf16 0.0, %v786
  %792 = vst [vmem:[%s790] sm:$0x1] %v791
  %s793 = scalar_lea.vmem %s0, 98
  %v794 = vld [vmem:[%s793] ss:$0 sm:$0x3]
  %v795 = vunpack.i.l.bf16 %v794
  %v797 = vunpack.i.h.bf16 %v794
  %s799 = scalar_lea.vmem %s1, 97
  %v800 = vpack.c.bf16 0.0, %v795
  %801 = vst [vmem:[%s799] sm:$0x1] %v800
  %s802 = scalar_lea.vmem %s0, 102
  %v803 = vld [vmem:[%s802] ss:$0 sm:$0x3]
  %v804 = vunpack.i.l.bf16 %v803
  %v806 = vunpack.i.h.bf16 %v803
  %s808 = scalar_lea.vmem %s1, 101
  %v809 = vpack.c.bf16 0.0, %v804
  %810 = vst [vmem:[%s808] sm:$0x1] %v809
  %s811 = scalar_lea.vmem %s0, 106
  %v812 = vld [vmem:[%s811] ss:$0 sm:$0x3]
  %v813 = vunpack.i.l.bf16 %v812
  %v815 = vunpack.i.h.bf16 %v812
  %s817 = scalar_lea.vmem %s1, 105
  %v818 = vpack.c.bf16 0.0, %v813
  %819 = vst [vmem:[%s817] sm:$0x1] %v818
  %s820 = scalar_lea.vmem %s0, 110
  %v821 = vld [vmem:[%s820] ss:$0 sm:$0x3]
  %v822 = vunpack.i.l.bf16 %v821
  %v824 = vunpack.i.h.bf16 %v821
  %s826 = scalar_lea.vmem %s1, 109
  %v827 = vpack.c.bf16 0.0, %v822
  %828 = vst [vmem:[%s826] sm:$0x1] %v827
  %s829 = scalar_lea.vmem %s0, 114
  %v830 = vld [vmem:[%s829] ss:$0 sm:$0x3]
  %v831 = vunpack.i.l.bf16 %v830
  %v833 = vunpack.i.h.bf16 %v830
  %s835 = scalar_lea.vmem %s1, 113
  %v836 = vpack.c.bf16 0.0, %v831
  %837 = vst [vmem:[%s835] sm:$0x1] %v836
  %s838 = scalar_lea.vmem %s0, 118
  %v839 = vld [vmem:[%s838] ss:$0 sm:$0x3]
  %v840 = vunpack.i.l.bf16 %v839
  %v842 = vunpack.i.h.bf16 %v839
  %s844 = scalar_lea.vmem %s1, 117
  %v845 = vpack.c.bf16 0.0, %v840
  %846 = vst [vmem:[%s844] sm:$0x1] %v845
  %s847 = scalar_lea.vmem %s0, 122
  %v848 = vld [vmem:[%s847] ss:$0 sm:$0x3]
  %v849 = vunpack.i.l.bf16 %v848
  %v851 = vunpack.i.h.bf16 %v848
  %s853 = scalar_lea.vmem %s1, 121
  %v854 = vpack.c.bf16 0.0, %v849
  %855 = vst [vmem:[%s853] sm:$0x1] %v854
  %s856 = scalar_lea.vmem %s0, 126
  %v857 = vld [vmem:[%s856] ss:$0 sm:$0x3]
  %v858 = vunpack.i.l.bf16 %v857
  %v860 = vunpack.i.h.bf16 %v857
  %s862 = scalar_lea.vmem %s1, 125
  %v863 = vpack.c.bf16 0.0, %v858
  %864 = vst [vmem:[%s862] sm:$0x1] %v863
  %s865 = scalar_lea.vmem %s0, 130
  %v866 = vld [vmem:[%s865] ss:$0 sm:$0x3]
  %v867 = vunpack.i.l.bf16 %v866
  %v869 = vunpack.i.h.bf16 %v866
  %s871 = scalar_lea.vmem %s1, 129
  %v872 = vpack.c.bf16 0.0, %v867
  %873 = vst [vmem:[%s871] sm:$0x1] %v872
  %s874 = scalar_lea.vmem %s0, 134
  %v875 = vld [vmem:[%s874] ss:$0 sm:$0x3]
  %v876 = vunpack.i.l.bf16 %v875
  %v878 = vunpack.i.h.bf16 %v875
  %s880 = scalar_lea.vmem %s1, 133
  %v881 = vpack.c.bf16 0.0, %v876
  %882 = vst [vmem:[%s880] sm:$0x1] %v881
  %s883 = scalar_lea.vmem %s0, 138
  %v884 = vld [vmem:[%s883] ss:$0 sm:$0x3]
  %v885 = vunpack.i.l.bf16 %v884
  %v887 = vunpack.i.h.bf16 %v884
  %s889 = scalar_lea.vmem %s1, 137
  %v890 = vpack.c.bf16 0.0, %v885
  %891 = vst [vmem:[%s889] sm:$0x1] %v890
  %s892 = scalar_lea.vmem %s0, 142
  %v893 = vld [vmem:[%s892] ss:$0 sm:$0x3]
  %v894 = vunpack.i.l.bf16 %v893
  %v896 = vunpack.i.h.bf16 %v893
  %s898 = scalar_lea.vmem %s1, 141
  %v899 = vpack.c.bf16 0.0, %v894
  %900 = vst [vmem:[%s898] sm:$0x1] %v899
  %s901 = scalar_lea.vmem %s0, 146
  %v902 = vld [vmem:[%s901] ss:$0 sm:$0x3]
  %v903 = vunpack.i.l.bf16 %v902
  %v905 = vunpack.i.h.bf16 %v902
  %s907 = scalar_lea.vmem %s1, 145
  %v908 = vpack.c.bf16 0.0, %v903
  %909 = vst [vmem:[%s907] sm:$0x1] %v908
  %s910 = scalar_lea.vmem %s0, 150
  %v911 = vld [vmem:[%s910] ss:$0 sm:$0x3]
  %v912 = vunpack.i.l.bf16 %v911
  %v914 = vunpack.i.h.bf16 %v911
  %s916 = scalar_lea.vmem %s1, 149
  %v917 = vpack.c.bf16 0.0, %v912
  %918 = vst [vmem:[%s916] sm:$0x1] %v917
  %s919 = scalar_lea.vmem %s0, 154
  %v920 = vld [vmem:[%s919] ss:$0 sm:$0x3]
  %v921 = vunpack.i.l.bf16 %v920
  %v923 = vunpack.i.h.bf16 %v920
  %s925 = scalar_lea.vmem %s1, 153
  %v926 = vpack.c.bf16 0.0, %v921
  %927 = vst [vmem:[%s925] sm:$0x1] %v926
  %s928 = scalar_lea.vmem %s0, 158
  %v929 = vld [vmem:[%s928] ss:$0 sm:$0x3]
  %v930 = vunpack.i.l.bf16 %v929
  %v932 = vunpack.i.h.bf16 %v929
  %s934 = scalar_lea.vmem %s1, 157
  %v935 = vpack.c.bf16 0.0, %v930
  %936 = vst [vmem:[%s934] sm:$0x1] %v935
  %s937 = scalar_lea.vmem %s0, 162
  %v938 = vld [vmem:[%s937] ss:$0 sm:$0x3]
  %v939 = vunpack.i.l.bf16 %v938
  %v941 = vunpack.i.h.bf16 %v938
  %s943 = scalar_lea.vmem %s1, 161
  %v944 = vpack.c.bf16 0.0, %v939
  %945 = vst [vmem:[%s943] sm:$0x1] %v944
  %s946 = scalar_lea.vmem %s0, 166
  %v947 = vld [vmem:[%s946] ss:$0 sm:$0x3]
  %v948 = vunpack.i.l.bf16 %v947
  %v950 = vunpack.i.h.bf16 %v947
  %s952 = scalar_lea.vmem %s1, 165
  %v953 = vpack.c.bf16 0.0, %v948
  %954 = vst [vmem:[%s952] sm:$0x1] %v953
  %s955 = scalar_lea.vmem %s0, 170
  %v956 = vld [vmem:[%s955] ss:$0 sm:$0x3]
  %v957 = vunpack.i.l.bf16 %v956
  %v959 = vunpack.i.h.bf16 %v956
  %s961 = scalar_lea.vmem %s1, 169
  %v962 = vpack.c.bf16 0.0, %v957
  %963 = vst [vmem:[%s961] sm:$0x1] %v962
  %s964 = scalar_lea.vmem %s0, 174
  %v965 = vld [vmem:[%s964] ss:$0 sm:$0x3]
  %v966 = vunpack.i.l.bf16 %v965
  %v968 = vunpack.i.h.bf16 %v965
  %s970 = scalar_lea.vmem %s1, 173
  %v971 = vpack.c.bf16 0.0, %v966
  %972 = vst [vmem:[%s970] sm:$0x1] %v971
  %s973 = scalar_lea.vmem %s0, 178
  %v974 = vld [vmem:[%s973] ss:$0 sm:$0x3]
  %v975 = vunpack.i.l.bf16 %v974
  %v977 = vunpack.i.h.bf16 %v974
  %s979 = scalar_lea.vmem %s1, 177
  %v980 = vpack.c.bf16 0.0, %v975
  %981 = vst [vmem:[%s979] sm:$0x1] %v980
  %s982 = scalar_lea.vmem %s0, 182
  %v983 = vld [vmem:[%s982] ss:$0 sm:$0x3]
  %v984 = vunpack.i.l.bf16 %v983
  %v986 = vunpack.i.h.bf16 %v983
  %s988 = scalar_lea.vmem %s1, 181
  %v989 = vpack.c.bf16 0.0, %v984
  %990 = vst [vmem:[%s988] sm:$0x1] %v989
  %s991 = scalar_lea.vmem %s0, 186
  %v992 = vld [vmem:[%s991] ss:$0 sm:$0x3]
  %v993 = vunpack.i.l.bf16 %v992
  %v995 = vunpack.i.h.bf16 %v992
  %s997 = scalar_lea.vmem %s1, 185
  %v998 = vpack.c.bf16 0.0, %v993
  %999 = vst [vmem:[%s997] sm:$0x1] %v998
  %s1000 = scalar_lea.vmem %s0, 190
  %v1001 = vld [vmem:[%s1000] ss:$0 sm:$0x3]
  %v1002 = vunpack.i.l.bf16 %v1001
  %v1004 = vunpack.i.h.bf16 %v1001
  %s1006 = scalar_lea.vmem %s1, 189
  %v1007 = vpack.c.bf16 0.0, %v1002
  %1008 = vst [vmem:[%s1006] sm:$0x1] %v1007
  %s1009 = scalar_lea.vmem %s0, 194
  %v1010 = vld [vmem:[%s1009] ss:$0 sm:$0x3]
  %v1011 = vunpack.i.l.bf16 %v1010
  %v1013 = vunpack.i.h.bf16 %v1010
  %s1015 = scalar_lea.vmem %s1, 193
  %v1016 = vpack.c.bf16 0.0, %v1011
  %1017 = vst [vmem:[%s1015] sm:$0x1] %v1016
  %s1018 = scalar_lea.vmem %s0, 198
  %v1019 = vld [vmem:[%s1018] ss:$0 sm:$0x3]
  %v1020 = vunpack.i.l.bf16 %v1019
  %v1022 = vunpack.i.h.bf16 %v1019
  %s1024 = scalar_lea.vmem %s1, 197
  %v1025 = vpack.c.bf16 0.0, %v1020
  %1026 = vst [vmem:[%s1024] sm:$0x1] %v1025
  %s1027 = scalar_lea.vmem %s0, 202
  %v1028 = vld [vmem:[%s1027] ss:$0 sm:$0x3]
  %v1029 = vunpack.i.l.bf16 %v1028
  %v1031 = vunpack.i.h.bf16 %v1028
  %s1033 = scalar_lea.vmem %s1, 201
  %v1034 = vpack.c.bf16 0.0, %v1029
  %1035 = vst [vmem:[%s1033] sm:$0x1] %v1034
  %s1036 = scalar_lea.vmem %s0, 206
  %v1037 = vld [vmem:[%s1036] ss:$0 sm:$0x3]
  %v1038 = vunpack.i.l.bf16 %v1037
  %v1040 = vunpack.i.h.bf16 %v1037
  %s1042 = scalar_lea.vmem %s1, 205
  %v1043 = vpack.c.bf16 0.0, %v1038
  %1044 = vst [vmem:[%s1042] sm:$0x1] %v1043
  %s1045 = scalar_lea.vmem %s0, 210
  %v1046 = vld [vmem:[%s1045] ss:$0 sm:$0x3]
  %v1047 = vunpack.i.l.bf16 %v1046
  %v1049 = vunpack.i.h.bf16 %v1046
  %s1051 = scalar_lea.vmem %s1, 209
  %v1052 = vpack.c.bf16 0.0, %v1047
  %1053 = vst [vmem:[%s1051] sm:$0x1] %v1052
  %s1054 = scalar_lea.vmem %s0, 214
  %v1055 = vld [vmem:[%s1054] ss:$0 sm:$0x3]
  %v1056 = vunpack.i.l.bf16 %v1055
  %v1058 = vunpack.i.h.bf16 %v1055
  %s1060 = scalar_lea.vmem %s1, 213
  %v1061 = vpack.c.bf16 0.0, %v1056
  %1062 = vst [vmem:[%s1060] sm:$0x1] %v1061
  %s1063 = scalar_lea.vmem %s0, 218
  %v1064 = vld [vmem:[%s1063] ss:$0 sm:$0x3]
  %v1065 = vunpack.i.l.bf16 %v1064
  %v1067 = vunpack.i.h.bf16 %v1064
  %s1069 = scalar_lea.vmem %s1, 217
  %v1070 = vpack.c.bf16 0.0, %v1065
  %1071 = vst [vmem:[%s1069] sm:$0x1] %v1070
  %s1072 = scalar_lea.vmem %s0, 222
  %v1073 = vld [vmem:[%s1072] ss:$0 sm:$0x3]
  %v1074 = vunpack.i.l.bf16 %v1073
  %v1076 = vunpack.i.h.bf16 %v1073
  %s1078 = scalar_lea.vmem %s1, 221
  %v1079 = vpack.c.bf16 0.0, %v1074
  %1080 = vst [vmem:[%s1078] sm:$0x1] %v1079
  %s1081 = scalar_lea.vmem %s0, 226
  %v1082 = vld [vmem:[%s1081] ss:$0 sm:$0x3]
  %v1083 = vunpack.i.l.bf16 %v1082
  %v1085 = vunpack.i.h.bf16 %v1082
  %s1087 = scalar_lea.vmem %s1, 225
  %v1088 = vpack.c.bf16 0.0, %v1083
  %1089 = vst [vmem:[%s1087] sm:$0x1] %v1088
  %s1090 = scalar_lea.vmem %s0, 230
  %v1091 = vld [vmem:[%s1090] ss:$0 sm:$0x3]
  %v1092 = vunpack.i.l.bf16 %v1091
  %v1094 = vunpack.i.h.bf16 %v1091
  %s1096 = scalar_lea.vmem %s1, 229
  %v1097 = vpack.c.bf16 0.0, %v1092
  %1098 = vst [vmem:[%s1096] sm:$0x1] %v1097
  %s1099 = scalar_lea.vmem %s0, 234
  %v1100 = vld [vmem:[%s1099] ss:$0 sm:$0x3]
  %v1101 = vunpack.i.l.bf16 %v1100
  %v1103 = vunpack.i.h.bf16 %v1100
  %s1105 = scalar_lea.vmem %s1, 233
  %v1106 = vpack.c.bf16 0.0, %v1101
  %1107 = vst [vmem:[%s1105] sm:$0x1] %v1106
  %s1108 = scalar_lea.vmem %s0, 238
  %v1109 = vld [vmem:[%s1108] ss:$0 sm:$0x3]
  %v1110 = vunpack.i.l.bf16 %v1109
  %v1112 = vunpack.i.h.bf16 %v1109
  %s1114 = scalar_lea.vmem %s1, 237
  %v1115 = vpack.c.bf16 0.0, %v1110
  %1116 = vst [vmem:[%s1114] sm:$0x1] %v1115
  %s1117 = scalar_lea.vmem %s0, 242
  %v1118 = vld [vmem:[%s1117] ss:$0 sm:$0x3]
  %v1119 = vunpack.i.l.bf16 %v1118
  %v1121 = vunpack.i.h.bf16 %v1118
  %s1123 = scalar_lea.vmem %s1, 241
  %v1124 = vpack.c.bf16 0.0, %v1119
  %1125 = vst [vmem:[%s1123] sm:$0x1] %v1124
  %s1126 = scalar_lea.vmem %s0, 246
  %v1127 = vld [vmem:[%s1126] ss:$0 sm:$0x3]
  %v1128 = vunpack.i.l.bf16 %v1127
  %v1130 = vunpack.i.h.bf16 %v1127
  %s1132 = scalar_lea.vmem %s1, 245
  %v1133 = vpack.c.bf16 0.0, %v1128
  %1134 = vst [vmem:[%s1132] sm:$0x1] %v1133
  %s1135 = scalar_lea.vmem %s0, 250
  %v1136 = vld [vmem:[%s1135] ss:$0 sm:$0x3]
  %v1137 = vunpack.i.l.bf16 %v1136
  %v1139 = vunpack.i.h.bf16 %v1136
  %s1141 = scalar_lea.vmem %s1, 249
  %v1142 = vpack.c.bf16 0.0, %v1137
  %1143 = vst [vmem:[%s1141] sm:$0x1] %v1142
  %s1144 = scalar_lea.vmem %s0, 254
  %v1145 = vld [vmem:[%s1144] ss:$0 sm:$0x3]
  %v1146 = vunpack.i.l.bf16 %v1145
  %v1148 = vunpack.i.h.bf16 %v1145
  %s1150 = scalar_lea.vmem %s1, 253
  %v1151 = vpack.c.bf16 0.0, %v1146
  %1152 = vst [vmem:[%s1150] sm:$0x1] %v1151
  %s1153 = scalar_lea.vmem %s0, 1
  %v1154 = vld [vmem:[%s1153] ss:$0 sm:$0x3]
  %v1155 = vunpack.i.l.bf16 %v1154
  %v1157 = vunpack.i.h.bf16 %v1154
  %s1159 = scalar_lea.vmem %s1, 2
  %v1160 = vpack.c.bf16 0.0, %v1155
  %1161 = vst [vmem:[%s1159] sm:$0x1] %v1160
  %s1162 = scalar_lea.vmem %s0, 5
  %v1163 = vld [vmem:[%s1162] ss:$0 sm:$0x3]
  %v1164 = vunpack.i.l.bf16 %v1163
  %v1166 = vunpack.i.h.bf16 %v1163
  %s1168 = scalar_lea.vmem %s1, 6
  %v1169 = vpack.c.bf16 0.0, %v1164
  %1170 = vst [vmem:[%s1168] sm:$0x1] %v1169
  %s1171 = scalar_lea.vmem %s0, 9
  %v1172 = vld [vmem:[%s1171] ss:$0 sm:$0x3]
  %v1173 = vunpack.i.l.bf16 %v1172
  %v1175 = vunpack.i.h.bf16 %v1172
  %s1177 = scalar_lea.vmem %s1, 10
  %v1178 = vpack.c.bf16 0.0, %v1173
  %1179 = vst [vmem:[%s1177] sm:$0x1] %v1178
  %s1180 = scalar_lea.vmem %s0, 13
  %v1181 = vld [vmem:[%s1180] ss:$0 sm:$0x3]
  %v1182 = vunpack.i.l.bf16 %v1181
  %v1184 = vunpack.i.h.bf16 %v1181
  %s1186 = scalar_lea.vmem %s1, 14
  %v1187 = vpack.c.bf16 0.0, %v1182
  %1188 = vst [vmem:[%s1186] sm:$0x1] %v1187
  %s1189 = scalar_lea.vmem %s0, 17
  %v1190 = vld [vmem:[%s1189] ss:$0 sm:$0x3]
  %v1191 = vunpack.i.l.bf16 %v1190
  %v1193 = vunpack.i.h.bf16 %v1190
  %s1195 = scalar_lea.vmem %s1, 18
  %v1196 = vpack.c.bf16 0.0, %v1191
  %1197 = vst [vmem:[%s1195] sm:$0x1] %v1196
  %s1198 = scalar_lea.vmem %s0, 21
  %v1199 = vld [vmem:[%s1198] ss:$0 sm:$0x3]
  %v1200 = vunpack.i.l.bf16 %v1199
  %v1202 = vunpack.i.h.bf16 %v1199
  %s1204 = scalar_lea.vmem %s1, 22
  %v1205 = vpack.c.bf16 0.0, %v1200
  %1206 = vst [vmem:[%s1204] sm:$0x1] %v1205
  %s1207 = scalar_lea.vmem %s0, 25
  %v1208 = vld [vmem:[%s1207] ss:$0 sm:$0x3]
  %v1209 = vunpack.i.l.bf16 %v1208
  %v1211 = vunpack.i.h.bf16 %v1208
  %s1213 = scalar_lea.vmem %s1, 26
  %v1214 = vpack.c.bf16 0.0, %v1209
  %1215 = vst [vmem:[%s1213] sm:$0x1] %v1214
  %s1216 = scalar_lea.vmem %s0, 29
  %v1217 = vld [vmem:[%s1216] ss:$0 sm:$0x3]
  %v1218 = vunpack.i.l.bf16 %v1217
  %v1220 = vunpack.i.h.bf16 %v1217
  %s1222 = scalar_lea.vmem %s1, 30
  %v1223 = vpack.c.bf16 0.0, %v1218
  %1224 = vst [vmem:[%s1222] sm:$0x1] %v1223
  %s1225 = scalar_lea.vmem %s0, 33
  %v1226 = vld [vmem:[%s1225] ss:$0 sm:$0x3]
  %v1227 = vunpack.i.l.bf16 %v1226
  %v1229 = vunpack.i.h.bf16 %v1226
  %s1231 = scalar_lea.vmem %s1, 34
  %v1232 = vpack.c.bf16 0.0, %v1227
  %1233 = vst [vmem:[%s1231] sm:$0x1] %v1232
  %s1234 = scalar_lea.vmem %s0, 37
  %v1235 = vld [vmem:[%s1234] ss:$0 sm:$0x3]
  %v1236 = vunpack.i.l.bf16 %v1235
  %v1238 = vunpack.i.h.bf16 %v1235
  %s1240 = scalar_lea.vmem %s1, 38
  %v1241 = vpack.c.bf16 0.0, %v1236
  %1242 = vst [vmem:[%s1240] sm:$0x1] %v1241
  %s1243 = scalar_lea.vmem %s0, 41
  %v1244 = vld [vmem:[%s1243] ss:$0 sm:$0x3]
  %v1245 = vunpack.i.l.bf16 %v1244
  %v1247 = vunpack.i.h.bf16 %v1244
  %s1249 = scalar_lea.vmem %s1, 42
  %v1250 = vpack.c.bf16 0.0, %v1245
  %1251 = vst [vmem:[%s1249] sm:$0x1] %v1250
  %s1252 = scalar_lea.vmem %s0, 45
  %v1253 = vld [vmem:[%s1252] ss:$0 sm:$0x3]
  %v1254 = vunpack.i.l.bf16 %v1253
  %v1256 = vunpack.i.h.bf16 %v1253
  %s1258 = scalar_lea.vmem %s1, 46
  %v1259 = vpack.c.bf16 0.0, %v1254
  %1260 = vst [vmem:[%s1258] sm:$0x1] %v1259
  %s1261 = scalar_lea.vmem %s0, 49
  %v1262 = vld [vmem:[%s1261] ss:$0 sm:$0x3]
  %v1263 = vunpack.i.l.bf16 %v1262
  %v1265 = vunpack.i.h.bf16 %v1262
  %s1267 = scalar_lea.vmem %s1, 50
  %v1268 = vpack.c.bf16 0.0, %v1263
  %1269 = vst [vmem:[%s1267] sm:$0x1] %v1268
  %s1270 = scalar_lea.vmem %s0, 53
  %v1271 = vld [vmem:[%s1270] ss:$0 sm:$0x3]
  %v1272 = vunpack.i.l.bf16 %v1271
  %v1274 = vunpack.i.h.bf16 %v1271
  %s1276 = scalar_lea.vmem %s1, 54
  %v1277 = vpack.c.bf16 0.0, %v1272
  %1278 = vst [vmem:[%s1276] sm:$0x1] %v1277
  %s1279 = scalar_lea.vmem %s0, 57
  %v1280 = vld [vmem:[%s1279] ss:$0 sm:$0x3]
  %v1281 = vunpack.i.l.bf16 %v1280
  %v1283 = vunpack.i.h.bf16 %v1280
  %s1285 = scalar_lea.vmem %s1, 58
  %v1286 = vpack.c.bf16 0.0, %v1281
  %1287 = vst [vmem:[%s1285] sm:$0x1] %v1286
  %s1288 = scalar_lea.vmem %s0, 61
  %v1289 = vld [vmem:[%s1288] ss:$0 sm:$0x3]
  %v1290 = vunpack.i.l.bf16 %v1289
  %v1292 = vunpack.i.h.bf16 %v1289
  %s1294 = scalar_lea.vmem %s1, 62
  %v1295 = vpack.c.bf16 0.0, %v1290
  %1296 = vst [vmem:[%s1294] sm:$0x1] %v1295
  %s1297 = scalar_lea.vmem %s0, 65
  %v1298 = vld [vmem:[%s1297] ss:$0 sm:$0x3]
  %v1299 = vunpack.i.l.bf16 %v1298
  %v1301 = vunpack.i.h.bf16 %v1298
  %s1303 = scalar_lea.vmem %s1, 66
  %v1304 = vpack.c.bf16 0.0, %v1299
  %1305 = vst [vmem:[%s1303] sm:$0x1] %v1304
  %s1306 = scalar_lea.vmem %s0, 69
  %v1307 = vld [vmem:[%s1306] ss:$0 sm:$0x3]
  %v1308 = vunpack.i.l.bf16 %v1307
  %v1310 = vunpack.i.h.bf16 %v1307
  %s1312 = scalar_lea.vmem %s1, 70
  %v1313 = vpack.c.bf16 0.0, %v1308
  %1314 = vst [vmem:[%s1312] sm:$0x1] %v1313
  %s1315 = scalar_lea.vmem %s0, 73
  %v1316 = vld [vmem:[%s1315] ss:$0 sm:$0x3]
  %v1317 = vunpack.i.l.bf16 %v1316
  %v1319 = vunpack.i.h.bf16 %v1316
  %s1321 = scalar_lea.vmem %s1, 74
  %v1322 = vpack.c.bf16 0.0, %v1317
  %1323 = vst [vmem:[%s1321] sm:$0x1] %v1322
  %s1324 = scalar_lea.vmem %s0, 77
  %v1325 = vld [vmem:[%s1324] ss:$0 sm:$0x3]
  %v1326 = vunpack.i.l.bf16 %v1325
  %v1328 = vunpack.i.h.bf16 %v1325
  %s1330 = scalar_lea.vmem %s1, 78
  %v1331 = vpack.c.bf16 0.0, %v1326
  %1332 = vst [vmem:[%s1330] sm:$0x1] %v1331
  %s1333 = scalar_lea.vmem %s0, 81
  %v1334 = vld [vmem:[%s1333] ss:$0 sm:$0x3]
  %v1335 = vunpack.i.l.bf16 %v1334
  %v1337 = vunpack.i.h.bf16 %v1334
  %s1339 = scalar_lea.vmem %s1, 82
  %v1340 = vpack.c.bf16 0.0, %v1335
  %1341 = vst [vmem:[%s1339] sm:$0x1] %v1340
  %s1342 = scalar_lea.vmem %s0, 85
  %v1343 = vld [vmem:[%s1342] ss:$0 sm:$0x3]
  %v1344 = vunpack.i.l.bf16 %v1343
  %v1346 = vunpack.i.h.bf16 %v1343
  %s1348 = scalar_lea.vmem %s1, 86
  %v1349 = vpack.c.bf16 0.0, %v1344
  %1350 = vst [vmem:[%s1348] sm:$0x1] %v1349
  %s1351 = scalar_lea.vmem %s0, 89
  %v1352 = vld [vmem:[%s1351] ss:$0 sm:$0x3]
  %v1353 = vunpack.i.l.bf16 %v1352
  %v1355 = vunpack.i.h.bf16 %v1352
  %s1357 = scalar_lea.vmem %s1, 90
  %v1358 = vpack.c.bf16 0.0, %v1353
  %1359 = vst [vmem:[%s1357] sm:$0x1] %v1358
  %s1360 = scalar_lea.vmem %s0, 93
  %v1361 = vld [vmem:[%s1360] ss:$0 sm:$0x3]
  %v1362 = vunpack.i.l.bf16 %v1361
  %v1364 = vunpack.i.h.bf16 %v1361
  %s1366 = scalar_lea.vmem %s1, 94
  %v1367 = vpack.c.bf16 0.0, %v1362
  %1368 = vst [vmem:[%s1366] sm:$0x1] %v1367
  %s1369 = scalar_lea.vmem %s0, 97
  %v1370 = vld [vmem:[%s1369] ss:$0 sm:$0x3]
  %v1371 = vunpack.i.l.bf16 %v1370
  %v1373 = vunpack.i.h.bf16 %v1370
  %s1375 = scalar_lea.vmem %s1, 98
  %v1376 = vpack.c.bf16 0.0, %v1371
  %1377 = vst [vmem:[%s1375] sm:$0x1] %v1376
  %s1378 = scalar_lea.vmem %s0, 101
  %v1379 = vld [vmem:[%s1378] ss:$0 sm:$0x3]
  %v1380 = vunpack.i.l.bf16 %v1379
  %v1382 = vunpack.i.h.bf16 %v1379
  %s1384 = scalar_lea.vmem %s1, 102
  %v1385 = vpack.c.bf16 0.0, %v1380
  %1386 = vst [vmem:[%s1384] sm:$0x1] %v1385
  %s1387 = scalar_lea.vmem %s0, 105
  %v1388 = vld [vmem:[%s1387] ss:$0 sm:$0x3]
  %v1389 = vunpack.i.l.bf16 %v1388
  %v1391 = vunpack.i.h.bf16 %v1388
  %s1393 = scalar_lea.vmem %s1, 106
  %v1394 = vpack.c.bf16 0.0, %v1389
  %1395 = vst [vmem:[%s1393] sm:$0x1] %v1394
  %s1396 = scalar_lea.vmem %s0, 109
  %v1397 = vld [vmem:[%s1396] ss:$0 sm:$0x3]
  %v1398 = vunpack.i.l.bf16 %v1397
  %v1400 = vunpack.i.h.bf16 %v1397
  %s1402 = scalar_lea.vmem %s1, 110
  %v1403 = vpack.c.bf16 0.0, %v1398
  %1404 = vst [vmem:[%s1402] sm:$0x1] %v1403
  %s1405 = scalar_lea.vmem %s0, 113
  %v1406 = vld [vmem:[%s1405] ss:$0 sm:$0x3]
  %v1407 = vunpack.i.l.bf16 %v1406
  %v1409 = vunpack.i.h.bf16 %v1406
  %s1411 = scalar_lea.vmem %s1, 114
  %v1412 = vpack.c.bf16 0.0, %v1407
  %1413 = vst [vmem:[%s1411] sm:$0x1] %v1412
  %s1414 = scalar_lea.vmem %s0, 117
  %v1415 = vld [vmem:[%s1414] ss:$0 sm:$0x3]
  %v1416 = vunpack.i.l.bf16 %v1415
  %v1418 = vunpack.i.h.bf16 %v1415
  %s1420 = scalar_lea.vmem %s1, 118
  %v1421 = vpack.c.bf16 0.0, %v1416
  %1422 = vst [vmem:[%s1420] sm:$0x1] %v1421
  %s1423 = scalar_lea.vmem %s0, 121
  %v1424 = vld [vmem:[%s1423] ss:$0 sm:$0x3]
  %v1425 = vunpack.i.l.bf16 %v1424
  %v1427 = vunpack.i.h.bf16 %v1424
  %s1429 = scalar_lea.vmem %s1, 122
  %v1430 = vpack.c.bf16 0.0, %v1425
  %1431 = vst [vmem:[%s1429] sm:$0x1] %v1430
  %s1432 = scalar_lea.vmem %s0, 125
  %v1433 = vld [vmem:[%s1432] ss:$0 sm:$0x3]
  %v1434 = vunpack.i.l.bf16 %v1433
  %v1436 = vunpack.i.h.bf16 %v1433
  %s1438 = scalar_lea.vmem %s1, 126
  %v1439 = vpack.c.bf16 0.0, %v1434
  %1440 = vst [vmem:[%s1438] sm:$0x1] %v1439
  %s1441 = scalar_lea.vmem %s0, 129
  %v1442 = vld [vmem:[%s1441] ss:$0 sm:$0x3]
  %v1443 = vunpack.i.l.bf16 %v1442
  %v1445 = vunpack.i.h.bf16 %v1442
  %s1447 = scalar_lea.vmem %s1, 130
  %v1448 = vpack.c.bf16 0.0, %v1443
  %1449 = vst [vmem:[%s1447] sm:$0x1] %v1448
  %s1450 = scalar_lea.vmem %s0, 133
  %v1451 = vld [vmem:[%s1450] ss:$0 sm:$0x3]
  %v1452 = vunpack.i.l.bf16 %v1451
  %v1454 = vunpack.i.h.bf16 %v1451
  %s1456 = scalar_lea.vmem %s1, 134
  %v1457 = vpack.c.bf16 0.0, %v1452
  %1458 = vst [vmem:[%s1456] sm:$0x1] %v1457
  %s1459 = scalar_lea.vmem %s0, 137
  %v1460 = vld [vmem:[%s1459] ss:$0 sm:$0x3]
  %v1461 = vunpack.i.l.bf16 %v1460
  %v1463 = vunpack.i.h.bf16 %v1460
  %s1465 = scalar_lea.vmem %s1, 138
  %v1466 = vpack.c.bf16 0.0, %v1461
  %1467 = vst [vmem:[%s1465] sm:$0x1] %v1466
  %s1468 = scalar_lea.vmem %s0, 141
  %v1469 = vld [vmem:[%s1468] ss:$0 sm:$0x3]
  %v1470 = vunpack.i.l.bf16 %v1469
  %v1472 = vunpack.i.h.bf16 %v1469
  %s1474 = scalar_lea.vmem %s1, 142
  %v1475 = vpack.c.bf16 0.0, %v1470
  %1476 = vst [vmem:[%s1474] sm:$0x1] %v1475
  %s1477 = scalar_lea.vmem %s0, 145
  %v1478 = vld [vmem:[%s1477] ss:$0 sm:$0x3]
  %v1479 = vunpack.i.l.bf16 %v1478
  %v1481 = vunpack.i.h.bf16 %v1478
  %s1483 = scalar_lea.vmem %s1, 146
  %v1484 = vpack.c.bf16 0.0, %v1479
  %1485 = vst [vmem:[%s1483] sm:$0x1] %v1484
  %s1486 = scalar_lea.vmem %s0, 149
  %v1487 = vld [vmem:[%s1486] ss:$0 sm:$0x3]
  %v1488 = vunpack.i.l.bf16 %v1487
  %v1490 = vunpack.i.h.bf16 %v1487
  %s1492 = scalar_lea.vmem %s1, 150
  %v1493 = vpack.c.bf16 0.0, %v1488
  %1494 = vst [vmem:[%s1492] sm:$0x1] %v1493
  %s1495 = scalar_lea.vmem %s0, 153
  %v1496 = vld [vmem:[%s1495] ss:$0 sm:$0x3]
  %v1497 = vunpack.i.l.bf16 %v1496
  %v1499 = vunpack.i.h.bf16 %v1496
  %s1501 = scalar_lea.vmem %s1, 154
  %v1502 = vpack.c.bf16 0.0, %v1497
  %1503 = vst [vmem:[%s1501] sm:$0x1] %v1502
  %s1504 = scalar_lea.vmem %s0, 157
  %v1505 = vld [vmem:[%s1504] ss:$0 sm:$0x3]
  %v1506 = vunpack.i.l.bf16 %v1505
  %v1508 = vunpack.i.h.bf16 %v1505
  %s1510 = scalar_lea.vmem %s1, 158
  %v1511 = vpack.c.bf16 0.0, %v1506
  %1512 = vst [vmem:[%s1510] sm:$0x1] %v1511
  %s1513 = scalar_lea.vmem %s0, 161
  %v1514 = vld [vmem:[%s1513] ss:$0 sm:$0x3]
  %v1515 = vunpack.i.l.bf16 %v1514
  %v1517 = vunpack.i.h.bf16 %v1514
  %s1519 = scalar_lea.vmem %s1, 162
  %v1520 = vpack.c.bf16 0.0, %v1515
  %1521 = vst [vmem:[%s1519] sm:$0x1] %v1520
  %s1522 = scalar_lea.vmem %s0, 165
  %v1523 = vld [vmem:[%s1522] ss:$0 sm:$0x3]
  %v1524 = vunpack.i.l.bf16 %v1523
  %v1526 = vunpack.i.h.bf16 %v1523
  %s1528 = scalar_lea.vmem %s1, 166
  %v1529 = vpack.c.bf16 0.0, %v1524
  %1530 = vst [vmem:[%s1528] sm:$0x1] %v1529
  %s1531 = scalar_lea.vmem %s0, 169
  %v1532 = vld [vmem:[%s1531] ss:$0 sm:$0x3]
  %v1533 = vunpack.i.l.bf16 %v1532
  %v1535 = vunpack.i.h.bf16 %v1532
  %s1537 = scalar_lea.vmem %s1, 170
  %v1538 = vpack.c.bf16 0.0, %v1533
  %1539 = vst [vmem:[%s1537] sm:$0x1] %v1538
  %s1540 = scalar_lea.vmem %s0, 173
  %v1541 = vld [vmem:[%s1540] ss:$0 sm:$0x3]
  %v1542 = vunpack.i.l.bf16 %v1541
  %v1544 = vunpack.i.h.bf16 %v1541
  %s1546 = scalar_lea.vmem %s1, 174
  %v1547 = vpack.c.bf16 0.0, %v1542
  %1548 = vst [vmem:[%s1546] sm:$0x1] %v1547
  %s1549 = scalar_lea.vmem %s0, 177
  %v1550 = vld [vmem:[%s1549] ss:$0 sm:$0x3]
  %v1551 = vunpack.i.l.bf16 %v1550
  %v1553 = vunpack.i.h.bf16 %v1550
  %s1555 = scalar_lea.vmem %s1, 178
  %v1556 = vpack.c.bf16 0.0, %v1551
  %1557 = vst [vmem:[%s1555] sm:$0x1] %v1556
  %s1558 = scalar_lea.vmem %s0, 181
  %v1559 = vld [vmem:[%s1558] ss:$0 sm:$0x3]
  %v1560 = vunpack.i.l.bf16 %v1559
  %v1562 = vunpack.i.h.bf16 %v1559
  %s1564 = scalar_lea.vmem %s1, 182
  %v1565 = vpack.c.bf16 0.0, %v1560
  %1566 = vst [vmem:[%s1564] sm:$0x1] %v1565
  %s1567 = scalar_lea.vmem %s0, 185
  %v1568 = vld [vmem:[%s1567] ss:$0 sm:$0x3]
  %v1569 = vunpack.i.l.bf16 %v1568
  %v1571 = vunpack.i.h.bf16 %v1568
  %s1573 = scalar_lea.vmem %s1, 186
  %v1574 = vpack.c.bf16 0.0, %v1569
  %1575 = vst [vmem:[%s1573] sm:$0x1] %v1574
  %s1576 = scalar_lea.vmem %s0, 189
  %v1577 = vld [vmem:[%s1576] ss:$0 sm:$0x3]
  %v1578 = vunpack.i.l.bf16 %v1577
  %v1580 = vunpack.i.h.bf16 %v1577
  %s1582 = scalar_lea.vmem %s1, 190
  %v1583 = vpack.c.bf16 0.0, %v1578
  %1584 = vst [vmem:[%s1582] sm:$0x1] %v1583
  %s1585 = scalar_lea.vmem %s0, 193
  %v1586 = vld [vmem:[%s1585] ss:$0 sm:$0x3]
  %v1587 = vunpack.i.l.bf16 %v1586
  %v1589 = vunpack.i.h.bf16 %v1586
  %s1591 = scalar_lea.vmem %s1, 194
  %v1592 = vpack.c.bf16 0.0, %v1587
  %1593 = vst [vmem:[%s1591] sm:$0x1] %v1592
  %s1594 = scalar_lea.vmem %s0, 197
  %v1595 = vld [vmem:[%s1594] ss:$0 sm:$0x3]
  %v1596 = vunpack.i.l.bf16 %v1595
  %v1598 = vunpack.i.h.bf16 %v1595
  %s1600 = scalar_lea.vmem %s1, 198
  %v1601 = vpack.c.bf16 0.0, %v1596
  %1602 = vst [vmem:[%s1600] sm:$0x1] %v1601
  %s1603 = scalar_lea.vmem %s0, 201
  %v1604 = vld [vmem:[%s1603] ss:$0 sm:$0x3]
  %v1605 = vunpack.i.l.bf16 %v1604
  %v1607 = vunpack.i.h.bf16 %v1604
  %s1609 = scalar_lea.vmem %s1, 202
  %v1610 = vpack.c.bf16 0.0, %v1605
  %1611 = vst [vmem:[%s1609] sm:$0x1] %v1610
  %s1612 = scalar_lea.vmem %s0, 205
  %v1613 = vld [vmem:[%s1612] ss:$0 sm:$0x3]
  %v1614 = vunpack.i.l.bf16 %v1613
  %v1616 = vunpack.i.h.bf16 %v1613
  %s1618 = scalar_lea.vmem %s1, 206
  %v1619 = vpack.c.bf16 0.0, %v1614
  %1620 = vst [vmem:[%s1618] sm:$0x1] %v1619
  %s1621 = scalar_lea.vmem %s0, 209
  %v1622 = vld [vmem:[%s1621] ss:$0 sm:$0x3]
  %v1623 = vunpack.i.l.bf16 %v1622
  %v1625 = vunpack.i.h.bf16 %v1622
  %s1627 = scalar_lea.vmem %s1, 210
  %v1628 = vpack.c.bf16 0.0, %v1623
  %1629 = vst [vmem:[%s1627] sm:$0x1] %v1628
  %s1630 = scalar_lea.vmem %s0, 213
  %v1631 = vld [vmem:[%s1630] ss:$0 sm:$0x3]
  %v1632 = vunpack.i.l.bf16 %v1631
  %v1634 = vunpack.i.h.bf16 %v1631
  %s1636 = scalar_lea.vmem %s1, 214
  %v1637 = vpack.c.bf16 0.0, %v1632
  %1638 = vst [vmem:[%s1636] sm:$0x1] %v1637
  %s1639 = scalar_lea.vmem %s0, 217
  %v1640 = vld [vmem:[%s1639] ss:$0 sm:$0x3]
  %v1641 = vunpack.i.l.bf16 %v1640
  %v1643 = vunpack.i.h.bf16 %v1640
  %s1645 = scalar_lea.vmem %s1, 218
  %v1646 = vpack.c.bf16 0.0, %v1641
  %1647 = vst [vmem:[%s1645] sm:$0x1] %v1646
  %s1648 = scalar_lea.vmem %s0, 221
  %v1649 = vld [vmem:[%s1648] ss:$0 sm:$0x3]
  %v1650 = vunpack.i.l.bf16 %v1649
  %v1652 = vunpack.i.h.bf16 %v1649
  %s1654 = scalar_lea.vmem %s1, 222
  %v1655 = vpack.c.bf16 0.0, %v1650
  %1656 = vst [vmem:[%s1654] sm:$0x1] %v1655
  %s1657 = scalar_lea.vmem %s0, 225
  %v1658 = vld [vmem:[%s1657] ss:$0 sm:$0x3]
  %v1659 = vunpack.i.l.bf16 %v1658
  %v1661 = vunpack.i.h.bf16 %v1658
  %s1663 = scalar_lea.vmem %s1, 226
  %v1664 = vpack.c.bf16 0.0, %v1659
  %1665 = vst [vmem:[%s1663] sm:$0x1] %v1664
  %s1666 = scalar_lea.vmem %s0, 229
  %v1667 = vld [vmem:[%s1666] ss:$0 sm:$0x3]
  %v1668 = vunpack.i.l.bf16 %v1667
  %v1670 = vunpack.i.h.bf16 %v1667
  %s1672 = scalar_lea.vmem %s1, 230
  %v1673 = vpack.c.bf16 0.0, %v1668
  %1674 = vst [vmem:[%s1672] sm:$0x1] %v1673
  %s1675 = scalar_lea.vmem %s0, 233
  %v1676 = vld [vmem:[%s1675] ss:$0 sm:$0x3]
  %v1677 = vunpack.i.l.bf16 %v1676
  %v1679 = vunpack.i.h.bf16 %v1676
  %s1681 = scalar_lea.vmem %s1, 234
  %v1682 = vpack.c.bf16 0.0, %v1677
  %1683 = vst [vmem:[%s1681] sm:$0x1] %v1682
  %s1684 = scalar_lea.vmem %s0, 237
  %v1685 = vld [vmem:[%s1684] ss:$0 sm:$0x3]
  %v1686 = vunpack.i.l.bf16 %v1685
  %v1688 = vunpack.i.h.bf16 %v1685
  %s1690 = scalar_lea.vmem %s1, 238
  %v1691 = vpack.c.bf16 0.0, %v1686
  %1692 = vst [vmem:[%s1690] sm:$0x1] %v1691
  %s1693 = scalar_lea.vmem %s0, 241
  %v1694 = vld [vmem:[%s1693] ss:$0 sm:$0x3]
  %v1695 = vunpack.i.l.bf16 %v1694
  %v1697 = vunpack.i.h.bf16 %v1694
  %s1699 = scalar_lea.vmem %s1, 242
  %v1700 = vpack.c.bf16 0.0, %v1695
  %1701 = vst [vmem:[%s1699] sm:$0x1] %v1700
  %s1702 = scalar_lea.vmem %s0, 245
  %v1703 = vld [vmem:[%s1702] ss:$0 sm:$0x3]
  %v1704 = vunpack.i.l.bf16 %v1703
  %v1706 = vunpack.i.h.bf16 %v1703
  %s1708 = scalar_lea.vmem %s1, 246
  %v1709 = vpack.c.bf16 0.0, %v1704
  %1710 = vst [vmem:[%s1708] sm:$0x1] %v1709
  %s1711 = scalar_lea.vmem %s0, 249
  %v1712 = vld [vmem:[%s1711] ss:$0 sm:$0x3]
  %v1713 = vunpack.i.l.bf16 %v1712
  %v1715 = vunpack.i.h.bf16 %v1712
  %s1717 = scalar_lea.vmem %s1, 250
  %v1718 = vpack.c.bf16 0.0, %v1713
  %1719 = vst [vmem:[%s1717] sm:$0x1] %v1718
  %s1720 = scalar_lea.vmem %s0, 253
  %v1721 = vld [vmem:[%s1720] ss:$0 sm:$0x3]
  %v1722 = vunpack.i.l.bf16 %v1721
  %v1724 = vunpack.i.h.bf16 %v1721
  %s1726 = scalar_lea.vmem %s1, 254
  %v1727 = vpack.c.bf16 0.0, %v1722
  %1728 = vst [vmem:[%s1726] sm:$0x1] %v1727
  %v1729 = vld [vmem:[%s0] ss:$0 sm:$0x3]
  %v1730 = vunpack.i.l.bf16 %v1729
  %v1732 = vunpack.i.h.bf16 %v1729
  %s1734 = scalar_lea.vmem %s1, 3
  %v1735 = vpack.c.bf16 0.0, %v1730
  %1736 = vst [vmem:[%s1734] sm:$0x1] %v1735
  %s1737 = scalar_lea.vmem %s0, 4
  %v1738 = vld [vmem:[%s1737] ss:$0 sm:$0x3]
  %v1739 = vunpack.i.l.bf16 %v1738
  %v1741 = vunpack.i.h.bf16 %v1738
  %s1743 = scalar_lea.vmem %s1, 7
  %v1744 = vpack.c.bf16 0.0, %v1739
  %1745 = vst [vmem:[%s1743] sm:$0x1] %v1744
  %s1746 = scalar_lea.vmem %s0, 8
  %v1747 = vld [vmem:[%s1746] ss:$0 sm:$0x3]
  %v1748 = vunpack.i.l.bf16 %v1747
  %v1750 = vunpack.i.h.bf16 %v1747
  %s1752 = scalar_lea.vmem %s1, 11
  %v1753 = vpack.c.bf16 0.0, %v1748
  %1754 = vst [vmem:[%s1752] sm:$0x1] %v1753
  %s1755 = scalar_lea.vmem %s0, 12
  %v1756 = vld [vmem:[%s1755] ss:$0 sm:$0x3]
  %v1757 = vunpack.i.l.bf16 %v1756
  %v1759 = vunpack.i.h.bf16 %v1756
  %s1761 = scalar_lea.vmem %s1, 15
  %v1762 = vpack.c.bf16 0.0, %v1757
  %1763 = vst [vmem:[%s1761] sm:$0x1] %v1762
  %s1764 = scalar_lea.vmem %s0, 16
  %v1765 = vld [vmem:[%s1764] ss:$0 sm:$0x3]
  %v1766 = vunpack.i.l.bf16 %v1765
  %v1768 = vunpack.i.h.bf16 %v1765
  %s1770 = scalar_lea.vmem %s1, 19
  %v1771 = vpack.c.bf16 0.0, %v1766
  %1772 = vst [vmem:[%s1770] sm:$0x1] %v1771
  %s1773 = scalar_lea.vmem %s0, 20
  %v1774 = vld [vmem:[%s1773] ss:$0 sm:$0x3]
  %v1775 = vunpack.i.l.bf16 %v1774
  %v1777 = vunpack.i.h.bf16 %v1774
  %s1779 = scalar_lea.vmem %s1, 23
  %v1780 = vpack.c.bf16 0.0, %v1775
  %1781 = vst [vmem:[%s1779] sm:$0x1] %v1780
  %s1782 = scalar_lea.vmem %s0, 24
  %v1783 = vld [vmem:[%s1782] ss:$0 sm:$0x3]
  %v1784 = vunpack.i.l.bf16 %v1783
  %v1786 = vunpack.i.h.bf16 %v1783
  %s1788 = scalar_lea.vmem %s1, 27
  %v1789 = vpack.c.bf16 0.0, %v1784
  %1790 = vst [vmem:[%s1788] sm:$0x1] %v1789
  %s1791 = scalar_lea.vmem %s0, 28
  %v1792 = vld [vmem:[%s1791] ss:$0 sm:$0x3]
  %v1793 = vunpack.i.l.bf16 %v1792
  %v1795 = vunpack.i.h.bf16 %v1792
  %s1797 = scalar_lea.vmem %s1, 31
  %v1798 = vpack.c.bf16 0.0, %v1793
  %1799 = vst [vmem:[%s1797] sm:$0x1] %v1798
  %s1800 = scalar_lea.vmem %s0, 32
  %v1801 = vld [vmem:[%s1800] ss:$0 sm:$0x3]
  %v1802 = vunpack.i.l.bf16 %v1801
  %v1804 = vunpack.i.h.bf16 %v1801
  %s1806 = scalar_lea.vmem %s1, 35
  %v1807 = vpack.c.bf16 0.0, %v1802
  %1808 = vst [vmem:[%s1806] sm:$0x1] %v1807
  %s1809 = scalar_lea.vmem %s0, 36
  %v1810 = vld [vmem:[%s1809] ss:$0 sm:$0x3]
  %v1811 = vunpack.i.l.bf16 %v1810
  %v1813 = vunpack.i.h.bf16 %v1810
  %s1815 = scalar_lea.vmem %s1, 39
  %v1816 = vpack.c.bf16 0.0, %v1811
  %1817 = vst [vmem:[%s1815] sm:$0x1] %v1816
  %s1818 = scalar_lea.vmem %s0, 40
  %v1819 = vld [vmem:[%s1818] ss:$0 sm:$0x3]
  %v1820 = vunpack.i.l.bf16 %v1819
  %v1822 = vunpack.i.h.bf16 %v1819
  %s1824 = scalar_lea.vmem %s1, 43
  %v1825 = vpack.c.bf16 0.0, %v1820
  %1826 = vst [vmem:[%s1824] sm:$0x1] %v1825
  %s1827 = scalar_lea.vmem %s0, 44
  %v1828 = vld [vmem:[%s1827] ss:$0 sm:$0x3]
  %v1829 = vunpack.i.l.bf16 %v1828
  %v1831 = vunpack.i.h.bf16 %v1828
  %s1833 = scalar_lea.vmem %s1, 47
  %v1834 = vpack.c.bf16 0.0, %v1829
  %1835 = vst [vmem:[%s1833] sm:$0x1] %v1834
  %s1836 = scalar_lea.vmem %s0, 48
  %v1837 = vld [vmem:[%s1836] ss:$0 sm:$0x3]
  %v1838 = vunpack.i.l.bf16 %v1837
  %v1840 = vunpack.i.h.bf16 %v1837
  %s1842 = scalar_lea.vmem %s1, 51
  %v1843 = vpack.c.bf16 0.0, %v1838
  %1844 = vst [vmem:[%s1842] sm:$0x1] %v1843
  %s1845 = scalar_lea.vmem %s0, 52
  %v1846 = vld [vmem:[%s1845] ss:$0 sm:$0x3]
  %v1847 = vunpack.i.l.bf16 %v1846
  %v1849 = vunpack.i.h.bf16 %v1846
  %s1851 = scalar_lea.vmem %s1, 55
  %v1852 = vpack.c.bf16 0.0, %v1847
  %1853 = vst [vmem:[%s1851] sm:$0x1] %v1852
  %s1854 = scalar_lea.vmem %s0, 56
  %v1855 = vld [vmem:[%s1854] ss:$0 sm:$0x3]
  %v1856 = vunpack.i.l.bf16 %v1855
  %v1858 = vunpack.i.h.bf16 %v1855
  %s1860 = scalar_lea.vmem %s1, 59
  %v1861 = vpack.c.bf16 0.0, %v1856
  %1862 = vst [vmem:[%s1860] sm:$0x1] %v1861
  %s1863 = scalar_lea.vmem %s0, 60
  %v1864 = vld [vmem:[%s1863] ss:$0 sm:$0x3]
  %v1865 = vunpack.i.l.bf16 %v1864
  %v1867 = vunpack.i.h.bf16 %v1864
  %s1869 = scalar_lea.vmem %s1, 63
  %v1870 = vpack.c.bf16 0.0, %v1865
  %1871 = vst [vmem:[%s1869] sm:$0x1] %v1870
  %s1872 = scalar_lea.vmem %s0, 64
  %v1873 = vld [vmem:[%s1872] ss:$0 sm:$0x3]
  %v1874 = vunpack.i.l.bf16 %v1873
  %v1876 = vunpack.i.h.bf16 %v1873
  %s1878 = scalar_lea.vmem %s1, 67
  %v1879 = vpack.c.bf16 0.0, %v1874
  %1880 = vst [vmem:[%s1878] sm:$0x1] %v1879
  %s1881 = scalar_lea.vmem %s0, 68
  %v1882 = vld [vmem:[%s1881] ss:$0 sm:$0x3]
  %v1883 = vunpack.i.l.bf16 %v1882
  %v1885 = vunpack.i.h.bf16 %v1882
  %s1887 = scalar_lea.vmem %s1, 71
  %v1888 = vpack.c.bf16 0.0, %v1883
  %1889 = vst [vmem:[%s1887] sm:$0x1] %v1888
  %s1890 = scalar_lea.vmem %s0, 72
  %v1891 = vld [vmem:[%s1890] ss:$0 sm:$0x3]
  %v1892 = vunpack.i.l.bf16 %v1891
  %v1894 = vunpack.i.h.bf16 %v1891
  %s1896 = scalar_lea.vmem %s1, 75
  %v1897 = vpack.c.bf16 0.0, %v1892
  %1898 = vst [vmem:[%s1896] sm:$0x1] %v1897
  %s1899 = scalar_lea.vmem %s0, 76
  %v1900 = vld [vmem:[%s1899] ss:$0 sm:$0x3]
  %v1901 = vunpack.i.l.bf16 %v1900
  %v1903 = vunpack.i.h.bf16 %v1900
  %s1905 = scalar_lea.vmem %s1, 79
  %v1906 = vpack.c.bf16 0.0, %v1901
  %1907 = vst [vmem:[%s1905] sm:$0x1] %v1906
  %s1908 = scalar_lea.vmem %s0, 80
  %v1909 = vld [vmem:[%s1908] ss:$0 sm:$0x3]
  %v1910 = vunpack.i.l.bf16 %v1909
  %v1912 = vunpack.i.h.bf16 %v1909
  %s1914 = scalar_lea.vmem %s1, 83
  %v1915 = vpack.c.bf16 0.0, %v1910
  %1916 = vst [vmem:[%s1914] sm:$0x1] %v1915
  %s1917 = scalar_lea.vmem %s0, 84
  %v1918 = vld [vmem:[%s1917] ss:$0 sm:$0x3]
  %v1919 = vunpack.i.l.bf16 %v1918
  %v1921 = vunpack.i.h.bf16 %v1918
  %s1923 = scalar_lea.vmem %s1, 87
  %v1924 = vpack.c.bf16 0.0, %v1919
  %1925 = vst [vmem:[%s1923] sm:$0x1] %v1924
  %s1926 = scalar_lea.vmem %s0, 88
  %v1927 = vld [vmem:[%s1926] ss:$0 sm:$0x3]
  %v1928 = vunpack.i.l.bf16 %v1927
  %v1930 = vunpack.i.h.bf16 %v1927
  %s1932 = scalar_lea.vmem %s1, 91
  %v1933 = vpack.c.bf16 0.0, %v1928
  %1934 = vst [vmem:[%s1932] sm:$0x1] %v1933
  %s1935 = scalar_lea.vmem %s0, 92
  %v1936 = vld [vmem:[%s1935] ss:$0 sm:$0x3]
  %v1937 = vunpack.i.l.bf16 %v1936
  %v1939 = vunpack.i.h.bf16 %v1936
  %s1941 = scalar_lea.vmem %s1, 95
  %v1942 = vpack.c.bf16 0.0, %v1937
  %1943 = vst [vmem:[%s1941] sm:$0x1] %v1942
  %s1944 = scalar_lea.vmem %s0, 96
  %v1945 = vld [vmem:[%s1944] ss:$0 sm:$0x3]
  %v1946 = vunpack.i.l.bf16 %v1945
  %v1948 = vunpack.i.h.bf16 %v1945
  %s1950 = scalar_lea.vmem %s1, 99
  %v1951 = vpack.c.bf16 0.0, %v1946
  %1952 = vst [vmem:[%s1950] sm:$0x1] %v1951
  %s1953 = scalar_lea.vmem %s0, 100
  %v1954 = vld [vmem:[%s1953] ss:$0 sm:$0x3]
  %v1955 = vunpack.i.l.bf16 %v1954
  %v1957 = vunpack.i.h.bf16 %v1954
  %s1959 = scalar_lea.vmem %s1, 103
  %v1960 = vpack.c.bf16 0.0, %v1955
  %1961 = vst [vmem:[%s1959] sm:$0x1] %v1960
  %s1962 = scalar_lea.vmem %s0, 104
  %v1963 = vld [vmem:[%s1962] ss:$0 sm:$0x3]
  %v1964 = vunpack.i.l.bf16 %v1963
  %v1966 = vunpack.i.h.bf16 %v1963
  %s1968 = scalar_lea.vmem %s1, 107
  %v1969 = vpack.c.bf16 0.0, %v1964
  %1970 = vst [vmem:[%s1968] sm:$0x1] %v1969
  %s1971 = scalar_lea.vmem %s0, 108
  %v1972 = vld [vmem:[%s1971] ss:$0 sm:$0x3]
  %v1973 = vunpack.i.l.bf16 %v1972
  %v1975 = vunpack.i.h.bf16 %v1972
  %s1977 = scalar_lea.vmem %s1, 111
  %v1978 = vpack.c.bf16 0.0, %v1973
  %1979 = vst [vmem:[%s1977] sm:$0x1] %v1978
  %s1980 = scalar_lea.vmem %s0, 112
  %v1981 = vld [vmem:[%s1980] ss:$0 sm:$0x3]
  %v1982 = vunpack.i.l.bf16 %v1981
  %v1984 = vunpack.i.h.bf16 %v1981
  %s1986 = scalar_lea.vmem %s1, 115
  %v1987 = vpack.c.bf16 0.0, %v1982
  %1988 = vst [vmem:[%s1986] sm:$0x1] %v1987
  %s1989 = scalar_lea.vmem %s0, 116
  %v1990 = vld [vmem:[%s1989] ss:$0 sm:$0x3]
  %v1991 = vunpack.i.l.bf16 %v1990
  %v1993 = vunpack.i.h.bf16 %v1990
  %s1995 = scalar_lea.vmem %s1, 119
  %v1996 = vpack.c.bf16 0.0, %v1991
  %1997 = vst [vmem:[%s1995] sm:$0x1] %v1996
  %s1998 = scalar_lea.vmem %s0, 120
  %v1999 = vld [vmem:[%s1998] ss:$0 sm:$0x3]
  %v2000 = vunpack.i.l.bf16 %v1999
  %v2002 = vunpack.i.h.bf16 %v1999
  %s2004 = scalar_lea.vmem %s1, 123
  %v2005 = vpack.c.bf16 0.0, %v2000
  %2006 = vst [vmem:[%s2004] sm:$0x1] %v2005
  %s2007 = scalar_lea.vmem %s0, 124
  %v2008 = vld [vmem:[%s2007] ss:$0 sm:$0x3]
  %v2009 = vunpack.i.l.bf16 %v2008
  %v2011 = vunpack.i.h.bf16 %v2008
  %s2013 = scalar_lea.vmem %s1, 127
  %v2014 = vpack.c.bf16 0.0, %v2009
  %2015 = vst [vmem:[%s2013] sm:$0x1] %v2014
  %s2016 = scalar_lea.vmem %s0, 128
  %v2017 = vld [vmem:[%s2016] ss:$0 sm:$0x3]
  %v2018 = vunpack.i.l.bf16 %v2017
  %v2020 = vunpack.i.h.bf16 %v2017
  %s2022 = scalar_lea.vmem %s1, 131
  %v2023 = vpack.c.bf16 0.0, %v2018
  %2024 = vst [vmem:[%s2022] sm:$0x1] %v2023
  %s2025 = scalar_lea.vmem %s0, 132
  %v2026 = vld [vmem:[%s2025] ss:$0 sm:$0x3]
  %v2027 = vunpack.i.l.bf16 %v2026
  %v2029 = vunpack.i.h.bf16 %v2026
  %s2031 = scalar_lea.vmem %s1, 135
  %v2032 = vpack.c.bf16 0.0, %v2027
  %2033 = vst [vmem:[%s2031] sm:$0x1] %v2032
  %s2034 = scalar_lea.vmem %s0, 136
  %v2035 = vld [vmem:[%s2034] ss:$0 sm:$0x3]
  %v2036 = vunpack.i.l.bf16 %v2035
  %v2038 = vunpack.i.h.bf16 %v2035
  %s2040 = scalar_lea.vmem %s1, 139
  %v2041 = vpack.c.bf16 0.0, %v2036
  %2042 = vst [vmem:[%s2040] sm:$0x1] %v2041
  %s2043 = scalar_lea.vmem %s0, 140
  %v2044 = vld [vmem:[%s2043] ss:$0 sm:$0x3]
  %v2045 = vunpack.i.l.bf16 %v2044
  %v2047 = vunpack.i.h.bf16 %v2044
  %s2049 = scalar_lea.vmem %s1, 143
  %v2050 = vpack.c.bf16 0.0, %v2045
  %2051 = vst [vmem:[%s2049] sm:$0x1] %v2050
  %s2052 = scalar_lea.vmem %s0, 144
  %v2053 = vld [vmem:[%s2052] ss:$0 sm:$0x3]
  %v2054 = vunpack.i.l.bf16 %v2053
  %v2056 = vunpack.i.h.bf16 %v2053
  %s2058 = scalar_lea.vmem %s1, 147
  %v2059 = vpack.c.bf16 0.0, %v2054
  %2060 = vst [vmem:[%s2058] sm:$0x1] %v2059
  %s2061 = scalar_lea.vmem %s0, 148
  %v2062 = vld [vmem:[%s2061] ss:$0 sm:$0x3]
  %v2063 = vunpack.i.l.bf16 %v2062
  %v2065 = vunpack.i.h.bf16 %v2062
  %s2067 = scalar_lea.vmem %s1, 151
  %v2068 = vpack.c.bf16 0.0, %v2063
  %2069 = vst [vmem:[%s2067] sm:$0x1] %v2068
  %s2070 = scalar_lea.vmem %s0, 152
  %v2071 = vld [vmem:[%s2070] ss:$0 sm:$0x3]
  %v2072 = vunpack.i.l.bf16 %v2071
  %v2074 = vunpack.i.h.bf16 %v2071
  %s2076 = scalar_lea.vmem %s1, 155
  %v2077 = vpack.c.bf16 0.0, %v2072
  %2078 = vst [vmem:[%s2076] sm:$0x1] %v2077
  %s2079 = scalar_lea.vmem %s0, 156
  %v2080 = vld [vmem:[%s2079] ss:$0 sm:$0x3]
  %v2081 = vunpack.i.l.bf16 %v2080
  %v2083 = vunpack.i.h.bf16 %v2080
  %s2085 = scalar_lea.vmem %s1, 159
  %v2086 = vpack.c.bf16 0.0, %v2081
  %2087 = vst [vmem:[%s2085] sm:$0x1] %v2086
  %s2088 = scalar_lea.vmem %s0, 160
  %v2089 = vld [vmem:[%s2088] ss:$0 sm:$0x3]
  %v2090 = vunpack.i.l.bf16 %v2089
  %v2092 = vunpack.i.h.bf16 %v2089
  %s2094 = scalar_lea.vmem %s1, 163
  %v2095 = vpack.c.bf16 0.0, %v2090
  %2096 = vst [vmem:[%s2094] sm:$0x1] %v2095
  %s2097 = scalar_lea.vmem %s0, 164
  %v2098 = vld [vmem:[%s2097] ss:$0 sm:$0x3]
  %v2099 = vunpack.i.l.bf16 %v2098
  %v2101 = vunpack.i.h.bf16 %v2098
  %s2103 = scalar_lea.vmem %s1, 167
  %v2104 = vpack.c.bf16 0.0, %v2099
  %2105 = vst [vmem:[%s2103] sm:$0x1] %v2104
  %s2106 = scalar_lea.vmem %s0, 168
  %v2107 = vld [vmem:[%s2106] ss:$0 sm:$0x3]
  %v2108 = vunpack.i.l.bf16 %v2107
  %v2110 = vunpack.i.h.bf16 %v2107
  %s2112 = scalar_lea.vmem %s1, 171
  %v2113 = vpack.c.bf16 0.0, %v2108
  %2114 = vst [vmem:[%s2112] sm:$0x1] %v2113
  %s2115 = scalar_lea.vmem %s0, 172
  %v2116 = vld [vmem:[%s2115] ss:$0 sm:$0x3]
  %v2117 = vunpack.i.l.bf16 %v2116
  %v2119 = vunpack.i.h.bf16 %v2116
  %s2121 = scalar_lea.vmem %s1, 175
  %v2122 = vpack.c.bf16 0.0, %v2117
  %2123 = vst [vmem:[%s2121] sm:$0x1] %v2122
  %s2124 = scalar_lea.vmem %s0, 176
  %v2125 = vld [vmem:[%s2124] ss:$0 sm:$0x3]
  %v2126 = vunpack.i.l.bf16 %v2125
  %v2128 = vunpack.i.h.bf16 %v2125
  %s2130 = scalar_lea.vmem %s1, 179
  %v2131 = vpack.c.bf16 0.0, %v2126
  %2132 = vst [vmem:[%s2130] sm:$0x1] %v2131
  %s2133 = scalar_lea.vmem %s0, 180
  %v2134 = vld [vmem:[%s2133] ss:$0 sm:$0x3]
  %v2135 = vunpack.i.l.bf16 %v2134
  %v2137 = vunpack.i.h.bf16 %v2134
  %s2139 = scalar_lea.vmem %s1, 183
  %v2140 = vpack.c.bf16 0.0, %v2135
  %2141 = vst [vmem:[%s2139] sm:$0x1] %v2140
  %s2142 = scalar_lea.vmem %s0, 184
  %v2143 = vld [vmem:[%s2142] ss:$0 sm:$0x3]
  %v2144 = vunpack.i.l.bf16 %v2143
  %v2146 = vunpack.i.h.bf16 %v2143
  %s2148 = scalar_lea.vmem %s1, 187
  %v2149 = vpack.c.bf16 0.0, %v2144
  %2150 = vst [vmem:[%s2148] sm:$0x1] %v2149
  %s2151 = scalar_lea.vmem %s0, 188
  %v2152 = vld [vmem:[%s2151] ss:$0 sm:$0x3]
  %v2153 = vunpack.i.l.bf16 %v2152
  %v2155 = vunpack.i.h.bf16 %v2152
  %s2157 = scalar_lea.vmem %s1, 191
  %v2158 = vpack.c.bf16 0.0, %v2153
  %2159 = vst [vmem:[%s2157] sm:$0x1] %v2158
  %s2160 = scalar_lea.vmem %s0, 192
  %v2161 = vld [vmem:[%s2160] ss:$0 sm:$0x3]
  %v2162 = vunpack.i.l.bf16 %v2161
  %v2164 = vunpack.i.h.bf16 %v2161
  %s2166 = scalar_lea.vmem %s1, 195
  %v2167 = vpack.c.bf16 0.0, %v2162
  %2168 = vst [vmem:[%s2166] sm:$0x1] %v2167
  %s2169 = scalar_lea.vmem %s0, 196
  %v2170 = vld [vmem:[%s2169] ss:$0 sm:$0x3]
  %v2171 = vunpack.i.l.bf16 %v2170
  %v2173 = vunpack.i.h.bf16 %v2170
  %s2175 = scalar_lea.vmem %s1, 199
  %v2176 = vpack.c.bf16 0.0, %v2171
  %2177 = vst [vmem:[%s2175] sm:$0x1] %v2176
  %s2178 = scalar_lea.vmem %s0, 200
  %v2179 = vld [vmem:[%s2178] ss:$0 sm:$0x3]
  %v2180 = vunpack.i.l.bf16 %v2179
  %v2182 = vunpack.i.h.bf16 %v2179
  %s2184 = scalar_lea.vmem %s1, 203
  %v2185 = vpack.c.bf16 0.0, %v2180
  %2186 = vst [vmem:[%s2184] sm:$0x1] %v2185
  %s2187 = scalar_lea.vmem %s0, 204
  %v2188 = vld [vmem:[%s2187] ss:$0 sm:$0x3]
  %v2189 = vunpack.i.l.bf16 %v2188
  %v2191 = vunpack.i.h.bf16 %v2188
  %s2193 = scalar_lea.vmem %s1, 207
  %v2194 = vpack.c.bf16 0.0, %v2189
  %2195 = vst [vmem:[%s2193] sm:$0x1] %v2194
  %s2196 = scalar_lea.vmem %s0, 208
  %v2197 = vld [vmem:[%s2196] ss:$0 sm:$0x3]
  %v2198 = vunpack.i.l.bf16 %v2197
  %v2200 = vunpack.i.h.bf16 %v2197
  %s2202 = scalar_lea.vmem %s1, 211
  %v2203 = vpack.c.bf16 0.0, %v2198
  %2204 = vst [vmem:[%s2202] sm:$0x1] %v2203
  %s2205 = scalar_lea.vmem %s0, 212
  %v2206 = vld [vmem:[%s2205] ss:$0 sm:$0x3]
  %v2207 = vunpack.i.l.bf16 %v2206
  %v2209 = vunpack.i.h.bf16 %v2206
  %s2211 = scalar_lea.vmem %s1, 215
  %v2212 = vpack.c.bf16 0.0, %v2207
  %2213 = vst [vmem:[%s2211] sm:$0x1] %v2212
  %s2214 = scalar_lea.vmem %s0, 216
  %v2215 = vld [vmem:[%s2214] ss:$0 sm:$0x3]
  %v2216 = vunpack.i.l.bf16 %v2215
  %v2218 = vunpack.i.h.bf16 %v2215
  %s2220 = scalar_lea.vmem %s1, 219
  %v2221 = vpack.c.bf16 0.0, %v2216
  %2222 = vst [vmem:[%s2220] sm:$0x1] %v2221
  %s2223 = scalar_lea.vmem %s0, 220
  %v2224 = vld [vmem:[%s2223] ss:$0 sm:$0x3]
  %v2225 = vunpack.i.l.bf16 %v2224
  %v2227 = vunpack.i.h.bf16 %v2224
  %s2229 = scalar_lea.vmem %s1, 223
  %v2230 = vpack.c.bf16 0.0, %v2225
  %2231 = vst [vmem:[%s2229] sm:$0x1] %v2230
  %s2232 = scalar_lea.vmem %s0, 224
  %v2233 = vld [vmem:[%s2232] ss:$0 sm:$0x3]
  %v2234 = vunpack.i.l.bf16 %v2233
  %v2236 = vunpack.i.h.bf16 %v2233
  %s2238 = scalar_lea.vmem %s1, 227
  %v2239 = vpack.c.bf16 0.0, %v2234
  %2240 = vst [vmem:[%s2238] sm:$0x1] %v2239
  %s2241 = scalar_lea.vmem %s0, 228
  %v2242 = vld [vmem:[%s2241] ss:$0 sm:$0x3]
  %v2243 = vunpack.i.l.bf16 %v2242
  %v2245 = vunpack.i.h.bf16 %v2242
  %s2247 = scalar_lea.vmem %s1, 231
  %v2248 = vpack.c.bf16 0.0, %v2243
  %2249 = vst [vmem:[%s2247] sm:$0x1] %v2248
  %s2250 = scalar_lea.vmem %s0, 232
  %v2251 = vld [vmem:[%s2250] ss:$0 sm:$0x3]
  %v2252 = vunpack.i.l.bf16 %v2251
  %v2254 = vunpack.i.h.bf16 %v2251
  %s2256 = scalar_lea.vmem %s1, 235
  %v2257 = vpack.c.bf16 0.0, %v2252
  %2258 = vst [vmem:[%s2256] sm:$0x1] %v2257
  %s2259 = scalar_lea.vmem %s0, 236
  %v2260 = vld [vmem:[%s2259] ss:$0 sm:$0x3]
  %v2261 = vunpack.i.l.bf16 %v2260
  %v2263 = vunpack.i.h.bf16 %v2260
  %s2265 = scalar_lea.vmem %s1, 239
  %v2266 = vpack.c.bf16 0.0, %v2261
  %2267 = vst [vmem:[%s2265] sm:$0x1] %v2266
  %s2268 = scalar_lea.vmem %s0, 240
  %v2269 = vld [vmem:[%s2268] ss:$0 sm:$0x3]
  %v2270 = vunpack.i.l.bf16 %v2269
  %v2272 = vunpack.i.h.bf16 %v2269
  %s2274 = scalar_lea.vmem %s1, 243
  %v2275 = vpack.c.bf16 0.0, %v2270
  %2276 = vst [vmem:[%s2274] sm:$0x1] %v2275
  %s2277 = scalar_lea.vmem %s0, 244
  %v2278 = vld [vmem:[%s2277] ss:$0 sm:$0x3]
  %v2279 = vunpack.i.l.bf16 %v2278
  %v2281 = vunpack.i.h.bf16 %v2278
  %s2283 = scalar_lea.vmem %s1, 247
  %v2284 = vpack.c.bf16 0.0, %v2279
  %2285 = vst [vmem:[%s2283] sm:$0x1] %v2284
  %s2286 = scalar_lea.vmem %s0, 248
  %v2287 = vld [vmem:[%s2286] ss:$0 sm:$0x3]
  %v2288 = vunpack.i.l.bf16 %v2287
  %v2290 = vunpack.i.h.bf16 %v2287
  %s2292 = scalar_lea.vmem %s1, 251
  %v2293 = vpack.c.bf16 0.0, %v2288
  %2294 = vst [vmem:[%s2292] sm:$0x1] %v2293
  %s2295 = scalar_lea.vmem %s0, 252
  %v2296 = vld [vmem:[%s2295] ss:$0 sm:$0x3]
  %v2297 = vunpack.i.l.bf16 %v2296
  %v2299 = vunpack.i.h.bf16 %v2296
  %s2301 = scalar_lea.vmem %s1, 255
  %v2302 = vpack.c.bf16 0.0, %v2297
  %2303 = vst [vmem:[%s2301] sm:$0x1] %v2302

// kernel: physnet_forward.22
$region0: #{physnet_forward.22}
  #allocation0 [shape = 'u32[]', space=smem, size = 0x4, offset = 0x4, fixed_abs, tag = 'smem constant byte address 0x4 - core index']
  #allocation1 [shape = 'u32[72,128]{1,0:T(1,128)}', space=vmem, size = 0x9000, scoped, tag = 'internal scratch']
  %s0 = inlined_call_operand.vmem [shape: bf16[4,128], index: 0, kind: input, shape index: {}]
  %s1 = inlined_call_operand.vmem [shape: f32[1,128], index: 1, kind: input, shape index: {}]
  %s2 = inlined_call_operand.vmem [shape: f32[1,128], index: 2, kind: input, shape index: {}]
  %s3 = inlined_call_operand.vmem [shape: bf16[4,128], index: 3, kind: output, shape index: {}]
  %s4 = sld [smem:[#allocation0]]
  $region22: #{physnet_forward.22} parent=0
    _
  %s6 = ssub.s32 1, %s4
  %s7 = scalar_select 0, %s6, %s4
  // Predicated region
  $region2: #{physnet_forward.22} parent=0 // pred_check
    _
  $region3: #{physnet_forward.22} parent=0 // pred_check_branch
    %9 = sbr.rel (0) target = $region5
  $region4: #{physnet_forward.22} parent=0 // pred_region
    _
  $region5: #{physnet_forward.22} parent=0 // pred_fallthru
    _
  // Predicated region
  $region6: #{physnet_forward.22} parent=0 // pred_check
    _
  $region7: #{physnet_forward.22} parent=0 // pred_check_branch
    %11 = sbr.rel (0) target = $region9
  $region8: #{physnet_forward.22} parent=0 // pred_region
    _
  $region9: #{physnet_forward.22} parent=0 // pred_fallthru
    _
  // Predicated region
  $region10: #{physnet_forward.22} parent=0 // pred_check
    _
  $region11: #{physnet_forward.22} parent=0 // pred_check_branch
    %13 = sbr.rel (0) target = $region13
  $region12: #{physnet_forward.22} parent=0 // pred_region
    _
  $region13: #{physnet_forward.22} parent=0 // pred_fallthru
    _
  %v14 = vld [vmem:[%s0] sm:$0x3]
  %v15 = vunpack.c.l.bf16 %v14
  %v16 = vld [vmem:[%s1] sm:$0x1]
  %v18 = vperm.slane %v16, 0
  %v20 = vmul.f32 %v15, %v18
  %v21 = vld [vmem:[%s2] sm:$0x1]
  %v23 = vperm.slane %v21, 0
  %v25 = vadd.f32 %v20, %v23
  %vm26 = vcmp.gt.f32.partialorder %v25, 0.0
  %v27 = vmin.f32 %v25, 0.0
  %v28 = vmul.f32 %v27, 1.442695
  %v29 = vpow.pop %v28
  %v30 = vsub.f32 %v29, 1.0
  %v31 = vsel %vm26, %v25, %v30
  %v32 = vpack.c.bf16 %v31, %v31
  %33 = vst [vmem:[%s3] sm:$0x3] %v32
  // Predicated region
  $region14: #{physnet_forward.22} parent=0 // pred_check
    _
  $region15: #{physnet_forward.22} parent=0 // pred_check_branch
    %35 = sbr.rel (0) target = $region17
  $region16: #{physnet_forward.22} parent=0 // pred_region
    _
  $region17: #{physnet_forward.22} parent=0 // pred_fallthru
    _
  // Predicated region
  $region18: #{physnet_forward.22} parent=0 // pred_check
    _
  $region19: #{physnet_forward.22} parent=0 // pred_check_branch
    %37 = sbr.rel (0) target = $region21
  $region20: #{physnet_forward.22} parent=0 // pred_region
    _
  $region21: #{physnet_forward.22} parent=0 // pred_fallthru
    _

// kernel: physnet_forward.23
$region0: #{physnet_forward.23}
  #allocation0 [shape = 'u32[]', space=smem, size = 0x4, offset = 0x4, fixed_abs, tag = 'smem constant byte address 0x4 - core index']
  #allocation1 [shape = 'u32[72,128]{1,0:T(1,128)}', space=vmem, size = 0x9000, scoped, tag = 'internal scratch']
  %s0 = inlined_call_operand.vmem [shape: bf16[8,128], index: 0, kind: input, shape index: {}]
  %s1 = inlined_call_operand.vmem [shape: f32[1,128], index: 1, kind: input, shape index: {}]
  %s2 = inlined_call_operand.vmem [shape: f32[1,128], index: 2, kind: input, shape index: {}]
  %s3 = inlined_call_operand.vmem [shape: bf16[8,128], index: 3, kind: output, shape index: {}]
  %s4 = sld [smem:[#allocation0]]
  $region22: #{physnet_forward.23} parent=0
    _
  %s6 = ssub.s32 1, %s4
  %s7 = scalar_select 0, %s6, %s4
  // Predicated region
  $region2: #{physnet_forward.23} parent=0 // pred_check
    _
  $region3: #{physnet_forward.23} parent=0 // pred_check_branch
    %9 = sbr.rel (0) target = $region5
  $region4: #{physnet_forward.23} parent=0 // pred_region
    _
  $region5: #{physnet_forward.23} parent=0 // pred_fallthru
    _
  // Predicated region
  $region6: #{physnet_forward.23} parent=0 // pred_check
    _
  $region7: #{physnet_forward.23} parent=0 // pred_check_branch
    %11 = sbr.rel (0) target = $region9
  $region8: #{physnet_forward.23} parent=0 // pred_region
    _
  $region9: #{physnet_forward.23} parent=0 // pred_fallthru
    _
  // Predicated region
  $region10: #{physnet_forward.23} parent=0 // pred_check
    _
  $region11: #{physnet_forward.23} parent=0 // pred_check_branch
    %13 = sbr.rel (0) target = $region13
  $region12: #{physnet_forward.23} parent=0 // pred_region
    _
  $region13: #{physnet_forward.23} parent=0 // pred_fallthru
    _
  %v14 = vld [vmem:[%s0] sm:$0xf]
  %v15 = vunpack.c.l.bf16 %v14
  %v16 = vld [vmem:[%s1] sm:$0x1]
  %v18 = vperm.slane %v16, 0
  %v20 = vmul.f32 %v15, %v18
  %v21 = vld [vmem:[%s2] sm:$0x1]
  %v23 = vperm.slane %v21, 0
  %v25 = vadd.f32 %v20, %v23
  %vm26 = vcmp.gt.f32.partialorder %v25, 0.0
  %v27 = vmin.f32 %v25, 0.0
  %v28 = vmul.f32 %v27, 1.442695
  %v29 = vpow.pop %v28
  %v30 = vsub.f32 %v29, 1.0
  %v31 = vsel %vm26, %v25, %v30
  %v32 = vpack.c.bf16 %v31, %v31
  %33 = vst [vmem:[%s3] sm:$0xf] %v32
  // Predicated region
  $region14: #{physnet_forward.23} parent=0 // pred_check
    _
  $region15: #{physnet_forward.23} parent=0 // pred_check_branch
    %35 = sbr.rel (0) target = $region17
  $region16: #{physnet_forward.23} parent=0 // pred_region
    _
  $region17: #{physnet_forward.23} parent=0 // pred_fallthru
    _
  // Predicated region
  $region18: #{physnet_forward.23} parent=0 // pred_check
    _
  $region19: #{physnet_forward.23} parent=0 // pred_check_branch
    %37 = sbr.rel (0) target = $region21
  $region20: #{physnet_forward.23} parent=0 // pred_region
    _
  $region21: #{physnet_forward.23} parent=0 // pred_fallthru
    _

</llo_original>
